<compile_context>
chip_gen: v7x
topology: tpu7x:2x2x1
jax: 0.10.0
libtpu: 0.0.40
codegen_flags: <defaults>
</compile_context>

<pallas_src>
import jax
import jax.numpy as jnp
from jax.experimental import pallas as pl
from jax.experimental.pallas import tpu as pltpu


D_IN, D1, D2, D_OUT = 3 * 64 * 64, 1024, 512, 2
TK = 4096                     # fc1 reduction tile (K = 12288 = 3 * 4096)
N_PAD = 128                   # pad fc3's N=2 out to one full lane tile


def _use_fused_head_path():
    """True on big-VMEM single-TC chips (v5e/v6e); False on v7x / unknown."""
    try:
        info_fn = getattr(pltpu, "get_tpu_info", None)
        if info_fn is None:
            return False
        return int(info_fn().vmem_capacity_bytes) >= 100 * 1024 * 1024
    except Exception:
        return False


# ---------------------------------------------------------------------------
# Split path (v7x / fallback): fc1 streamed over (N, K), then fused fc2+fc3.
# ---------------------------------------------------------------------------
def _fc1_kernel(xT_ref, w_ref, b_ref, o_ref):
    """Grid = (n, k): n tiles output N (parallel across TCs), k walks K.

    xT_ref is the fully resident activation, shape (nk, B, tk); the k-th chunk
    is selected with a leading-dim dynamic index.  The f32 output block is the
    accumulator: bias init at k==0, ReLU at the last k.
    """
    k = pl.program_id(1)

    @pl.when(k == 0)
    def _():
        o_ref[...] = jnp.zeros_like(o_ref) + b_ref[...]  # bias broadcast init

    o_ref[...] += jnp.dot(xT_ref[k], w_ref[...],
                          preferred_element_type=jnp.float32)

    @pl.when(k == pl.num_programs(1) - 1)
    def _():
        o_ref[...] = jnp.maximum(o_ref[...], 0.0)


def linear_relu_streamed(xT, w, b, *, tn, vmem_limit_bytes=40 * 1024 * 1024):
    """relu(x @ w + b) with x pre-chunked as xT[(k, B, tk)] and w streamed."""
    nk, B, tk = xT.shape
    K, N = w.shape
    assert K == nk * tk and N % tn == 0, (K, nk, tk, N, tn)
    b2 = b.reshape(1, N)

    return pl.pallas_call(
        _fc1_kernel,
        out_shape=jax.ShapeDtypeStruct((B, N), jnp.float32),
        grid_spec=pltpu.PrefetchScalarGridSpec(
            num_scalar_prefetch=0,
            grid=(N // tn, nk),
            in_specs=[
                pl.BlockSpec((nk, B, tk), lambda n, k: (0, 0, 0)),  # resident x
                pl.BlockSpec((tk, tn), lambda n, k: (k, n)),        # w1 slab
                pl.BlockSpec((1, tn), lambda n, k: (0, n)),         # bias slab
            ],
            out_specs=pl.BlockSpec((B, tn), lambda n, k: (0, n)),
        ),
        compiler_params=pltpu.CompilerParams(
            dimension_semantics=("parallel", "arbitrary"),
            vmem_limit_bytes=vmem_limit_bytes,
        ),
    )(xT, w, b2)


def _head_kernel(h_ref, w2_ref, b2_ref, w3_ref, b3_ref, o_ref):
    h2 = jnp.dot(h_ref[...].astype(w2_ref.dtype), w2_ref[...],
                 preferred_element_type=jnp.float32)
    h2 = jnp.maximum(h2 + b2_ref[...], 0.0)
    h3 = jnp.dot(h2, w3_ref[...], preferred_element_type=jnp.float32)
    o_ref[...] = jnp.maximum(h3 + b3_ref[...], 0.0).astype(o_ref.dtype)


def fused_fc2_fc3(h, w2, b2, w3p, b3p):
    """relu(relu(h @ w2 + b2) @ w3p + b3p); all weights fully VMEM-resident."""
    B, d1 = h.shape
    d1w, d2 = w2.shape
    d2w, n_pad = w3p.shape
    assert d1 == d1w and d2 == d2w, (d1, d1w, d2, d2w)

    return pl.pallas_call(
        _head_kernel,
        out_shape=jax.ShapeDtypeStruct((B, n_pad), jnp.float32),
        grid_spec=pltpu.PrefetchScalarGridSpec(
            num_scalar_prefetch=0,
            grid=(1,),
            in_specs=[
                pl.BlockSpec((B, d1), lambda i: (0, 0)),
                pl.BlockSpec((d1, d2), lambda i: (0, 0)),
                pl.BlockSpec((1, d2), lambda i: (0, 0)),
                pl.BlockSpec((d2, n_pad), lambda i: (0, 0)),
                pl.BlockSpec((1, n_pad), lambda i: (0, 0)),
            ],
            out_specs=pl.BlockSpec((B, n_pad), lambda i: (0, 0)),
        ),
        compiler_params=pltpu.CompilerParams(dimension_semantics=("arbitrary",)),
    )(h, w2, b2.reshape(1, d2), w3p, b3p)


# ---------------------------------------------------------------------------
# Fused path (v5e/v6e, 128 MiB VMEM): fc1 (full-N slabs) + fc2 + fc3 in ONE call.
# ---------------------------------------------------------------------------
def _fc1_head_kernel(xT_ref, w1_ref, b1_ref, w2_ref, b2_ref, w3_ref, b3_ref,
                     o_ref, h_acc):
    """Grid = (k,): stream full-N w1 slabs; run the fc2/fc3 head at the last k."""
    k = pl.program_id(0)

    @pl.when(k == 0)
    def _():
        h_acc[...] = jnp.zeros_like(h_acc) + b1_ref[...]

    h_acc[...] += jnp.dot(xT_ref[k], w1_ref[...],
                          preferred_element_type=jnp.float32)

    @pl.when(k == pl.num_programs(0) - 1)
    def _():
        h = jnp.maximum(h_acc[...], 0.0)                 # fc1 ReLU
        h2 = jnp.dot(h.astype(w2_ref.dtype), w2_ref[...],
                     preferred_element_type=jnp.float32)
        h2 = jnp.maximum(h2 + b2_ref[...], 0.0)          # fc2 ReLU
        h3 = jnp.dot(h2, w3_ref[...], preferred_element_type=jnp.float32)
        o_ref[...] = jnp.maximum(h3 + b3_ref[...], 0.0).astype(o_ref.dtype)


def fused_mlp(xT, w1, b1, w2, b2, w3p, b3p, *, vmem_limit_bytes=48 * 1024 * 1024):
    nk, B, tk = xT.shape
    K, d1 = w1.shape
    d1w, d2 = w2.shape
    d2w, n_pad = w3p.shape
    assert K == nk * tk and d1 == d1w and d2 == d2w, (K, nk, tk, d1, d1w, d2, d2w)

    return pl.pallas_call(
        _fc1_head_kernel,
        out_shape=jax.ShapeDtypeStruct((B, n_pad), jnp.float32),
        grid_spec=pltpu.PrefetchScalarGridSpec(
            num_scalar_prefetch=0,
            grid=(nk,),
            in_specs=[
                pl.BlockSpec((nk, B, tk), lambda k: (0, 0, 0)),  # resident x
                pl.BlockSpec((tk, d1), lambda k: (k, 0)),        # w1 full-N slab
                pl.BlockSpec((1, d1), lambda k: (0, 0)),
                pl.BlockSpec((d1, d2), lambda k: (0, 0)),        # w2 resident
                pl.BlockSpec((1, d2), lambda k: (0, 0)),
                pl.BlockSpec((d2, n_pad), lambda k: (0, 0)),     # w3 resident
                pl.BlockSpec((1, n_pad), lambda k: (0, 0)),
            ],
            out_specs=pl.BlockSpec((B, n_pad), lambda k: (0, 0)),
            scratch_shapes=[pltpu.VMEM((B, d1), jnp.float32)],   # fc1 accumulator
        ),
        compiler_params=pltpu.CompilerParams(
            dimension_semantics=("arbitrary",),
            vmem_limit_bytes=vmem_limit_bytes,
        ),
    )(xT, w1, b1.reshape(1, d1), w2, b2.reshape(1, d2), w3p, b3p)


# ---------------------------------------------------------------------------
# Full forward pass
# ---------------------------------------------------------------------------
def dnn_forward(x, params, *, fuse_head=None):
    """Forward pass of `dnn` (inference mode).  x: [B, 3, 64, 64] -> [B, 2]."""
    if fuse_head is None:
        fuse_head = _use_fused_head_path()

    B = x.shape[0]
    h = x.reshape(B, -1).astype(params["w1"].dtype)      # bf16 activations
    K = h.shape[1]
    nk = K // TK
    xT = h.reshape(B, nk, TK).transpose(1, 0, 2)         # (nk, B, tk), VMEM-resident

    # Pad fc3's tiny N (=2) to 128 lanes for dense stores; padded columns are
    # exactly relu(0 + 0) = 0 and are sliced off below.
    w3, b3 = params["w3"], params["b3"]
    w3p = jnp.zeros((D2, N_PAD), w3.dtype).at[:, :D_OUT].set(w3)
    b3p = jnp.zeros((1, N_PAD), b3.dtype).at[0, :D_OUT].set(b3)

    # TODO(synk): nn.Dropout(p=0.2) is identity in eval/inference mode; training-mode
    # dropout (pltpu.prng_random_bits mask + 1/(1-p) scale) is not emitted here.

    if fuse_head:
        out = fused_mlp(xT, params["w1"], params["b1"],
                        params["w2"], params["b2"], w3p, b3p)
    else:
        h1 = linear_relu_streamed(xT, params["w1"], params["b1"], tn=512)
        out = fused_fc2_fc3(h1, params["w2"], params["b2"], w3p, b3p)
    return out[:, :D_OUT]


def init_params(key):
    """Parameter init matching the nn.Linear shapes of `dnn`.

    w1/w2 are stored in bf16 (streamed weights); biases and w3 stay f32.
    """
    k1, k2, k3 = jax.random.split(key, 3)
    w1 = (jax.random.normal(k1, (D_IN, D1), jnp.float32)
          * (1.0 / jnp.sqrt(D_IN))).astype(jnp.bfloat16)
    w2 = (jax.random.normal(k2, (D1, D2), jnp.float32)
          * (1.0 / jnp.sqrt(D1))).astype(jnp.bfloat16)
    w3 = jax.random.normal(k3, (D2, D_OUT), jnp.float32) * (1.0 / jnp.sqrt(D2))
    return {
        "w1": w1, "b1": jnp.full((D1,), 0.01, jnp.float32),
        "w2": w2, "b2": jnp.full((D2,), 0.01, jnp.float32),
        "w3": w3, "b3": jnp.full((D_OUT,), 0.01, jnp.float32),
    }


def ref_forward(x, params):
    """Plain-JAX reference with the same bf16 input rounding / f32 accumulation."""
    f32 = jnp.float32
    hp = jax.lax.Precision.HIGHEST
    h = x.reshape(x.shape[0], -1).astype(params["w1"].dtype).astype(f32)
    h = jnp.maximum(jnp.dot(h, params["w1"].astype(f32), precision=hp)
                    + params["b1"], 0.0)
    h = h.astype(params["w2"].dtype).astype(f32)
    h = jnp.maximum(jnp.dot(h, params["w2"].astype(f32), precision=hp)
                    + params["b2"], 0.0)
    h = jnp.maximum(jnp.dot(h, params["w3"], precision=hp) + params["b3"], 0.0)
    return h


if __name__ == "__main__":
    key = jax.random.PRNGKey(0)
    pkey, xkey = jax.random.split(key)

    params = init_params(pkey)
    x = jax.random.normal(xkey, (2, 3, 64, 64), jnp.float32)  # B=2, NCHW

    out = jax.jit(dnn_forward)(x, params)
    out = jax.block_until_ready(out)

    expected = ref_forward(x, params)
    assert out.shape == (2, 2), out.shape
    assert jnp.allclose(out, expected, rtol=2e-3, atol=2e-3), (out, expected)

    print("KERNEL_OK")
</pallas_src>

<mosaic_0001>
module attributes {stable_mosaic.version = 11 : i64} {
  func.func @_fc1_kernel(%arg0: i32, %arg1: i32, %arg2: memref<3x2x4096xbf16, #tpu.memory_space<vmem>>, %arg3: memref<4096x512xbf16, #tpu.memory_space<vmem>>, %arg4: memref<1x512xf32, #tpu.memory_space<vmem>>, %arg5: memref<2x512xf32, #tpu.memory_space<vmem>>) attributes {dimension_semantics = [#tpu.dimension_semantics<parallel>, #tpu.dimension_semantics<arbitrary>], iteration_bounds = array<i64: 2, 3>, scalar_prefetch = 0 : i64, scratch_operands = 0 : i64, tpu.core_type = #tpu.core_type<tc>, window_params = [{pipeline_mode = #tpu.pipeline_mode<synchronous>, transform_indices = @transform_0, window_bounds = array<i64: 3, 2, 4096>}, {transform_indices = @transform_1, window_bounds = array<i64: 4096, 512>}, {transform_indices = @transform_2, window_bounds = array<i64: 1, 512>}, {transform_indices = @transform_3, window_bounds = array<i64: 2, 512>}]} {
    %c0_i32 = arith.constant 0 : i32
    %0 = arith.cmpi eq, %arg1, %c0_i32 : i32
    %1 = arith.extui %0 : i1 to i32
    %c0_i32_0 = arith.constant 0 : i32
    %2 = arith.cmpi ne, %1, %c0_i32_0 : i32
    scf.if %2 {
      %cst_9 = arith.constant 0.000000e+00 : f32
      %14 = vector.broadcast %cst_9 : f32 to vector<2x512xf32>
      %c0_10 = arith.constant 0 : index
      %c0_11 = arith.constant 0 : index
      %15 = vector.load %arg4[%c0_10, %c0_11] : memref<1x512xf32, #tpu.memory_space<vmem>>, vector<1x512xf32>
      %16 = vector.broadcast %15 : vector<1x512xf32> to vector<2x512xf32>
      %17 = arith.addf %14, %16 : vector<2x512xf32>
      %c0_12 = arith.constant 0 : index
      %c0_13 = arith.constant 0 : index
      %18 = vector.load %arg5[%c0_12, %c0_13] : memref<2x512xf32, #tpu.memory_space<vmem>>, vector<2x512xf32>
      tpu.vector_store %arg5[%c0_12, %c0_13], %17 {strides = array<i32>} : memref<2x512xf32, #tpu.memory_space<vmem>>, vector<2x512xf32>,
    } else {
    }
    %c0 = arith.constant 0 : index
    %c0_1 = arith.constant 0 : index
    %3 = vector.load %arg5[%c0, %c0_1] : memref<2x512xf32, #tpu.memory_space<vmem>>, vector<2x512xf32>
    %4 = arith.index_cast %arg1 : i32 to index
    %c0_2 = arith.constant 0 : index
    %c0_3 = arith.constant 0 : index
    %5 = vector.load %arg2[%4, %c0_2, %c0_3] : memref<3x2x4096xbf16, #tpu.memory_space<vmem>>, vector<1x2x4096xbf16>
    %6 = vector.shape_cast %5 : vector<1x2x4096xbf16> to vector<2x4096xbf16>
    %c0_4 = arith.constant 0 : index
    %c0_5 = arith.constant 0 : index
    %7 = vector.load %arg3[%c0_4, %c0_5] : memref<4096x512xbf16, #tpu.memory_space<vmem>>, vector<4096x512xbf16>
    %cst = arith.constant dense<0.000000e+00> : vector<2x512xf32>
    %8 = tpu.matmul %6, %7, %cst {dimension_numbers = #tpu.dot_dimension_numbers<[1], [0], [0], [1], [0, 0, 1, 1], [], []>} : vector<2x4096xbf16>, vector<4096x512xbf16>, vector<2x512xf32> -> vector<2x512xf32>
    %9 = arith.addf %3, %8 : vector<2x512xf32>
    %c0_6 = arith.constant 0 : index
    %c0_7 = arith.constant 0 : index
    %10 = vector.load %arg5[%c0_6, %c0_7] : memref<2x512xf32, #tpu.memory_space<vmem>>, vector<2x512xf32>
    tpu.vector_store %arg5[%c0_6, %c0_7], %9 {strides = array<i32>} : memref<2x512xf32, #tpu.memory_space<vmem>>, vector<2x512xf32>,
    %c2_i32 = arith.constant 2 : i32
    %11 = arith.cmpi eq, %arg1, %c2_i32 : i32
    %12 = arith.extui %11 : i1 to i32
    %c0_i32_8 = arith.constant 0 : i32
    %13 = arith.cmpi ne, %12, %c0_i32_8 : i32
    scf.if %13 {
      %c0_9 = arith.constant 0 : index
      %c0_10 = arith.constant 0 : index
      %14 = vector.load %arg5[%c0_9, %c0_10] : memref<2x512xf32, #tpu.memory_space<vmem>>, vector<2x512xf32>
      %cst_11 = arith.constant 0.000000e+00 : f32
      %15 = vector.broadcast %cst_11 : f32 to vector<2x512xf32>
      %16 = arith.maximumf %14, %15 : vector<2x512xf32>
      %c0_12 = arith.constant 0 : index
      %c0_13 = arith.constant 0 : index
      %17 = vector.load %arg5[%c0_12, %c0_13] : memref<2x512xf32, #tpu.memory_space<vmem>>, vector<2x512xf32>
      tpu.vector_store %arg5[%c0_12, %c0_13], %16 {strides = array<i32>} : memref<2x512xf32, #tpu.memory_space<vmem>>, vector<2x512xf32>,
    } else {
    }
    return
  }
  func.func @transform_0(%arg0: i32, %arg1: i32) -> (i32, i32, i32) {
    %c0_i32 = arith.constant 0 : i32
    %c0_i32_0 = arith.constant 0 : i32
    %c0_i32_1 = arith.constant 0 : i32
    %c0_i32_2 = arith.constant 0 : i32
    return %c0_i32, %c0_i32_0, %c0_i32_1 : i32, i32, i32
  }
  func.func @transform_1(%arg0: i32, %arg1: i32) -> (i32, i32) {
    %c0_i32 = arith.constant 0 : i32
    return %arg1, %arg0 : i32, i32
  }
  func.func @transform_2(%arg0: i32, %arg1: i32) -> (i32, i32) {
    %c0_i32 = arith.constant 0 : i32
    %c0_i32_0 = arith.constant 0 : i32
    return %c0_i32, %arg0 : i32, i32
  }
  func.func @transform_3(%arg0: i32, %arg1: i32) -> (i32, i32) {
    %c0_i32 = arith.constant 0 : i32
    %c0_i32_0 = arith.constant 0 : i32
    return %c0_i32, %arg0 : i32, i32
  }
}

module attributes {stable_mosaic.version = 11 : i64} {
  func.func @_head_kernel(%arg0: i32, %arg1: memref<2x1024xf32, #tpu.memory_space<vmem>>, %arg2: memref<1024x512xbf16, #tpu.memory_space<vmem>>, %arg3: memref<1x512xf32, #tpu.memory_space<vmem>>, %arg4: memref<512x128xf32, #tpu.memory_space<vmem>>, %arg5: memref<1x128xf32, #tpu.memory_space<vmem>>, %arg6: memref<2x128xf32, #tpu.memory_space<vmem>>) attributes {dimension_semantics = [#tpu.dimension_semantics<arbitrary>], iteration_bounds = array<i64: 1>, scalar_prefetch = 0 : i64, scratch_operands = 0 : i64, tpu.core_type = #tpu.core_type<tc>, window_params = [{pipeline_mode = #tpu.pipeline_mode<synchronous>, transform_indices = @transform_0, window_bounds = array<i64: 2, 1024>}, {pipeline_mode = #tpu.pipeline_mode<synchronous>, transform_indices = @transform_1, window_bounds = array<i64: 1024, 512>}, {pipeline_mode = #tpu.pipeline_mode<synchronous>, transform_indices = @transform_2, window_bounds = array<i64: 1, 512>}, {pipeline_mode = #tpu.pipeline_mode<synchronous>, transform_indices = @transform_3, window_bounds = array<i64: 512, 128>}, {pipeline_mode = #tpu.pipeline_mode<synchronous>, transform_indices = @transform_4, window_bounds = array<i64: 1, 128>}, {pipeline_mode = #tpu.pipeline_mode<synchronous>, transform_indices = @transform_5, window_bounds = array<i64: 2, 128>}]} {
    %c0 = arith.constant 0 : index
    %c0_0 = arith.constant 0 : index
    %0 = vector.load %arg1[%c0, %c0_0] : memref<2x1024xf32, #tpu.memory_space<vmem>>, vector<2x1024xf32>
    %1 = arith.truncf %0 : vector<2x1024xf32> to vector<2x1024xbf16>
    %c0_1 = arith.constant 0 : index
    %c0_2 = arith.constant 0 : index
    %2 = vector.load %arg2[%c0_1, %c0_2] : memref<1024x512xbf16, #tpu.memory_space<vmem>>, vector<1024x512xbf16>
    %cst = arith.constant dense<0.000000e+00> : vector<2x512xf32>
    %3 = tpu.matmul %1, %2, %cst {dimension_numbers = #tpu.dot_dimension_numbers<[1], [0], [0], [1], [0, 0, 1, 1], [], []>} : vector<2x1024xbf16>, vector<1024x512xbf16>, vector<2x512xf32> -> vector<2x512xf32>
    %c0_3 = arith.constant 0 : index
    %c0_4 = arith.constant 0 : index
    %4 = vector.load %arg3[%c0_3, %c0_4] : memref<1x512xf32, #tpu.memory_space<vmem>>, vector<1x512xf32>
    %5 = vector.broadcast %4 : vector<1x512xf32> to vector<2x512xf32>
    %6 = arith.addf %3, %5 : vector<2x512xf32>
    %cst_5 = arith.constant 0.000000e+00 : f32
    %7 = vector.broadcast %cst_5 : f32 to vector<2x512xf32>
    %8 = arith.maximumf %6, %7 : vector<2x512xf32>
    %c0_6 = arith.constant 0 : index
    %c0_7 = arith.constant 0 : index
    %9 = vector.load %arg4[%c0_6, %c0_7] : memref<512x128xf32, #tpu.memory_space<vmem>>, vector<512x128xf32>
    %cst_8 = arith.constant dense<0.000000e+00> : vector<2x128xf32>
    %10 = tpu.matmul %8, %9, %cst_8 {dimension_numbers = #tpu.dot_dimension_numbers<[1], [0], [0], [1], [0, 0, 1, 1], [], []>} : vector<2x512xf32>, vector<512x128xf32>, vector<2x128xf32> -> vector<2x128xf32>
    %c0_9 = arith.constant 0 : index
    %c0_10 = arith.constant 0 : index
    %11 = vector.load %arg5[%c0_9, %c0_10] : memref<1x128xf32, #tpu.memory_space<vmem>>, vector<1x128xf32>
    %12 = vector.broadcast %11 : vector<1x128xf32> to vector<2x128xf32>
    %13 = arith.addf %10, %12 : vector<2x128xf32>
    %cst_11 = arith.constant 0.000000e+00 : f32
    %14 = vector.broadcast %cst_11 : f32 to vector<2x128xf32>
    %15 = arith.maximumf %13, %14 : vector<2x128xf32>
    %c0_12 = arith.constant 0 : index
    %c0_13 = arith.constant 0 : index
    %16 = vector.load %arg6[%c0_12, %c0_13] : memref<2x128xf32, #tpu.memory_space<vmem>>, vector<2x128xf32>
    tpu.vector_store %arg6[%c0_12, %c0_13], %15 {strides = array<i32>} : memref<2x128xf32, #tpu.memory_space<vmem>>, vector<2x128xf32>,
    return
  }
  func.func @transform_0(%arg0: i32) -> (i32, i32) {
    %c0_i32 = arith.constant 0 : i32
    %c0_i32_0 = arith.constant 0 : i32
    %c0_i32_1 = arith.constant 0 : i32
    return %c0_i32, %c0_i32_0 : i32, i32
  }
  func.func @transform_1(%arg0: i32) -> (i32, i32) {
    %c0_i32 = arith.constant 0 : i32
    %c0_i32_0 = arith.constant 0 : i32
    %c0_i32_1 = arith.constant 0 : i32
    return %c0_i32, %c0_i32_0 : i32, i32
  }
  func.func @transform_2(%arg0: i32) -> (i32, i32) {
    %c0_i32 = arith.constant 0 : i32
    %c0_i32_0 = arith.constant 0 : i32
    %c0_i32_1 = arith.constant 0 : i32
    return %c0_i32, %c0_i32_0 : i32, i32
  }
  func.func @transform_3(%arg0: i32) -> (i32, i32) {
    %c0_i32 = arith.constant 0 : i32
    %c0_i32_0 = arith.constant 0 : i32
    %c0_i32_1 = arith.constant 0 : i32
    return %c0_i32, %c0_i32_0 : i32, i32
  }
  func.func @transform_4(%arg0: i32) -> (i32, i32) {
    %c0_i32 = arith.constant 0 : i32
    %c0_i32_0 = arith.constant 0 : i32
    %c0_i32_1 = arith.constant 0 : i32
    return %c0_i32, %c0_i32_0 : i32, i32
  }
  func.func @transform_5(%arg0: i32) -> (i32, i32) {
    %c0_i32 = arith.constant 0 : i32
    %c0_i32_0 = arith.constant 0 : i32
    %c0_i32_1 = arith.constant 0 : i32
    return %c0_i32, %c0_i32_0 : i32, i32
  }
}

</mosaic_0001>

<llo_original>
// kernel: dnn_forward.3
$region0: #{dnn_forward.3}
  #allocation0 [shape = 'u32[]', space=smem, size = 0x4, offset = 0x4, fixed_abs, tag = 'smem constant byte address 0x4 - core index']
  #allocation1 [shape = 'u32[144,128]{1,0:T(1,128)}', space=vmem, size = 0x12000, scoped, tag = 'internal scratch']
  %s0 = inlined_call_operand.vmem [shape: f32[2,1024], index: 0, kind: input, shape index: {}]
  %s1 = inlined_call_operand.vmem [shape: bf16[1024,512], index: 1, kind: input, shape index: {}]
  %s2 = inlined_call_operand.vmem [shape: f32[1,512], index: 2, kind: input, shape index: {}]
  %s3 = inlined_call_operand.vmem [shape: f32[512,128], index: 3, kind: input, shape index: {}]
  %s4 = inlined_call_operand.vmem [shape: f32[1,128], index: 4, kind: input, shape index: {}]
  %s5 = inlined_call_operand.hbm [shape: f32[2,128], index: 5, kind: output, shape index: {}]
  %s6 = sld [smem:[#allocation0]]
  $region30: #{dnn_forward.3} parent=0
    _
  %s8 = ssub.s32 1, %s6
  %s9 = scalar_select 0, %s8, %s6
  $region1: #{dnn_forward.3} parent=0
    #allocation2 [shape = 'u8[1024]{0}', space=vmem, size = 0x400, scoped, tag = 'output window, operand 0, single buffered']
    #allocation3 [shape = 's32[1]{0}', space=sflag, size = 0x4, scoped, tag = 'scoped memory for dnn_forward.3']
    %10 = vsyncpa [#allocation3], 0
    // Predicated region
    $region2: #{dnn_forward.3} parent=1 // pred_check
      _
    $region3: #{dnn_forward.3} parent=1 // pred_check_branch
      %12 = sbr.rel (0) target = $region5
    $region4: #{dnn_forward.3} parent=1 // pred_region
      _
    $region5: #{dnn_forward.3} parent=1 // pred_fallthru
      _
    // Predicated region
    $region6: #{dnn_forward.3} parent=1 // pred_check
      _
    $region7: #{dnn_forward.3} parent=1 // pred_check_branch
      %14 = sbr.rel (0) target = $region9
    $region8: #{dnn_forward.3} parent=1 // pred_region
      _
    $region9: #{dnn_forward.3} parent=1 // pred_fallthru
      _
    // Predicated region
    $region10: #{dnn_forward.3} parent=1 // pred_check
      _
    $region11: #{dnn_forward.3} parent=1 // pred_check_branch
      %16 = sbr.rel (0) target = $region13
    $region12: #{dnn_forward.3} parent=1 // pred_region
      _
    $region13: #{dnn_forward.3} parent=1 // pred_fallthru
      _
    // Predicated region
    $region14: #{dnn_forward.3} parent=1 // pred_check
      _
    $region15: #{dnn_forward.3} parent=1 // pred_check_branch
      %18 = sbr.rel (0) target = $region17
    $region16: #{dnn_forward.3} parent=1 // pred_region
      _
    $region17: #{dnn_forward.3} parent=1 // pred_fallthru
      _
    // Predicated region
    $region18: #{dnn_forward.3} parent=1 // pred_check
      _
    $region19: #{dnn_forward.3} parent=1 // pred_check_branch
      %20 = sbr.rel (0) target = $region21
    $region20: #{dnn_forward.3} parent=1 // pred_region
      _
    $region21: #{dnn_forward.3} parent=1 // pred_fallthru
      _
    %v21 = vld [vmem:[%s0] sm:$0xff]
    %v22 = vld [vmem:[%s0 + $0x8] sm:$0xff]
    %v25 = vcombine.high %v21, %v21
    %v27 = vunpack.c.l.s4 1983009808
    %v28 = vunpack.c.0.s8 %v27
    %v29 = vlaneseq
    %v30 = vshrl.u32 %v29, 7
    %v31 = vsub.s32 %v28, %v30
    %v32 = vrot.slane %v21, %v31
    %v34 = vunpack.c.l.s4 1983009808
    %v35 = vunpack.c.0.s8 %v34
    %v36 = vlaneseq
    %v37 = vshrl.u32 %v36, 7
    %v38 = vsub.s32 %v35, %v37
    %v39 = vrot.slane %v25, %v38
    %v40 = vcombine.high %v32, %v32
    %v41 = vcombine.high %v39, %v39
    %v42 = vcombine.high %v22, %v22
    %v44 = vunpack.c.l.s4 1983009808
    %v45 = vunpack.c.0.s8 %v44
    %v46 = vlaneseq
    %v47 = vshrl.u32 %v46, 7
    %v48 = vsub.s32 %v45, %v47
    %v49 = vrot.slane %v22, %v48
    %v51 = vunpack.c.l.s4 1983009808
    %v52 = vunpack.c.0.s8 %v51
    %v53 = vlaneseq
    %v54 = vshrl.u32 %v53, 7
    %v55 = vsub.s32 %v52, %v54
    %v56 = vrot.slane %v42, %v55
    %v57 = vcombine.high %v49, %v49
    %v58 = vcombine.high %v56, %v56
    %v67 = vpack.c.bf16 %v32, %v32
    %v68 = vpack.c.bf16 %v40, %v40
    %v69 = vpack.c.bf16 %v39, %v39
    %v70 = vpack.c.bf16 %v41, %v41
    %v71 = vpack.c.bf16 %v49, %v49
    %v72 = vpack.c.bf16 %v57, %v57
    %v73 = vpack.c.bf16 %v56, %v56
    %v74 = vpack.c.bf16 %v58, %v58
    %v75 = vld [vmem:[%s1] sm:$0xff]
    %v76 = vld [vmem:[%s1 + $0x8] sm:$0xff]
    %v77 = vld [vmem:[%s1 + $0x10] sm:$0xff]
    %v78 = vld [vmem:[%s1 + $0x18] sm:$0xff]
    %v79 = vld [vmem:[%s1 + $0x20] sm:$0xff]
    %v80 = vld [vmem:[%s1 + $0x28] sm:$0xff]
    %v81 = vld [vmem:[%s1 + $0x30] sm:$0xff]
    %v82 = vld [vmem:[%s1 + $0x38] sm:$0xff]
    %v83 = vld [vmem:[%s1 + $0x40] sm:$0xff]
    %v84 = vld [vmem:[%s1 + $0x48] sm:$0xff]
    %v85 = vld [vmem:[%s1 + $0x50] sm:$0xff]
    %v86 = vld [vmem:[%s1 + $0x58] sm:$0xff]
    %v87 = vld [vmem:[%s1 + $0x60] sm:$0xff]
    %v88 = vld [vmem:[%s1 + $0x68] sm:$0xff]
    %v89 = vld [vmem:[%s1 + $0x70] sm:$0xff]
    %v90 = vld [vmem:[%s1 + $0x78] sm:$0xff]
    %v91 = vld [vmem:[%s1 + $0x80] sm:$0xff]
    %v92 = vld [vmem:[%s1 + $0x88] sm:$0xff]
    %v93 = vld [vmem:[%s1 + $0x90] sm:$0xff]
    %v94 = vld [vmem:[%s1 + $0x98] sm:$0xff]
    %v95 = vld [vmem:[%s1 + $0xa0] sm:$0xff]
    %v96 = vld [vmem:[%s1 + $0xa8] sm:$0xff]
    %v97 = vld [vmem:[%s1 + $0xb0] sm:$0xff]
    %v98 = vld [vmem:[%s1 + $0xb8] sm:$0xff]
    %v99 = vld [vmem:[%s1 + $0xc0] sm:$0xff]
    %v100 = vld [vmem:[%s1 + $0xc8] sm:$0xff]
    %v101 = vld [vmem:[%s1 + $0xd0] sm:$0xff]
    %v102 = vld [vmem:[%s1 + $0xd8] sm:$0xff]
    %v103 = vld [vmem:[%s1 + $0xe0] sm:$0xff]
    %v104 = vld [vmem:[%s1 + $0xe8] sm:$0xff]
    %v105 = vld [vmem:[%s1 + $0xf0] sm:$0xff]
    %v106 = vld [vmem:[%s1 + $0xf8] sm:$0xff]
    %v107 = vld [vmem:[%s1 + $0x100] sm:$0xff]
    %v108 = vld [vmem:[%s1 + $0x108] sm:$0xff]
    %v109 = vld [vmem:[%s1 + $0x110] sm:$0xff]
    %v110 = vld [vmem:[%s1 + $0x118] sm:$0xff]
    %v111 = vld [vmem:[%s1 + $0x120] sm:$0xff]
    %v112 = vld [vmem:[%s1 + $0x128] sm:$0xff]
    %v113 = vld [vmem:[%s1 + $0x130] sm:$0xff]
    %v114 = vld [vmem:[%s1 + $0x138] sm:$0xff]
    %v115 = vld [vmem:[%s1 + $0x140] sm:$0xff]
    %v116 = vld [vmem:[%s1 + $0x148] sm:$0xff]
    %v117 = vld [vmem:[%s1 + $0x150] sm:$0xff]
    %v118 = vld [vmem:[%s1 + $0x158] sm:$0xff]
    %v119 = vld [vmem:[%s1 + $0x160] sm:$0xff]
    %v120 = vld [vmem:[%s1 + $0x168] sm:$0xff]
    %v121 = vld [vmem:[%s1 + $0x170] sm:$0xff]
    %v122 = vld [vmem:[%s1 + $0x178] sm:$0xff]
    %v123 = vld [vmem:[%s1 + $0x180] sm:$0xff]
    %v124 = vld [vmem:[%s1 + $0x188] sm:$0xff]
    %v125 = vld [vmem:[%s1 + $0x190] sm:$0xff]
    %v126 = vld [vmem:[%s1 + $0x198] sm:$0xff]
    %v127 = vld [vmem:[%s1 + $0x1a0] sm:$0xff]
    %v128 = vld [vmem:[%s1 + $0x1a8] sm:$0xff]
    %v129 = vld [vmem:[%s1 + $0x1b0] sm:$0xff]
    %v130 = vld [vmem:[%s1 + $0x1b8] sm:$0xff]
    %v131 = vld [vmem:[%s1 + $0x1c0] sm:$0xff]
    %v132 = vld [vmem:[%s1 + $0x1c8] sm:$0xff]
    %v133 = vld [vmem:[%s1 + $0x1d0] sm:$0xff]
    %v134 = vld [vmem:[%s1 + $0x1d8] sm:$0xff]
    %v135 = vld [vmem:[%s1 + $0x1e0] sm:$0xff]
    %v136 = vld [vmem:[%s1 + $0x1e8] sm:$0xff]
    %v137 = vld [vmem:[%s1 + $0x1f0] sm:$0xff]
    %v138 = vld [vmem:[%s1 + $0x1f8] sm:$0xff]
    %v139 = vld [vmem:[%s1 + $0x200] sm:$0xff]
    %v140 = vld [vmem:[%s1 + $0x208] sm:$0xff]
    %v141 = vld [vmem:[%s1 + $0x210] sm:$0xff]
    %v142 = vld [vmem:[%s1 + $0x218] sm:$0xff]
    %v143 = vld [vmem:[%s1 + $0x220] sm:$0xff]
    %v144 = vld [vmem:[%s1 + $0x228] sm:$0xff]
    %v145 = vld [vmem:[%s1 + $0x230] sm:$0xff]
    %v146 = vld [vmem:[%s1 + $0x238] sm:$0xff]
    %v147 = vld [vmem:[%s1 + $0x240] sm:$0xff]
    %v148 = vld [vmem:[%s1 + $0x248] sm:$0xff]
    %v149 = vld [vmem:[%s1 + $0x250] sm:$0xff]
    %v150 = vld [vmem:[%s1 + $0x258] sm:$0xff]
    %v151 = vld [vmem:[%s1 + $0x260] sm:$0xff]
    %v152 = vld [vmem:[%s1 + $0x268] sm:$0xff]
    %v153 = vld [vmem:[%s1 + $0x270] sm:$0xff]
    %v154 = vld [vmem:[%s1 + $0x278] sm:$0xff]
    %v155 = vld [vmem:[%s1 + $0x280] sm:$0xff]
    %v156 = vld [vmem:[%s1 + $0x288] sm:$0xff]
    %v157 = vld [vmem:[%s1 + $0x290] sm:$0xff]
    %v158 = vld [vmem:[%s1 + $0x298] sm:$0xff]
    %v159 = vld [vmem:[%s1 + $0x2a0] sm:$0xff]
    %v160 = vld [vmem:[%s1 + $0x2a8] sm:$0xff]
    %v161 = vld [vmem:[%s1 + $0x2b0] sm:$0xff]
    %v162 = vld [vmem:[%s1 + $0x2b8] sm:$0xff]
    %v163 = vld [vmem:[%s1 + $0x2c0] sm:$0xff]
    %v164 = vld [vmem:[%s1 + $0x2c8] sm:$0xff]
    %v165 = vld [vmem:[%s1 + $0x2d0] sm:$0xff]
    %v166 = vld [vmem:[%s1 + $0x2d8] sm:$0xff]
    %v167 = vld [vmem:[%s1 + $0x2e0] sm:$0xff]
    %v168 = vld [vmem:[%s1 + $0x2e8] sm:$0xff]
    %v169 = vld [vmem:[%s1 + $0x2f0] sm:$0xff]
    %v170 = vld [vmem:[%s1 + $0x2f8] sm:$0xff]
    %v171 = vld [vmem:[%s1 + $0x300] sm:$0xff]
    %v172 = vld [vmem:[%s1 + $0x308] sm:$0xff]
    %v173 = vld [vmem:[%s1 + $0x310] sm:$0xff]
    %v174 = vld [vmem:[%s1 + $0x318] sm:$0xff]
    %v175 = vld [vmem:[%s1 + $0x320] sm:$0xff]
    %v176 = vld [vmem:[%s1 + $0x328] sm:$0xff]
    %v177 = vld [vmem:[%s1 + $0x330] sm:$0xff]
    %v178 = vld [vmem:[%s1 + $0x338] sm:$0xff]
    %v179 = vld [vmem:[%s1 + $0x340] sm:$0xff]
    %v180 = vld [vmem:[%s1 + $0x348] sm:$0xff]
    %v181 = vld [vmem:[%s1 + $0x350] sm:$0xff]
    %v182 = vld [vmem:[%s1 + $0x358] sm:$0xff]
    %v183 = vld [vmem:[%s1 + $0x360] sm:$0xff]
    %v184 = vld [vmem:[%s1 + $0x368] sm:$0xff]
    %v185 = vld [vmem:[%s1 + $0x370] sm:$0xff]
    %v186 = vld [vmem:[%s1 + $0x378] sm:$0xff]
    %v187 = vld [vmem:[%s1 + $0x380] sm:$0xff]
    %v188 = vld [vmem:[%s1 + $0x388] sm:$0xff]
    %v189 = vld [vmem:[%s1 + $0x390] sm:$0xff]
    %v190 = vld [vmem:[%s1 + $0x398] sm:$0xff]
    %v191 = vld [vmem:[%s1 + $0x3a0] sm:$0xff]
    %v192 = vld [vmem:[%s1 + $0x3a8] sm:$0xff]
    %v193 = vld [vmem:[%s1 + $0x3b0] sm:$0xff]
    %v194 = vld [vmem:[%s1 + $0x3b8] sm:$0xff]
    %v195 = vld [vmem:[%s1 + $0x3c0] sm:$0xff]
    %v196 = vld [vmem:[%s1 + $0x3c8] sm:$0xff]
    %v197 = vld [vmem:[%s1 + $0x3d0] sm:$0xff]
    %v198 = vld [vmem:[%s1 + $0x3d8] sm:$0xff]
    %v199 = vld [vmem:[%s1 + $0x3e0] sm:$0xff]
    %v200 = vld [vmem:[%s1 + $0x3e8] sm:$0xff]
    %v201 = vld [vmem:[%s1 + $0x3f0] sm:$0xff]
    %v202 = vld [vmem:[%s1 + $0x3f8] sm:$0xff]
    %v203 = vld [vmem:[%s1 + $0x400] sm:$0xff]
    %v204 = vld [vmem:[%s1 + $0x408] sm:$0xff]
    %v205 = vld [vmem:[%s1 + $0x410] sm:$0xff]
    %v206 = vld [vmem:[%s1 + $0x418] sm:$0xff]
    %v207 = vld [vmem:[%s1 + $0x420] sm:$0xff]
    %v208 = vld [vmem:[%s1 + $0x428] sm:$0xff]
    %v209 = vld [vmem:[%s1 + $0x430] sm:$0xff]
    %v210 = vld [vmem:[%s1 + $0x438] sm:$0xff]
    %v211 = vld [vmem:[%s1 + $0x440] sm:$0xff]
    %v212 = vld [vmem:[%s1 + $0x448] sm:$0xff]
    %v213 = vld [vmem:[%s1 + $0x450] sm:$0xff]
    %v214 = vld [vmem:[%s1 + $0x458] sm:$0xff]
    %v215 = vld [vmem:[%s1 + $0x460] sm:$0xff]
    %v216 = vld [vmem:[%s1 + $0x468] sm:$0xff]
    %v217 = vld [vmem:[%s1 + $0x470] sm:$0xff]
    %v218 = vld [vmem:[%s1 + $0x478] sm:$0xff]
    %v219 = vld [vmem:[%s1 + $0x480] sm:$0xff]
    %v220 = vld [vmem:[%s1 + $0x488] sm:$0xff]
    %v221 = vld [vmem:[%s1 + $0x490] sm:$0xff]
    %v222 = vld [vmem:[%s1 + $0x498] sm:$0xff]
    %v223 = vld [vmem:[%s1 + $0x4a0] sm:$0xff]
    %v224 = vld [vmem:[%s1 + $0x4a8] sm:$0xff]
    %v225 = vld [vmem:[%s1 + $0x4b0] sm:$0xff]
    %v226 = vld [vmem:[%s1 + $0x4b8] sm:$0xff]
    %v227 = vld [vmem:[%s1 + $0x4c0] sm:$0xff]
    %v228 = vld [vmem:[%s1 + $0x4c8] sm:$0xff]
    %v229 = vld [vmem:[%s1 + $0x4d0] sm:$0xff]
    %v230 = vld [vmem:[%s1 + $0x4d8] sm:$0xff]
    %v231 = vld [vmem:[%s1 + $0x4e0] sm:$0xff]
    %v232 = vld [vmem:[%s1 + $0x4e8] sm:$0xff]
    %v233 = vld [vmem:[%s1 + $0x4f0] sm:$0xff]
    %v234 = vld [vmem:[%s1 + $0x4f8] sm:$0xff]
    %v235 = vld [vmem:[%s1 + $0x500] sm:$0xff]
    %v236 = vld [vmem:[%s1 + $0x508] sm:$0xff]
    %v237 = vld [vmem:[%s1 + $0x510] sm:$0xff]
    %v238 = vld [vmem:[%s1 + $0x518] sm:$0xff]
    %v239 = vld [vmem:[%s1 + $0x520] sm:$0xff]
    %v240 = vld [vmem:[%s1 + $0x528] sm:$0xff]
    %v241 = vld [vmem:[%s1 + $0x530] sm:$0xff]
    %v242 = vld [vmem:[%s1 + $0x538] sm:$0xff]
    %v243 = vld [vmem:[%s1 + $0x540] sm:$0xff]
    %v244 = vld [vmem:[%s1 + $0x548] sm:$0xff]
    %v245 = vld [vmem:[%s1 + $0x550] sm:$0xff]
    %v246 = vld [vmem:[%s1 + $0x558] sm:$0xff]
    %v247 = vld [vmem:[%s1 + $0x560] sm:$0xff]
    %v248 = vld [vmem:[%s1 + $0x568] sm:$0xff]
    %v249 = vld [vmem:[%s1 + $0x570] sm:$0xff]
    %v250 = vld [vmem:[%s1 + $0x578] sm:$0xff]
    %v251 = vld [vmem:[%s1 + $0x580] sm:$0xff]
    %v252 = vld [vmem:[%s1 + $0x588] sm:$0xff]
    %v253 = vld [vmem:[%s1 + $0x590] sm:$0xff]
    %v254 = vld [vmem:[%s1 + $0x598] sm:$0xff]
    %v255 = vld [vmem:[%s1 + $0x5a0] sm:$0xff]
    %v256 = vld [vmem:[%s1 + $0x5a8] sm:$0xff]
    %v257 = vld [vmem:[%s1 + $0x5b0] sm:$0xff]
    %v258 = vld [vmem:[%s1 + $0x5b8] sm:$0xff]
    %v259 = vld [vmem:[%s1 + $0x5c0] sm:$0xff]
    %v260 = vld [vmem:[%s1 + $0x5c8] sm:$0xff]
    %v261 = vld [vmem:[%s1 + $0x5d0] sm:$0xff]
    %v262 = vld [vmem:[%s1 + $0x5d8] sm:$0xff]
    %v263 = vld [vmem:[%s1 + $0x5e0] sm:$0xff]
    %v264 = vld [vmem:[%s1 + $0x5e8] sm:$0xff]
    %v265 = vld [vmem:[%s1 + $0x5f0] sm:$0xff]
    %v266 = vld [vmem:[%s1 + $0x5f8] sm:$0xff]
    %v267 = vld [vmem:[%s1 + $0x600] sm:$0xff]
    %v268 = vld [vmem:[%s1 + $0x608] sm:$0xff]
    %v269 = vld [vmem:[%s1 + $0x610] sm:$0xff]
    %v270 = vld [vmem:[%s1 + $0x618] sm:$0xff]
    %v271 = vld [vmem:[%s1 + $0x620] sm:$0xff]
    %v272 = vld [vmem:[%s1 + $0x628] sm:$0xff]
    %v273 = vld [vmem:[%s1 + $0x630] sm:$0xff]
    %v274 = vld [vmem:[%s1 + $0x638] sm:$0xff]
    %v275 = vld [vmem:[%s1 + $0x640] sm:$0xff]
    %v276 = vld [vmem:[%s1 + $0x648] sm:$0xff]
    %v277 = vld [vmem:[%s1 + $0x650] sm:$0xff]
    %v278 = vld [vmem:[%s1 + $0x658] sm:$0xff]
    %v279 = vld [vmem:[%s1 + $0x660] sm:$0xff]
    %v280 = vld [vmem:[%s1 + $0x668] sm:$0xff]
    %v281 = vld [vmem:[%s1 + $0x670] sm:$0xff]
    %v282 = vld [vmem:[%s1 + $0x678] sm:$0xff]
    %v283 = vld [vmem:[%s1 + $0x680] sm:$0xff]
    %v284 = vld [vmem:[%s1 + $0x688] sm:$0xff]
    %v285 = vld [vmem:[%s1 + $0x690] sm:$0xff]
    %v286 = vld [vmem:[%s1 + $0x698] sm:$0xff]
    %v287 = vld [vmem:[%s1 + $0x6a0] sm:$0xff]
    %v288 = vld [vmem:[%s1 + $0x6a8] sm:$0xff]
    %v289 = vld [vmem:[%s1 + $0x6b0] sm:$0xff]
    %v290 = vld [vmem:[%s1 + $0x6b8] sm:$0xff]
    %v291 = vld [vmem:[%s1 + $0x6c0] sm:$0xff]
    %v292 = vld [vmem:[%s1 + $0x6c8] sm:$0xff]
    %v293 = vld [vmem:[%s1 + $0x6d0] sm:$0xff]
    %v294 = vld [vmem:[%s1 + $0x6d8] sm:$0xff]
    %v295 = vld [vmem:[%s1 + $0x6e0] sm:$0xff]
    %v296 = vld [vmem:[%s1 + $0x6e8] sm:$0xff]
    %v297 = vld [vmem:[%s1 + $0x6f0] sm:$0xff]
    %v298 = vld [vmem:[%s1 + $0x6f8] sm:$0xff]
    %v299 = vld [vmem:[%s1 + $0x700] sm:$0xff]
    %v300 = vld [vmem:[%s1 + $0x708] sm:$0xff]
    %v301 = vld [vmem:[%s1 + $0x710] sm:$0xff]
    %v302 = vld [vmem:[%s1 + $0x718] sm:$0xff]
    %v303 = vld [vmem:[%s1 + $0x720] sm:$0xff]
    %v304 = vld [vmem:[%s1 + $0x728] sm:$0xff]
    %v305 = vld [vmem:[%s1 + $0x730] sm:$0xff]
    %v306 = vld [vmem:[%s1 + $0x738] sm:$0xff]
    %v307 = vld [vmem:[%s1 + $0x740] sm:$0xff]
    %v308 = vld [vmem:[%s1 + $0x748] sm:$0xff]
    %v309 = vld [vmem:[%s1 + $0x750] sm:$0xff]
    %v310 = vld [vmem:[%s1 + $0x758] sm:$0xff]
    %v311 = vld [vmem:[%s1 + $0x760] sm:$0xff]
    %v312 = vld [vmem:[%s1 + $0x768] sm:$0xff]
    %v313 = vld [vmem:[%s1 + $0x770] sm:$0xff]
    %v314 = vld [vmem:[%s1 + $0x778] sm:$0xff]
    %v315 = vld [vmem:[%s1 + $0x780] sm:$0xff]
    %v316 = vld [vmem:[%s1 + $0x788] sm:$0xff]
    %v317 = vld [vmem:[%s1 + $0x790] sm:$0xff]
    %v318 = vld [vmem:[%s1 + $0x798] sm:$0xff]
    %v319 = vld [vmem:[%s1 + $0x7a0] sm:$0xff]
    %v320 = vld [vmem:[%s1 + $0x7a8] sm:$0xff]
    %v321 = vld [vmem:[%s1 + $0x7b0] sm:$0xff]
    %v322 = vld [vmem:[%s1 + $0x7b8] sm:$0xff]
    %v323 = vld [vmem:[%s1 + $0x7c0] sm:$0xff]
    %v324 = vld [vmem:[%s1 + $0x7c8] sm:$0xff]
    %v325 = vld [vmem:[%s1 + $0x7d0] sm:$0xff]
    %v326 = vld [vmem:[%s1 + $0x7d8] sm:$0xff]
    %v327 = vld [vmem:[%s1 + $0x7e0] sm:$0xff]
    %v328 = vld [vmem:[%s1 + $0x7e8] sm:$0xff]
    %v329 = vld [vmem:[%s1 + $0x7f0] sm:$0xff]
    %v330 = vld [vmem:[%s1 + $0x7f8] sm:$0xff]
    %v331 = vld [vmem:[%s2] sm:$0xf]
    %v333 = vlaneseq
    %v334 = vshrl.u32 %v333, 7
    %v335 = vsub.s32 0, %v334
    %v336 = vrot.slane %v331, %v335
    %v337 = vlaneseq
    %v338 = vshrl.u32 %v337, 7
    %v339 = vsub.s32 1, %v338
    %v340 = vrot.slane %v331, %v339
    %v341 = vlaneseq
    %v342 = vshrl.u32 %v341, 7
    %v343 = vsub.s32 2, %v342
    %v344 = vrot.slane %v331, %v343
    %v345 = vlaneseq
    %v346 = vshrl.u32 %v345, 7
    %v347 = vsub.s32 3, %v346
    %v348 = vrot.slane %v331, %v347
    %v609 = vunpack.c.l.b16 %v75
    %v610 = vunpack.c.h.b16 %v75
    %v611 = vunpack.c.l.b16 %v76
    %v612 = vunpack.c.h.b16 %v76
    %v613 = vunpack.c.l.b16 %v77
    %v614 = vunpack.c.h.b16 %v77
    %v615 = vunpack.c.l.b16 %v78
    %v616 = vunpack.c.h.b16 %v78
    %v617 = vunpack.c.l.b16 %v79
    %v618 = vunpack.c.h.b16 %v79
    %v619 = vunpack.c.l.b16 %v80
    %v620 = vunpack.c.h.b16 %v80
    %v621 = vunpack.c.l.b16 %v81
    %v622 = vunpack.c.h.b16 %v81
    %v623 = vunpack.c.l.b16 %v82
    %v624 = vunpack.c.h.b16 %v82
    %v625 = vunpack.c.l.b16 %v83
    %v626 = vunpack.c.h.b16 %v83
    %v627 = vunpack.c.l.b16 %v84
    %v628 = vunpack.c.h.b16 %v84
    %v629 = vunpack.c.l.b16 %v85
    %v630 = vunpack.c.h.b16 %v85
    %v631 = vunpack.c.l.b16 %v86
    %v632 = vunpack.c.h.b16 %v86
    %v633 = vunpack.c.l.b16 %v87
    %v634 = vunpack.c.h.b16 %v87
    %v635 = vunpack.c.l.b16 %v88
    %v636 = vunpack.c.h.b16 %v88
    %v637 = vunpack.c.l.b16 %v89
    %v638 = vunpack.c.h.b16 %v89
    %v639 = vunpack.c.l.b16 %v90
    %v640 = vunpack.c.h.b16 %v90
    %v641 = vunpack.c.l.b16 %v91
    %v642 = vunpack.c.h.b16 %v91
    %v643 = vunpack.c.l.b16 %v92
    %v644 = vunpack.c.h.b16 %v92
    %v645 = vunpack.c.l.b16 %v93
    %v646 = vunpack.c.h.b16 %v93
    %v647 = vunpack.c.l.b16 %v94
    %v648 = vunpack.c.h.b16 %v94
    %v649 = vunpack.c.l.b16 %v95
    %v650 = vunpack.c.h.b16 %v95
    %v651 = vunpack.c.l.b16 %v96
    %v652 = vunpack.c.h.b16 %v96
    %v653 = vunpack.c.l.b16 %v97
    %v654 = vunpack.c.h.b16 %v97
    %v655 = vunpack.c.l.b16 %v98
    %v656 = vunpack.c.h.b16 %v98
    %v657 = vunpack.c.l.b16 %v99
    %v658 = vunpack.c.h.b16 %v99
    %v659 = vunpack.c.l.b16 %v100
    %v660 = vunpack.c.h.b16 %v100
    %v661 = vunpack.c.l.b16 %v101
    %v662 = vunpack.c.h.b16 %v101
    %v663 = vunpack.c.l.b16 %v102
    %v664 = vunpack.c.h.b16 %v102
    %v665 = vunpack.c.l.b16 %v103
    %v666 = vunpack.c.h.b16 %v103
    %v667 = vunpack.c.l.b16 %v104
    %v668 = vunpack.c.h.b16 %v104
    %v669 = vunpack.c.l.b16 %v105
    %v670 = vunpack.c.h.b16 %v105
    %v671 = vunpack.c.l.b16 %v106
    %v672 = vunpack.c.h.b16 %v106
    %v673 = vunpack.c.l.b16 %v107
    %v674 = vunpack.c.h.b16 %v107
    %v675 = vunpack.c.l.b16 %v108
    %v676 = vunpack.c.h.b16 %v108
    %v677 = vunpack.c.l.b16 %v109
    %v678 = vunpack.c.h.b16 %v109
    %v679 = vunpack.c.l.b16 %v110
    %v680 = vunpack.c.h.b16 %v110
    %v681 = vunpack.c.l.b16 %v111
    %v682 = vunpack.c.h.b16 %v111
    %v683 = vunpack.c.l.b16 %v112
    %v684 = vunpack.c.h.b16 %v112
    %v685 = vunpack.c.l.b16 %v113
    %v686 = vunpack.c.h.b16 %v113
    %v687 = vunpack.c.l.b16 %v114
    %v688 = vunpack.c.h.b16 %v114
    %v689 = vunpack.c.l.b16 %v115
    %v690 = vunpack.c.h.b16 %v115
    %v691 = vunpack.c.l.b16 %v116
    %v692 = vunpack.c.h.b16 %v116
    %v693 = vunpack.c.l.b16 %v117
    %v694 = vunpack.c.h.b16 %v117
    %v695 = vunpack.c.l.b16 %v118
    %v696 = vunpack.c.h.b16 %v118
    %v697 = vunpack.c.l.b16 %v119
    %v698 = vunpack.c.h.b16 %v119
    %v699 = vunpack.c.l.b16 %v120
    %v700 = vunpack.c.h.b16 %v120
    %v701 = vunpack.c.l.b16 %v121
    %v702 = vunpack.c.h.b16 %v121
    %v703 = vunpack.c.l.b16 %v122
    %v704 = vunpack.c.h.b16 %v122
    %v705 = vunpack.c.l.b16 %v123
    %v706 = vunpack.c.h.b16 %v123
    %v707 = vunpack.c.l.b16 %v124
    %v708 = vunpack.c.h.b16 %v124
    %v709 = vunpack.c.l.b16 %v125
    %v710 = vunpack.c.h.b16 %v125
    %v711 = vunpack.c.l.b16 %v126
    %v712 = vunpack.c.h.b16 %v126
    %v713 = vunpack.c.l.b16 %v127
    %v714 = vunpack.c.h.b16 %v127
    %v715 = vunpack.c.l.b16 %v128
    %v716 = vunpack.c.h.b16 %v128
    %v717 = vunpack.c.l.b16 %v129
    %v718 = vunpack.c.h.b16 %v129
    %v719 = vunpack.c.l.b16 %v130
    %v720 = vunpack.c.h.b16 %v130
    %v721 = vunpack.c.l.b16 %v131
    %v722 = vunpack.c.h.b16 %v131
    %v723 = vunpack.c.l.b16 %v132
    %v724 = vunpack.c.h.b16 %v132
    %v725 = vunpack.c.l.b16 %v133
    %v726 = vunpack.c.h.b16 %v133
    %v727 = vunpack.c.l.b16 %v134
    %v728 = vunpack.c.h.b16 %v134
    %v729 = vunpack.c.l.b16 %v135
    %v730 = vunpack.c.h.b16 %v135
    %v731 = vunpack.c.l.b16 %v136
    %v732 = vunpack.c.h.b16 %v136
    %v733 = vunpack.c.l.b16 %v137
    %v734 = vunpack.c.h.b16 %v137
    %v735 = vunpack.c.l.b16 %v138
    %v736 = vunpack.c.h.b16 %v138
    %v737 = vunpack.c.l.b16 %v139
    %v738 = vunpack.c.h.b16 %v139
    %v739 = vunpack.c.l.b16 %v140
    %v740 = vunpack.c.h.b16 %v140
    %v741 = vunpack.c.l.b16 %v141
    %v742 = vunpack.c.h.b16 %v141
    %v743 = vunpack.c.l.b16 %v142
    %v744 = vunpack.c.h.b16 %v142
    %v745 = vunpack.c.l.b16 %v143
    %v746 = vunpack.c.h.b16 %v143
    %v747 = vunpack.c.l.b16 %v144
    %v748 = vunpack.c.h.b16 %v144
    %v749 = vunpack.c.l.b16 %v145
    %v750 = vunpack.c.h.b16 %v145
    %v751 = vunpack.c.l.b16 %v146
    %v752 = vunpack.c.h.b16 %v146
    %v753 = vunpack.c.l.b16 %v147
    %v754 = vunpack.c.h.b16 %v147
    %v755 = vunpack.c.l.b16 %v148
    %v756 = vunpack.c.h.b16 %v148
    %v757 = vunpack.c.l.b16 %v149
    %v758 = vunpack.c.h.b16 %v149
    %v759 = vunpack.c.l.b16 %v150
    %v760 = vunpack.c.h.b16 %v150
    %v761 = vunpack.c.l.b16 %v151
    %v762 = vunpack.c.h.b16 %v151
    %v763 = vunpack.c.l.b16 %v152
    %v764 = vunpack.c.h.b16 %v152
    %v765 = vunpack.c.l.b16 %v153
    %v766 = vunpack.c.h.b16 %v153
    %v767 = vunpack.c.l.b16 %v154
    %v768 = vunpack.c.h.b16 %v154
    %v769 = vunpack.c.l.b16 %v155
    %v770 = vunpack.c.h.b16 %v155
    %v771 = vunpack.c.l.b16 %v156
    %v772 = vunpack.c.h.b16 %v156
    %v773 = vunpack.c.l.b16 %v157
    %v774 = vunpack.c.h.b16 %v157
    %v775 = vunpack.c.l.b16 %v158
    %v776 = vunpack.c.h.b16 %v158
    %v777 = vunpack.c.l.b16 %v159
    %v778 = vunpack.c.h.b16 %v159
    %v779 = vunpack.c.l.b16 %v160
    %v780 = vunpack.c.h.b16 %v160
    %v781 = vunpack.c.l.b16 %v161
    %v782 = vunpack.c.h.b16 %v161
    %v783 = vunpack.c.l.b16 %v162
    %v784 = vunpack.c.h.b16 %v162
    %v785 = vunpack.c.l.b16 %v163
    %v786 = vunpack.c.h.b16 %v163
    %v787 = vunpack.c.l.b16 %v164
    %v788 = vunpack.c.h.b16 %v164
    %v789 = vunpack.c.l.b16 %v165
    %v790 = vunpack.c.h.b16 %v165
    %v791 = vunpack.c.l.b16 %v166
    %v792 = vunpack.c.h.b16 %v166
    %v793 = vunpack.c.l.b16 %v167
    %v794 = vunpack.c.h.b16 %v167
    %v795 = vunpack.c.l.b16 %v168
    %v796 = vunpack.c.h.b16 %v168
    %v797 = vunpack.c.l.b16 %v169
    %v798 = vunpack.c.h.b16 %v169
    %v799 = vunpack.c.l.b16 %v170
    %v800 = vunpack.c.h.b16 %v170
    %v801 = vunpack.c.l.b16 %v171
    %v802 = vunpack.c.h.b16 %v171
    %v803 = vunpack.c.l.b16 %v172
    %v804 = vunpack.c.h.b16 %v172
    %v805 = vunpack.c.l.b16 %v173
    %v806 = vunpack.c.h.b16 %v173
    %v807 = vunpack.c.l.b16 %v174
    %v808 = vunpack.c.h.b16 %v174
    %v809 = vunpack.c.l.b16 %v175
    %v810 = vunpack.c.h.b16 %v175
    %v811 = vunpack.c.l.b16 %v176
    %v812 = vunpack.c.h.b16 %v176
    %v813 = vunpack.c.l.b16 %v177
    %v814 = vunpack.c.h.b16 %v177
    %v815 = vunpack.c.l.b16 %v178
    %v816 = vunpack.c.h.b16 %v178
    %v817 = vunpack.c.l.b16 %v179
    %v818 = vunpack.c.h.b16 %v179
    %v819 = vunpack.c.l.b16 %v180
    %v820 = vunpack.c.h.b16 %v180
    %v821 = vunpack.c.l.b16 %v181
    %v822 = vunpack.c.h.b16 %v181
    %v823 = vunpack.c.l.b16 %v182
    %v824 = vunpack.c.h.b16 %v182
    %v825 = vunpack.c.l.b16 %v183
    %v826 = vunpack.c.h.b16 %v183
    %v827 = vunpack.c.l.b16 %v184
    %v828 = vunpack.c.h.b16 %v184
    %v829 = vunpack.c.l.b16 %v185
    %v830 = vunpack.c.h.b16 %v185
    %v831 = vunpack.c.l.b16 %v186
    %v832 = vunpack.c.h.b16 %v186
    %v833 = vunpack.c.l.b16 %v187
    %v834 = vunpack.c.h.b16 %v187
    %v835 = vunpack.c.l.b16 %v188
    %v836 = vunpack.c.h.b16 %v188
    %v837 = vunpack.c.l.b16 %v189
    %v838 = vunpack.c.h.b16 %v189
    %v839 = vunpack.c.l.b16 %v190
    %v840 = vunpack.c.h.b16 %v190
    %v841 = vunpack.c.l.b16 %v191
    %v842 = vunpack.c.h.b16 %v191
    %v843 = vunpack.c.l.b16 %v192
    %v844 = vunpack.c.h.b16 %v192
    %v845 = vunpack.c.l.b16 %v193
    %v846 = vunpack.c.h.b16 %v193
    %v847 = vunpack.c.l.b16 %v194
    %v848 = vunpack.c.h.b16 %v194
    %v849 = vunpack.c.l.b16 %v195
    %v850 = vunpack.c.h.b16 %v195
    %v851 = vunpack.c.l.b16 %v196
    %v852 = vunpack.c.h.b16 %v196
    %v853 = vunpack.c.l.b16 %v197
    %v854 = vunpack.c.h.b16 %v197
    %v855 = vunpack.c.l.b16 %v198
    %v856 = vunpack.c.h.b16 %v198
    %v857 = vunpack.c.l.b16 %v199
    %v858 = vunpack.c.h.b16 %v199
    %v859 = vunpack.c.l.b16 %v200
    %v860 = vunpack.c.h.b16 %v200
    %v861 = vunpack.c.l.b16 %v201
    %v862 = vunpack.c.h.b16 %v201
    %v863 = vunpack.c.l.b16 %v202
    %v864 = vunpack.c.h.b16 %v202
    %v865 = vunpack.c.l.b16 %v203
    %v866 = vunpack.c.h.b16 %v203
    %v867 = vunpack.c.l.b16 %v204
    %v868 = vunpack.c.h.b16 %v204
    %v869 = vunpack.c.l.b16 %v205
    %v870 = vunpack.c.h.b16 %v205
    %v871 = vunpack.c.l.b16 %v206
    %v872 = vunpack.c.h.b16 %v206
    %v873 = vunpack.c.l.b16 %v207
    %v874 = vunpack.c.h.b16 %v207
    %v875 = vunpack.c.l.b16 %v208
    %v876 = vunpack.c.h.b16 %v208
    %v877 = vunpack.c.l.b16 %v209
    %v878 = vunpack.c.h.b16 %v209
    %v879 = vunpack.c.l.b16 %v210
    %v880 = vunpack.c.h.b16 %v210
    %v881 = vunpack.c.l.b16 %v211
    %v882 = vunpack.c.h.b16 %v211
    %v883 = vunpack.c.l.b16 %v212
    %v884 = vunpack.c.h.b16 %v212
    %v885 = vunpack.c.l.b16 %v213
    %v886 = vunpack.c.h.b16 %v213
    %v887 = vunpack.c.l.b16 %v214
    %v888 = vunpack.c.h.b16 %v214
    %v889 = vunpack.c.l.b16 %v215
    %v890 = vunpack.c.h.b16 %v215
    %v891 = vunpack.c.l.b16 %v216
    %v892 = vunpack.c.h.b16 %v216
    %v893 = vunpack.c.l.b16 %v217
    %v894 = vunpack.c.h.b16 %v217
    %v895 = vunpack.c.l.b16 %v218
    %v896 = vunpack.c.h.b16 %v218
    %v897 = vunpack.c.l.b16 %v219
    %v898 = vunpack.c.h.b16 %v219
    %v899 = vunpack.c.l.b16 %v220
    %v900 = vunpack.c.h.b16 %v220
    %v901 = vunpack.c.l.b16 %v221
    %v902 = vunpack.c.h.b16 %v221
    %v903 = vunpack.c.l.b16 %v222
    %v904 = vunpack.c.h.b16 %v222
    %v905 = vunpack.c.l.b16 %v223
    %v906 = vunpack.c.h.b16 %v223
    %v907 = vunpack.c.l.b16 %v224
    %v908 = vunpack.c.h.b16 %v224
    %v909 = vunpack.c.l.b16 %v225
    %v910 = vunpack.c.h.b16 %v225
    %v911 = vunpack.c.l.b16 %v226
    %v912 = vunpack.c.h.b16 %v226
    %v913 = vunpack.c.l.b16 %v227
    %v914 = vunpack.c.h.b16 %v227
    %v915 = vunpack.c.l.b16 %v228
    %v916 = vunpack.c.h.b16 %v228
    %v917 = vunpack.c.l.b16 %v229
    %v918 = vunpack.c.h.b16 %v229
    %v919 = vunpack.c.l.b16 %v230
    %v920 = vunpack.c.h.b16 %v230
    %v921 = vunpack.c.l.b16 %v231
    %v922 = vunpack.c.h.b16 %v231
    %v923 = vunpack.c.l.b16 %v232
    %v924 = vunpack.c.h.b16 %v232
    %v925 = vunpack.c.l.b16 %v233
    %v926 = vunpack.c.h.b16 %v233
    %v927 = vunpack.c.l.b16 %v234
    %v928 = vunpack.c.h.b16 %v234
    %v929 = vunpack.c.l.b16 %v235
    %v930 = vunpack.c.h.b16 %v235
    %v931 = vunpack.c.l.b16 %v236
    %v932 = vunpack.c.h.b16 %v236
    %v933 = vunpack.c.l.b16 %v237
    %v934 = vunpack.c.h.b16 %v237
    %v935 = vunpack.c.l.b16 %v238
    %v936 = vunpack.c.h.b16 %v238
    %v937 = vunpack.c.l.b16 %v239
    %v938 = vunpack.c.h.b16 %v239
    %v939 = vunpack.c.l.b16 %v240
    %v940 = vunpack.c.h.b16 %v240
    %v941 = vunpack.c.l.b16 %v241
    %v942 = vunpack.c.h.b16 %v241
    %v943 = vunpack.c.l.b16 %v242
    %v944 = vunpack.c.h.b16 %v242
    %v945 = vunpack.c.l.b16 %v243
    %v946 = vunpack.c.h.b16 %v243
    %v947 = vunpack.c.l.b16 %v244
    %v948 = vunpack.c.h.b16 %v244
    %v949 = vunpack.c.l.b16 %v245
    %v950 = vunpack.c.h.b16 %v245
    %v951 = vunpack.c.l.b16 %v246
    %v952 = vunpack.c.h.b16 %v246
    %v953 = vunpack.c.l.b16 %v247
    %v954 = vunpack.c.h.b16 %v247
    %v955 = vunpack.c.l.b16 %v248
    %v956 = vunpack.c.h.b16 %v248
    %v957 = vunpack.c.l.b16 %v249
    %v958 = vunpack.c.h.b16 %v249
    %v959 = vunpack.c.l.b16 %v250
    %v960 = vunpack.c.h.b16 %v250
    %v961 = vunpack.c.l.b16 %v251
    %v962 = vunpack.c.h.b16 %v251
    %v963 = vunpack.c.l.b16 %v252
    %v964 = vunpack.c.h.b16 %v252
    %v965 = vunpack.c.l.b16 %v253
    %v966 = vunpack.c.h.b16 %v253
    %v967 = vunpack.c.l.b16 %v254
    %v968 = vunpack.c.h.b16 %v254
    %v969 = vunpack.c.l.b16 %v255
    %v970 = vunpack.c.h.b16 %v255
    %v971 = vunpack.c.l.b16 %v256
    %v972 = vunpack.c.h.b16 %v256
    %v973 = vunpack.c.l.b16 %v257
    %v974 = vunpack.c.h.b16 %v257
    %v975 = vunpack.c.l.b16 %v258
    %v976 = vunpack.c.h.b16 %v258
    %v977 = vunpack.c.l.b16 %v259
    %v978 = vunpack.c.h.b16 %v259
    %v979 = vunpack.c.l.b16 %v260
    %v980 = vunpack.c.h.b16 %v260
    %v981 = vunpack.c.l.b16 %v261
    %v982 = vunpack.c.h.b16 %v261
    %v983 = vunpack.c.l.b16 %v262
    %v984 = vunpack.c.h.b16 %v262
    %v985 = vunpack.c.l.b16 %v263
    %v986 = vunpack.c.h.b16 %v263
    %v987 = vunpack.c.l.b16 %v264
    %v988 = vunpack.c.h.b16 %v264
    %v989 = vunpack.c.l.b16 %v265
    %v990 = vunpack.c.h.b16 %v265
    %v991 = vunpack.c.l.b16 %v266
    %v992 = vunpack.c.h.b16 %v266
    %v993 = vunpack.c.l.b16 %v267
    %v994 = vunpack.c.h.b16 %v267
    %v995 = vunpack.c.l.b16 %v268
    %v996 = vunpack.c.h.b16 %v268
    %v997 = vunpack.c.l.b16 %v269
    %v998 = vunpack.c.h.b16 %v269
    %v999 = vunpack.c.l.b16 %v270
    %v1000 = vunpack.c.h.b16 %v270
    %v1001 = vunpack.c.l.b16 %v271
    %v1002 = vunpack.c.h.b16 %v271
    %v1003 = vunpack.c.l.b16 %v272
    %v1004 = vunpack.c.h.b16 %v272
    %v1005 = vunpack.c.l.b16 %v273
    %v1006 = vunpack.c.h.b16 %v273
    %v1007 = vunpack.c.l.b16 %v274
    %v1008 = vunpack.c.h.b16 %v274
    %v1009 = vunpack.c.l.b16 %v275
    %v1010 = vunpack.c.h.b16 %v275
    %v1011 = vunpack.c.l.b16 %v276
    %v1012 = vunpack.c.h.b16 %v276
    %v1013 = vunpack.c.l.b16 %v277
    %v1014 = vunpack.c.h.b16 %v277
    %v1015 = vunpack.c.l.b16 %v278
    %v1016 = vunpack.c.h.b16 %v278
    %v1017 = vunpack.c.l.b16 %v279
    %v1018 = vunpack.c.h.b16 %v279
    %v1019 = vunpack.c.l.b16 %v280
    %v1020 = vunpack.c.h.b16 %v280
    %v1021 = vunpack.c.l.b16 %v281
    %v1022 = vunpack.c.h.b16 %v281
    %v1023 = vunpack.c.l.b16 %v282
    %v1024 = vunpack.c.h.b16 %v282
    %v1025 = vunpack.c.l.b16 %v283
    %v1026 = vunpack.c.h.b16 %v283
    %v1027 = vunpack.c.l.b16 %v284
    %v1028 = vunpack.c.h.b16 %v284
    %v1029 = vunpack.c.l.b16 %v285
    %v1030 = vunpack.c.h.b16 %v285
    %v1031 = vunpack.c.l.b16 %v286
    %v1032 = vunpack.c.h.b16 %v286
    %v1033 = vunpack.c.l.b16 %v287
    %v1034 = vunpack.c.h.b16 %v287
    %v1035 = vunpack.c.l.b16 %v288
    %v1036 = vunpack.c.h.b16 %v288
    %v1037 = vunpack.c.l.b16 %v289
    %v1038 = vunpack.c.h.b16 %v289
    %v1039 = vunpack.c.l.b16 %v290
    %v1040 = vunpack.c.h.b16 %v290
    %v1041 = vunpack.c.l.b16 %v291
    %v1042 = vunpack.c.h.b16 %v291
    %v1043 = vunpack.c.l.b16 %v292
    %v1044 = vunpack.c.h.b16 %v292
    %v1045 = vunpack.c.l.b16 %v293
    %v1046 = vunpack.c.h.b16 %v293
    %v1047 = vunpack.c.l.b16 %v294
    %v1048 = vunpack.c.h.b16 %v294
    %v1049 = vunpack.c.l.b16 %v295
    %v1050 = vunpack.c.h.b16 %v295
    %v1051 = vunpack.c.l.b16 %v296
    %v1052 = vunpack.c.h.b16 %v296
    %v1053 = vunpack.c.l.b16 %v297
    %v1054 = vunpack.c.h.b16 %v297
    %v1055 = vunpack.c.l.b16 %v298
    %v1056 = vunpack.c.h.b16 %v298
    %v1057 = vunpack.c.l.b16 %v299
    %v1058 = vunpack.c.h.b16 %v299
    %v1059 = vunpack.c.l.b16 %v300
    %v1060 = vunpack.c.h.b16 %v300
    %v1061 = vunpack.c.l.b16 %v301
    %v1062 = vunpack.c.h.b16 %v301
    %v1063 = vunpack.c.l.b16 %v302
    %v1064 = vunpack.c.h.b16 %v302
    %v1065 = vunpack.c.l.b16 %v303
    %v1066 = vunpack.c.h.b16 %v303
    %v1067 = vunpack.c.l.b16 %v304
    %v1068 = vunpack.c.h.b16 %v304
    %v1069 = vunpack.c.l.b16 %v305
    %v1070 = vunpack.c.h.b16 %v305
    %v1071 = vunpack.c.l.b16 %v306
    %v1072 = vunpack.c.h.b16 %v306
    %v1073 = vunpack.c.l.b16 %v307
    %v1074 = vunpack.c.h.b16 %v307
    %v1075 = vunpack.c.l.b16 %v308
    %v1076 = vunpack.c.h.b16 %v308
    %v1077 = vunpack.c.l.b16 %v309
    %v1078 = vunpack.c.h.b16 %v309
    %v1079 = vunpack.c.l.b16 %v310
    %v1080 = vunpack.c.h.b16 %v310
    %v1081 = vunpack.c.l.b16 %v311
    %v1082 = vunpack.c.h.b16 %v311
    %v1083 = vunpack.c.l.b16 %v312
    %v1084 = vunpack.c.h.b16 %v312
    %v1085 = vunpack.c.l.b16 %v313
    %v1086 = vunpack.c.h.b16 %v313
    %v1087 = vunpack.c.l.b16 %v314
    %v1088 = vunpack.c.h.b16 %v314
    %v1089 = vunpack.c.l.b16 %v315
    %v1090 = vunpack.c.h.b16 %v315
    %v1091 = vunpack.c.l.b16 %v316
    %v1092 = vunpack.c.h.b16 %v316
    %v1093 = vunpack.c.l.b16 %v317
    %v1094 = vunpack.c.h.b16 %v317
    %v1095 = vunpack.c.l.b16 %v318
    %v1096 = vunpack.c.h.b16 %v318
    %v1097 = vunpack.c.l.b16 %v319
    %v1098 = vunpack.c.h.b16 %v319
    %v1099 = vunpack.c.l.b16 %v320
    %v1100 = vunpack.c.h.b16 %v320
    %v1101 = vunpack.c.l.b16 %v321
    %v1102 = vunpack.c.h.b16 %v321
    %v1103 = vunpack.c.l.b16 %v322
    %v1104 = vunpack.c.h.b16 %v322
    %v1105 = vunpack.c.l.b16 %v323
    %v1106 = vunpack.c.h.b16 %v323
    %v1107 = vunpack.c.l.b16 %v324
    %v1108 = vunpack.c.h.b16 %v324
    %v1109 = vunpack.c.l.b16 %v325
    %v1110 = vunpack.c.h.b16 %v325
    %v1111 = vunpack.c.l.b16 %v326
    %v1112 = vunpack.c.h.b16 %v326
    %v1113 = vunpack.c.l.b16 %v327
    %v1114 = vunpack.c.h.b16 %v327
    %v1115 = vunpack.c.l.b16 %v328
    %v1116 = vunpack.c.h.b16 %v328
    %v1117 = vunpack.c.l.b16 %v329
    %v1118 = vunpack.c.h.b16 %v329
    %v1119 = vunpack.c.l.b16 %v330
    %v1120 = vunpack.c.h.b16 %v330
    %v1121 = vpack.c.b16 %v613, %v609
    %v1122 = vpack.c.b16 %v614, %v610
    %v1123 = vpack.c.b16 %v615, %v611
    %v1124 = vpack.c.b16 %v616, %v612
    %v1125 = vpack.c.b16 %v621, %v617
    %v1126 = vpack.c.b16 %v622, %v618
    %v1127 = vpack.c.b16 %v623, %v619
    %v1128 = vpack.c.b16 %v624, %v620
    %v1129 = vpack.c.b16 %v629, %v625
    %v1130 = vpack.c.b16 %v630, %v626
    %v1131 = vpack.c.b16 %v631, %v627
    %v1132 = vpack.c.b16 %v632, %v628
    %v1133 = vpack.c.b16 %v637, %v633
    %v1134 = vpack.c.b16 %v638, %v634
    %v1135 = vpack.c.b16 %v639, %v635
    %v1136 = vpack.c.b16 %v640, %v636
    %v1137 = vpack.c.b16 %v645, %v641
    %v1138 = vpack.c.b16 %v646, %v642
    %v1139 = vpack.c.b16 %v647, %v643
    %v1140 = vpack.c.b16 %v648, %v644
    %v1141 = vpack.c.b16 %v653, %v649
    %v1142 = vpack.c.b16 %v654, %v650
    %v1143 = vpack.c.b16 %v655, %v651
    %v1144 = vpack.c.b16 %v656, %v652
    %v1145 = vpack.c.b16 %v661, %v657
    %v1146 = vpack.c.b16 %v662, %v658
    %v1147 = vpack.c.b16 %v663, %v659
    %v1148 = vpack.c.b16 %v664, %v660
    %v1149 = vpack.c.b16 %v669, %v665
    %v1150 = vpack.c.b16 %v670, %v666
    %v1151 = vpack.c.b16 %v671, %v667
    %v1152 = vpack.c.b16 %v672, %v668
    %v1153 = vpack.c.b16 %v677, %v673
    %v1154 = vpack.c.b16 %v678, %v674
    %v1155 = vpack.c.b16 %v679, %v675
    %v1156 = vpack.c.b16 %v680, %v676
    %v1157 = vpack.c.b16 %v685, %v681
    %v1158 = vpack.c.b16 %v686, %v682
    %v1159 = vpack.c.b16 %v687, %v683
    %v1160 = vpack.c.b16 %v688, %v684
    %v1161 = vpack.c.b16 %v693, %v689
    %v1162 = vpack.c.b16 %v694, %v690
    %v1163 = vpack.c.b16 %v695, %v691
    %v1164 = vpack.c.b16 %v696, %v692
    %v1165 = vpack.c.b16 %v701, %v697
    %v1166 = vpack.c.b16 %v702, %v698
    %v1167 = vpack.c.b16 %v703, %v699
    %v1168 = vpack.c.b16 %v704, %v700
    %v1169 = vpack.c.b16 %v709, %v705
    %v1170 = vpack.c.b16 %v710, %v706
    %v1171 = vpack.c.b16 %v711, %v707
    %v1172 = vpack.c.b16 %v712, %v708
    %v1173 = vpack.c.b16 %v717, %v713
    %v1174 = vpack.c.b16 %v718, %v714
    %v1175 = vpack.c.b16 %v719, %v715
    %v1176 = vpack.c.b16 %v720, %v716
    %v1177 = vpack.c.b16 %v725, %v721
    %v1178 = vpack.c.b16 %v726, %v722
    %v1179 = vpack.c.b16 %v727, %v723
    %v1180 = vpack.c.b16 %v728, %v724
    %v1181 = vpack.c.b16 %v733, %v729
    %v1182 = vpack.c.b16 %v734, %v730
    %v1183 = vpack.c.b16 %v735, %v731
    %v1184 = vpack.c.b16 %v736, %v732
    %v1185 = vpack.c.b16 %v741, %v737
    %v1186 = vpack.c.b16 %v742, %v738
    %v1187 = vpack.c.b16 %v743, %v739
    %v1188 = vpack.c.b16 %v744, %v740
    %v1189 = vpack.c.b16 %v749, %v745
    %v1190 = vpack.c.b16 %v750, %v746
    %v1191 = vpack.c.b16 %v751, %v747
    %v1192 = vpack.c.b16 %v752, %v748
    %v1193 = vpack.c.b16 %v757, %v753
    %v1194 = vpack.c.b16 %v758, %v754
    %v1195 = vpack.c.b16 %v759, %v755
    %v1196 = vpack.c.b16 %v760, %v756
    %v1197 = vpack.c.b16 %v765, %v761
    %v1198 = vpack.c.b16 %v766, %v762
    %v1199 = vpack.c.b16 %v767, %v763
    %v1200 = vpack.c.b16 %v768, %v764
    %v1201 = vpack.c.b16 %v773, %v769
    %v1202 = vpack.c.b16 %v774, %v770
    %v1203 = vpack.c.b16 %v775, %v771
    %v1204 = vpack.c.b16 %v776, %v772
    %v1205 = vpack.c.b16 %v781, %v777
    %v1206 = vpack.c.b16 %v782, %v778
    %v1207 = vpack.c.b16 %v783, %v779
    %v1208 = vpack.c.b16 %v784, %v780
    %v1209 = vpack.c.b16 %v789, %v785
    %v1210 = vpack.c.b16 %v790, %v786
    %v1211 = vpack.c.b16 %v791, %v787
    %v1212 = vpack.c.b16 %v792, %v788
    %v1213 = vpack.c.b16 %v797, %v793
    %v1214 = vpack.c.b16 %v798, %v794
    %v1215 = vpack.c.b16 %v799, %v795
    %v1216 = vpack.c.b16 %v800, %v796
    %v1217 = vpack.c.b16 %v805, %v801
    %v1218 = vpack.c.b16 %v806, %v802
    %v1219 = vpack.c.b16 %v807, %v803
    %v1220 = vpack.c.b16 %v808, %v804
    %v1221 = vpack.c.b16 %v813, %v809
    %v1222 = vpack.c.b16 %v814, %v810
    %v1223 = vpack.c.b16 %v815, %v811
    %v1224 = vpack.c.b16 %v816, %v812
    %v1225 = vpack.c.b16 %v821, %v817
    %v1226 = vpack.c.b16 %v822, %v818
    %v1227 = vpack.c.b16 %v823, %v819
    %v1228 = vpack.c.b16 %v824, %v820
    %v1229 = vpack.c.b16 %v829, %v825
    %v1230 = vpack.c.b16 %v830, %v826
    %v1231 = vpack.c.b16 %v831, %v827
    %v1232 = vpack.c.b16 %v832, %v828
    %v1233 = vpack.c.b16 %v837, %v833
    %v1234 = vpack.c.b16 %v838, %v834
    %v1235 = vpack.c.b16 %v839, %v835
    %v1236 = vpack.c.b16 %v840, %v836
    %v1237 = vpack.c.b16 %v845, %v841
    %v1238 = vpack.c.b16 %v846, %v842
    %v1239 = vpack.c.b16 %v847, %v843
    %v1240 = vpack.c.b16 %v848, %v844
    %v1241 = vpack.c.b16 %v853, %v849
    %v1242 = vpack.c.b16 %v854, %v850
    %v1243 = vpack.c.b16 %v855, %v851
    %v1244 = vpack.c.b16 %v856, %v852
    %v1245 = vpack.c.b16 %v861, %v857
    %v1246 = vpack.c.b16 %v862, %v858
    %v1247 = vpack.c.b16 %v863, %v859
    %v1248 = vpack.c.b16 %v864, %v860
    %v1249 = vpack.c.b16 %v869, %v865
    %v1250 = vpack.c.b16 %v870, %v866
    %v1251 = vpack.c.b16 %v871, %v867
    %v1252 = vpack.c.b16 %v872, %v868
    %v1253 = vpack.c.b16 %v877, %v873
    %v1254 = vpack.c.b16 %v878, %v874
    %v1255 = vpack.c.b16 %v879, %v875
    %v1256 = vpack.c.b16 %v880, %v876
    %v1257 = vpack.c.b16 %v885, %v881
    %v1258 = vpack.c.b16 %v886, %v882
    %v1259 = vpack.c.b16 %v887, %v883
    %v1260 = vpack.c.b16 %v888, %v884
    %v1261 = vpack.c.b16 %v893, %v889
    %v1262 = vpack.c.b16 %v894, %v890
    %v1263 = vpack.c.b16 %v895, %v891
    %v1264 = vpack.c.b16 %v896, %v892
    %v1265 = vpack.c.b16 %v901, %v897
    %v1266 = vpack.c.b16 %v902, %v898
    %v1267 = vpack.c.b16 %v903, %v899
    %v1268 = vpack.c.b16 %v904, %v900
    %v1269 = vpack.c.b16 %v909, %v905
    %v1270 = vpack.c.b16 %v910, %v906
    %v1271 = vpack.c.b16 %v911, %v907
    %v1272 = vpack.c.b16 %v912, %v908
    %v1273 = vpack.c.b16 %v917, %v913
    %v1274 = vpack.c.b16 %v918, %v914
    %v1275 = vpack.c.b16 %v919, %v915
    %v1276 = vpack.c.b16 %v920, %v916
    %v1277 = vpack.c.b16 %v925, %v921
    %v1278 = vpack.c.b16 %v926, %v922
    %v1279 = vpack.c.b16 %v927, %v923
    %v1280 = vpack.c.b16 %v928, %v924
    %v1281 = vpack.c.b16 %v933, %v929
    %v1282 = vpack.c.b16 %v934, %v930
    %v1283 = vpack.c.b16 %v935, %v931
    %v1284 = vpack.c.b16 %v936, %v932
    %v1285 = vpack.c.b16 %v941, %v937
    %v1286 = vpack.c.b16 %v942, %v938
    %v1287 = vpack.c.b16 %v943, %v939
    %v1288 = vpack.c.b16 %v944, %v940
    %v1289 = vpack.c.b16 %v949, %v945
    %v1290 = vpack.c.b16 %v950, %v946
    %v1291 = vpack.c.b16 %v951, %v947
    %v1292 = vpack.c.b16 %v952, %v948
    %v1293 = vpack.c.b16 %v957, %v953
    %v1294 = vpack.c.b16 %v958, %v954
    %v1295 = vpack.c.b16 %v959, %v955
    %v1296 = vpack.c.b16 %v960, %v956
    %v1297 = vpack.c.b16 %v965, %v961
    %v1298 = vpack.c.b16 %v966, %v962
    %v1299 = vpack.c.b16 %v967, %v963
    %v1300 = vpack.c.b16 %v968, %v964
    %v1301 = vpack.c.b16 %v973, %v969
    %v1302 = vpack.c.b16 %v974, %v970
    %v1303 = vpack.c.b16 %v975, %v971
    %v1304 = vpack.c.b16 %v976, %v972
    %v1305 = vpack.c.b16 %v981, %v977
    %v1306 = vpack.c.b16 %v982, %v978
    %v1307 = vpack.c.b16 %v983, %v979
    %v1308 = vpack.c.b16 %v984, %v980
    %v1309 = vpack.c.b16 %v989, %v985
    %v1310 = vpack.c.b16 %v990, %v986
    %v1311 = vpack.c.b16 %v991, %v987
    %v1312 = vpack.c.b16 %v992, %v988
    %v1313 = vpack.c.b16 %v997, %v993
    %v1314 = vpack.c.b16 %v998, %v994
    %v1315 = vpack.c.b16 %v999, %v995
    %v1316 = vpack.c.b16 %v1000, %v996
    %v1317 = vpack.c.b16 %v1005, %v1001
    %v1318 = vpack.c.b16 %v1006, %v1002
    %v1319 = vpack.c.b16 %v1007, %v1003
    %v1320 = vpack.c.b16 %v1008, %v1004
    %v1321 = vpack.c.b16 %v1013, %v1009
    %v1322 = vpack.c.b16 %v1014, %v1010
    %v1323 = vpack.c.b16 %v1015, %v1011
    %v1324 = vpack.c.b16 %v1016, %v1012
    %v1325 = vpack.c.b16 %v1021, %v1017
    %v1326 = vpack.c.b16 %v1022, %v1018
    %v1327 = vpack.c.b16 %v1023, %v1019
    %v1328 = vpack.c.b16 %v1024, %v1020
    %v1329 = vpack.c.b16 %v1029, %v1025
    %v1330 = vpack.c.b16 %v1030, %v1026
    %v1331 = vpack.c.b16 %v1031, %v1027
    %v1332 = vpack.c.b16 %v1032, %v1028
    %v1333 = vpack.c.b16 %v1037, %v1033
    %v1334 = vpack.c.b16 %v1038, %v1034
    %v1335 = vpack.c.b16 %v1039, %v1035
    %v1336 = vpack.c.b16 %v1040, %v1036
    %v1337 = vpack.c.b16 %v1045, %v1041
    %v1338 = vpack.c.b16 %v1046, %v1042
    %v1339 = vpack.c.b16 %v1047, %v1043
    %v1340 = vpack.c.b16 %v1048, %v1044
    %v1341 = vpack.c.b16 %v1053, %v1049
    %v1342 = vpack.c.b16 %v1054, %v1050
    %v1343 = vpack.c.b16 %v1055, %v1051
    %v1344 = vpack.c.b16 %v1056, %v1052
    %v1345 = vpack.c.b16 %v1061, %v1057
    %v1346 = vpack.c.b16 %v1062, %v1058
    %v1347 = vpack.c.b16 %v1063, %v1059
    %v1348 = vpack.c.b16 %v1064, %v1060
    %v1349 = vpack.c.b16 %v1069, %v1065
    %v1350 = vpack.c.b16 %v1070, %v1066
    %v1351 = vpack.c.b16 %v1071, %v1067
    %v1352 = vpack.c.b16 %v1072, %v1068
    %v1353 = vpack.c.b16 %v1077, %v1073
    %v1354 = vpack.c.b16 %v1078, %v1074
    %v1355 = vpack.c.b16 %v1079, %v1075
    %v1356 = vpack.c.b16 %v1080, %v1076
    %v1357 = vpack.c.b16 %v1085, %v1081
    %v1358 = vpack.c.b16 %v1086, %v1082
    %v1359 = vpack.c.b16 %v1087, %v1083
    %v1360 = vpack.c.b16 %v1088, %v1084
    %v1361 = vpack.c.b16 %v1093, %v1089
    %v1362 = vpack.c.b16 %v1094, %v1090
    %v1363 = vpack.c.b16 %v1095, %v1091
    %v1364 = vpack.c.b16 %v1096, %v1092
    %v1365 = vpack.c.b16 %v1101, %v1097
    %v1366 = vpack.c.b16 %v1102, %v1098
    %v1367 = vpack.c.b16 %v1103, %v1099
    %v1368 = vpack.c.b16 %v1104, %v1100
    %v1369 = vpack.c.b16 %v1109, %v1105
    %v1370 = vpack.c.b16 %v1110, %v1106
    %v1371 = vpack.c.b16 %v1111, %v1107
    %v1372 = vpack.c.b16 %v1112, %v1108
    %v1373 = vpack.c.b16 %v1117, %v1113
    %v1374 = vpack.c.b16 %v1118, %v1114
    %v1375 = vpack.c.b16 %v1119, %v1115
    %v1376 = vpack.c.b16 %v1120, %v1116
    %1633 = vmatprep.subr.bf16.mxu0 %v1122
    %1634 = vmatpush1.bf16.msra.mxu0 %v1121
    %1635 = vmatprep.subr.bf16.mxu0 %v1126
    %1636 = vmatpush1.bf16.msra.mxu0 %v1125
    %1637 = vmatprep.subr.bf16.mxu0 %v1130
    %1638 = vmatpush1.bf16.msra.mxu0 %v1129
    %1639 = vmatprep.subr.bf16.mxu0 %v1134
    %1640 = vmatpush1.bf16.msra.mxu0 %v1133
    %1641 = vmatprep.subr.bf16.mxu0 %v1138
    %1642 = vmatpush1.bf16.msra.mxu0 %v1137
    %1643 = vmatprep.subr.bf16.mxu0 %v1142
    %1644 = vmatpush1.bf16.msra.mxu0 %v1141
    %1645 = vmatprep.subr.bf16.mxu0 %v1146
    %1646 = vmatpush1.bf16.msra.mxu0 %v1145
    %1647 = vmatprep.subr.bf16.mxu0 %v1150
    %1648 = vmatpush1.bf16.msra.mxu0 %v1149
    %1649 = vmatprep.subr.bf16.mxu0 %v1154
    %1650 = vmatpush1.bf16.msra.mxu0 %v1153
    %1651 = vmatprep.subr.bf16.mxu0 %v1158
    %1652 = vmatpush1.bf16.msra.mxu0 %v1157
    %1653 = vmatprep.subr.bf16.mxu0 %v1162
    %1654 = vmatpush1.bf16.msra.mxu0 %v1161
    %1655 = vmatprep.subr.bf16.mxu0 %v1166
    %1656 = vmatpush1.bf16.msra.mxu0 %v1165
    %1657 = vmatprep.subr.bf16.mxu0 %v1170
    %1658 = vmatpush1.bf16.msra.mxu0 %v1169
    %1659 = vmatprep.subr.bf16.mxu0 %v1174
    %1660 = vmatpush1.bf16.msra.mxu0 %v1173
    %1661 = vmatprep.subr.bf16.mxu0 %v1178
    %1662 = vmatpush1.bf16.msra.mxu0 %v1177
    %1663 = vmatprep.subr.bf16.mxu0 %v1182
    %1664 = vmatpush1.bf16.msra.mxu0 %v1181
    %1665 = vmatprep.mubr.bf16.mxu0 %v68
    %1666 = vmatmul.mubr.bf16.gmra.mrb[0].mxu0 %v67
    %v1667 = vpop.f32.mrb[0].mxu0
    %v1668 = vadd.f32 %v336, %v1667
    %v1669 = vpop.f32.mrb[0].mxu0
    %v1670 = vadd.f32 %v340, %v1669
    %v1671 = vpop.f32.mrb[0].mxu0
    %v1672 = vpop.f32.mrb[0].mxu0
    %1673 = vdwg.mxu0
    %1674 = vmatprep.subr.bf16.mxu0 %v1186
    %1675 = vmatpush1.bf16.msra.mxu0 %v1185
    %1676 = vmatprep.subr.bf16.mxu0 %v1190
    %1677 = vmatpush1.bf16.msra.mxu0 %v1189
    %1678 = vmatprep.subr.bf16.mxu0 %v1194
    %1679 = vmatpush1.bf16.msra.mxu0 %v1193
    %1680 = vmatprep.subr.bf16.mxu0 %v1198
    %1681 = vmatpush1.bf16.msra.mxu0 %v1197
    %1682 = vmatprep.subr.bf16.mxu0 %v1202
    %1683 = vmatpush1.bf16.msra.mxu0 %v1201
    %1684 = vmatprep.subr.bf16.mxu0 %v1206
    %1685 = vmatpush1.bf16.msra.mxu0 %v1205
    %1686 = vmatprep.subr.bf16.mxu0 %v1210
    %1687 = vmatpush1.bf16.msra.mxu0 %v1209
    %1688 = vmatprep.subr.bf16.mxu0 %v1214
    %1689 = vmatpush1.bf16.msra.mxu0 %v1213
    %1690 = vmatprep.subr.bf16.mxu0 %v1218
    %1691 = vmatpush1.bf16.msra.mxu0 %v1217
    %1692 = vmatprep.subr.bf16.mxu0 %v1222
    %1693 = vmatpush1.bf16.msra.mxu0 %v1221
    %1694 = vmatprep.subr.bf16.mxu0 %v1226
    %1695 = vmatpush1.bf16.msra.mxu0 %v1225
    %1696 = vmatprep.subr.bf16.mxu0 %v1230
    %1697 = vmatpush1.bf16.msra.mxu0 %v1229
    %1698 = vmatprep.subr.bf16.mxu0 %v1234
    %1699 = vmatpush1.bf16.msra.mxu0 %v1233
    %1700 = vmatprep.subr.bf16.mxu0 %v1238
    %1701 = vmatpush1.bf16.msra.mxu0 %v1237
    %1702 = vmatprep.subr.bf16.mxu0 %v1242
    %1703 = vmatpush1.bf16.msra.mxu0 %v1241
    %1704 = vmatprep.subr.bf16.mxu0 %v1246
    %1705 = vmatpush1.bf16.msra.mxu0 %v1245
    %1706 = vmatprep.mubr.bf16.mxu0 %v70
    %1707 = vmatmul.mubr.bf16.gmra.mrb[0].mxu0 %v69
    %v1708 = vpop.f32.mrb[0].mxu0
    %v1709 = vadd.f32 %v1668, %v1708
    %v1710 = vpop.f32.mrb[0].mxu0
    %v1711 = vadd.f32 %v1670, %v1710
    %v1712 = vpop.f32.mrb[0].mxu0
    %v1713 = vpop.f32.mrb[0].mxu0
    %1714 = vdwg.mxu0
    %1715 = vmatprep.subr.bf16.mxu0 %v1250
    %1716 = vmatpush1.bf16.msra.mxu0 %v1249
    %1717 = vmatprep.subr.bf16.mxu0 %v1254
    %1718 = vmatpush1.bf16.msra.mxu0 %v1253
    %1719 = vmatprep.subr.bf16.mxu0 %v1258
    %1720 = vmatpush1.bf16.msra.mxu0 %v1257
    %1721 = vmatprep.subr.bf16.mxu0 %v1262
    %1722 = vmatpush1.bf16.msra.mxu0 %v1261
    %1723 = vmatprep.subr.bf16.mxu0 %v1266
    %1724 = vmatpush1.bf16.msra.mxu0 %v1265
    %1725 = vmatprep.subr.bf16.mxu0 %v1270
    %1726 = vmatpush1.bf16.msra.mxu0 %v1269
    %1727 = vmatprep.subr.bf16.mxu0 %v1274
    %1728 = vmatpush1.bf16.msra.mxu0 %v1273
    %1729 = vmatprep.subr.bf16.mxu0 %v1278
    %1730 = vmatpush1.bf16.msra.mxu0 %v1277
    %1731 = vmatprep.subr.bf16.mxu0 %v1282
    %1732 = vmatpush1.bf16.msra.mxu0 %v1281
    %1733 = vmatprep.subr.bf16.mxu0 %v1286
    %1734 = vmatpush1.bf16.msra.mxu0 %v1285
    %1735 = vmatprep.subr.bf16.mxu0 %v1290
    %1736 = vmatpush1.bf16.msra.mxu0 %v1289
    %1737 = vmatprep.subr.bf16.mxu0 %v1294
    %1738 = vmatpush1.bf16.msra.mxu0 %v1293
    %1739 = vmatprep.subr.bf16.mxu0 %v1298
    %1740 = vmatpush1.bf16.msra.mxu0 %v1297
    %1741 = vmatprep.subr.bf16.mxu0 %v1302
    %1742 = vmatpush1.bf16.msra.mxu0 %v1301
    %1743 = vmatprep.subr.bf16.mxu0 %v1306
    %1744 = vmatpush1.bf16.msra.mxu0 %v1305
    %1745 = vmatprep.subr.bf16.mxu0 %v1310
    %1746 = vmatpush1.bf16.msra.mxu0 %v1309
    %1747 = vmatprep.mubr.bf16.mxu0 %v72
    %1748 = vmatmul.mubr.bf16.gmra.mrb[0].mxu0 %v71
    %v1749 = vpop.f32.mrb[0].mxu0
    %v1750 = vadd.f32 %v1709, %v1749
    %v1751 = vpop.f32.mrb[0].mxu0
    %v1752 = vadd.f32 %v1711, %v1751
    %v1753 = vpop.f32.mrb[0].mxu0
    %v1754 = vpop.f32.mrb[0].mxu0
    %1755 = vdwg.mxu0
    %1756 = vmatprep.subr.bf16.mxu0 %v1314
    %1757 = vmatpush1.bf16.msra.mxu0 %v1313
    %1758 = vmatprep.subr.bf16.mxu0 %v1318
    %1759 = vmatpush1.bf16.msra.mxu0 %v1317
    %1760 = vmatprep.subr.bf16.mxu0 %v1322
    %1761 = vmatpush1.bf16.msra.mxu0 %v1321
    %1762 = vmatprep.subr.bf16.mxu0 %v1326
    %1763 = vmatpush1.bf16.msra.mxu0 %v1325
    %1764 = vmatprep.subr.bf16.mxu0 %v1330
    %1765 = vmatpush1.bf16.msra.mxu0 %v1329
    %1766 = vmatprep.subr.bf16.mxu0 %v1334
    %1767 = vmatpush1.bf16.msra.mxu0 %v1333
    %1768 = vmatprep.subr.bf16.mxu0 %v1338
    %1769 = vmatpush1.bf16.msra.mxu0 %v1337
    %1770 = vmatprep.subr.bf16.mxu0 %v1342
    %1771 = vmatpush1.bf16.msra.mxu0 %v1341
    %1772 = vmatprep.subr.bf16.mxu0 %v1346
    %1773 = vmatpush1.bf16.msra.mxu0 %v1345
    %1774 = vmatprep.subr.bf16.mxu0 %v1350
    %1775 = vmatpush1.bf16.msra.mxu0 %v1349
    %1776 = vmatprep.subr.bf16.mxu0 %v1354
    %1777 = vmatpush1.bf16.msra.mxu0 %v1353
    %1778 = vmatprep.subr.bf16.mxu0 %v1358
    %1779 = vmatpush1.bf16.msra.mxu0 %v1357
    %1780 = vmatprep.subr.bf16.mxu0 %v1362
    %1781 = vmatpush1.bf16.msra.mxu0 %v1361
    %1782 = vmatprep.subr.bf16.mxu0 %v1366
    %1783 = vmatpush1.bf16.msra.mxu0 %v1365
    %1784 = vmatprep.subr.bf16.mxu0 %v1370
    %1785 = vmatpush1.bf16.msra.mxu0 %v1369
    %1786 = vmatprep.subr.bf16.mxu0 %v1374
    %1787 = vmatpush1.bf16.msra.mxu0 %v1373
    %1788 = vmatprep.mubr.bf16.mxu0 %v74
    %1789 = vmatmul.mubr.bf16.gmra.mrb[0].mxu0 %v73
    %v1790 = vpop.f32.mrb[0].mxu0
    %v1791 = vadd.f32 %v1750, %v1790
    %v1792 = vpop.f32.mrb[0].mxu0
    %v1793 = vadd.f32 %v1752, %v1792
    %v1794 = vpop.f32.mrb[0].mxu0
    %v1795 = vpop.f32.mrb[0].mxu0
    %1796 = vdwg.mxu0
    %1797 = vmatprep.subr.bf16.mxu0 %v1124
    %1798 = vmatpush1.bf16.msra.mxu0 %v1123
    %1799 = vmatprep.subr.bf16.mxu0 %v1128
    %1800 = vmatpush1.bf16.msra.mxu0 %v1127
    %1801 = vmatprep.subr.bf16.mxu0 %v1132
    %1802 = vmatpush1.bf16.msra.mxu0 %v1131
    %1803 = vmatprep.subr.bf16.mxu0 %v1136
    %1804 = vmatpush1.bf16.msra.mxu0 %v1135
    %1805 = vmatprep.subr.bf16.mxu0 %v1140
    %1806 = vmatpush1.bf16.msra.mxu0 %v1139
    %1807 = vmatprep.subr.bf16.mxu0 %v1144
    %1808 = vmatpush1.bf16.msra.mxu0 %v1143
    %1809 = vmatprep.subr.bf16.mxu0 %v1148
    %1810 = vmatpush1.bf16.msra.mxu0 %v1147
    %1811 = vmatprep.subr.bf16.mxu0 %v1152
    %1812 = vmatpush1.bf16.msra.mxu0 %v1151
    %1813 = vmatprep.subr.bf16.mxu0 %v1156
    %1814 = vmatpush1.bf16.msra.mxu0 %v1155
    %1815 = vmatprep.subr.bf16.mxu0 %v1160
    %1816 = vmatpush1.bf16.msra.mxu0 %v1159
    %1817 = vmatprep.subr.bf16.mxu0 %v1164
    %1818 = vmatpush1.bf16.msra.mxu0 %v1163
    %1819 = vmatprep.subr.bf16.mxu0 %v1168
    %1820 = vmatpush1.bf16.msra.mxu0 %v1167
    %1821 = vmatprep.subr.bf16.mxu0 %v1172
    %1822 = vmatpush1.bf16.msra.mxu0 %v1171
    %1823 = vmatprep.subr.bf16.mxu0 %v1176
    %1824 = vmatpush1.bf16.msra.mxu0 %v1175
    %1825 = vmatprep.subr.bf16.mxu0 %v1180
    %1826 = vmatpush1.bf16.msra.mxu0 %v1179
    %1827 = vmatprep.subr.bf16.mxu0 %v1184
    %1828 = vmatpush1.bf16.msra.mxu0 %v1183
    %1829 = vmatprep.mubr.bf16.mxu0 %v68
    %1830 = vmatmul.mubr.bf16.gmra.mrb[0].mxu0 %v67
    %v1831 = vpop.f32.mrb[0].mxu0
    %v1832 = vadd.f32 %v344, %v1831
    %v1833 = vpop.f32.mrb[0].mxu0
    %v1834 = vadd.f32 %v348, %v1833
    %v1835 = vpop.f32.mrb[0].mxu0
    %v1836 = vpop.f32.mrb[0].mxu0
    %1837 = vdwg.mxu0
    %1838 = vmatprep.subr.bf16.mxu0 %v1188
    %1839 = vmatpush1.bf16.msra.mxu0 %v1187
    %1840 = vmatprep.subr.bf16.mxu0 %v1192
    %1841 = vmatpush1.bf16.msra.mxu0 %v1191
    %1842 = vmatprep.subr.bf16.mxu0 %v1196
    %1843 = vmatpush1.bf16.msra.mxu0 %v1195
    %1844 = vmatprep.subr.bf16.mxu0 %v1200
    %1845 = vmatpush1.bf16.msra.mxu0 %v1199
    %1846 = vmatprep.subr.bf16.mxu0 %v1204
    %1847 = vmatpush1.bf16.msra.mxu0 %v1203
    %1848 = vmatprep.subr.bf16.mxu0 %v1208
    %1849 = vmatpush1.bf16.msra.mxu0 %v1207
    %1850 = vmatprep.subr.bf16.mxu0 %v1212
    %1851 = vmatpush1.bf16.msra.mxu0 %v1211
    %1852 = vmatprep.subr.bf16.mxu0 %v1216
    %1853 = vmatpush1.bf16.msra.mxu0 %v1215
    %1854 = vmatprep.subr.bf16.mxu0 %v1220
    %1855 = vmatpush1.bf16.msra.mxu0 %v1219
    %1856 = vmatprep.subr.bf16.mxu0 %v1224
    %1857 = vmatpush1.bf16.msra.mxu0 %v1223
    %1858 = vmatprep.subr.bf16.mxu0 %v1228
    %1859 = vmatpush1.bf16.msra.mxu0 %v1227
    %1860 = vmatprep.subr.bf16.mxu0 %v1232
    %1861 = vmatpush1.bf16.msra.mxu0 %v1231
    %1862 = vmatprep.subr.bf16.mxu0 %v1236
    %1863 = vmatpush1.bf16.msra.mxu0 %v1235
    %1864 = vmatprep.subr.bf16.mxu0 %v1240
    %1865 = vmatpush1.bf16.msra.mxu0 %v1239
    %1866 = vmatprep.subr.bf16.mxu0 %v1244
    %1867 = vmatpush1.bf16.msra.mxu0 %v1243
    %1868 = vmatprep.subr.bf16.mxu0 %v1248
    %1869 = vmatpush1.bf16.msra.mxu0 %v1247
    %1870 = vmatprep.mubr.bf16.mxu0 %v70
    %1871 = vmatmul.mubr.bf16.gmra.mrb[0].mxu0 %v69
    %v1872 = vpop.f32.mrb[0].mxu0
    %v1873 = vadd.f32 %v1832, %v1872
    %v1874 = vpop.f32.mrb[0].mxu0
    %v1875 = vadd.f32 %v1834, %v1874
    %v1876 = vpop.f32.mrb[0].mxu0
    %v1877 = vpop.f32.mrb[0].mxu0
    %1878 = vdwg.mxu0
    %1879 = vmatprep.subr.bf16.mxu0 %v1252
    %1880 = vmatpush1.bf16.msra.mxu0 %v1251
    %1881 = vmatprep.subr.bf16.mxu0 %v1256
    %1882 = vmatpush1.bf16.msra.mxu0 %v1255
    %1883 = vmatprep.subr.bf16.mxu0 %v1260
    %1884 = vmatpush1.bf16.msra.mxu0 %v1259
    %1885 = vmatprep.subr.bf16.mxu0 %v1264
    %1886 = vmatpush1.bf16.msra.mxu0 %v1263
    %1887 = vmatprep.subr.bf16.mxu0 %v1268
    %1888 = vmatpush1.bf16.msra.mxu0 %v1267
    %1889 = vmatprep.subr.bf16.mxu0 %v1272
    %1890 = vmatpush1.bf16.msra.mxu0 %v1271
    %1891 = vmatprep.subr.bf16.mxu0 %v1276
    %1892 = vmatpush1.bf16.msra.mxu0 %v1275
    %1893 = vmatprep.subr.bf16.mxu0 %v1280
    %1894 = vmatpush1.bf16.msra.mxu0 %v1279
    %1895 = vmatprep.subr.bf16.mxu0 %v1284
    %1896 = vmatpush1.bf16.msra.mxu0 %v1283
    %1897 = vmatprep.subr.bf16.mxu0 %v1288
    %1898 = vmatpush1.bf16.msra.mxu0 %v1287
    %1899 = vmatprep.subr.bf16.mxu0 %v1292
    %1900 = vmatpush1.bf16.msra.mxu0 %v1291
    %1901 = vmatprep.subr.bf16.mxu0 %v1296
    %1902 = vmatpush1.bf16.msra.mxu0 %v1295
    %1903 = vmatprep.subr.bf16.mxu0 %v1300
    %1904 = vmatpush1.bf16.msra.mxu0 %v1299
    %1905 = vmatprep.subr.bf16.mxu0 %v1304
    %1906 = vmatpush1.bf16.msra.mxu0 %v1303
    %1907 = vmatprep.subr.bf16.mxu0 %v1308
    %1908 = vmatpush1.bf16.msra.mxu0 %v1307
    %1909 = vmatprep.subr.bf16.mxu0 %v1312
    %1910 = vmatpush1.bf16.msra.mxu0 %v1311
    %1911 = vmatprep.mubr.bf16.mxu0 %v72
    %1912 = vmatmul.mubr.bf16.gmra.mrb[0].mxu0 %v71
    %v1913 = vpop.f32.mrb[0].mxu0
    %v1914 = vadd.f32 %v1873, %v1913
    %v1915 = vpop.f32.mrb[0].mxu0
    %v1916 = vadd.f32 %v1875, %v1915
    %v1917 = vpop.f32.mrb[0].mxu0
    %v1918 = vpop.f32.mrb[0].mxu0
    %1919 = vdwg.mxu0
    %1920 = vmatprep.subr.bf16.mxu0 %v1316
    %1921 = vmatpush1.bf16.msra.mxu0 %v1315
    %1922 = vmatprep.subr.bf16.mxu0 %v1320
    %1923 = vmatpush1.bf16.msra.mxu0 %v1319
    %1924 = vmatprep.subr.bf16.mxu0 %v1324
    %1925 = vmatpush1.bf16.msra.mxu0 %v1323
    %1926 = vmatprep.subr.bf16.mxu0 %v1328
    %1927 = vmatpush1.bf16.msra.mxu0 %v1327
    %1928 = vmatprep.subr.bf16.mxu0 %v1332
    %1929 = vmatpush1.bf16.msra.mxu0 %v1331
    %1930 = vmatprep.subr.bf16.mxu0 %v1336
    %1931 = vmatpush1.bf16.msra.mxu0 %v1335
    %1932 = vmatprep.subr.bf16.mxu0 %v1340
    %1933 = vmatpush1.bf16.msra.mxu0 %v1339
    %1934 = vmatprep.subr.bf16.mxu0 %v1344
    %1935 = vmatpush1.bf16.msra.mxu0 %v1343
    %1936 = vmatprep.subr.bf16.mxu0 %v1348
    %1937 = vmatpush1.bf16.msra.mxu0 %v1347
    %1938 = vmatprep.subr.bf16.mxu0 %v1352
    %1939 = vmatpush1.bf16.msra.mxu0 %v1351
    %1940 = vmatprep.subr.bf16.mxu0 %v1356
    %1941 = vmatpush1.bf16.msra.mxu0 %v1355
    %1942 = vmatprep.subr.bf16.mxu0 %v1360
    %1943 = vmatpush1.bf16.msra.mxu0 %v1359
    %1944 = vmatprep.subr.bf16.mxu0 %v1364
    %1945 = vmatpush1.bf16.msra.mxu0 %v1363
    %1946 = vmatprep.subr.bf16.mxu0 %v1368
    %1947 = vmatpush1.bf16.msra.mxu0 %v1367
    %1948 = vmatprep.subr.bf16.mxu0 %v1372
    %1949 = vmatpush1.bf16.msra.mxu0 %v1371
    %1950 = vmatprep.subr.bf16.mxu0 %v1376
    %1951 = vmatpush1.bf16.msra.mxu0 %v1375
    %1952 = vmatprep.mubr.bf16.mxu0 %v74
    %1953 = vmatmul.mubr.bf16.gmra.mrb[0].mxu0 %v73
    %v1954 = vpop.f32.mrb[0].mxu0
    %v1955 = vadd.f32 %v1914, %v1954
    %v1956 = vpop.f32.mrb[0].mxu0
    %v1957 = vadd.f32 %v1916, %v1956
    %v1958 = vpop.f32.mrb[0].mxu0
    %v1959 = vpop.f32.mrb[0].mxu0
    %1960 = vdwg.mxu0
    %v1961 = vmax.f32 %v1791, 0.0
    %v1962 = vmax.f32 %v1793, 0.0
    %v1963 = vmax.f32 %v1955, 0.0
    %v1964 = vmax.f32 %v1957, 0.0
    %v1965 = vld [vmem:[%s3] sm:$0xff]
    %v1966 = vld [vmem:[%s3 + $0x8] sm:$0xff]
    %v1967 = vld [vmem:[%s3 + $0x10] sm:$0xff]
    %v1968 = vld [vmem:[%s3 + $0x18] sm:$0xff]
    %v1969 = vld [vmem:[%s3 + $0x20] sm:$0xff]
    %v1970 = vld [vmem:[%s3 + $0x28] sm:$0xff]
    %v1971 = vld [vmem:[%s3 + $0x30] sm:$0xff]
    %v1972 = vld [vmem:[%s3 + $0x38] sm:$0xff]
    %v1973 = vld [vmem:[%s3 + $0x40] sm:$0xff]
    %v1974 = vld [vmem:[%s3 + $0x48] sm:$0xff]
    %v1975 = vld [vmem:[%s3 + $0x50] sm:$0xff]
    %v1976 = vld [vmem:[%s3 + $0x58] sm:$0xff]
    %v1977 = vld [vmem:[%s3 + $0x60] sm:$0xff]
    %v1978 = vld [vmem:[%s3 + $0x68] sm:$0xff]
    %v1979 = vld [vmem:[%s3 + $0x70] sm:$0xff]
    %v1980 = vld [vmem:[%s3 + $0x78] sm:$0xff]
    %v1981 = vld [vmem:[%s3 + $0x80] sm:$0xff]
    %v1982 = vld [vmem:[%s3 + $0x88] sm:$0xff]
    %v1983 = vld [vmem:[%s3 + $0x90] sm:$0xff]
    %v1984 = vld [vmem:[%s3 + $0x98] sm:$0xff]
    %v1985 = vld [vmem:[%s3 + $0xa0] sm:$0xff]
    %v1986 = vld [vmem:[%s3 + $0xa8] sm:$0xff]
    %v1987 = vld [vmem:[%s3 + $0xb0] sm:$0xff]
    %v1988 = vld [vmem:[%s3 + $0xb8] sm:$0xff]
    %v1989 = vld [vmem:[%s3 + $0xc0] sm:$0xff]
    %v1990 = vld [vmem:[%s3 + $0xc8] sm:$0xff]
    %v1991 = vld [vmem:[%s3 + $0xd0] sm:$0xff]
    %v1992 = vld [vmem:[%s3 + $0xd8] sm:$0xff]
    %v1993 = vld [vmem:[%s3 + $0xe0] sm:$0xff]
    %v1994 = vld [vmem:[%s3 + $0xe8] sm:$0xff]
    %v1995 = vld [vmem:[%s3 + $0xf0] sm:$0xff]
    %v1996 = vld [vmem:[%s3 + $0xf8] sm:$0xff]
    %v1997 = vld [vmem:[%s3 + $0x100] sm:$0xff]
    %v1998 = vld [vmem:[%s3 + $0x108] sm:$0xff]
    %v1999 = vld [vmem:[%s3 + $0x110] sm:$0xff]
    %v2000 = vld [vmem:[%s3 + $0x118] sm:$0xff]
    %v2001 = vld [vmem:[%s3 + $0x120] sm:$0xff]
    %v2002 = vld [vmem:[%s3 + $0x128] sm:$0xff]
    %v2003 = vld [vmem:[%s3 + $0x130] sm:$0xff]
    %v2004 = vld [vmem:[%s3 + $0x138] sm:$0xff]
    %v2005 = vld [vmem:[%s3 + $0x140] sm:$0xff]
    %v2006 = vld [vmem:[%s3 + $0x148] sm:$0xff]
    %v2007 = vld [vmem:[%s3 + $0x150] sm:$0xff]
    %v2008 = vld [vmem:[%s3 + $0x158] sm:$0xff]
    %v2009 = vld [vmem:[%s3 + $0x160] sm:$0xff]
    %v2010 = vld [vmem:[%s3 + $0x168] sm:$0xff]
    %v2011 = vld [vmem:[%s3 + $0x170] sm:$0xff]
    %v2012 = vld [vmem:[%s3 + $0x178] sm:$0xff]
    %v2013 = vld [vmem:[%s3 + $0x180] sm:$0xff]
    %v2014 = vld [vmem:[%s3 + $0x188] sm:$0xff]
    %v2015 = vld [vmem:[%s3 + $0x190] sm:$0xff]
    %v2016 = vld [vmem:[%s3 + $0x198] sm:$0xff]
    %v2017 = vld [vmem:[%s3 + $0x1a0] sm:$0xff]
    %v2018 = vld [vmem:[%s3 + $0x1a8] sm:$0xff]
    %v2019 = vld [vmem:[%s3 + $0x1b0] sm:$0xff]
    %v2020 = vld [vmem:[%s3 + $0x1b8] sm:$0xff]
    %v2021 = vld [vmem:[%s3 + $0x1c0] sm:$0xff]
    %v2022 = vld [vmem:[%s3 + $0x1c8] sm:$0xff]
    %v2023 = vld [vmem:[%s3 + $0x1d0] sm:$0xff]
    %v2024 = vld [vmem:[%s3 + $0x1d8] sm:$0xff]
    %v2025 = vld [vmem:[%s3 + $0x1e0] sm:$0xff]
    %v2026 = vld [vmem:[%s3 + $0x1e8] sm:$0xff]
    %v2027 = vld [vmem:[%s3 + $0x1f0] sm:$0xff]
    %v2028 = vld [vmem:[%s3 + $0x1f8] sm:$0xff]
    %v2029 = vld [vmem:[%s4] sm:$0x1]
    %v2031 = vlaneseq
    %v2032 = vshrl.u32 %v2031, 7
    %v2033 = vsub.s32 0, %v2032
    %v2034 = vrot.slane %v2029, %v2033
    %2036 = vmatprep.subr.mxu0 0.0
    %2037 = vmatpush1.msra.mxu0 %v1965
    %2038 = vmatprep.subr.mxu0 0.0
    %2039 = vmatpush1.msra.mxu0 %v1966
    %2040 = vmatprep.subr.mxu0 0.0
    %2041 = vmatpush1.msra.mxu0 %v1967
    %2042 = vmatprep.subr.mxu0 0.0
    %2043 = vmatpush1.msra.mxu0 %v1968
    %2044 = vmatprep.subr.mxu0 0.0
    %2045 = vmatpush1.msra.mxu0 %v1969
    %2046 = vmatprep.subr.mxu0 0.0
    %2047 = vmatpush1.msra.mxu0 %v1970
    %2048 = vmatprep.subr.mxu0 0.0
    %2049 = vmatpush1.msra.mxu0 %v1971
    %2050 = vmatprep.subr.mxu0 0.0
    %2051 = vmatpush1.msra.mxu0 %v1972
    %2052 = vmatprep.subr.mxu0 0.0
    %2053 = vmatpush1.msra.mxu0 %v1973
    %2054 = vmatprep.subr.mxu0 0.0
    %2055 = vmatpush1.msra.mxu0 %v1974
    %2056 = vmatprep.subr.mxu0 0.0
    %2057 = vmatpush1.msra.mxu0 %v1975
    %2058 = vmatprep.subr.mxu0 0.0
    %2059 = vmatpush1.msra.mxu0 %v1976
    %2060 = vmatprep.subr.mxu0 0.0
    %2061 = vmatpush1.msra.mxu0 %v1977
    %2062 = vmatprep.subr.mxu0 0.0
    %2063 = vmatpush1.msra.mxu0 %v1978
    %2064 = vmatprep.subr.mxu0 0.0
    %2065 = vmatpush1.msra.mxu0 %v1979
    %2066 = vmatprep.subr.mxu0 0.0
    %2067 = vmatpush1.msra.mxu0 %v1980
    %2068 = vmatprep.subr.mxu0 0.0
    %2069 = vmatpush1.msra.mxu0 %v1981
    %2070 = vmatprep.subr.mxu0 0.0
    %2071 = vmatpush1.msra.mxu0 %v1982
    %2072 = vmatprep.subr.mxu0 0.0
    %2073 = vmatpush1.msra.mxu0 %v1983
    %2074 = vmatprep.subr.mxu0 0.0
    %2075 = vmatpush1.msra.mxu0 %v1984
    %2076 = vmatprep.subr.mxu0 0.0
    %2077 = vmatpush1.msra.mxu0 %v1985
    %2078 = vmatprep.subr.mxu0 0.0
    %2079 = vmatpush1.msra.mxu0 %v1986
    %2080 = vmatprep.subr.mxu0 0.0
    %2081 = vmatpush1.msra.mxu0 %v1987
    %2082 = vmatprep.subr.mxu0 0.0
    %2083 = vmatpush1.msra.mxu0 %v1988
    %2084 = vmatprep.subr.mxu0 0.0
    %2085 = vmatpush1.msra.mxu0 %v1989
    %2086 = vmatprep.subr.mxu0 0.0
    %2087 = vmatpush1.msra.mxu0 %v1990
    %2088 = vmatprep.subr.mxu0 0.0
    %2089 = vmatpush1.msra.mxu0 %v1991
    %2090 = vmatprep.subr.mxu0 0.0
    %2091 = vmatpush1.msra.mxu0 %v1992
    %2092 = vmatprep.subr.mxu0 0.0
    %2093 = vmatpush1.msra.mxu0 %v1993
    %2094 = vmatprep.subr.mxu0 0.0
    %2095 = vmatpush1.msra.mxu0 %v1994
    %2096 = vmatprep.subr.mxu0 0.0
    %2097 = vmatpush1.msra.mxu0 %v1995
    %2098 = vmatprep.subr.mxu0 0.0
    %2099 = vmatpush1.msra.mxu0 %v1996
    %2100 = vmatprep.mubr.f32.mxu0 %v1962
    %2101 = vmatmul.mubr.f32.gmra.mrb[0].mxu0 %v1961
    %v2102 = vpop.f32.mrb[0].mxu0
    %v2103 = vadd.f32 %v2034, %v2102
    %v2104 = vpop.f32.mrb[0].mxu0
    %2105 = vdwg.mxu0
    %2106 = vmatprep.subr.mxu0 0.0
    %2107 = vmatpush1.msra.mxu0 %v1997
    %2108 = vmatprep.subr.mxu0 0.0
    %2109 = vmatpush1.msra.mxu0 %v1998
    %2110 = vmatprep.subr.mxu0 0.0
    %2111 = vmatpush1.msra.mxu0 %v1999
    %2112 = vmatprep.subr.mxu0 0.0
    %2113 = vmatpush1.msra.mxu0 %v2000
    %2114 = vmatprep.subr.mxu0 0.0
    %2115 = vmatpush1.msra.mxu0 %v2001
    %2116 = vmatprep.subr.mxu0 0.0
    %2117 = vmatpush1.msra.mxu0 %v2002
    %2118 = vmatprep.subr.mxu0 0.0
    %2119 = vmatpush1.msra.mxu0 %v2003
    %2120 = vmatprep.subr.mxu0 0.0
    %2121 = vmatpush1.msra.mxu0 %v2004
    %2122 = vmatprep.subr.mxu0 0.0
    %2123 = vmatpush1.msra.mxu0 %v2005
    %2124 = vmatprep.subr.mxu0 0.0
    %2125 = vmatpush1.msra.mxu0 %v2006
    %2126 = vmatprep.subr.mxu0 0.0
    %2127 = vmatpush1.msra.mxu0 %v2007
    %2128 = vmatprep.subr.mxu0 0.0
    %2129 = vmatpush1.msra.mxu0 %v2008
    %2130 = vmatprep.subr.mxu0 0.0
    %2131 = vmatpush1.msra.mxu0 %v2009
    %2132 = vmatprep.subr.mxu0 0.0
    %2133 = vmatpush1.msra.mxu0 %v2010
    %2134 = vmatprep.subr.mxu0 0.0
    %2135 = vmatpush1.msra.mxu0 %v2011
    %2136 = vmatprep.subr.mxu0 0.0
    %2137 = vmatpush1.msra.mxu0 %v2012
    %2138 = vmatprep.subr.mxu0 0.0
    %2139 = vmatpush1.msra.mxu0 %v2013
    %2140 = vmatprep.subr.mxu0 0.0
    %2141 = vmatpush1.msra.mxu0 %v2014
    %2142 = vmatprep.subr.mxu0 0.0
    %2143 = vmatpush1.msra.mxu0 %v2015
    %2144 = vmatprep.subr.mxu0 0.0
    %2145 = vmatpush1.msra.mxu0 %v2016
    %2146 = vmatprep.subr.mxu0 0.0
    %2147 = vmatpush1.msra.mxu0 %v2017
    %2148 = vmatprep.subr.mxu0 0.0
    %2149 = vmatpush1.msra.mxu0 %v2018
    %2150 = vmatprep.subr.mxu0 0.0
    %2151 = vmatpush1.msra.mxu0 %v2019
    %2152 = vmatprep.subr.mxu0 0.0
    %2153 = vmatpush1.msra.mxu0 %v2020
    %2154 = vmatprep.subr.mxu0 0.0
    %2155 = vmatpush1.msra.mxu0 %v2021
    %2156 = vmatprep.subr.mxu0 0.0
    %2157 = vmatpush1.msra.mxu0 %v2022
    %2158 = vmatprep.subr.mxu0 0.0
    %2159 = vmatpush1.msra.mxu0 %v2023
    %2160 = vmatprep.subr.mxu0 0.0
    %2161 = vmatpush1.msra.mxu0 %v2024
    %2162 = vmatprep.subr.mxu0 0.0
    %2163 = vmatpush1.msra.mxu0 %v2025
    %2164 = vmatprep.subr.mxu0 0.0
    %2165 = vmatpush1.msra.mxu0 %v2026
    %2166 = vmatprep.subr.mxu0 0.0
    %2167 = vmatpush1.msra.mxu0 %v2027
    %2168 = vmatprep.subr.mxu0 0.0
    %2169 = vmatpush1.msra.mxu0 %v2028
    %2170 = vmatprep.mubr.f32.mxu0 %v1964
    %2171 = vmatmul.mubr.f32.gmra.mrb[0].mxu0 %v1963
    %v2172 = vpop.f32.mrb[0].mxu0
    %v2173 = vadd.f32 %v2103, %v2172
    %v2174 = vpop.f32.mrb[0].mxu0
    %2175 = vdwg.mxu0
    %v2176 = vmax.f32 %v2173, 0.0
    %2177 = vst [vmem:[#allocation2] sm:$0x3] %v2176
    // Predicated region
    $region22: #{dnn_forward.3} parent=1 // pred_check
      _
    $region23: #{dnn_forward.3} parent=1 // pred_check_branch
      %2179 = sbr.rel (0) target = $region25
    $region24: #{dnn_forward.3} parent=1 // pred_region
      %s2181 = ssub.s32 32, 32
      %2182 = vsyncadd [#allocation3], %s2181
      %s2184 = sshll.u32 [#allocation2], 4
      %s2185 = int_to_ptr.vmem [resolvable:$true] %s2184
      %2187 = dma.vmem_to_hbm [thread:$0]  %s2185, 32, %s5, [#allocation3]
    $region25: #{dnn_forward.3} parent=1 // pred_fallthru
      _
    // Predicated region
    $region26: #{dnn_forward.3} parent=1 // pred_check
      _
    $region27: #{dnn_forward.3} parent=1 // pred_check_branch
      %2189 = sbr.rel (0) target = $region29
    $region28: #{dnn_forward.3} parent=1 // pred_region
      %2190 = dma.done [#allocation3], 32
    $region29: #{dnn_forward.3} parent=1 // pred_fallthru
      _
    %2191 = vsyncpa [#allocation3], 1

// kernel: dnn_forward.2
$region0: #{dnn_forward.2}
  #allocation0 [shape = 'u32[]', space=smem, size = 0x4, offset = 0x4, fixed_abs, tag = 'smem constant byte address 0x4 - core index']
  #allocation1 [shape = 'u32[144,128]{1,0:T(1,128)}', space=vmem, size = 0x12000, scoped, tag = 'internal scratch']
  %s0 = inlined_call_operand.vmem [shape: bf16[3,2,4096], index: 0, kind: input, shape index: {}]
  %s1 = inlined_call_operand.hbm [shape: bf16[12288,1024], index: 1, kind: input, shape index: {}]
  %s2 = inlined_call_operand.hbm [shape: f32[1,1024], index: 2, kind: input, shape index: {}]
  %s3 = inlined_call_operand.vmem [shape: f32[2,1024], index: 3, kind: output, shape index: {}]
  %s4 = sld [smem:[#allocation0]]
  $region61: #{dnn_forward.2} parent=0
    _
  %s6 = ssub.s32 1, %s4
  %s7 = scalar_select 0, %s6, %s4
  $region1: #{dnn_forward.2} parent=0
    #allocation2 [shape = 'u8[8388608]{0}', space=vmem, size = 0x800000, scoped, tag = 'input window, operand 1']
    #allocation3 [shape = 's32[2]{0}', space=sflag, size = 0x8, scoped, tag = 'scoped memory for dnn_forward.2']
    #allocation4 [shape = 'u8[4096]{0}', space=vmem, size = 0x1000, scoped, tag = 'input window, operand 2']
    #allocation5 [shape = 's32[2]{0}', space=sflag, size = 0x8, scoped, tag = 'scoped memory for dnn_forward.2']
    %8 = vsyncpa [#allocation3], 0
    %s9 = scalar_lea.sflag [#allocation3], 1
    %10 = vsyncpa %s9, 0
    %11 = vsyncpa [#allocation5], 0
    %s12 = scalar_lea.sflag [#allocation5], 1
    %13 = vsyncpa %s12, 0
    loop: start=0, step=1, limit=8
    $region2: #{dnn_forward.2} parent=1 // loop_pre_header
      _
    $region3: #{dnn_forward.2} parent=1 // loop_header
      %s15 = sphi 0, %s19
      %p16 = scmp.ge.s32.totalorder %s15, 8
      %s22 = sphi 0, %s34
      %s23 = sphi 0, %s30
      %s24 = sphi 0, %s22
      %s25 = sphi 0, %s23
      %s26 = sphi 0, %s24
      %s27 = sphi 0, %s25
      %s35 = sphi 0, %s35
      %s37 = sphi 0, %s35
      %s38 = sphi 0, %s37
      %s52 = sphi 0, %s38
      %s60 = sphi 0, %s62
      %s63 = sphi 0, %s60
      %s64 = sphi 0, %s63
      %s80 = sphi 0, %s64
      %s86 = sphi 0, %s88
      %s89 = sphi 0, %s86
      %s90 = sphi 0, %s89
      %s106 = sphi 0, %s90
      %s112 = sphi 0, %s114
      %s115 = sphi 0, %s112
      %s116 = sphi 0, %s115
      %s132 = sphi 0, %s116
    $region4: #{dnn_forward.2} parent=1 // loop_header_branch
      %18 = sbr.rel (%p16) target = $region8
    $region5: #{dnn_forward.2} parent=1 // loop_body
      %s20 = ssub.s32 %s15, 1
      %s21 = ssub.s32 %s15, 2
      %s28 = sadd.s32 1, %s23
      %p29 = scmp.ge.s32.totalorder %s28, 3
      %s30 = scalar_select %p29, 0, %s28
      %s31 = sadd.s32 1, %s22
      %s32 = scalar_select %p29, %s31, %s22
      %p33 = scmp.ge.s32.totalorder %s32, 2
      %s34 = scalar_select %p33, 0, %s32
      %s36 = sadd.s32 %s35, 1
      %p39 = scmp.eq.s32.totalorder %s15, 5
      %p40 = scmp.ne.s32.totalorder %s35, %s37
      %p41 = scmp.eq.s32.totalorder %s15, 0
      %p42 = por %p40, %p41
      %p43 = scmp.ne.s32.totalorder %s35, %s37
      %p44 = scmp.eq.s32.totalorder %s20, 5
      %p45 = por %p43, %p44
      %p46 = scmp.ne.s32.totalorder %s37, %s38
      %p47 = scmp.eq.s32.totalorder %s20, 0
      %p48 = por %p46, %p47
      %p49 = scmp.ne.s32.totalorder %s37, %s38
      %p50 = scmp.eq.s32.totalorder %s21, 5
      %p51 = por %p49, %p50
      %p53 = scmp.ne.s32.totalorder %s38, %s52
      %p54 = scmp.eq.s32.totalorder %s21, 0
      %p55 = por %p53, %p54
      %s56 = ssub.s32 %s23, %s30
      %s57 = ssub.s32 %s22, %s34
      %s58 = sor.u32 %s56, %s57
      %p59 = scmp.eq.s32.totalorder %s58, 0
      %s61 = sadd.s32 %s60, 1
      %s62 = scalar_select %p59, %s60, %s61
      %p65 = pneg %p59
      %p66 = scmp.eq.s32.totalorder %s15, 5
      %p67 = por %p65, %p66
      %p68 = scmp.ne.s32.totalorder %s60, %s63
      %p69 = scmp.eq.s32.totalorder %s15, 0
      %p70 = por %p68, %p69
      %p71 = scmp.ne.s32.totalorder %s60, %s63
      %p72 = scmp.eq.s32.totalorder %s20, 5
      %p73 = por %p71, %p72
      %p74 = scmp.ne.s32.totalorder %s63, %s64
      %p75 = scmp.eq.s32.totalorder %s20, 0
      %p76 = por %p74, %p75
      %p77 = scmp.ne.s32.totalorder %s63, %s64
      %p78 = scmp.eq.s32.totalorder %s21, 5
      %p79 = por %p77, %p78
      %p81 = scmp.ne.s32.totalorder %s64, %s80
      %p82 = scmp.eq.s32.totalorder %s21, 0
      %p83 = por %p81, %p82
      %s84 = ssub.s32 %s22, %s34
      %p85 = scmp.eq.s32.totalorder %s84, 0
      %s87 = sadd.s32 %s86, 1
      %s88 = scalar_select %p85, %s86, %s87
      %p91 = pneg %p85
      %p92 = scmp.eq.s32.totalorder %s15, 5
      %p93 = por %p91, %p92
      %p94 = scmp.ne.s32.totalorder %s86, %s89
      %p95 = scmp.eq.s32.totalorder %s15, 0
      %p96 = por %p94, %p95
      %p97 = scmp.ne.s32.totalorder %s86, %s89
      %p98 = scmp.eq.s32.totalorder %s20, 5
      %p99 = por %p97, %p98
      %p100 = scmp.ne.s32.totalorder %s89, %s90
      %p101 = scmp.eq.s32.totalorder %s20, 0
      %p102 = por %p100, %p101
      %p103 = scmp.ne.s32.totalorder %s89, %s90
      %p104 = scmp.eq.s32.totalorder %s21, 5
      %p105 = por %p103, %p104
      %p107 = scmp.ne.s32.totalorder %s90, %s106
      %p108 = scmp.eq.s32.totalorder %s21, 0
      %p109 = por %p107, %p108
      %s110 = ssub.s32 %s22, %s34
      %p111 = scmp.eq.s32.totalorder %s110, 0
      %s113 = sadd.s32 %s112, 1
      %s114 = scalar_select %p111, %s112, %s113
      %p117 = pneg %p111
      %p118 = scmp.eq.s32.totalorder %s15, 5
      %p119 = por %p117, %p118
      %p120 = scmp.ne.s32.totalorder %s112, %s115
      %p121 = scmp.eq.s32.totalorder %s15, 0
      %p122 = por %p120, %p121
      %p123 = scmp.ne.s32.totalorder %s112, %s115
      %p124 = scmp.eq.s32.totalorder %s20, 5
      %p125 = por %p123, %p124
      %p126 = scmp.ne.s32.totalorder %s115, %s116
      %p127 = scmp.eq.s32.totalorder %s20, 0
      %p128 = por %p126, %p127
      %p129 = scmp.ne.s32.totalorder %s115, %s116
      %p130 = scmp.eq.s32.totalorder %s21, 5
      %p131 = por %p129, %p130
      %p133 = scmp.ne.s32.totalorder %s116, %s132
      %p134 = scmp.eq.s32.totalorder %s21, 0
      %p135 = por %p133, %p134
      %p136 = scmp.le.s32.totalorder 1, %s15
      %p137 = scmp.lt.s32.totalorder %s15, 7
      %p138 = pnand %p136, %p137
      %p139 = pneg %p138
      // Predicated region
      $region9: #{dnn_forward.2} parent=5 // pred_check
        _
      $region10: #{dnn_forward.2} parent=5 // pred_check_branch
        %141 = sbr.rel (%p138) target = $region12
      $region11: #{dnn_forward.2} parent=5 // pred_region
        %s142 = ssub.s32 %s15, 1
        // Predicated region
        $region13: #{dnn_forward.2} parent=11 // pred_check
          %p143 = pneg %p48
        $region14: #{dnn_forward.2} parent=11 // pred_check_branch
          %145 = sbr.rel (%p143) target = $region16
        $region15: #{dnn_forward.2} parent=11 // pred_region
          _
        $region16: #{dnn_forward.2} parent=11 // pred_fallthru
          _
      $region12: #{dnn_forward.2} parent=5 // pred_fallthru
        _
      %p146 = scmp.lt.s32.totalorder %s15, 6
      // Predicated region
      $region17: #{dnn_forward.2} parent=5 // pred_check
        %p147 = pneg %p146
      $region18: #{dnn_forward.2} parent=5 // pred_check_branch
        %149 = sbr.rel (%p147) target = $region20
      $region19: #{dnn_forward.2} parent=5 // pred_region
        // Predicated region
        $region21: #{dnn_forward.2} parent=19 // pred_check
          %p150 = pneg %p70
        $region22: #{dnn_forward.2} parent=19 // pred_check_branch
          %152 = sbr.rel (%p150) target = $region24
        $region23: #{dnn_forward.2} parent=19 // pred_region
          %s153 = sand.u32 %s60, 1
          %s154 = scalar_lea.sflag [#allocation3], %s153
          %s155 = sand.u32 %s60, 1
          %s156 = smul.addr %s155, 8192
          %s157 = scalar_lea.vmem [#allocation2], %s156
          %s158 = smul.u32 512, %s23
          %s159 = smul.u32 4, %s22
          %s161 = ssub.s32 131072, 131072
          %162 = vsyncadd %s154, %s161
          %s163 = smul.addr %s158, 8
          %s164 = sadd.s32 %s159, %s163
          %s165 = smul.addr %s164, 64
          %s166 = scalar_lea.hbm %s1, %s165
          %s167 = sshll.u32 %s157, 4
          %s168 = int_to_ptr.vmem [resolvable:$true] %s167
          %173 = dma.hbm_to_vmem [thread:$0]  %s166, 131072, %s168, %s154, 512, 256, 16
        $region24: #{dnn_forward.2} parent=19 // pred_fallthru
          _
        // Predicated region
        $region25: #{dnn_forward.2} parent=19 // pred_check
          %p174 = pneg %p96
        $region26: #{dnn_forward.2} parent=19 // pred_check_branch
          %176 = sbr.rel (%p174) target = $region28
        $region27: #{dnn_forward.2} parent=19 // pred_region
          %s177 = sand.u32 %s86, 1
          %s178 = scalar_lea.sflag [#allocation5], %s177
          %s179 = sand.u32 %s86, 1
          %s180 = smul.addr %s179, 4
          %s181 = scalar_lea.vmem [#allocation4], %s180
          %s182 = smul.u32 4, %s22
          %s184 = ssub.s32 64, 64
          %185 = vsyncadd %s178, %s184
          %s186 = smul.addr %s182, 16
          %s187 = scalar_lea.hbm %s2, %s186
          %s189 = sshll.u32 %s181, 4
          %s190 = int_to_ptr.vmem [resolvable:$true] %s189
          %192 = dma.hbm_to_vmem [thread:$0]  %s187, 64, %s190, %s178
        $region28: #{dnn_forward.2} parent=19 // pred_fallthru
          _
      $region20: #{dnn_forward.2} parent=5 // pred_fallthru
        _
      %p193 = scmp.le.s32.totalorder 1, %s15
      %p194 = scmp.lt.s32.totalorder %s15, 7
      %p195 = pnand %p193, %p194
      %p196 = pneg %p195
      // Predicated region
      $region29: #{dnn_forward.2} parent=5 // pred_check
        _
      $region30: #{dnn_forward.2} parent=5 // pred_check_branch
        %198 = sbr.rel (%p195) target = $region32
      $region31: #{dnn_forward.2} parent=5 // pred_region
        %s199 = ssub.s32 %s15, 1
        %s200 = sand.u32 %s63, 1
        %s201 = scalar_lea.sflag [#allocation3], %s200
        %s202 = sand.u32 %s63, 1
        %s203 = smul.addr %s202, 8192
        %s204 = scalar_lea.vmem [#allocation2], %s203
        // Predicated region
        $region33: #{dnn_forward.2} parent=31 // pred_check
          %p205 = pneg %p76
        $region34: #{dnn_forward.2} parent=31 // pred_check_branch
          %207 = sbr.rel (%p205) target = $region36
        $region35: #{dnn_forward.2} parent=31 // pred_region
          %208 = dma.done %s201, 131072
        $region36: #{dnn_forward.2} parent=31 // pred_fallthru
          _
        %s209 = sand.u32 %s89, 1
        %s210 = scalar_lea.sflag [#allocation5], %s209
        %s211 = sand.u32 %s89, 1
        %s212 = smul.addr %s211, 4
        %s213 = scalar_lea.vmem [#allocation4], %s212
        // Predicated region
        $region37: #{dnn_forward.2} parent=31 // pred_check
          %p214 = pneg %p102
        $region38: #{dnn_forward.2} parent=31 // pred_check_branch
          %216 = sbr.rel (%p214) target = $region40
        $region39: #{dnn_forward.2} parent=31 // pred_region
          %217 = dma.done %s210, 64
        $region40: #{dnn_forward.2} parent=31 // pred_fallthru
          _
        %p218 = pneg %p48
        %p219 = pneg %p45
        %s220 = sand.u32 %s63, 1
        %s221 = scalar_lea.sflag [#allocation3], %s220
        %s222 = sand.u32 %s63, 1
        %s223 = smul.addr %s222, 8192
        %s224 = scalar_lea.vmem [#allocation2], %s223
        %p225 = pneg %p76
        %p226 = pneg %p73
        %s227 = sand.u32 %s89, 1
        %s228 = scalar_lea.sflag [#allocation5], %s227
        %s229 = sand.u32 %s89, 1
        %s230 = smul.addr %s229, 4
        %s231 = scalar_lea.vmem [#allocation4], %s230
        %p232 = pneg %p102
        %p233 = pneg %p99
        %p234 = pneg %p128
        %p235 = pneg %p125
        %s236 = smul.u32 4, %s24
        %p237 = scmp.lt.s32.totalorder %s236, 7
        %s238 = scalar_select %p237, %s236, 7
        %s239 = smul.addr %s238, 2
        %s240 = scalar_lea.vmem %s3, %s239
        %s241 = smul.u32 512, %s25
        %s242 = smul.u32 4, %s24
        %s243 = smul.u32 4, %s24
        %s244 = smul.u32 4, %s24
        %p245 = scmp.lt.s32.totalorder %s244, 7
        %s246 = scalar_select %p245, %s244, 7
        %s247 = smul.addr %s246, 2
        %s248 = scalar_lea.vmem %s3, %s247
        %s249 = smul.u32 4, %s24
        %p250 = scmp.eq.s32.totalorder %s25, 0
        // Predicated region
        $region41: #{dnn_forward.2} parent=31 // pred_check
          %p251 = pneg %p250
        $region42: #{dnn_forward.2} parent=31 // pred_check_branch
          %253 = sbr.rel (%p251) target = $region44
        $region43: #{dnn_forward.2} parent=31 // pred_region
          %v254 = vld [vmem:[%s213] sm:$0xf]
          %v256 = vlaneseq
          %v257 = vshrl.u32 %v256, 7
          %v258 = vsub.s32 0, %v257
          %v259 = vrot.slane %v254, %v258
          %v260 = vlaneseq
          %v261 = vshrl.u32 %v260, 7
          %v262 = vsub.s32 1, %v261
          %v263 = vrot.slane %v254, %v262
          %v264 = vlaneseq
          %v265 = vshrl.u32 %v264, 7
          %v266 = vsub.s32 2, %v265
          %v267 = vrot.slane %v254, %v266
          %v268 = vlaneseq
          %v269 = vshrl.u32 %v268, 7
          %v270 = vsub.s32 3, %v269
          %v271 = vrot.slane %v254, %v270
          %v276 = vadd.f32 %v259, 0.0
          %v277 = vadd.f32 %v263, 0.0
          %v278 = vadd.f32 %v267, 0.0
          %v279 = vadd.f32 %v271, 0.0
          %v284 = vcombine.low %v276, %v277
          %v285 = vcombine.low %v278, %v279
          %v287 = vunpack.c.l.s4 1983009808
          %v288 = vunpack.c.0.s8 %v287
          %v289 = vlaneseq
          %v290 = vshrl.u32 %v289, 7
          %v291 = vsub.s32 %v288, %v290
          %v292 = vrot.slane %v284, %v291
          %v294 = vunpack.c.l.s4 1983009808
          %v295 = vunpack.c.0.s8 %v294
          %v296 = vlaneseq
          %v297 = vshrl.u32 %v296, 7
          %v298 = vsub.s32 %v295, %v297
          %v299 = vrot.slane %v285, %v298
          %v300 = vcombine.low %v292, %v299
          %302 = vst [vmem:[%s248] sm:$0xff] %v300
        $region44: #{dnn_forward.2} parent=31 // pred_fallthru
          _
        %v303 = vld [vmem:[%s248] sm:$0xff]
        %s304 = smul.u32 %s25, 32
        %s305 = scalar_lea.vmem %s0, %s304
        %v306 = vld [vmem:[%s305] sm:$0xff]
        %v307 = vld [vmem:[%s305 + $0x8] sm:$0xff]
        %v308 = vld [vmem:[%s305 + $0x10] sm:$0xff]
        %v309 = vld [vmem:[%s305 + $0x18] sm:$0xff]
        %v310 = vld [vmem:[%s204] sm:$0xff]
        %v311 = vld [vmem:[%s204 + $0x8] sm:$0xff]
        %v312 = vld [vmem:[%s204 + $0x10] sm:$0xff]
        %v313 = vld [vmem:[%s204 + $0x18] sm:$0xff]
        %v314 = vld [vmem:[%s204 + $0x20] sm:$0xff]
        %v315 = vld [vmem:[%s204 + $0x28] sm:$0xff]
        %v316 = vld [vmem:[%s204 + $0x30] sm:$0xff]
        %v317 = vld [vmem:[%s204 + $0x38] sm:$0xff]
        %v318 = vld [vmem:[%s204 + $0x40] sm:$0xff]
        %v319 = vld [vmem:[%s204 + $0x48] sm:$0xff]
        %v320 = vld [vmem:[%s204 + $0x50] sm:$0xff]
        %v321 = vld [vmem:[%s204 + $0x58] sm:$0xff]
        %v322 = vld [vmem:[%s204 + $0x60] sm:$0xff]
        %v323 = vld [vmem:[%s204 + $0x68] sm:$0xff]
        %v324 = vld [vmem:[%s204 + $0x70] sm:$0xff]
        %v325 = vld [vmem:[%s204 + $0x78] sm:$0xff]
        %v326 = vld [vmem:[%s204 + $0x80] sm:$0xff]
        %v327 = vld [vmem:[%s204 + $0x88] sm:$0xff]
        %v328 = vld [vmem:[%s204 + $0x90] sm:$0xff]
        %v329 = vld [vmem:[%s204 + $0x98] sm:$0xff]
        %v330 = vld [vmem:[%s204 + $0xa0] sm:$0xff]
        %v331 = vld [vmem:[%s204 + $0xa8] sm:$0xff]
        %v332 = vld [vmem:[%s204 + $0xb0] sm:$0xff]
        %v333 = vld [vmem:[%s204 + $0xb8] sm:$0xff]
        %v334 = vld [vmem:[%s204 + $0xc0] sm:$0xff]
        %v335 = vld [vmem:[%s204 + $0xc8] sm:$0xff]
        %v336 = vld [vmem:[%s204 + $0xd0] sm:$0xff]
        %v337 = vld [vmem:[%s204 + $0xd8] sm:$0xff]
        %v338 = vld [vmem:[%s204 + $0xe0] sm:$0xff]
        %v339 = vld [vmem:[%s204 + $0xe8] sm:$0xff]
        %v340 = vld [vmem:[%s204 + $0xf0] sm:$0xff]
        %v341 = vld [vmem:[%s204 + $0xf8] sm:$0xff]
        %v342 = vld [vmem:[%s204 + $0x100] sm:$0xff]
        %v343 = vld [vmem:[%s204 + $0x108] sm:$0xff]
        %v344 = vld [vmem:[%s204 + $0x110] sm:$0xff]
        %v345 = vld [vmem:[%s204 + $0x118] sm:$0xff]
        %v346 = vld [vmem:[%s204 + $0x120] sm:$0xff]
        %v347 = vld [vmem:[%s204 + $0x128] sm:$0xff]
        %v348 = vld [vmem:[%s204 + $0x130] sm:$0xff]
        %v349 = vld [vmem:[%s204 + $0x138] sm:$0xff]
        %v350 = vld [vmem:[%s204 + $0x140] sm:$0xff]
        %v351 = vld [vmem:[%s204 + $0x148] sm:$0xff]
        %v352 = vld [vmem:[%s204 + $0x150] sm:$0xff]
        %v353 = vld [vmem:[%s204 + $0x158] sm:$0xff]
        %v354 = vld [vmem:[%s204 + $0x160] sm:$0xff]
        %v355 = vld [vmem:[%s204 + $0x168] sm:$0xff]
        %v356 = vld [vmem:[%s204 + $0x170] sm:$0xff]
        %v357 = vld [vmem:[%s204 + $0x178] sm:$0xff]
        %v358 = vld [vmem:[%s204 + $0x180] sm:$0xff]
        %v359 = vld [vmem:[%s204 + $0x188] sm:$0xff]
        %v360 = vld [vmem:[%s204 + $0x190] sm:$0xff]
        %v361 = vld [vmem:[%s204 + $0x198] sm:$0xff]
        %v362 = vld [vmem:[%s204 + $0x1a0] sm:$0xff]
        %v363 = vld [vmem:[%s204 + $0x1a8] sm:$0xff]
        %v364 = vld [vmem:[%s204 + $0x1b0] sm:$0xff]
        %v365 = vld [vmem:[%s204 + $0x1b8] sm:$0xff]
        %v366 = vld [vmem:[%s204 + $0x1c0] sm:$0xff]
        %v367 = vld [vmem:[%s204 + $0x1c8] sm:$0xff]
        %v368 = vld [vmem:[%s204 + $0x1d0] sm:$0xff]
        %v369 = vld [vmem:[%s204 + $0x1d8] sm:$0xff]
        %v370 = vld [vmem:[%s204 + $0x1e0] sm:$0xff]
        %v371 = vld [vmem:[%s204 + $0x1e8] sm:$0xff]
        %v372 = vld [vmem:[%s204 + $0x1f0] sm:$0xff]
        %v373 = vld [vmem:[%s204 + $0x1f8] sm:$0xff]
        %v374 = vld [vmem:[%s204 + $0x200] sm:$0xff]
        %v375 = vld [vmem:[%s204 + $0x208] sm:$0xff]
        %v376 = vld [vmem:[%s204 + $0x210] sm:$0xff]
        %v377 = vld [vmem:[%s204 + $0x218] sm:$0xff]
        %v378 = vld [vmem:[%s204 + $0x220] sm:$0xff]
        %v379 = vld [vmem:[%s204 + $0x228] sm:$0xff]
        %v380 = vld [vmem:[%s204 + $0x230] sm:$0xff]
        %v381 = vld [vmem:[%s204 + $0x238] sm:$0xff]
        %v382 = vld [vmem:[%s204 + $0x240] sm:$0xff]
        %v383 = vld [vmem:[%s204 + $0x248] sm:$0xff]
        %v384 = vld [vmem:[%s204 + $0x250] sm:$0xff]
        %v385 = vld [vmem:[%s204 + $0x258] sm:$0xff]
        %v386 = vld [vmem:[%s204 + $0x260] sm:$0xff]
        %v387 = vld [vmem:[%s204 + $0x268] sm:$0xff]
        %v388 = vld [vmem:[%s204 + $0x270] sm:$0xff]
        %v389 = vld [vmem:[%s204 + $0x278] sm:$0xff]
        %v390 = vld [vmem:[%s204 + $0x280] sm:$0xff]
        %v391 = vld [vmem:[%s204 + $0x288] sm:$0xff]
        %v392 = vld [vmem:[%s204 + $0x290] sm:$0xff]
        %v393 = vld [vmem:[%s204 + $0x298] sm:$0xff]
        %v394 = vld [vmem:[%s204 + $0x2a0] sm:$0xff]
        %v395 = vld [vmem:[%s204 + $0x2a8] sm:$0xff]
        %v396 = vld [vmem:[%s204 + $0x2b0] sm:$0xff]
        %v397 = vld [vmem:[%s204 + $0x2b8] sm:$0xff]
        %v398 = vld [vmem:[%s204 + $0x2c0] sm:$0xff]
        %v399 = vld [vmem:[%s204 + $0x2c8] sm:$0xff]
        %v400 = vld [vmem:[%s204 + $0x2d0] sm:$0xff]
        %v401 = vld [vmem:[%s204 + $0x2d8] sm:$0xff]
        %v402 = vld [vmem:[%s204 + $0x2e0] sm:$0xff]
        %v403 = vld [vmem:[%s204 + $0x2e8] sm:$0xff]
        %v404 = vld [vmem:[%s204 + $0x2f0] sm:$0xff]
        %v405 = vld [vmem:[%s204 + $0x2f8] sm:$0xff]
        %v406 = vld [vmem:[%s204 + $0x300] sm:$0xff]
        %v407 = vld [vmem:[%s204 + $0x308] sm:$0xff]
        %v408 = vld [vmem:[%s204 + $0x310] sm:$0xff]
        %v409 = vld [vmem:[%s204 + $0x318] sm:$0xff]
        %v410 = vld [vmem:[%s204 + $0x320] sm:$0xff]
        %v411 = vld [vmem:[%s204 + $0x328] sm:$0xff]
        %v412 = vld [vmem:[%s204 + $0x330] sm:$0xff]
        %v413 = vld [vmem:[%s204 + $0x338] sm:$0xff]
        %v414 = vld [vmem:[%s204 + $0x340] sm:$0xff]
        %v415 = vld [vmem:[%s204 + $0x348] sm:$0xff]
        %v416 = vld [vmem:[%s204 + $0x350] sm:$0xff]
        %v417 = vld [vmem:[%s204 + $0x358] sm:$0xff]
        %v418 = vld [vmem:[%s204 + $0x360] sm:$0xff]
        %v419 = vld [vmem:[%s204 + $0x368] sm:$0xff]
        %v420 = vld [vmem:[%s204 + $0x370] sm:$0xff]
        %v421 = vld [vmem:[%s204 + $0x378] sm:$0xff]
        %v422 = vld [vmem:[%s204 + $0x380] sm:$0xff]
        %v423 = vld [vmem:[%s204 + $0x388] sm:$0xff]
        %v424 = vld [vmem:[%s204 + $0x390] sm:$0xff]
        %v425 = vld [vmem:[%s204 + $0x398] sm:$0xff]
        %v426 = vld [vmem:[%s204 + $0x3a0] sm:$0xff]
        %v427 = vld [vmem:[%s204 + $0x3a8] sm:$0xff]
        %v428 = vld [vmem:[%s204 + $0x3b0] sm:$0xff]
        %v429 = vld [vmem:[%s204 + $0x3b8] sm:$0xff]
        %v430 = vld [vmem:[%s204 + $0x3c0] sm:$0xff]
        %v431 = vld [vmem:[%s204 + $0x3c8] sm:$0xff]
        %v432 = vld [vmem:[%s204 + $0x3d0] sm:$0xff]
        %v433 = vld [vmem:[%s204 + $0x3d8] sm:$0xff]
        %v434 = vld [vmem:[%s204 + $0x3e0] sm:$0xff]
        %v435 = vld [vmem:[%s204 + $0x3e8] sm:$0xff]
        %v436 = vld [vmem:[%s204 + $0x3f0] sm:$0xff]
        %v437 = vld [vmem:[%s204 + $0x3f8] sm:$0xff]
        %v438 = vld [vmem:[%s204 + $0x400] sm:$0xff]
        %v439 = vld [vmem:[%s204 + $0x408] sm:$0xff]
        %v440 = vld [vmem:[%s204 + $0x410] sm:$0xff]
        %v441 = vld [vmem:[%s204 + $0x418] sm:$0xff]
        %v442 = vld [vmem:[%s204 + $0x420] sm:$0xff]
        %v443 = vld [vmem:[%s204 + $0x428] sm:$0xff]
        %v444 = vld [vmem:[%s204 + $0x430] sm:$0xff]
        %v445 = vld [vmem:[%s204 + $0x438] sm:$0xff]
        %v446 = vld [vmem:[%s204 + $0x440] sm:$0xff]
        %v447 = vld [vmem:[%s204 + $0x448] sm:$0xff]
        %v448 = vld [vmem:[%s204 + $0x450] sm:$0xff]
        %v449 = vld [vmem:[%s204 + $0x458] sm:$0xff]
        %v450 = vld [vmem:[%s204 + $0x460] sm:$0xff]
        %v451 = vld [vmem:[%s204 + $0x468] sm:$0xff]
        %v452 = vld [vmem:[%s204 + $0x470] sm:$0xff]
        %v453 = vld [vmem:[%s204 + $0x478] sm:$0xff]
        %v454 = vld [vmem:[%s204 + $0x480] sm:$0xff]
        %v455 = vld [vmem:[%s204 + $0x488] sm:$0xff]
        %v456 = vld [vmem:[%s204 + $0x490] sm:$0xff]
        %v457 = vld [vmem:[%s204 + $0x498] sm:$0xff]
        %v458 = vld [vmem:[%s204 + $0x4a0] sm:$0xff]
        %v459 = vld [vmem:[%s204 + $0x4a8] sm:$0xff]
        %v460 = vld [vmem:[%s204 + $0x4b0] sm:$0xff]
        %v461 = vld [vmem:[%s204 + $0x4b8] sm:$0xff]
        %v462 = vld [vmem:[%s204 + $0x4c0] sm:$0xff]
        %v463 = vld [vmem:[%s204 + $0x4c8] sm:$0xff]
        %v464 = vld [vmem:[%s204 + $0x4d0] sm:$0xff]
        %v465 = vld [vmem:[%s204 + $0x4d8] sm:$0xff]
        %v466 = vld [vmem:[%s204 + $0x4e0] sm:$0xff]
        %v467 = vld [vmem:[%s204 + $0x4e8] sm:$0xff]
        %v468 = vld [vmem:[%s204 + $0x4f0] sm:$0xff]
        %v469 = vld [vmem:[%s204 + $0x4f8] sm:$0xff]
        %v470 = vld [vmem:[%s204 + $0x500] sm:$0xff]
        %v471 = vld [vmem:[%s204 + $0x508] sm:$0xff]
        %v472 = vld [vmem:[%s204 + $0x510] sm:$0xff]
        %v473 = vld [vmem:[%s204 + $0x518] sm:$0xff]
        %v474 = vld [vmem:[%s204 + $0x520] sm:$0xff]
        %v475 = vld [vmem:[%s204 + $0x528] sm:$0xff]
        %v476 = vld [vmem:[%s204 + $0x530] sm:$0xff]
        %v477 = vld [vmem:[%s204 + $0x538] sm:$0xff]
        %v478 = vld [vmem:[%s204 + $0x540] sm:$0xff]
        %v479 = vld [vmem:[%s204 + $0x548] sm:$0xff]
        %v480 = vld [vmem:[%s204 + $0x550] sm:$0xff]
        %v481 = vld [vmem:[%s204 + $0x558] sm:$0xff]
        %v482 = vld [vmem:[%s204 + $0x560] sm:$0xff]
        %v483 = vld [vmem:[%s204 + $0x568] sm:$0xff]
        %v484 = vld [vmem:[%s204 + $0x570] sm:$0xff]
        %v485 = vld [vmem:[%s204 + $0x578] sm:$0xff]
        %v486 = vld [vmem:[%s204 + $0x580] sm:$0xff]
        %v487 = vld [vmem:[%s204 + $0x588] sm:$0xff]
        %v488 = vld [vmem:[%s204 + $0x590] sm:$0xff]
        %v489 = vld [vmem:[%s204 + $0x598] sm:$0xff]
        %v490 = vld [vmem:[%s204 + $0x5a0] sm:$0xff]
        %v491 = vld [vmem:[%s204 + $0x5a8] sm:$0xff]
        %v492 = vld [vmem:[%s204 + $0x5b0] sm:$0xff]
        %v493 = vld [vmem:[%s204 + $0x5b8] sm:$0xff]
        %v494 = vld [vmem:[%s204 + $0x5c0] sm:$0xff]
        %v495 = vld [vmem:[%s204 + $0x5c8] sm:$0xff]
        %v496 = vld [vmem:[%s204 + $0x5d0] sm:$0xff]
        %v497 = vld [vmem:[%s204 + $0x5d8] sm:$0xff]
        %v498 = vld [vmem:[%s204 + $0x5e0] sm:$0xff]
        %v499 = vld [vmem:[%s204 + $0x5e8] sm:$0xff]
        %v500 = vld [vmem:[%s204 + $0x5f0] sm:$0xff]
        %v501 = vld [vmem:[%s204 + $0x5f8] sm:$0xff]
        %v502 = vld [vmem:[%s204 + $0x600] sm:$0xff]
        %v503 = vld [vmem:[%s204 + $0x608] sm:$0xff]
        %v504 = vld [vmem:[%s204 + $0x610] sm:$0xff]
        %v505 = vld [vmem:[%s204 + $0x618] sm:$0xff]
        %v506 = vld [vmem:[%s204 + $0x620] sm:$0xff]
        %v507 = vld [vmem:[%s204 + $0x628] sm:$0xff]
        %v508 = vld [vmem:[%s204 + $0x630] sm:$0xff]
        %v509 = vld [vmem:[%s204 + $0x638] sm:$0xff]
        %v510 = vld [vmem:[%s204 + $0x640] sm:$0xff]
        %v511 = vld [vmem:[%s204 + $0x648] sm:$0xff]
        %v512 = vld [vmem:[%s204 + $0x650] sm:$0xff]
        %v513 = vld [vmem:[%s204 + $0x658] sm:$0xff]
        %v514 = vld [vmem:[%s204 + $0x660] sm:$0xff]
        %v515 = vld [vmem:[%s204 + $0x668] sm:$0xff]
        %v516 = vld [vmem:[%s204 + $0x670] sm:$0xff]
        %v517 = vld [vmem:[%s204 + $0x678] sm:$0xff]
        %v518 = vld [vmem:[%s204 + $0x680] sm:$0xff]
        %v519 = vld [vmem:[%s204 + $0x688] sm:$0xff]
        %v520 = vld [vmem:[%s204 + $0x690] sm:$0xff]
        %v521 = vld [vmem:[%s204 + $0x698] sm:$0xff]
        %v522 = vld [vmem:[%s204 + $0x6a0] sm:$0xff]
        %v523 = vld [vmem:[%s204 + $0x6a8] sm:$0xff]
        %v524 = vld [vmem:[%s204 + $0x6b0] sm:$0xff]
        %v525 = vld [vmem:[%s204 + $0x6b8] sm:$0xff]
        %v526 = vld [vmem:[%s204 + $0x6c0] sm:$0xff]
        %v527 = vld [vmem:[%s204 + $0x6c8] sm:$0xff]
        %v528 = vld [vmem:[%s204 + $0x6d0] sm:$0xff]
        %v529 = vld [vmem:[%s204 + $0x6d8] sm:$0xff]
        %v530 = vld [vmem:[%s204 + $0x6e0] sm:$0xff]
        %v531 = vld [vmem:[%s204 + $0x6e8] sm:$0xff]
        %v532 = vld [vmem:[%s204 + $0x6f0] sm:$0xff]
        %v533 = vld [vmem:[%s204 + $0x6f8] sm:$0xff]
        %v534 = vld [vmem:[%s204 + $0x700] sm:$0xff]
        %v535 = vld [vmem:[%s204 + $0x708] sm:$0xff]
        %v536 = vld [vmem:[%s204 + $0x710] sm:$0xff]
        %v537 = vld [vmem:[%s204 + $0x718] sm:$0xff]
        %v538 = vld [vmem:[%s204 + $0x720] sm:$0xff]
        %v539 = vld [vmem:[%s204 + $0x728] sm:$0xff]
        %v540 = vld [vmem:[%s204 + $0x730] sm:$0xff]
        %v541 = vld [vmem:[%s204 + $0x738] sm:$0xff]
        %v542 = vld [vmem:[%s204 + $0x740] sm:$0xff]
        %v543 = vld [vmem:[%s204 + $0x748] sm:$0xff]
        %v544 = vld [vmem:[%s204 + $0x750] sm:$0xff]
        %v545 = vld [vmem:[%s204 + $0x758] sm:$0xff]
        %v546 = vld [vmem:[%s204 + $0x760] sm:$0xff]
        %v547 = vld [vmem:[%s204 + $0x768] sm:$0xff]
        %v548 = vld [vmem:[%s204 + $0x770] sm:$0xff]
        %v549 = vld [vmem:[%s204 + $0x778] sm:$0xff]
        %v550 = vld [vmem:[%s204 + $0x780] sm:$0xff]
        %v551 = vld [vmem:[%s204 + $0x788] sm:$0xff]
        %v552 = vld [vmem:[%s204 + $0x790] sm:$0xff]
        %v553 = vld [vmem:[%s204 + $0x798] sm:$0xff]
        %v554 = vld [vmem:[%s204 + $0x7a0] sm:$0xff]
        %v555 = vld [vmem:[%s204 + $0x7a8] sm:$0xff]
        %v556 = vld [vmem:[%s204 + $0x7b0] sm:$0xff]
        %v557 = vld [vmem:[%s204 + $0x7b8] sm:$0xff]
        %v558 = vld [vmem:[%s204 + $0x7c0] sm:$0xff]
        %v559 = vld [vmem:[%s204 + $0x7c8] sm:$0xff]
        %v560 = vld [vmem:[%s204 + $0x7d0] sm:$0xff]
        %v561 = vld [vmem:[%s204 + $0x7d8] sm:$0xff]
        %v562 = vld [vmem:[%s204 + $0x7e0] sm:$0xff]
        %v563 = vld [vmem:[%s204 + $0x7e8] sm:$0xff]
        %v564 = vld [vmem:[%s204 + $0x7f0] sm:$0xff]
        %v565 = vld [vmem:[%s204 + $0x7f8] sm:$0xff]
        %v566 = vld [vmem:[%s204 + $0x800] sm:$0xff]
        %v567 = vld [vmem:[%s204 + $0x808] sm:$0xff]
        %v568 = vld [vmem:[%s204 + $0x810] sm:$0xff]
        %v569 = vld [vmem:[%s204 + $0x818] sm:$0xff]
        %v570 = vld [vmem:[%s204 + $0x820] sm:$0xff]
        %v571 = vld [vmem:[%s204 + $0x828] sm:$0xff]
        %v572 = vld [vmem:[%s204 + $0x830] sm:$0xff]
        %v573 = vld [vmem:[%s204 + $0x838] sm:$0xff]
        %v574 = vld [vmem:[%s204 + $0x840] sm:$0xff]
        %v575 = vld [vmem:[%s204 + $0x848] sm:$0xff]
        %v576 = vld [vmem:[%s204 + $0x850] sm:$0xff]
        %v577 = vld [vmem:[%s204 + $0x858] sm:$0xff]
        %v578 = vld [vmem:[%s204 + $0x860] sm:$0xff]
        %v579 = vld [vmem:[%s204 + $0x868] sm:$0xff]
        %v580 = vld [vmem:[%s204 + $0x870] sm:$0xff]
        %v581 = vld [vmem:[%s204 + $0x878] sm:$0xff]
        %v582 = vld [vmem:[%s204 + $0x880] sm:$0xff]
        %v583 = vld [vmem:[%s204 + $0x888] sm:$0xff]
        %v584 = vld [vmem:[%s204 + $0x890] sm:$0xff]
        %v585 = vld [vmem:[%s204 + $0x898] sm:$0xff]
        %v586 = vld [vmem:[%s204 + $0x8a0] sm:$0xff]
        %v587 = vld [vmem:[%s204 + $0x8a8] sm:$0xff]
        %v588 = vld [vmem:[%s204 + $0x8b0] sm:$0xff]
        %v589 = vld [vmem:[%s204 + $0x8b8] sm:$0xff]
        %v590 = vld [vmem:[%s204 + $0x8c0] sm:$0xff]
        %v591 = vld [vmem:[%s204 + $0x8c8] sm:$0xff]
        %v592 = vld [vmem:[%s204 + $0x8d0] sm:$0xff]
        %v593 = vld [vmem:[%s204 + $0x8d8] sm:$0xff]
        %v594 = vld [vmem:[%s204 + $0x8e0] sm:$0xff]
        %v595 = vld [vmem:[%s204 + $0x8e8] sm:$0xff]
        %v596 = vld [vmem:[%s204 + $0x8f0] sm:$0xff]
        %v597 = vld [vmem:[%s204 + $0x8f8] sm:$0xff]
        %v598 = vld [vmem:[%s204 + $0x900] sm:$0xff]
        %v599 = vld [vmem:[%s204 + $0x908] sm:$0xff]
        %v600 = vld [vmem:[%s204 + $0x910] sm:$0xff]
        %v601 = vld [vmem:[%s204 + $0x918] sm:$0xff]
        %v602 = vld [vmem:[%s204 + $0x920] sm:$0xff]
        %v603 = vld [vmem:[%s204 + $0x928] sm:$0xff]
        %v604 = vld [vmem:[%s204 + $0x930] sm:$0xff]
        %v605 = vld [vmem:[%s204 + $0x938] sm:$0xff]
        %v606 = vld [vmem:[%s204 + $0x940] sm:$0xff]
        %v607 = vld [vmem:[%s204 + $0x948] sm:$0xff]
        %v608 = vld [vmem:[%s204 + $0x950] sm:$0xff]
        %v609 = vld [vmem:[%s204 + $0x958] sm:$0xff]
        %v610 = vld [vmem:[%s204 + $0x960] sm:$0xff]
        %v611 = vld [vmem:[%s204 + $0x968] sm:$0xff]
        %v612 = vld [vmem:[%s204 + $0x970] sm:$0xff]
        %v613 = vld [vmem:[%s204 + $0x978] sm:$0xff]
        %v614 = vld [vmem:[%s204 + $0x980] sm:$0xff]
        %v615 = vld [vmem:[%s204 + $0x988] sm:$0xff]
        %v616 = vld [vmem:[%s204 + $0x990] sm:$0xff]
        %v617 = vld [vmem:[%s204 + $0x998] sm:$0xff]
        %v618 = vld [vmem:[%s204 + $0x9a0] sm:$0xff]
        %v619 = vld [vmem:[%s204 + $0x9a8] sm:$0xff]
        %v620 = vld [vmem:[%s204 + $0x9b0] sm:$0xff]
        %v621 = vld [vmem:[%s204 + $0x9b8] sm:$0xff]
        %v622 = vld [vmem:[%s204 + $0x9c0] sm:$0xff]
        %v623 = vld [vmem:[%s204 + $0x9c8] sm:$0xff]
        %v624 = vld [vmem:[%s204 + $0x9d0] sm:$0xff]
        %v625 = vld [vmem:[%s204 + $0x9d8] sm:$0xff]
        %v626 = vld [vmem:[%s204 + $0x9e0] sm:$0xff]
        %v627 = vld [vmem:[%s204 + $0x9e8] sm:$0xff]
        %v628 = vld [vmem:[%s204 + $0x9f0] sm:$0xff]
        %v629 = vld [vmem:[%s204 + $0x9f8] sm:$0xff]
        %v630 = vld [vmem:[%s204 + $0xa00] sm:$0xff]
        %v631 = vld [vmem:[%s204 + $0xa08] sm:$0xff]
        %v632 = vld [vmem:[%s204 + $0xa10] sm:$0xff]
        %v633 = vld [vmem:[%s204 + $0xa18] sm:$0xff]
        %v634 = vld [vmem:[%s204 + $0xa20] sm:$0xff]
        %v635 = vld [vmem:[%s204 + $0xa28] sm:$0xff]
        %v636 = vld [vmem:[%s204 + $0xa30] sm:$0xff]
        %v637 = vld [vmem:[%s204 + $0xa38] sm:$0xff]
        %v638 = vld [vmem:[%s204 + $0xa40] sm:$0xff]
        %v639 = vld [vmem:[%s204 + $0xa48] sm:$0xff]
        %v640 = vld [vmem:[%s204 + $0xa50] sm:$0xff]
        %v641 = vld [vmem:[%s204 + $0xa58] sm:$0xff]
        %v642 = vld [vmem:[%s204 + $0xa60] sm:$0xff]
        %v643 = vld [vmem:[%s204 + $0xa68] sm:$0xff]
        %v644 = vld [vmem:[%s204 + $0xa70] sm:$0xff]
        %v645 = vld [vmem:[%s204 + $0xa78] sm:$0xff]
        %v646 = vld [vmem:[%s204 + $0xa80] sm:$0xff]
        %v647 = vld [vmem:[%s204 + $0xa88] sm:$0xff]
        %v648 = vld [vmem:[%s204 + $0xa90] sm:$0xff]
        %v649 = vld [vmem:[%s204 + $0xa98] sm:$0xff]
        %v650 = vld [vmem:[%s204 + $0xaa0] sm:$0xff]
        %v651 = vld [vmem:[%s204 + $0xaa8] sm:$0xff]
        %v652 = vld [vmem:[%s204 + $0xab0] sm:$0xff]
        %v653 = vld [vmem:[%s204 + $0xab8] sm:$0xff]
        %v654 = vld [vmem:[%s204 + $0xac0] sm:$0xff]
        %v655 = vld [vmem:[%s204 + $0xac8] sm:$0xff]
        %v656 = vld [vmem:[%s204 + $0xad0] sm:$0xff]
        %v657 = vld [vmem:[%s204 + $0xad8] sm:$0xff]
        %v658 = vld [vmem:[%s204 + $0xae0] sm:$0xff]
        %v659 = vld [vmem:[%s204 + $0xae8] sm:$0xff]
        %v660 = vld [vmem:[%s204 + $0xaf0] sm:$0xff]
        %v661 = vld [vmem:[%s204 + $0xaf8] sm:$0xff]
        %v662 = vld [vmem:[%s204 + $0xb00] sm:$0xff]
        %v663 = vld [vmem:[%s204 + $0xb08] sm:$0xff]
        %v664 = vld [vmem:[%s204 + $0xb10] sm:$0xff]
        %v665 = vld [vmem:[%s204 + $0xb18] sm:$0xff]
        %v666 = vld [vmem:[%s204 + $0xb20] sm:$0xff]
        %v667 = vld [vmem:[%s204 + $0xb28] sm:$0xff]
        %v668 = vld [vmem:[%s204 + $0xb30] sm:$0xff]
        %v669 = vld [vmem:[%s204 + $0xb38] sm:$0xff]
        %v670 = vld [vmem:[%s204 + $0xb40] sm:$0xff]
        %v671 = vld [vmem:[%s204 + $0xb48] sm:$0xff]
        %v672 = vld [vmem:[%s204 + $0xb50] sm:$0xff]
        %v673 = vld [vmem:[%s204 + $0xb58] sm:$0xff]
        %v674 = vld [vmem:[%s204 + $0xb60] sm:$0xff]
        %v675 = vld [vmem:[%s204 + $0xb68] sm:$0xff]
        %v676 = vld [vmem:[%s204 + $0xb70] sm:$0xff]
        %v677 = vld [vmem:[%s204 + $0xb78] sm:$0xff]
        %v678 = vld [vmem:[%s204 + $0xb80] sm:$0xff]
        %v679 = vld [vmem:[%s204 + $0xb88] sm:$0xff]
        %v680 = vld [vmem:[%s204 + $0xb90] sm:$0xff]
        %v681 = vld [vmem:[%s204 + $0xb98] sm:$0xff]
        %v682 = vld [vmem:[%s204 + $0xba0] sm:$0xff]
        %v683 = vld [vmem:[%s204 + $0xba8] sm:$0xff]
        %v684 = vld [vmem:[%s204 + $0xbb0] sm:$0xff]
        %v685 = vld [vmem:[%s204 + $0xbb8] sm:$0xff]
        %v686 = vld [vmem:[%s204 + $0xbc0] sm:$0xff]
        %v687 = vld [vmem:[%s204 + $0xbc8] sm:$0xff]
        %v688 = vld [vmem:[%s204 + $0xbd0] sm:$0xff]
        %v689 = vld [vmem:[%s204 + $0xbd8] sm:$0xff]
        %v690 = vld [vmem:[%s204 + $0xbe0] sm:$0xff]
        %v691 = vld [vmem:[%s204 + $0xbe8] sm:$0xff]
        %v692 = vld [vmem:[%s204 + $0xbf0] sm:$0xff]
        %v693 = vld [vmem:[%s204 + $0xbf8] sm:$0xff]
        %v694 = vld [vmem:[%s204 + $0xc00] sm:$0xff]
        %v695 = vld [vmem:[%s204 + $0xc08] sm:$0xff]
        %v696 = vld [vmem:[%s204 + $0xc10] sm:$0xff]
        %v697 = vld [vmem:[%s204 + $0xc18] sm:$0xff]
        %v698 = vld [vmem:[%s204 + $0xc20] sm:$0xff]
        %v699 = vld [vmem:[%s204 + $0xc28] sm:$0xff]
        %v700 = vld [vmem:[%s204 + $0xc30] sm:$0xff]
        %v701 = vld [vmem:[%s204 + $0xc38] sm:$0xff]
        %v702 = vld [vmem:[%s204 + $0xc40] sm:$0xff]
        %v703 = vld [vmem:[%s204 + $0xc48] sm:$0xff]
        %v704 = vld [vmem:[%s204 + $0xc50] sm:$0xff]
        %v705 = vld [vmem:[%s204 + $0xc58] sm:$0xff]
        %v706 = vld [vmem:[%s204 + $0xc60] sm:$0xff]
        %v707 = vld [vmem:[%s204 + $0xc68] sm:$0xff]
        %v708 = vld [vmem:[%s204 + $0xc70] sm:$0xff]
        %v709 = vld [vmem:[%s204 + $0xc78] sm:$0xff]
        %v710 = vld [vmem:[%s204 + $0xc80] sm:$0xff]
        %v711 = vld [vmem:[%s204 + $0xc88] sm:$0xff]
        %v712 = vld [vmem:[%s204 + $0xc90] sm:$0xff]
        %v713 = vld [vmem:[%s204 + $0xc98] sm:$0xff]
        %v714 = vld [vmem:[%s204 + $0xca0] sm:$0xff]
        %v715 = vld [vmem:[%s204 + $0xca8] sm:$0xff]
        %v716 = vld [vmem:[%s204 + $0xcb0] sm:$0xff]
        %v717 = vld [vmem:[%s204 + $0xcb8] sm:$0xff]
        %v718 = vld [vmem:[%s204 + $0xcc0] sm:$0xff]
        %v719 = vld [vmem:[%s204 + $0xcc8] sm:$0xff]
        %v720 = vld [vmem:[%s204 + $0xcd0] sm:$0xff]
        %v721 = vld [vmem:[%s204 + $0xcd8] sm:$0xff]
        %v722 = vld [vmem:[%s204 + $0xce0] sm:$0xff]
        %v723 = vld [vmem:[%s204 + $0xce8] sm:$0xff]
        %v724 = vld [vmem:[%s204 + $0xcf0] sm:$0xff]
        %v725 = vld [vmem:[%s204 + $0xcf8] sm:$0xff]
        %v726 = vld [vmem:[%s204 + $0xd00] sm:$0xff]
        %v727 = vld [vmem:[%s204 + $0xd08] sm:$0xff]
        %v728 = vld [vmem:[%s204 + $0xd10] sm:$0xff]
        %v729 = vld [vmem:[%s204 + $0xd18] sm:$0xff]
        %v730 = vld [vmem:[%s204 + $0xd20] sm:$0xff]
        %v731 = vld [vmem:[%s204 + $0xd28] sm:$0xff]
        %v732 = vld [vmem:[%s204 + $0xd30] sm:$0xff]
        %v733 = vld [vmem:[%s204 + $0xd38] sm:$0xff]
        %v734 = vld [vmem:[%s204 + $0xd40] sm:$0xff]
        %v735 = vld [vmem:[%s204 + $0xd48] sm:$0xff]
        %v736 = vld [vmem:[%s204 + $0xd50] sm:$0xff]
        %v737 = vld [vmem:[%s204 + $0xd58] sm:$0xff]
        %v738 = vld [vmem:[%s204 + $0xd60] sm:$0xff]
        %v739 = vld [vmem:[%s204 + $0xd68] sm:$0xff]
        %v740 = vld [vmem:[%s204 + $0xd70] sm:$0xff]
        %v741 = vld [vmem:[%s204 + $0xd78] sm:$0xff]
        %v742 = vld [vmem:[%s204 + $0xd80] sm:$0xff]
        %v743 = vld [vmem:[%s204 + $0xd88] sm:$0xff]
        %v744 = vld [vmem:[%s204 + $0xd90] sm:$0xff]
        %v745 = vld [vmem:[%s204 + $0xd98] sm:$0xff]
        %v746 = vld [vmem:[%s204 + $0xda0] sm:$0xff]
        %v747 = vld [vmem:[%s204 + $0xda8] sm:$0xff]
        %v748 = vld [vmem:[%s204 + $0xdb0] sm:$0xff]
        %v749 = vld [vmem:[%s204 + $0xdb8] sm:$0xff]
        %v750 = vld [vmem:[%s204 + $0xdc0] sm:$0xff]
        %v751 = vld [vmem:[%s204 + $0xdc8] sm:$0xff]
        %v752 = vld [vmem:[%s204 + $0xdd0] sm:$0xff]
        %v753 = vld [vmem:[%s204 + $0xdd8] sm:$0xff]
        %v754 = vld [vmem:[%s204 + $0xde0] sm:$0xff]
        %v755 = vld [vmem:[%s204 + $0xde8] sm:$0xff]
        %v756 = vld [vmem:[%s204 + $0xdf0] sm:$0xff]
        %v757 = vld [vmem:[%s204 + $0xdf8] sm:$0xff]
        %v758 = vld [vmem:[%s204 + $0xe00] sm:$0xff]
        %v759 = vld [vmem:[%s204 + $0xe08] sm:$0xff]
        %v760 = vld [vmem:[%s204 + $0xe10] sm:$0xff]
        %v761 = vld [vmem:[%s204 + $0xe18] sm:$0xff]
        %v762 = vld [vmem:[%s204 + $0xe20] sm:$0xff]
        %v763 = vld [vmem:[%s204 + $0xe28] sm:$0xff]
        %v764 = vld [vmem:[%s204 + $0xe30] sm:$0xff]
        %v765 = vld [vmem:[%s204 + $0xe38] sm:$0xff]
        %v766 = vld [vmem:[%s204 + $0xe40] sm:$0xff]
        %v767 = vld [vmem:[%s204 + $0xe48] sm:$0xff]
        %v768 = vld [vmem:[%s204 + $0xe50] sm:$0xff]
        %v769 = vld [vmem:[%s204 + $0xe58] sm:$0xff]
        %v770 = vld [vmem:[%s204 + $0xe60] sm:$0xff]
        %v771 = vld [vmem:[%s204 + $0xe68] sm:$0xff]
        %v772 = vld [vmem:[%s204 + $0xe70] sm:$0xff]
        %v773 = vld [vmem:[%s204 + $0xe78] sm:$0xff]
        %v774 = vld [vmem:[%s204 + $0xe80] sm:$0xff]
        %v775 = vld [vmem:[%s204 + $0xe88] sm:$0xff]
        %v776 = vld [vmem:[%s204 + $0xe90] sm:$0xff]
        %v777 = vld [vmem:[%s204 + $0xe98] sm:$0xff]
        %v778 = vld [vmem:[%s204 + $0xea0] sm:$0xff]
        %v779 = vld [vmem:[%s204 + $0xea8] sm:$0xff]
        %v780 = vld [vmem:[%s204 + $0xeb0] sm:$0xff]
        %v781 = vld [vmem:[%s204 + $0xeb8] sm:$0xff]
        %v782 = vld [vmem:[%s204 + $0xec0] sm:$0xff]
        %v783 = vld [vmem:[%s204 + $0xec8] sm:$0xff]
        %v784 = vld [vmem:[%s204 + $0xed0] sm:$0xff]
        %v785 = vld [vmem:[%s204 + $0xed8] sm:$0xff]
        %v786 = vld [vmem:[%s204 + $0xee0] sm:$0xff]
        %v787 = vld [vmem:[%s204 + $0xee8] sm:$0xff]
        %v788 = vld [vmem:[%s204 + $0xef0] sm:$0xff]
        %v789 = vld [vmem:[%s204 + $0xef8] sm:$0xff]
        %v790 = vld [vmem:[%s204 + $0xf00] sm:$0xff]
        %v791 = vld [vmem:[%s204 + $0xf08] sm:$0xff]
        %v792 = vld [vmem:[%s204 + $0xf10] sm:$0xff]
        %v793 = vld [vmem:[%s204 + $0xf18] sm:$0xff]
        %v794 = vld [vmem:[%s204 + $0xf20] sm:$0xff]
        %v795 = vld [vmem:[%s204 + $0xf28] sm:$0xff]
        %v796 = vld [vmem:[%s204 + $0xf30] sm:$0xff]
        %v797 = vld [vmem:[%s204 + $0xf38] sm:$0xff]
        %v798 = vld [vmem:[%s204 + $0xf40] sm:$0xff]
        %v799 = vld [vmem:[%s204 + $0xf48] sm:$0xff]
        %v800 = vld [vmem:[%s204 + $0xf50] sm:$0xff]
        %v801 = vld [vmem:[%s204 + $0xf58] sm:$0xff]
        %v802 = vld [vmem:[%s204 + $0xf60] sm:$0xff]
        %v803 = vld [vmem:[%s204 + $0xf68] sm:$0xff]
        %v804 = vld [vmem:[%s204 + $0xf70] sm:$0xff]
        %v805 = vld [vmem:[%s204 + $0xf78] sm:$0xff]
        %v806 = vld [vmem:[%s204 + $0xf80] sm:$0xff]
        %v807 = vld [vmem:[%s204 + $0xf88] sm:$0xff]
        %v808 = vld [vmem:[%s204 + $0xf90] sm:$0xff]
        %v809 = vld [vmem:[%s204 + $0xf98] sm:$0xff]
        %v810 = vld [vmem:[%s204 + $0xfa0] sm:$0xff]
        %v811 = vld [vmem:[%s204 + $0xfa8] sm:$0xff]
        %v812 = vld [vmem:[%s204 + $0xfb0] sm:$0xff]
        %v813 = vld [vmem:[%s204 + $0xfb8] sm:$0xff]
        %v814 = vld [vmem:[%s204 + $0xfc0] sm:$0xff]
        %v815 = vld [vmem:[%s204 + $0xfc8] sm:$0xff]
        %v816 = vld [vmem:[%s204 + $0xfd0] sm:$0xff]
        %v817 = vld [vmem:[%s204 + $0xfd8] sm:$0xff]
        %v818 = vld [vmem:[%s204 + $0xfe0] sm:$0xff]
        %v819 = vld [vmem:[%s204 + $0xfe8] sm:$0xff]
        %v820 = vld [vmem:[%s204 + $0xff0] sm:$0xff]
        %v821 = vld [vmem:[%s204 + $0xff8] sm:$0xff]
        %v822 = vld [vmem:[%s204 + $0x1000] sm:$0xff]
        %v823 = vld [vmem:[%s204 + $0x1008] sm:$0xff]
        %v824 = vld [vmem:[%s204 + $0x1010] sm:$0xff]
        %v825 = vld [vmem:[%s204 + $0x1018] sm:$0xff]
        %v826 = vld [vmem:[%s204 + $0x1020] sm:$0xff]
        %v827 = vld [vmem:[%s204 + $0x1028] sm:$0xff]
        %v828 = vld [vmem:[%s204 + $0x1030] sm:$0xff]
        %v829 = vld [vmem:[%s204 + $0x1038] sm:$0xff]
        %v830 = vld [vmem:[%s204 + $0x1040] sm:$0xff]
        %v831 = vld [vmem:[%s204 + $0x1048] sm:$0xff]
        %v832 = vld [vmem:[%s204 + $0x1050] sm:$0xff]
        %v833 = vld [vmem:[%s204 + $0x1058] sm:$0xff]
        %v834 = vld [vmem:[%s204 + $0x1060] sm:$0xff]
        %v835 = vld [vmem:[%s204 + $0x1068] sm:$0xff]
        %v836 = vld [vmem:[%s204 + $0x1070] sm:$0xff]
        %v837 = vld [vmem:[%s204 + $0x1078] sm:$0xff]
        %v838 = vld [vmem:[%s204 + $0x1080] sm:$0xff]
        %v839 = vld [vmem:[%s204 + $0x1088] sm:$0xff]
        %v840 = vld [vmem:[%s204 + $0x1090] sm:$0xff]
        %v841 = vld [vmem:[%s204 + $0x1098] sm:$0xff]
        %v842 = vld [vmem:[%s204 + $0x10a0] sm:$0xff]
        %v843 = vld [vmem:[%s204 + $0x10a8] sm:$0xff]
        %v844 = vld [vmem:[%s204 + $0x10b0] sm:$0xff]
        %v845 = vld [vmem:[%s204 + $0x10b8] sm:$0xff]
        %v846 = vld [vmem:[%s204 + $0x10c0] sm:$0xff]
        %v847 = vld [vmem:[%s204 + $0x10c8] sm:$0xff]
        %v848 = vld [vmem:[%s204 + $0x10d0] sm:$0xff]
        %v849 = vld [vmem:[%s204 + $0x10d8] sm:$0xff]
        %v850 = vld [vmem:[%s204 + $0x10e0] sm:$0xff]
        %v851 = vld [vmem:[%s204 + $0x10e8] sm:$0xff]
        %v852 = vld [vmem:[%s204 + $0x10f0] sm:$0xff]
        %v853 = vld [vmem:[%s204 + $0x10f8] sm:$0xff]
        %v854 = vld [vmem:[%s204 + $0x1100] sm:$0xff]
        %v855 = vld [vmem:[%s204 + $0x1108] sm:$0xff]
        %v856 = vld [vmem:[%s204 + $0x1110] sm:$0xff]
        %v857 = vld [vmem:[%s204 + $0x1118] sm:$0xff]
        %v858 = vld [vmem:[%s204 + $0x1120] sm:$0xff]
        %v859 = vld [vmem:[%s204 + $0x1128] sm:$0xff]
        %v860 = vld [vmem:[%s204 + $0x1130] sm:$0xff]
        %v861 = vld [vmem:[%s204 + $0x1138] sm:$0xff]
        %v862 = vld [vmem:[%s204 + $0x1140] sm:$0xff]
        %v863 = vld [vmem:[%s204 + $0x1148] sm:$0xff]
        %v864 = vld [vmem:[%s204 + $0x1150] sm:$0xff]
        %v865 = vld [vmem:[%s204 + $0x1158] sm:$0xff]
        %v866 = vld [vmem:[%s204 + $0x1160] sm:$0xff]
        %v867 = vld [vmem:[%s204 + $0x1168] sm:$0xff]
        %v868 = vld [vmem:[%s204 + $0x1170] sm:$0xff]
        %v869 = vld [vmem:[%s204 + $0x1178] sm:$0xff]
        %v870 = vld [vmem:[%s204 + $0x1180] sm:$0xff]
        %v871 = vld [vmem:[%s204 + $0x1188] sm:$0xff]
        %v872 = vld [vmem:[%s204 + $0x1190] sm:$0xff]
        %v873 = vld [vmem:[%s204 + $0x1198] sm:$0xff]
        %v874 = vld [vmem:[%s204 + $0x11a0] sm:$0xff]
        %v875 = vld [vmem:[%s204 + $0x11a8] sm:$0xff]
        %v876 = vld [vmem:[%s204 + $0x11b0] sm:$0xff]
        %v877 = vld [vmem:[%s204 + $0x11b8] sm:$0xff]
        %v878 = vld [vmem:[%s204 + $0x11c0] sm:$0xff]
        %v879 = vld [vmem:[%s204 + $0x11c8] sm:$0xff]
        %v880 = vld [vmem:[%s204 + $0x11d0] sm:$0xff]
        %v881 = vld [vmem:[%s204 + $0x11d8] sm:$0xff]
        %v882 = vld [vmem:[%s204 + $0x11e0] sm:$0xff]
        %v883 = vld [vmem:[%s204 + $0x11e8] sm:$0xff]
        %v884 = vld [vmem:[%s204 + $0x11f0] sm:$0xff]
        %v885 = vld [vmem:[%s204 + $0x11f8] sm:$0xff]
        %v886 = vld [vmem:[%s204 + $0x1200] sm:$0xff]
        %v887 = vld [vmem:[%s204 + $0x1208] sm:$0xff]
        %v888 = vld [vmem:[%s204 + $0x1210] sm:$0xff]
        %v889 = vld [vmem:[%s204 + $0x1218] sm:$0xff]
        %v890 = vld [vmem:[%s204 + $0x1220] sm:$0xff]
        %v891 = vld [vmem:[%s204 + $0x1228] sm:$0xff]
        %v892 = vld [vmem:[%s204 + $0x1230] sm:$0xff]
        %v893 = vld [vmem:[%s204 + $0x1238] sm:$0xff]
        %v894 = vld [vmem:[%s204 + $0x1240] sm:$0xff]
        %v895 = vld [vmem:[%s204 + $0x1248] sm:$0xff]
        %v896 = vld [vmem:[%s204 + $0x1250] sm:$0xff]
        %v897 = vld [vmem:[%s204 + $0x1258] sm:$0xff]
        %v898 = vld [vmem:[%s204 + $0x1260] sm:$0xff]
        %v899 = vld [vmem:[%s204 + $0x1268] sm:$0xff]
        %v900 = vld [vmem:[%s204 + $0x1270] sm:$0xff]
        %v901 = vld [vmem:[%s204 + $0x1278] sm:$0xff]
        %v902 = vld [vmem:[%s204 + $0x1280] sm:$0xff]
        %v903 = vld [vmem:[%s204 + $0x1288] sm:$0xff]
        %v904 = vld [vmem:[%s204 + $0x1290] sm:$0xff]
        %v905 = vld [vmem:[%s204 + $0x1298] sm:$0xff]
        %v906 = vld [vmem:[%s204 + $0x12a0] sm:$0xff]
        %v907 = vld [vmem:[%s204 + $0x12a8] sm:$0xff]
        %v908 = vld [vmem:[%s204 + $0x12b0] sm:$0xff]
        %v909 = vld [vmem:[%s204 + $0x12b8] sm:$0xff]
        %v910 = vld [vmem:[%s204 + $0x12c0] sm:$0xff]
        %v911 = vld [vmem:[%s204 + $0x12c8] sm:$0xff]
        %v912 = vld [vmem:[%s204 + $0x12d0] sm:$0xff]
        %v913 = vld [vmem:[%s204 + $0x12d8] sm:$0xff]
        %v914 = vld [vmem:[%s204 + $0x12e0] sm:$0xff]
        %v915 = vld [vmem:[%s204 + $0x12e8] sm:$0xff]
        %v916 = vld [vmem:[%s204 + $0x12f0] sm:$0xff]
        %v917 = vld [vmem:[%s204 + $0x12f8] sm:$0xff]
        %v918 = vld [vmem:[%s204 + $0x1300] sm:$0xff]
        %v919 = vld [vmem:[%s204 + $0x1308] sm:$0xff]
        %v920 = vld [vmem:[%s204 + $0x1310] sm:$0xff]
        %v921 = vld [vmem:[%s204 + $0x1318] sm:$0xff]
        %v922 = vld [vmem:[%s204 + $0x1320] sm:$0xff]
        %v923 = vld [vmem:[%s204 + $0x1328] sm:$0xff]
        %v924 = vld [vmem:[%s204 + $0x1330] sm:$0xff]
        %v925 = vld [vmem:[%s204 + $0x1338] sm:$0xff]
        %v926 = vld [vmem:[%s204 + $0x1340] sm:$0xff]
        %v927 = vld [vmem:[%s204 + $0x1348] sm:$0xff]
        %v928 = vld [vmem:[%s204 + $0x1350] sm:$0xff]
        %v929 = vld [vmem:[%s204 + $0x1358] sm:$0xff]
        %v930 = vld [vmem:[%s204 + $0x1360] sm:$0xff]
        %v931 = vld [vmem:[%s204 + $0x1368] sm:$0xff]
        %v932 = vld [vmem:[%s204 + $0x1370] sm:$0xff]
        %v933 = vld [vmem:[%s204 + $0x1378] sm:$0xff]
        %v934 = vld [vmem:[%s204 + $0x1380] sm:$0xff]
        %v935 = vld [vmem:[%s204 + $0x1388] sm:$0xff]
        %v936 = vld [vmem:[%s204 + $0x1390] sm:$0xff]
        %v937 = vld [vmem:[%s204 + $0x1398] sm:$0xff]
        %v938 = vld [vmem:[%s204 + $0x13a0] sm:$0xff]
        %v939 = vld [vmem:[%s204 + $0x13a8] sm:$0xff]
        %v940 = vld [vmem:[%s204 + $0x13b0] sm:$0xff]
        %v941 = vld [vmem:[%s204 + $0x13b8] sm:$0xff]
        %v942 = vld [vmem:[%s204 + $0x13c0] sm:$0xff]
        %v943 = vld [vmem:[%s204 + $0x13c8] sm:$0xff]
        %v944 = vld [vmem:[%s204 + $0x13d0] sm:$0xff]
        %v945 = vld [vmem:[%s204 + $0x13d8] sm:$0xff]
        %v946 = vld [vmem:[%s204 + $0x13e0] sm:$0xff]
        %v947 = vld [vmem:[%s204 + $0x13e8] sm:$0xff]
        %v948 = vld [vmem:[%s204 + $0x13f0] sm:$0xff]
        %v949 = vld [vmem:[%s204 + $0x13f8] sm:$0xff]
        %v950 = vld [vmem:[%s204 + $0x1400] sm:$0xff]
        %v951 = vld [vmem:[%s204 + $0x1408] sm:$0xff]
        %v952 = vld [vmem:[%s204 + $0x1410] sm:$0xff]
        %v953 = vld [vmem:[%s204 + $0x1418] sm:$0xff]
        %v954 = vld [vmem:[%s204 + $0x1420] sm:$0xff]
        %v955 = vld [vmem:[%s204 + $0x1428] sm:$0xff]
        %v956 = vld [vmem:[%s204 + $0x1430] sm:$0xff]
        %v957 = vld [vmem:[%s204 + $0x1438] sm:$0xff]
        %v958 = vld [vmem:[%s204 + $0x1440] sm:$0xff]
        %v959 = vld [vmem:[%s204 + $0x1448] sm:$0xff]
        %v960 = vld [vmem:[%s204 + $0x1450] sm:$0xff]
        %v961 = vld [vmem:[%s204 + $0x1458] sm:$0xff]
        %v962 = vld [vmem:[%s204 + $0x1460] sm:$0xff]
        %v963 = vld [vmem:[%s204 + $0x1468] sm:$0xff]
        %v964 = vld [vmem:[%s204 + $0x1470] sm:$0xff]
        %v965 = vld [vmem:[%s204 + $0x1478] sm:$0xff]
        %v966 = vld [vmem:[%s204 + $0x1480] sm:$0xff]
        %v967 = vld [vmem:[%s204 + $0x1488] sm:$0xff]
        %v968 = vld [vmem:[%s204 + $0x1490] sm:$0xff]
        %v969 = vld [vmem:[%s204 + $0x1498] sm:$0xff]
        %v970 = vld [vmem:[%s204 + $0x14a0] sm:$0xff]
        %v971 = vld [vmem:[%s204 + $0x14a8] sm:$0xff]
        %v972 = vld [vmem:[%s204 + $0x14b0] sm:$0xff]
        %v973 = vld [vmem:[%s204 + $0x14b8] sm:$0xff]
        %v974 = vld [vmem:[%s204 + $0x14c0] sm:$0xff]
        %v975 = vld [vmem:[%s204 + $0x14c8] sm:$0xff]
        %v976 = vld [vmem:[%s204 + $0x14d0] sm:$0xff]
        %v977 = vld [vmem:[%s204 + $0x14d8] sm:$0xff]
        %v978 = vld [vmem:[%s204 + $0x14e0] sm:$0xff]
        %v979 = vld [vmem:[%s204 + $0x14e8] sm:$0xff]
        %v980 = vld [vmem:[%s204 + $0x14f0] sm:$0xff]
        %v981 = vld [vmem:[%s204 + $0x14f8] sm:$0xff]
        %v982 = vld [vmem:[%s204 + $0x1500] sm:$0xff]
        %v983 = vld [vmem:[%s204 + $0x1508] sm:$0xff]
        %v984 = vld [vmem:[%s204 + $0x1510] sm:$0xff]
        %v985 = vld [vmem:[%s204 + $0x1518] sm:$0xff]
        %v986 = vld [vmem:[%s204 + $0x1520] sm:$0xff]
        %v987 = vld [vmem:[%s204 + $0x1528] sm:$0xff]
        %v988 = vld [vmem:[%s204 + $0x1530] sm:$0xff]
        %v989 = vld [vmem:[%s204 + $0x1538] sm:$0xff]
        %v990 = vld [vmem:[%s204 + $0x1540] sm:$0xff]
        %v991 = vld [vmem:[%s204 + $0x1548] sm:$0xff]
        %v992 = vld [vmem:[%s204 + $0x1550] sm:$0xff]
        %v993 = vld [vmem:[%s204 + $0x1558] sm:$0xff]
        %v994 = vld [vmem:[%s204 + $0x1560] sm:$0xff]
        %v995 = vld [vmem:[%s204 + $0x1568] sm:$0xff]
        %v996 = vld [vmem:[%s204 + $0x1570] sm:$0xff]
        %v997 = vld [vmem:[%s204 + $0x1578] sm:$0xff]
        %v998 = vld [vmem:[%s204 + $0x1580] sm:$0xff]
        %v999 = vld [vmem:[%s204 + $0x1588] sm:$0xff]
        %v1000 = vld [vmem:[%s204 + $0x1590] sm:$0xff]
        %v1001 = vld [vmem:[%s204 + $0x1598] sm:$0xff]
        %v1002 = vld [vmem:[%s204 + $0x15a0] sm:$0xff]
        %v1003 = vld [vmem:[%s204 + $0x15a8] sm:$0xff]
        %v1004 = vld [vmem:[%s204 + $0x15b0] sm:$0xff]
        %v1005 = vld [vmem:[%s204 + $0x15b8] sm:$0xff]
        %v1006 = vld [vmem:[%s204 + $0x15c0] sm:$0xff]
        %v1007 = vld [vmem:[%s204 + $0x15c8] sm:$0xff]
        %v1008 = vld [vmem:[%s204 + $0x15d0] sm:$0xff]
        %v1009 = vld [vmem:[%s204 + $0x15d8] sm:$0xff]
        %v1010 = vld [vmem:[%s204 + $0x15e0] sm:$0xff]
        %v1011 = vld [vmem:[%s204 + $0x15e8] sm:$0xff]
        %v1012 = vld [vmem:[%s204 + $0x15f0] sm:$0xff]
        %v1013 = vld [vmem:[%s204 + $0x15f8] sm:$0xff]
        %v1014 = vld [vmem:[%s204 + $0x1600] sm:$0xff]
        %v1015 = vld [vmem:[%s204 + $0x1608] sm:$0xff]
        %v1016 = vld [vmem:[%s204 + $0x1610] sm:$0xff]
        %v1017 = vld [vmem:[%s204 + $0x1618] sm:$0xff]
        %v1018 = vld [vmem:[%s204 + $0x1620] sm:$0xff]
        %v1019 = vld [vmem:[%s204 + $0x1628] sm:$0xff]
        %v1020 = vld [vmem:[%s204 + $0x1630] sm:$0xff]
        %v1021 = vld [vmem:[%s204 + $0x1638] sm:$0xff]
        %v1022 = vld [vmem:[%s204 + $0x1640] sm:$0xff]
        %v1023 = vld [vmem:[%s204 + $0x1648] sm:$0xff]
        %v1024 = vld [vmem:[%s204 + $0x1650] sm:$0xff]
        %v1025 = vld [vmem:[%s204 + $0x1658] sm:$0xff]
        %v1026 = vld [vmem:[%s204 + $0x1660] sm:$0xff]
        %v1027 = vld [vmem:[%s204 + $0x1668] sm:$0xff]
        %v1028 = vld [vmem:[%s204 + $0x1670] sm:$0xff]
        %v1029 = vld [vmem:[%s204 + $0x1678] sm:$0xff]
        %v1030 = vld [vmem:[%s204 + $0x1680] sm:$0xff]
        %v1031 = vld [vmem:[%s204 + $0x1688] sm:$0xff]
        %v1032 = vld [vmem:[%s204 + $0x1690] sm:$0xff]
        %v1033 = vld [vmem:[%s204 + $0x1698] sm:$0xff]
        %v1034 = vld [vmem:[%s204 + $0x16a0] sm:$0xff]
        %v1035 = vld [vmem:[%s204 + $0x16a8] sm:$0xff]
        %v1036 = vld [vmem:[%s204 + $0x16b0] sm:$0xff]
        %v1037 = vld [vmem:[%s204 + $0x16b8] sm:$0xff]
        %v1038 = vld [vmem:[%s204 + $0x16c0] sm:$0xff]
        %v1039 = vld [vmem:[%s204 + $0x16c8] sm:$0xff]
        %v1040 = vld [vmem:[%s204 + $0x16d0] sm:$0xff]
        %v1041 = vld [vmem:[%s204 + $0x16d8] sm:$0xff]
        %v1042 = vld [vmem:[%s204 + $0x16e0] sm:$0xff]
        %v1043 = vld [vmem:[%s204 + $0x16e8] sm:$0xff]
        %v1044 = vld [vmem:[%s204 + $0x16f0] sm:$0xff]
        %v1045 = vld [vmem:[%s204 + $0x16f8] sm:$0xff]
        %v1046 = vld [vmem:[%s204 + $0x1700] sm:$0xff]
        %v1047 = vld [vmem:[%s204 + $0x1708] sm:$0xff]
        %v1048 = vld [vmem:[%s204 + $0x1710] sm:$0xff]
        %v1049 = vld [vmem:[%s204 + $0x1718] sm:$0xff]
        %v1050 = vld [vmem:[%s204 + $0x1720] sm:$0xff]
        %v1051 = vld [vmem:[%s204 + $0x1728] sm:$0xff]
        %v1052 = vld [vmem:[%s204 + $0x1730] sm:$0xff]
        %v1053 = vld [vmem:[%s204 + $0x1738] sm:$0xff]
        %v1054 = vld [vmem:[%s204 + $0x1740] sm:$0xff]
        %v1055 = vld [vmem:[%s204 + $0x1748] sm:$0xff]
        %v1056 = vld [vmem:[%s204 + $0x1750] sm:$0xff]
        %v1057 = vld [vmem:[%s204 + $0x1758] sm:$0xff]
        %v1058 = vld [vmem:[%s204 + $0x1760] sm:$0xff]
        %v1059 = vld [vmem:[%s204 + $0x1768] sm:$0xff]
        %v1060 = vld [vmem:[%s204 + $0x1770] sm:$0xff]
        %v1061 = vld [vmem:[%s204 + $0x1778] sm:$0xff]
        %v1062 = vld [vmem:[%s204 + $0x1780] sm:$0xff]
        %v1063 = vld [vmem:[%s204 + $0x1788] sm:$0xff]
        %v1064 = vld [vmem:[%s204 + $0x1790] sm:$0xff]
        %v1065 = vld [vmem:[%s204 + $0x1798] sm:$0xff]
        %v1066 = vld [vmem:[%s204 + $0x17a0] sm:$0xff]
        %v1067 = vld [vmem:[%s204 + $0x17a8] sm:$0xff]
        %v1068 = vld [vmem:[%s204 + $0x17b0] sm:$0xff]
        %v1069 = vld [vmem:[%s204 + $0x17b8] sm:$0xff]
        %v1070 = vld [vmem:[%s204 + $0x17c0] sm:$0xff]
        %v1071 = vld [vmem:[%s204 + $0x17c8] sm:$0xff]
        %v1072 = vld [vmem:[%s204 + $0x17d0] sm:$0xff]
        %v1073 = vld [vmem:[%s204 + $0x17d8] sm:$0xff]
        %v1074 = vld [vmem:[%s204 + $0x17e0] sm:$0xff]
        %v1075 = vld [vmem:[%s204 + $0x17e8] sm:$0xff]
        %v1076 = vld [vmem:[%s204 + $0x17f0] sm:$0xff]
        %v1077 = vld [vmem:[%s204 + $0x17f8] sm:$0xff]
        %v1078 = vld [vmem:[%s204 + $0x1800] sm:$0xff]
        %v1079 = vld [vmem:[%s204 + $0x1808] sm:$0xff]
        %v1080 = vld [vmem:[%s204 + $0x1810] sm:$0xff]
        %v1081 = vld [vmem:[%s204 + $0x1818] sm:$0xff]
        %v1082 = vld [vmem:[%s204 + $0x1820] sm:$0xff]
        %v1083 = vld [vmem:[%s204 + $0x1828] sm:$0xff]
        %v1084 = vld [vmem:[%s204 + $0x1830] sm:$0xff]
        %v1085 = vld [vmem:[%s204 + $0x1838] sm:$0xff]
        %v1086 = vld [vmem:[%s204 + $0x1840] sm:$0xff]
        %v1087 = vld [vmem:[%s204 + $0x1848] sm:$0xff]
        %v1088 = vld [vmem:[%s204 + $0x1850] sm:$0xff]
        %v1089 = vld [vmem:[%s204 + $0x1858] sm:$0xff]
        %v1090 = vld [vmem:[%s204 + $0x1860] sm:$0xff]
        %v1091 = vld [vmem:[%s204 + $0x1868] sm:$0xff]
        %v1092 = vld [vmem:[%s204 + $0x1870] sm:$0xff]
        %v1093 = vld [vmem:[%s204 + $0x1878] sm:$0xff]
        %v1094 = vld [vmem:[%s204 + $0x1880] sm:$0xff]
        %v1095 = vld [vmem:[%s204 + $0x1888] sm:$0xff]
        %v1096 = vld [vmem:[%s204 + $0x1890] sm:$0xff]
        %v1097 = vld [vmem:[%s204 + $0x1898] sm:$0xff]
        %v1098 = vld [vmem:[%s204 + $0x18a0] sm:$0xff]
        %v1099 = vld [vmem:[%s204 + $0x18a8] sm:$0xff]
        %v1100 = vld [vmem:[%s204 + $0x18b0] sm:$0xff]
        %v1101 = vld [vmem:[%s204 + $0x18b8] sm:$0xff]
        %v1102 = vld [vmem:[%s204 + $0x18c0] sm:$0xff]
        %v1103 = vld [vmem:[%s204 + $0x18c8] sm:$0xff]
        %v1104 = vld [vmem:[%s204 + $0x18d0] sm:$0xff]
        %v1105 = vld [vmem:[%s204 + $0x18d8] sm:$0xff]
        %v1106 = vld [vmem:[%s204 + $0x18e0] sm:$0xff]
        %v1107 = vld [vmem:[%s204 + $0x18e8] sm:$0xff]
        %v1108 = vld [vmem:[%s204 + $0x18f0] sm:$0xff]
        %v1109 = vld [vmem:[%s204 + $0x18f8] sm:$0xff]
        %v1110 = vld [vmem:[%s204 + $0x1900] sm:$0xff]
        %v1111 = vld [vmem:[%s204 + $0x1908] sm:$0xff]
        %v1112 = vld [vmem:[%s204 + $0x1910] sm:$0xff]
        %v1113 = vld [vmem:[%s204 + $0x1918] sm:$0xff]
        %v1114 = vld [vmem:[%s204 + $0x1920] sm:$0xff]
        %v1115 = vld [vmem:[%s204 + $0x1928] sm:$0xff]
        %v1116 = vld [vmem:[%s204 + $0x1930] sm:$0xff]
        %v1117 = vld [vmem:[%s204 + $0x1938] sm:$0xff]
        %v1118 = vld [vmem:[%s204 + $0x1940] sm:$0xff]
        %v1119 = vld [vmem:[%s204 + $0x1948] sm:$0xff]
        %v1120 = vld [vmem:[%s204 + $0x1950] sm:$0xff]
        %v1121 = vld [vmem:[%s204 + $0x1958] sm:$0xff]
        %v1122 = vld [vmem:[%s204 + $0x1960] sm:$0xff]
        %v1123 = vld [vmem:[%s204 + $0x1968] sm:$0xff]
        %v1124 = vld [vmem:[%s204 + $0x1970] sm:$0xff]
        %v1125 = vld [vmem:[%s204 + $0x1978] sm:$0xff]
        %v1126 = vld [vmem:[%s204 + $0x1980] sm:$0xff]
        %v1127 = vld [vmem:[%s204 + $0x1988] sm:$0xff]
        %v1128 = vld [vmem:[%s204 + $0x1990] sm:$0xff]
        %v1129 = vld [vmem:[%s204 + $0x1998] sm:$0xff]
        %v1130 = vld [vmem:[%s204 + $0x19a0] sm:$0xff]
        %v1131 = vld [vmem:[%s204 + $0x19a8] sm:$0xff]
        %v1132 = vld [vmem:[%s204 + $0x19b0] sm:$0xff]
        %v1133 = vld [vmem:[%s204 + $0x19b8] sm:$0xff]
        %v1134 = vld [vmem:[%s204 + $0x19c0] sm:$0xff]
        %v1135 = vld [vmem:[%s204 + $0x19c8] sm:$0xff]
        %v1136 = vld [vmem:[%s204 + $0x19d0] sm:$0xff]
        %v1137 = vld [vmem:[%s204 + $0x19d8] sm:$0xff]
        %v1138 = vld [vmem:[%s204 + $0x19e0] sm:$0xff]
        %v1139 = vld [vmem:[%s204 + $0x19e8] sm:$0xff]
        %v1140 = vld [vmem:[%s204 + $0x19f0] sm:$0xff]
        %v1141 = vld [vmem:[%s204 + $0x19f8] sm:$0xff]
        %v1142 = vld [vmem:[%s204 + $0x1a00] sm:$0xff]
        %v1143 = vld [vmem:[%s204 + $0x1a08] sm:$0xff]
        %v1144 = vld [vmem:[%s204 + $0x1a10] sm:$0xff]
        %v1145 = vld [vmem:[%s204 + $0x1a18] sm:$0xff]
        %v1146 = vld [vmem:[%s204 + $0x1a20] sm:$0xff]
        %v1147 = vld [vmem:[%s204 + $0x1a28] sm:$0xff]
        %v1148 = vld [vmem:[%s204 + $0x1a30] sm:$0xff]
        %v1149 = vld [vmem:[%s204 + $0x1a38] sm:$0xff]
        %v1150 = vld [vmem:[%s204 + $0x1a40] sm:$0xff]
        %v1151 = vld [vmem:[%s204 + $0x1a48] sm:$0xff]
        %v1152 = vld [vmem:[%s204 + $0x1a50] sm:$0xff]
        %v1153 = vld [vmem:[%s204 + $0x1a58] sm:$0xff]
        %v1154 = vld [vmem:[%s204 + $0x1a60] sm:$0xff]
        %v1155 = vld [vmem:[%s204 + $0x1a68] sm:$0xff]
        %v1156 = vld [vmem:[%s204 + $0x1a70] sm:$0xff]
        %v1157 = vld [vmem:[%s204 + $0x1a78] sm:$0xff]
        %v1158 = vld [vmem:[%s204 + $0x1a80] sm:$0xff]
        %v1159 = vld [vmem:[%s204 + $0x1a88] sm:$0xff]
        %v1160 = vld [vmem:[%s204 + $0x1a90] sm:$0xff]
        %v1161 = vld [vmem:[%s204 + $0x1a98] sm:$0xff]
        %v1162 = vld [vmem:[%s204 + $0x1aa0] sm:$0xff]
        %v1163 = vld [vmem:[%s204 + $0x1aa8] sm:$0xff]
        %v1164 = vld [vmem:[%s204 + $0x1ab0] sm:$0xff]
        %v1165 = vld [vmem:[%s204 + $0x1ab8] sm:$0xff]
        %v1166 = vld [vmem:[%s204 + $0x1ac0] sm:$0xff]
        %v1167 = vld [vmem:[%s204 + $0x1ac8] sm:$0xff]
        %v1168 = vld [vmem:[%s204 + $0x1ad0] sm:$0xff]
        %v1169 = vld [vmem:[%s204 + $0x1ad8] sm:$0xff]
        %v1170 = vld [vmem:[%s204 + $0x1ae0] sm:$0xff]
        %v1171 = vld [vmem:[%s204 + $0x1ae8] sm:$0xff]
        %v1172 = vld [vmem:[%s204 + $0x1af0] sm:$0xff]
        %v1173 = vld [vmem:[%s204 + $0x1af8] sm:$0xff]
        %v1174 = vld [vmem:[%s204 + $0x1b00] sm:$0xff]
        %v1175 = vld [vmem:[%s204 + $0x1b08] sm:$0xff]
        %v1176 = vld [vmem:[%s204 + $0x1b10] sm:$0xff]
        %v1177 = vld [vmem:[%s204 + $0x1b18] sm:$0xff]
        %v1178 = vld [vmem:[%s204 + $0x1b20] sm:$0xff]
        %v1179 = vld [vmem:[%s204 + $0x1b28] sm:$0xff]
        %v1180 = vld [vmem:[%s204 + $0x1b30] sm:$0xff]
        %v1181 = vld [vmem:[%s204 + $0x1b38] sm:$0xff]
        %v1182 = vld [vmem:[%s204 + $0x1b40] sm:$0xff]
        %v1183 = vld [vmem:[%s204 + $0x1b48] sm:$0xff]
        %v1184 = vld [vmem:[%s204 + $0x1b50] sm:$0xff]
        %v1185 = vld [vmem:[%s204 + $0x1b58] sm:$0xff]
        %v1186 = vld [vmem:[%s204 + $0x1b60] sm:$0xff]
        %v1187 = vld [vmem:[%s204 + $0x1b68] sm:$0xff]
        %v1188 = vld [vmem:[%s204 + $0x1b70] sm:$0xff]
        %v1189 = vld [vmem:[%s204 + $0x1b78] sm:$0xff]
        %v1190 = vld [vmem:[%s204 + $0x1b80] sm:$0xff]
        %v1191 = vld [vmem:[%s204 + $0x1b88] sm:$0xff]
        %v1192 = vld [vmem:[%s204 + $0x1b90] sm:$0xff]
        %v1193 = vld [vmem:[%s204 + $0x1b98] sm:$0xff]
        %v1194 = vld [vmem:[%s204 + $0x1ba0] sm:$0xff]
        %v1195 = vld [vmem:[%s204 + $0x1ba8] sm:$0xff]
        %v1196 = vld [vmem:[%s204 + $0x1bb0] sm:$0xff]
        %v1197 = vld [vmem:[%s204 + $0x1bb8] sm:$0xff]
        %v1198 = vld [vmem:[%s204 + $0x1bc0] sm:$0xff]
        %v1199 = vld [vmem:[%s204 + $0x1bc8] sm:$0xff]
        %v1200 = vld [vmem:[%s204 + $0x1bd0] sm:$0xff]
        %v1201 = vld [vmem:[%s204 + $0x1bd8] sm:$0xff]
        %v1202 = vld [vmem:[%s204 + $0x1be0] sm:$0xff]
        %v1203 = vld [vmem:[%s204 + $0x1be8] sm:$0xff]
        %v1204 = vld [vmem:[%s204 + $0x1bf0] sm:$0xff]
        %v1205 = vld [vmem:[%s204 + $0x1bf8] sm:$0xff]
        %v1206 = vld [vmem:[%s204 + $0x1c00] sm:$0xff]
        %v1207 = vld [vmem:[%s204 + $0x1c08] sm:$0xff]
        %v1208 = vld [vmem:[%s204 + $0x1c10] sm:$0xff]
        %v1209 = vld [vmem:[%s204 + $0x1c18] sm:$0xff]
        %v1210 = vld [vmem:[%s204 + $0x1c20] sm:$0xff]
        %v1211 = vld [vmem:[%s204 + $0x1c28] sm:$0xff]
        %v1212 = vld [vmem:[%s204 + $0x1c30] sm:$0xff]
        %v1213 = vld [vmem:[%s204 + $0x1c38] sm:$0xff]
        %v1214 = vld [vmem:[%s204 + $0x1c40] sm:$0xff]
        %v1215 = vld [vmem:[%s204 + $0x1c48] sm:$0xff]
        %v1216 = vld [vmem:[%s204 + $0x1c50] sm:$0xff]
        %v1217 = vld [vmem:[%s204 + $0x1c58] sm:$0xff]
        %v1218 = vld [vmem:[%s204 + $0x1c60] sm:$0xff]
        %v1219 = vld [vmem:[%s204 + $0x1c68] sm:$0xff]
        %v1220 = vld [vmem:[%s204 + $0x1c70] sm:$0xff]
        %v1221 = vld [vmem:[%s204 + $0x1c78] sm:$0xff]
        %v1222 = vld [vmem:[%s204 + $0x1c80] sm:$0xff]
        %v1223 = vld [vmem:[%s204 + $0x1c88] sm:$0xff]
        %v1224 = vld [vmem:[%s204 + $0x1c90] sm:$0xff]
        %v1225 = vld [vmem:[%s204 + $0x1c98] sm:$0xff]
        %v1226 = vld [vmem:[%s204 + $0x1ca0] sm:$0xff]
        %v1227 = vld [vmem:[%s204 + $0x1ca8] sm:$0xff]
        %v1228 = vld [vmem:[%s204 + $0x1cb0] sm:$0xff]
        %v1229 = vld [vmem:[%s204 + $0x1cb8] sm:$0xff]
        %v1230 = vld [vmem:[%s204 + $0x1cc0] sm:$0xff]
        %v1231 = vld [vmem:[%s204 + $0x1cc8] sm:$0xff]
        %v1232 = vld [vmem:[%s204 + $0x1cd0] sm:$0xff]
        %v1233 = vld [vmem:[%s204 + $0x1cd8] sm:$0xff]
        %v1234 = vld [vmem:[%s204 + $0x1ce0] sm:$0xff]
        %v1235 = vld [vmem:[%s204 + $0x1ce8] sm:$0xff]
        %v1236 = vld [vmem:[%s204 + $0x1cf0] sm:$0xff]
        %v1237 = vld [vmem:[%s204 + $0x1cf8] sm:$0xff]
        %v1238 = vld [vmem:[%s204 + $0x1d00] sm:$0xff]
        %v1239 = vld [vmem:[%s204 + $0x1d08] sm:$0xff]
        %v1240 = vld [vmem:[%s204 + $0x1d10] sm:$0xff]
        %v1241 = vld [vmem:[%s204 + $0x1d18] sm:$0xff]
        %v1242 = vld [vmem:[%s204 + $0x1d20] sm:$0xff]
        %v1243 = vld [vmem:[%s204 + $0x1d28] sm:$0xff]
        %v1244 = vld [vmem:[%s204 + $0x1d30] sm:$0xff]
        %v1245 = vld [vmem:[%s204 + $0x1d38] sm:$0xff]
        %v1246 = vld [vmem:[%s204 + $0x1d40] sm:$0xff]
        %v1247 = vld [vmem:[%s204 + $0x1d48] sm:$0xff]
        %v1248 = vld [vmem:[%s204 + $0x1d50] sm:$0xff]
        %v1249 = vld [vmem:[%s204 + $0x1d58] sm:$0xff]
        %v1250 = vld [vmem:[%s204 + $0x1d60] sm:$0xff]
        %v1251 = vld [vmem:[%s204 + $0x1d68] sm:$0xff]
        %v1252 = vld [vmem:[%s204 + $0x1d70] sm:$0xff]
        %v1253 = vld [vmem:[%s204 + $0x1d78] sm:$0xff]
        %v1254 = vld [vmem:[%s204 + $0x1d80] sm:$0xff]
        %v1255 = vld [vmem:[%s204 + $0x1d88] sm:$0xff]
        %v1256 = vld [vmem:[%s204 + $0x1d90] sm:$0xff]
        %v1257 = vld [vmem:[%s204 + $0x1d98] sm:$0xff]
        %v1258 = vld [vmem:[%s204 + $0x1da0] sm:$0xff]
        %v1259 = vld [vmem:[%s204 + $0x1da8] sm:$0xff]
        %v1260 = vld [vmem:[%s204 + $0x1db0] sm:$0xff]
        %v1261 = vld [vmem:[%s204 + $0x1db8] sm:$0xff]
        %v1262 = vld [vmem:[%s204 + $0x1dc0] sm:$0xff]
        %v1263 = vld [vmem:[%s204 + $0x1dc8] sm:$0xff]
        %v1264 = vld [vmem:[%s204 + $0x1dd0] sm:$0xff]
        %v1265 = vld [vmem:[%s204 + $0x1dd8] sm:$0xff]
        %v1266 = vld [vmem:[%s204 + $0x1de0] sm:$0xff]
        %v1267 = vld [vmem:[%s204 + $0x1de8] sm:$0xff]
        %v1268 = vld [vmem:[%s204 + $0x1df0] sm:$0xff]
        %v1269 = vld [vmem:[%s204 + $0x1df8] sm:$0xff]
        %v1270 = vld [vmem:[%s204 + $0x1e00] sm:$0xff]
        %v1271 = vld [vmem:[%s204 + $0x1e08] sm:$0xff]
        %v1272 = vld [vmem:[%s204 + $0x1e10] sm:$0xff]
        %v1273 = vld [vmem:[%s204 + $0x1e18] sm:$0xff]
        %v1274 = vld [vmem:[%s204 + $0x1e20] sm:$0xff]
        %v1275 = vld [vmem:[%s204 + $0x1e28] sm:$0xff]
        %v1276 = vld [vmem:[%s204 + $0x1e30] sm:$0xff]
        %v1277 = vld [vmem:[%s204 + $0x1e38] sm:$0xff]
        %v1278 = vld [vmem:[%s204 + $0x1e40] sm:$0xff]
        %v1279 = vld [vmem:[%s204 + $0x1e48] sm:$0xff]
        %v1280 = vld [vmem:[%s204 + $0x1e50] sm:$0xff]
        %v1281 = vld [vmem:[%s204 + $0x1e58] sm:$0xff]
        %v1282 = vld [vmem:[%s204 + $0x1e60] sm:$0xff]
        %v1283 = vld [vmem:[%s204 + $0x1e68] sm:$0xff]
        %v1284 = vld [vmem:[%s204 + $0x1e70] sm:$0xff]
        %v1285 = vld [vmem:[%s204 + $0x1e78] sm:$0xff]
        %v1286 = vld [vmem:[%s204 + $0x1e80] sm:$0xff]
        %v1287 = vld [vmem:[%s204 + $0x1e88] sm:$0xff]
        %v1288 = vld [vmem:[%s204 + $0x1e90] sm:$0xff]
        %v1289 = vld [vmem:[%s204 + $0x1e98] sm:$0xff]
        %v1290 = vld [vmem:[%s204 + $0x1ea0] sm:$0xff]
        %v1291 = vld [vmem:[%s204 + $0x1ea8] sm:$0xff]
        %v1292 = vld [vmem:[%s204 + $0x1eb0] sm:$0xff]
        %v1293 = vld [vmem:[%s204 + $0x1eb8] sm:$0xff]
        %v1294 = vld [vmem:[%s204 + $0x1ec0] sm:$0xff]
        %v1295 = vld [vmem:[%s204 + $0x1ec8] sm:$0xff]
        %v1296 = vld [vmem:[%s204 + $0x1ed0] sm:$0xff]
        %v1297 = vld [vmem:[%s204 + $0x1ed8] sm:$0xff]
        %v1298 = vld [vmem:[%s204 + $0x1ee0] sm:$0xff]
        %v1299 = vld [vmem:[%s204 + $0x1ee8] sm:$0xff]
        %v1300 = vld [vmem:[%s204 + $0x1ef0] sm:$0xff]
        %v1301 = vld [vmem:[%s204 + $0x1ef8] sm:$0xff]
        %v1302 = vld [vmem:[%s204 + $0x1f00] sm:$0xff]
        %v1303 = vld [vmem:[%s204 + $0x1f08] sm:$0xff]
        %v1304 = vld [vmem:[%s204 + $0x1f10] sm:$0xff]
        %v1305 = vld [vmem:[%s204 + $0x1f18] sm:$0xff]
        %v1306 = vld [vmem:[%s204 + $0x1f20] sm:$0xff]
        %v1307 = vld [vmem:[%s204 + $0x1f28] sm:$0xff]
        %v1308 = vld [vmem:[%s204 + $0x1f30] sm:$0xff]
        %v1309 = vld [vmem:[%s204 + $0x1f38] sm:$0xff]
        %v1310 = vld [vmem:[%s204 + $0x1f40] sm:$0xff]
        %v1311 = vld [vmem:[%s204 + $0x1f48] sm:$0xff]
        %v1312 = vld [vmem:[%s204 + $0x1f50] sm:$0xff]
        %v1313 = vld [vmem:[%s204 + $0x1f58] sm:$0xff]
        %v1314 = vld [vmem:[%s204 + $0x1f60] sm:$0xff]
        %v1315 = vld [vmem:[%s204 + $0x1f68] sm:$0xff]
        %v1316 = vld [vmem:[%s204 + $0x1f70] sm:$0xff]
        %v1317 = vld [vmem:[%s204 + $0x1f78] sm:$0xff]
        %v1318 = vld [vmem:[%s204 + $0x1f80] sm:$0xff]
        %v1319 = vld [vmem:[%s204 + $0x1f88] sm:$0xff]
        %v1320 = vld [vmem:[%s204 + $0x1f90] sm:$0xff]
        %v1321 = vld [vmem:[%s204 + $0x1f98] sm:$0xff]
        %v1322 = vld [vmem:[%s204 + $0x1fa0] sm:$0xff]
        %v1323 = vld [vmem:[%s204 + $0x1fa8] sm:$0xff]
        %v1324 = vld [vmem:[%s204 + $0x1fb0] sm:$0xff]
        %v1325 = vld [vmem:[%s204 + $0x1fb8] sm:$0xff]
        %v1326 = vld [vmem:[%s204 + $0x1fc0] sm:$0xff]
        %v1327 = vld [vmem:[%s204 + $0x1fc8] sm:$0xff]
        %v1328 = vld [vmem:[%s204 + $0x1fd0] sm:$0xff]
        %v1329 = vld [vmem:[%s204 + $0x1fd8] sm:$0xff]
        %v1330 = vld [vmem:[%s204 + $0x1fe0] sm:$0xff]
        %v1331 = vld [vmem:[%s204 + $0x1fe8] sm:$0xff]
        %v1332 = vld [vmem:[%s204 + $0x1ff0] sm:$0xff]
        %v1333 = vld [vmem:[%s204 + $0x1ff8] sm:$0xff]
        %v1338 = vcombine.high %v306, %v306
        %v1340 = vunpack.c.l.s4 1966171168
        %v1341 = vunpack.c.0.s8 %v1340
        %v1342 = vlaneseq
        %v1343 = vshrl.u32 %v1342, 7
        %v1344 = vsub.s32 %v1341, %v1343
        %v1345 = vrot.slane %v306, %v1344
        %v1347 = vunpack.c.l.s4 1966171168
        %v1348 = vunpack.c.0.s8 %v1347
        %v1349 = vlaneseq
        %v1350 = vshrl.u32 %v1349, 7
        %v1351 = vsub.s32 %v1348, %v1350
        %v1352 = vrot.slane %v1338, %v1351
        %v1353 = vcombine.high %v1345, %v1345
        %v1354 = vcombine.high %v1352, %v1352
        %v1356 = vunpack.c.l.s4 1966171168
        %v1357 = vunpack.c.0.s8 %v1356
        %v1358 = vlaneseq
        %v1359 = vshrl.u32 %v1358, 7
        %v1360 = vsub.s32 %v1357, %v1359
        %v1361 = vrot.slane %v1345, %v1360
        %v1363 = vunpack.c.l.s4 1966171168
        %v1364 = vunpack.c.0.s8 %v1363
        %v1365 = vlaneseq
        %v1366 = vshrl.u32 %v1365, 7
        %v1367 = vsub.s32 %v1364, %v1366
        %v1368 = vrot.slane %v1352, %v1367
        %v1370 = vunpack.c.l.s4 1966171168
        %v1371 = vunpack.c.0.s8 %v1370
        %v1372 = vlaneseq
        %v1373 = vshrl.u32 %v1372, 7
        %v1374 = vsub.s32 %v1371, %v1373
        %v1375 = vrot.slane %v1353, %v1374
        %v1377 = vunpack.c.l.s4 1966171168
        %v1378 = vunpack.c.0.s8 %v1377
        %v1379 = vlaneseq
        %v1380 = vshrl.u32 %v1379, 7
        %v1381 = vsub.s32 %v1378, %v1380
        %v1382 = vrot.slane %v1354, %v1381
        %v1383 = vcombine.high %v1361, %v1361
        %v1384 = vcombine.high %v1368, %v1368
        %v1385 = vcombine.high %v1375, %v1375
        %v1386 = vcombine.high %v1382, %v1382
        %v1387 = vcombine.high %v307, %v307
        %v1389 = vunpack.c.l.s4 1966171168
        %v1390 = vunpack.c.0.s8 %v1389
        %v1391 = vlaneseq
        %v1392 = vshrl.u32 %v1391, 7
        %v1393 = vsub.s32 %v1390, %v1392
        %v1394 = vrot.slane %v307, %v1393
        %v1396 = vunpack.c.l.s4 1966171168
        %v1397 = vunpack.c.0.s8 %v1396
        %v1398 = vlaneseq
        %v1399 = vshrl.u32 %v1398, 7
        %v1400 = vsub.s32 %v1397, %v1399
        %v1401 = vrot.slane %v1387, %v1400
        %v1402 = vcombine.high %v1394, %v1394
        %v1403 = vcombine.high %v1401, %v1401
        %v1405 = vunpack.c.l.s4 1966171168
        %v1406 = vunpack.c.0.s8 %v1405
        %v1407 = vlaneseq
        %v1408 = vshrl.u32 %v1407, 7
        %v1409 = vsub.s32 %v1406, %v1408
        %v1410 = vrot.slane %v1394, %v1409
        %v1412 = vunpack.c.l.s4 1966171168
        %v1413 = vunpack.c.0.s8 %v1412
        %v1414 = vlaneseq
        %v1415 = vshrl.u32 %v1414, 7
        %v1416 = vsub.s32 %v1413, %v1415
        %v1417 = vrot.slane %v1401, %v1416
        %v1419 = vunpack.c.l.s4 1966171168
        %v1420 = vunpack.c.0.s8 %v1419
        %v1421 = vlaneseq
        %v1422 = vshrl.u32 %v1421, 7
        %v1423 = vsub.s32 %v1420, %v1422
        %v1424 = vrot.slane %v1402, %v1423
        %v1426 = vunpack.c.l.s4 1966171168
        %v1427 = vunpack.c.0.s8 %v1426
        %v1428 = vlaneseq
        %v1429 = vshrl.u32 %v1428, 7
        %v1430 = vsub.s32 %v1427, %v1429
        %v1431 = vrot.slane %v1403, %v1430
        %v1432 = vcombine.high %v1410, %v1410
        %v1433 = vcombine.high %v1417, %v1417
        %v1434 = vcombine.high %v1424, %v1424
        %v1435 = vcombine.high %v1431, %v1431
        %v1436 = vcombine.high %v308, %v308
        %v1438 = vunpack.c.l.s4 1966171168
        %v1439 = vunpack.c.0.s8 %v1438
        %v1440 = vlaneseq
        %v1441 = vshrl.u32 %v1440, 7
        %v1442 = vsub.s32 %v1439, %v1441
        %v1443 = vrot.slane %v308, %v1442
        %v1445 = vunpack.c.l.s4 1966171168
        %v1446 = vunpack.c.0.s8 %v1445
        %v1447 = vlaneseq
        %v1448 = vshrl.u32 %v1447, 7
        %v1449 = vsub.s32 %v1446, %v1448
        %v1450 = vrot.slane %v1436, %v1449
        %v1451 = vcombine.high %v1443, %v1443
        %v1452 = vcombine.high %v1450, %v1450
        %v1454 = vunpack.c.l.s4 1966171168
        %v1455 = vunpack.c.0.s8 %v1454
        %v1456 = vlaneseq
        %v1457 = vshrl.u32 %v1456, 7
        %v1458 = vsub.s32 %v1455, %v1457
        %v1459 = vrot.slane %v1443, %v1458
        %v1461 = vunpack.c.l.s4 1966171168
        %v1462 = vunpack.c.0.s8 %v1461
        %v1463 = vlaneseq
        %v1464 = vshrl.u32 %v1463, 7
        %v1465 = vsub.s32 %v1462, %v1464
        %v1466 = vrot.slane %v1450, %v1465
        %v1468 = vunpack.c.l.s4 1966171168
        %v1469 = vunpack.c.0.s8 %v1468
        %v1470 = vlaneseq
        %v1471 = vshrl.u32 %v1470, 7
        %v1472 = vsub.s32 %v1469, %v1471
        %v1473 = vrot.slane %v1451, %v1472
        %v1475 = vunpack.c.l.s4 1966171168
        %v1476 = vunpack.c.0.s8 %v1475
        %v1477 = vlaneseq
        %v1478 = vshrl.u32 %v1477, 7
        %v1479 = vsub.s32 %v1476, %v1478
        %v1480 = vrot.slane %v1452, %v1479
        %v1481 = vcombine.high %v1459, %v1459
        %v1482 = vcombine.high %v1466, %v1466
        %v1483 = vcombine.high %v1473, %v1473
        %v1484 = vcombine.high %v1480, %v1480
        %v1485 = vcombine.high %v309, %v309
        %v1487 = vunpack.c.l.s4 1966171168
        %v1488 = vunpack.c.0.s8 %v1487
        %v1489 = vlaneseq
        %v1490 = vshrl.u32 %v1489, 7
        %v1491 = vsub.s32 %v1488, %v1490
        %v1492 = vrot.slane %v309, %v1491
        %v1494 = vunpack.c.l.s4 1966171168
        %v1495 = vunpack.c.0.s8 %v1494
        %v1496 = vlaneseq
        %v1497 = vshrl.u32 %v1496, 7
        %v1498 = vsub.s32 %v1495, %v1497
        %v1499 = vrot.slane %v1485, %v1498
        %v1500 = vcombine.high %v1492, %v1492
        %v1501 = vcombine.high %v1499, %v1499
        %v1503 = vunpack.c.l.s4 1966171168
        %v1504 = vunpack.c.0.s8 %v1503
        %v1505 = vlaneseq
        %v1506 = vshrl.u32 %v1505, 7
        %v1507 = vsub.s32 %v1504, %v1506
        %v1508 = vrot.slane %v1492, %v1507
        %v1510 = vunpack.c.l.s4 1966171168
        %v1511 = vunpack.c.0.s8 %v1510
        %v1512 = vlaneseq
        %v1513 = vshrl.u32 %v1512, 7
        %v1514 = vsub.s32 %v1511, %v1513
        %v1515 = vrot.slane %v1499, %v1514
        %v1517 = vunpack.c.l.s4 1966171168
        %v1518 = vunpack.c.0.s8 %v1517
        %v1519 = vlaneseq
        %v1520 = vshrl.u32 %v1519, 7
        %v1521 = vsub.s32 %v1518, %v1520
        %v1522 = vrot.slane %v1500, %v1521
        %v1524 = vunpack.c.l.s4 1966171168
        %v1525 = vunpack.c.0.s8 %v1524
        %v1526 = vlaneseq
        %v1527 = vshrl.u32 %v1526, 7
        %v1528 = vsub.s32 %v1525, %v1527
        %v1529 = vrot.slane %v1501, %v1528
        %v1530 = vcombine.high %v1508, %v1508
        %v1531 = vcombine.high %v1515, %v1515
        %v1532 = vcombine.high %v1522, %v1522
        %v1533 = vcombine.high %v1529, %v1529
        %v2590 = vunpack.c.l.b16 %v310
        %v2591 = vunpack.c.h.b16 %v310
        %v2592 = vunpack.c.l.b16 %v311
        %v2593 = vunpack.c.h.b16 %v311
        %v2594 = vunpack.c.l.b16 %v312
        %v2595 = vunpack.c.h.b16 %v312
        %v2596 = vunpack.c.l.b16 %v313
        %v2597 = vunpack.c.h.b16 %v313
        %v2598 = vunpack.c.l.b16 %v314
        %v2599 = vunpack.c.h.b16 %v314
        %v2600 = vunpack.c.l.b16 %v315
        %v2601 = vunpack.c.h.b16 %v315
        %v2602 = vunpack.c.l.b16 %v316
        %v2603 = vunpack.c.h.b16 %v316
        %v2604 = vunpack.c.l.b16 %v317
        %v2605 = vunpack.c.h.b16 %v317
        %v2606 = vunpack.c.l.b16 %v318
        %v2607 = vunpack.c.h.b16 %v318
        %v2608 = vunpack.c.l.b16 %v319
        %v2609 = vunpack.c.h.b16 %v319
        %v2610 = vunpack.c.l.b16 %v320
        %v2611 = vunpack.c.h.b16 %v320
        %v2612 = vunpack.c.l.b16 %v321
        %v2613 = vunpack.c.h.b16 %v321
        %v2614 = vunpack.c.l.b16 %v322
        %v2615 = vunpack.c.h.b16 %v322
        %v2616 = vunpack.c.l.b16 %v323
        %v2617 = vunpack.c.h.b16 %v323
        %v2618 = vunpack.c.l.b16 %v324
        %v2619 = vunpack.c.h.b16 %v324
        %v2620 = vunpack.c.l.b16 %v325
        %v2621 = vunpack.c.h.b16 %v325
        %v2622 = vunpack.c.l.b16 %v326
        %v2623 = vunpack.c.h.b16 %v326
        %v2624 = vunpack.c.l.b16 %v327
        %v2625 = vunpack.c.h.b16 %v327
        %v2626 = vunpack.c.l.b16 %v328
        %v2627 = vunpack.c.h.b16 %v328
        %v2628 = vunpack.c.l.b16 %v329
        %v2629 = vunpack.c.h.b16 %v329
        %v2630 = vunpack.c.l.b16 %v330
        %v2631 = vunpack.c.h.b16 %v330
        %v2632 = vunpack.c.l.b16 %v331
        %v2633 = vunpack.c.h.b16 %v331
        %v2634 = vunpack.c.l.b16 %v332
        %v2635 = vunpack.c.h.b16 %v332
        %v2636 = vunpack.c.l.b16 %v333
        %v2637 = vunpack.c.h.b16 %v333
        %v2638 = vunpack.c.l.b16 %v334
        %v2639 = vunpack.c.h.b16 %v334
        %v2640 = vunpack.c.l.b16 %v335
        %v2641 = vunpack.c.h.b16 %v335
        %v2642 = vunpack.c.l.b16 %v336
        %v2643 = vunpack.c.h.b16 %v336
        %v2644 = vunpack.c.l.b16 %v337
        %v2645 = vunpack.c.h.b16 %v337
        %v2646 = vunpack.c.l.b16 %v338
        %v2647 = vunpack.c.h.b16 %v338
        %v2648 = vunpack.c.l.b16 %v339
        %v2649 = vunpack.c.h.b16 %v339
        %v2650 = vunpack.c.l.b16 %v340
        %v2651 = vunpack.c.h.b16 %v340
        %v2652 = vunpack.c.l.b16 %v341
        %v2653 = vunpack.c.h.b16 %v341
        %v2654 = vunpack.c.l.b16 %v342
        %v2655 = vunpack.c.h.b16 %v342
        %v2656 = vunpack.c.l.b16 %v343
        %v2657 = vunpack.c.h.b16 %v343
        %v2658 = vunpack.c.l.b16 %v344
        %v2659 = vunpack.c.h.b16 %v344
        %v2660 = vunpack.c.l.b16 %v345
        %v2661 = vunpack.c.h.b16 %v345
        %v2662 = vunpack.c.l.b16 %v346
        %v2663 = vunpack.c.h.b16 %v346
        %v2664 = vunpack.c.l.b16 %v347
        %v2665 = vunpack.c.h.b16 %v347
        %v2666 = vunpack.c.l.b16 %v348
        %v2667 = vunpack.c.h.b16 %v348
        %v2668 = vunpack.c.l.b16 %v349
        %v2669 = vunpack.c.h.b16 %v349
        %v2670 = vunpack.c.l.b16 %v350
        %v2671 = vunpack.c.h.b16 %v350
        %v2672 = vunpack.c.l.b16 %v351
        %v2673 = vunpack.c.h.b16 %v351
        %v2674 = vunpack.c.l.b16 %v352
        %v2675 = vunpack.c.h.b16 %v352
        %v2676 = vunpack.c.l.b16 %v353
        %v2677 = vunpack.c.h.b16 %v353
        %v2678 = vunpack.c.l.b16 %v354
        %v2679 = vunpack.c.h.b16 %v354
        %v2680 = vunpack.c.l.b16 %v355
        %v2681 = vunpack.c.h.b16 %v355
        %v2682 = vunpack.c.l.b16 %v356
        %v2683 = vunpack.c.h.b16 %v356
        %v2684 = vunpack.c.l.b16 %v357
        %v2685 = vunpack.c.h.b16 %v357
        %v2686 = vunpack.c.l.b16 %v358
        %v2687 = vunpack.c.h.b16 %v358
        %v2688 = vunpack.c.l.b16 %v359
        %v2689 = vunpack.c.h.b16 %v359
        %v2690 = vunpack.c.l.b16 %v360
        %v2691 = vunpack.c.h.b16 %v360
        %v2692 = vunpack.c.l.b16 %v361
        %v2693 = vunpack.c.h.b16 %v361
        %v2694 = vunpack.c.l.b16 %v362
        %v2695 = vunpack.c.h.b16 %v362
        %v2696 = vunpack.c.l.b16 %v363
        %v2697 = vunpack.c.h.b16 %v363
        %v2698 = vunpack.c.l.b16 %v364
        %v2699 = vunpack.c.h.b16 %v364
        %v2700 = vunpack.c.l.b16 %v365
        %v2701 = vunpack.c.h.b16 %v365
        %v2702 = vunpack.c.l.b16 %v366
        %v2703 = vunpack.c.h.b16 %v366
        %v2704 = vunpack.c.l.b16 %v367
        %v2705 = vunpack.c.h.b16 %v367
        %v2706 = vunpack.c.l.b16 %v368
        %v2707 = vunpack.c.h.b16 %v368
        %v2708 = vunpack.c.l.b16 %v369
        %v2709 = vunpack.c.h.b16 %v369
        %v2710 = vunpack.c.l.b16 %v370
        %v2711 = vunpack.c.h.b16 %v370
        %v2712 = vunpack.c.l.b16 %v371
        %v2713 = vunpack.c.h.b16 %v371
        %v2714 = vunpack.c.l.b16 %v372
        %v2715 = vunpack.c.h.b16 %v372
        %v2716 = vunpack.c.l.b16 %v373
        %v2717 = vunpack.c.h.b16 %v373
        %v2718 = vunpack.c.l.b16 %v374
        %v2719 = vunpack.c.h.b16 %v374
        %v2720 = vunpack.c.l.b16 %v375
        %v2721 = vunpack.c.h.b16 %v375
        %v2722 = vunpack.c.l.b16 %v376
        %v2723 = vunpack.c.h.b16 %v376
        %v2724 = vunpack.c.l.b16 %v377
        %v2725 = vunpack.c.h.b16 %v377
        %v2726 = vunpack.c.l.b16 %v378
        %v2727 = vunpack.c.h.b16 %v378
        %v2728 = vunpack.c.l.b16 %v379
        %v2729 = vunpack.c.h.b16 %v379
        %v2730 = vunpack.c.l.b16 %v380
        %v2731 = vunpack.c.h.b16 %v380
        %v2732 = vunpack.c.l.b16 %v381
        %v2733 = vunpack.c.h.b16 %v381
        %v2734 = vunpack.c.l.b16 %v382
        %v2735 = vunpack.c.h.b16 %v382
        %v2736 = vunpack.c.l.b16 %v383
        %v2737 = vunpack.c.h.b16 %v383
        %v2738 = vunpack.c.l.b16 %v384
        %v2739 = vunpack.c.h.b16 %v384
        %v2740 = vunpack.c.l.b16 %v385
        %v2741 = vunpack.c.h.b16 %v385
        %v2742 = vunpack.c.l.b16 %v386
        %v2743 = vunpack.c.h.b16 %v386
        %v2744 = vunpack.c.l.b16 %v387
        %v2745 = vunpack.c.h.b16 %v387
        %v2746 = vunpack.c.l.b16 %v388
        %v2747 = vunpack.c.h.b16 %v388
        %v2748 = vunpack.c.l.b16 %v389
        %v2749 = vunpack.c.h.b16 %v389
        %v2750 = vunpack.c.l.b16 %v390
        %v2751 = vunpack.c.h.b16 %v390
        %v2752 = vunpack.c.l.b16 %v391
        %v2753 = vunpack.c.h.b16 %v391
        %v2754 = vunpack.c.l.b16 %v392
        %v2755 = vunpack.c.h.b16 %v392
        %v2756 = vunpack.c.l.b16 %v393
        %v2757 = vunpack.c.h.b16 %v393
        %v2758 = vunpack.c.l.b16 %v394
        %v2759 = vunpack.c.h.b16 %v394
        %v2760 = vunpack.c.l.b16 %v395
        %v2761 = vunpack.c.h.b16 %v395
        %v2762 = vunpack.c.l.b16 %v396
        %v2763 = vunpack.c.h.b16 %v396
        %v2764 = vunpack.c.l.b16 %v397
        %v2765 = vunpack.c.h.b16 %v397
        %v2766 = vunpack.c.l.b16 %v398
        %v2767 = vunpack.c.h.b16 %v398
        %v2768 = vunpack.c.l.b16 %v399
        %v2769 = vunpack.c.h.b16 %v399
        %v2770 = vunpack.c.l.b16 %v400
        %v2771 = vunpack.c.h.b16 %v400
        %v2772 = vunpack.c.l.b16 %v401
        %v2773 = vunpack.c.h.b16 %v401
        %v2774 = vunpack.c.l.b16 %v402
        %v2775 = vunpack.c.h.b16 %v402
        %v2776 = vunpack.c.l.b16 %v403
        %v2777 = vunpack.c.h.b16 %v403
        %v2778 = vunpack.c.l.b16 %v404
        %v2779 = vunpack.c.h.b16 %v404
        %v2780 = vunpack.c.l.b16 %v405
        %v2781 = vunpack.c.h.b16 %v405
        %v2782 = vunpack.c.l.b16 %v406
        %v2783 = vunpack.c.h.b16 %v406
        %v2784 = vunpack.c.l.b16 %v407
        %v2785 = vunpack.c.h.b16 %v407
        %v2786 = vunpack.c.l.b16 %v408
        %v2787 = vunpack.c.h.b16 %v408
        %v2788 = vunpack.c.l.b16 %v409
        %v2789 = vunpack.c.h.b16 %v409
        %v2790 = vunpack.c.l.b16 %v410
        %v2791 = vunpack.c.h.b16 %v410
        %v2792 = vunpack.c.l.b16 %v411
        %v2793 = vunpack.c.h.b16 %v411
        %v2794 = vunpack.c.l.b16 %v412
        %v2795 = vunpack.c.h.b16 %v412
        %v2796 = vunpack.c.l.b16 %v413
        %v2797 = vunpack.c.h.b16 %v413
        %v2798 = vunpack.c.l.b16 %v414
        %v2799 = vunpack.c.h.b16 %v414
        %v2800 = vunpack.c.l.b16 %v415
        %v2801 = vunpack.c.h.b16 %v415
        %v2802 = vunpack.c.l.b16 %v416
        %v2803 = vunpack.c.h.b16 %v416
        %v2804 = vunpack.c.l.b16 %v417
        %v2805 = vunpack.c.h.b16 %v417
        %v2806 = vunpack.c.l.b16 %v418
        %v2807 = vunpack.c.h.b16 %v418
        %v2808 = vunpack.c.l.b16 %v419
        %v2809 = vunpack.c.h.b16 %v419
        %v2810 = vunpack.c.l.b16 %v420
        %v2811 = vunpack.c.h.b16 %v420
        %v2812 = vunpack.c.l.b16 %v421
        %v2813 = vunpack.c.h.b16 %v421
        %v2814 = vunpack.c.l.b16 %v422
        %v2815 = vunpack.c.h.b16 %v422
        %v2816 = vunpack.c.l.b16 %v423
        %v2817 = vunpack.c.h.b16 %v423
        %v2818 = vunpack.c.l.b16 %v424
        %v2819 = vunpack.c.h.b16 %v424
        %v2820 = vunpack.c.l.b16 %v425
        %v2821 = vunpack.c.h.b16 %v425
        %v2822 = vunpack.c.l.b16 %v426
        %v2823 = vunpack.c.h.b16 %v426
        %v2824 = vunpack.c.l.b16 %v427
        %v2825 = vunpack.c.h.b16 %v427
        %v2826 = vunpack.c.l.b16 %v428
        %v2827 = vunpack.c.h.b16 %v428
        %v2828 = vunpack.c.l.b16 %v429
        %v2829 = vunpack.c.h.b16 %v429
        %v2830 = vunpack.c.l.b16 %v430
        %v2831 = vunpack.c.h.b16 %v430
        %v2832 = vunpack.c.l.b16 %v431
        %v2833 = vunpack.c.h.b16 %v431
        %v2834 = vunpack.c.l.b16 %v432
        %v2835 = vunpack.c.h.b16 %v432
        %v2836 = vunpack.c.l.b16 %v433
        %v2837 = vunpack.c.h.b16 %v433
        %v2838 = vunpack.c.l.b16 %v434
        %v2839 = vunpack.c.h.b16 %v434
        %v2840 = vunpack.c.l.b16 %v435
        %v2841 = vunpack.c.h.b16 %v435
        %v2842 = vunpack.c.l.b16 %v436
        %v2843 = vunpack.c.h.b16 %v436
        %v2844 = vunpack.c.l.b16 %v437
        %v2845 = vunpack.c.h.b16 %v437
        %v2846 = vunpack.c.l.b16 %v438
        %v2847 = vunpack.c.h.b16 %v438
        %v2848 = vunpack.c.l.b16 %v439
        %v2849 = vunpack.c.h.b16 %v439
        %v2850 = vunpack.c.l.b16 %v440
        %v2851 = vunpack.c.h.b16 %v440
        %v2852 = vunpack.c.l.b16 %v441
        %v2853 = vunpack.c.h.b16 %v441
        %v2854 = vunpack.c.l.b16 %v442
        %v2855 = vunpack.c.h.b16 %v442
        %v2856 = vunpack.c.l.b16 %v443
        %v2857 = vunpack.c.h.b16 %v443
        %v2858 = vunpack.c.l.b16 %v444
        %v2859 = vunpack.c.h.b16 %v444
        %v2860 = vunpack.c.l.b16 %v445
        %v2861 = vunpack.c.h.b16 %v445
        %v2862 = vunpack.c.l.b16 %v446
        %v2863 = vunpack.c.h.b16 %v446
        %v2864 = vunpack.c.l.b16 %v447
        %v2865 = vunpack.c.h.b16 %v447
        %v2866 = vunpack.c.l.b16 %v448
        %v2867 = vunpack.c.h.b16 %v448
        %v2868 = vunpack.c.l.b16 %v449
        %v2869 = vunpack.c.h.b16 %v449
        %v2870 = vunpack.c.l.b16 %v450
        %v2871 = vunpack.c.h.b16 %v450
        %v2872 = vunpack.c.l.b16 %v451
        %v2873 = vunpack.c.h.b16 %v451
        %v2874 = vunpack.c.l.b16 %v452
        %v2875 = vunpack.c.h.b16 %v452
        %v2876 = vunpack.c.l.b16 %v453
        %v2877 = vunpack.c.h.b16 %v453
        %v2878 = vunpack.c.l.b16 %v454
        %v2879 = vunpack.c.h.b16 %v454
        %v2880 = vunpack.c.l.b16 %v455
        %v2881 = vunpack.c.h.b16 %v455
        %v2882 = vunpack.c.l.b16 %v456
        %v2883 = vunpack.c.h.b16 %v456
        %v2884 = vunpack.c.l.b16 %v457
        %v2885 = vunpack.c.h.b16 %v457
        %v2886 = vunpack.c.l.b16 %v458
        %v2887 = vunpack.c.h.b16 %v458
        %v2888 = vunpack.c.l.b16 %v459
        %v2889 = vunpack.c.h.b16 %v459
        %v2890 = vunpack.c.l.b16 %v460
        %v2891 = vunpack.c.h.b16 %v460
        %v2892 = vunpack.c.l.b16 %v461
        %v2893 = vunpack.c.h.b16 %v461
        %v2894 = vunpack.c.l.b16 %v462
        %v2895 = vunpack.c.h.b16 %v462
        %v2896 = vunpack.c.l.b16 %v463
        %v2897 = vunpack.c.h.b16 %v463
        %v2898 = vunpack.c.l.b16 %v464
        %v2899 = vunpack.c.h.b16 %v464
        %v2900 = vunpack.c.l.b16 %v465
        %v2901 = vunpack.c.h.b16 %v465
        %v2902 = vunpack.c.l.b16 %v466
        %v2903 = vunpack.c.h.b16 %v466
        %v2904 = vunpack.c.l.b16 %v467
        %v2905 = vunpack.c.h.b16 %v467
        %v2906 = vunpack.c.l.b16 %v468
        %v2907 = vunpack.c.h.b16 %v468
        %v2908 = vunpack.c.l.b16 %v469
        %v2909 = vunpack.c.h.b16 %v469
        %v2910 = vunpack.c.l.b16 %v470
        %v2911 = vunpack.c.h.b16 %v470
        %v2912 = vunpack.c.l.b16 %v471
        %v2913 = vunpack.c.h.b16 %v471
        %v2914 = vunpack.c.l.b16 %v472
        %v2915 = vunpack.c.h.b16 %v472
        %v2916 = vunpack.c.l.b16 %v473
        %v2917 = vunpack.c.h.b16 %v473
        %v2918 = vunpack.c.l.b16 %v474
        %v2919 = vunpack.c.h.b16 %v474
        %v2920 = vunpack.c.l.b16 %v475
        %v2921 = vunpack.c.h.b16 %v475
        %v2922 = vunpack.c.l.b16 %v476
        %v2923 = vunpack.c.h.b16 %v476
        %v2924 = vunpack.c.l.b16 %v477
        %v2925 = vunpack.c.h.b16 %v477
        %v2926 = vunpack.c.l.b16 %v478
        %v2927 = vunpack.c.h.b16 %v478
        %v2928 = vunpack.c.l.b16 %v479
        %v2929 = vunpack.c.h.b16 %v479
        %v2930 = vunpack.c.l.b16 %v480
        %v2931 = vunpack.c.h.b16 %v480
        %v2932 = vunpack.c.l.b16 %v481
        %v2933 = vunpack.c.h.b16 %v481
        %v2934 = vunpack.c.l.b16 %v482
        %v2935 = vunpack.c.h.b16 %v482
        %v2936 = vunpack.c.l.b16 %v483
        %v2937 = vunpack.c.h.b16 %v483
        %v2938 = vunpack.c.l.b16 %v484
        %v2939 = vunpack.c.h.b16 %v484
        %v2940 = vunpack.c.l.b16 %v485
        %v2941 = vunpack.c.h.b16 %v485
        %v2942 = vunpack.c.l.b16 %v486
        %v2943 = vunpack.c.h.b16 %v486
        %v2944 = vunpack.c.l.b16 %v487
        %v2945 = vunpack.c.h.b16 %v487
        %v2946 = vunpack.c.l.b16 %v488
        %v2947 = vunpack.c.h.b16 %v488
        %v2948 = vunpack.c.l.b16 %v489
        %v2949 = vunpack.c.h.b16 %v489
        %v2950 = vunpack.c.l.b16 %v490
        %v2951 = vunpack.c.h.b16 %v490
        %v2952 = vunpack.c.l.b16 %v491
        %v2953 = vunpack.c.h.b16 %v491
        %v2954 = vunpack.c.l.b16 %v492
        %v2955 = vunpack.c.h.b16 %v492
        %v2956 = vunpack.c.l.b16 %v493
        %v2957 = vunpack.c.h.b16 %v493
        %v2958 = vunpack.c.l.b16 %v494
        %v2959 = vunpack.c.h.b16 %v494
        %v2960 = vunpack.c.l.b16 %v495
        %v2961 = vunpack.c.h.b16 %v495
        %v2962 = vunpack.c.l.b16 %v496
        %v2963 = vunpack.c.h.b16 %v496
        %v2964 = vunpack.c.l.b16 %v497
        %v2965 = vunpack.c.h.b16 %v497
        %v2966 = vunpack.c.l.b16 %v498
        %v2967 = vunpack.c.h.b16 %v498
        %v2968 = vunpack.c.l.b16 %v499
        %v2969 = vunpack.c.h.b16 %v499
        %v2970 = vunpack.c.l.b16 %v500
        %v2971 = vunpack.c.h.b16 %v500
        %v2972 = vunpack.c.l.b16 %v501
        %v2973 = vunpack.c.h.b16 %v501
        %v2974 = vunpack.c.l.b16 %v502
        %v2975 = vunpack.c.h.b16 %v502
        %v2976 = vunpack.c.l.b16 %v503
        %v2977 = vunpack.c.h.b16 %v503
        %v2978 = vunpack.c.l.b16 %v504
        %v2979 = vunpack.c.h.b16 %v504
        %v2980 = vunpack.c.l.b16 %v505
        %v2981 = vunpack.c.h.b16 %v505
        %v2982 = vunpack.c.l.b16 %v506
        %v2983 = vunpack.c.h.b16 %v506
        %v2984 = vunpack.c.l.b16 %v507
        %v2985 = vunpack.c.h.b16 %v507
        %v2986 = vunpack.c.l.b16 %v508
        %v2987 = vunpack.c.h.b16 %v508
        %v2988 = vunpack.c.l.b16 %v509
        %v2989 = vunpack.c.h.b16 %v509
        %v2990 = vunpack.c.l.b16 %v510
        %v2991 = vunpack.c.h.b16 %v510
        %v2992 = vunpack.c.l.b16 %v511
        %v2993 = vunpack.c.h.b16 %v511
        %v2994 = vunpack.c.l.b16 %v512
        %v2995 = vunpack.c.h.b16 %v512
        %v2996 = vunpack.c.l.b16 %v513
        %v2997 = vunpack.c.h.b16 %v513
        %v2998 = vunpack.c.l.b16 %v514
        %v2999 = vunpack.c.h.b16 %v514
        %v3000 = vunpack.c.l.b16 %v515
        %v3001 = vunpack.c.h.b16 %v515
        %v3002 = vunpack.c.l.b16 %v516
        %v3003 = vunpack.c.h.b16 %v516
        %v3004 = vunpack.c.l.b16 %v517
        %v3005 = vunpack.c.h.b16 %v517
        %v3006 = vunpack.c.l.b16 %v518
        %v3007 = vunpack.c.h.b16 %v518
        %v3008 = vunpack.c.l.b16 %v519
        %v3009 = vunpack.c.h.b16 %v519
        %v3010 = vunpack.c.l.b16 %v520
        %v3011 = vunpack.c.h.b16 %v520
        %v3012 = vunpack.c.l.b16 %v521
        %v3013 = vunpack.c.h.b16 %v521
        %v3014 = vunpack.c.l.b16 %v522
        %v3015 = vunpack.c.h.b16 %v522
        %v3016 = vunpack.c.l.b16 %v523
        %v3017 = vunpack.c.h.b16 %v523
        %v3018 = vunpack.c.l.b16 %v524
        %v3019 = vunpack.c.h.b16 %v524
        %v3020 = vunpack.c.l.b16 %v525
        %v3021 = vunpack.c.h.b16 %v525
        %v3022 = vunpack.c.l.b16 %v526
        %v3023 = vunpack.c.h.b16 %v526
        %v3024 = vunpack.c.l.b16 %v527
        %v3025 = vunpack.c.h.b16 %v527
        %v3026 = vunpack.c.l.b16 %v528
        %v3027 = vunpack.c.h.b16 %v528
        %v3028 = vunpack.c.l.b16 %v529
        %v3029 = vunpack.c.h.b16 %v529
        %v3030 = vunpack.c.l.b16 %v530
        %v3031 = vunpack.c.h.b16 %v530
        %v3032 = vunpack.c.l.b16 %v531
        %v3033 = vunpack.c.h.b16 %v531
        %v3034 = vunpack.c.l.b16 %v532
        %v3035 = vunpack.c.h.b16 %v532
        %v3036 = vunpack.c.l.b16 %v533
        %v3037 = vunpack.c.h.b16 %v533
        %v3038 = vunpack.c.l.b16 %v534
        %v3039 = vunpack.c.h.b16 %v534
        %v3040 = vunpack.c.l.b16 %v535
        %v3041 = vunpack.c.h.b16 %v535
        %v3042 = vunpack.c.l.b16 %v536
        %v3043 = vunpack.c.h.b16 %v536
        %v3044 = vunpack.c.l.b16 %v537
        %v3045 = vunpack.c.h.b16 %v537
        %v3046 = vunpack.c.l.b16 %v538
        %v3047 = vunpack.c.h.b16 %v538
        %v3048 = vunpack.c.l.b16 %v539
        %v3049 = vunpack.c.h.b16 %v539
        %v3050 = vunpack.c.l.b16 %v540
        %v3051 = vunpack.c.h.b16 %v540
        %v3052 = vunpack.c.l.b16 %v541
        %v3053 = vunpack.c.h.b16 %v541
        %v3054 = vunpack.c.l.b16 %v542
        %v3055 = vunpack.c.h.b16 %v542
        %v3056 = vunpack.c.l.b16 %v543
        %v3057 = vunpack.c.h.b16 %v543
        %v3058 = vunpack.c.l.b16 %v544
        %v3059 = vunpack.c.h.b16 %v544
        %v3060 = vunpack.c.l.b16 %v545
        %v3061 = vunpack.c.h.b16 %v545
        %v3062 = vunpack.c.l.b16 %v546
        %v3063 = vunpack.c.h.b16 %v546
        %v3064 = vunpack.c.l.b16 %v547
        %v3065 = vunpack.c.h.b16 %v547
        %v3066 = vunpack.c.l.b16 %v548
        %v3067 = vunpack.c.h.b16 %v548
        %v3068 = vunpack.c.l.b16 %v549
        %v3069 = vunpack.c.h.b16 %v549
        %v3070 = vunpack.c.l.b16 %v550
        %v3071 = vunpack.c.h.b16 %v550
        %v3072 = vunpack.c.l.b16 %v551
        %v3073 = vunpack.c.h.b16 %v551
        %v3074 = vunpack.c.l.b16 %v552
        %v3075 = vunpack.c.h.b16 %v552
        %v3076 = vunpack.c.l.b16 %v553
        %v3077 = vunpack.c.h.b16 %v553
        %v3078 = vunpack.c.l.b16 %v554
        %v3079 = vunpack.c.h.b16 %v554
        %v3080 = vunpack.c.l.b16 %v555
        %v3081 = vunpack.c.h.b16 %v555
        %v3082 = vunpack.c.l.b16 %v556
        %v3083 = vunpack.c.h.b16 %v556
        %v3084 = vunpack.c.l.b16 %v557
        %v3085 = vunpack.c.h.b16 %v557
        %v3086 = vunpack.c.l.b16 %v558
        %v3087 = vunpack.c.h.b16 %v558
        %v3088 = vunpack.c.l.b16 %v559
        %v3089 = vunpack.c.h.b16 %v559
        %v3090 = vunpack.c.l.b16 %v560
        %v3091 = vunpack.c.h.b16 %v560
        %v3092 = vunpack.c.l.b16 %v561
        %v3093 = vunpack.c.h.b16 %v561
        %v3094 = vunpack.c.l.b16 %v562
        %v3095 = vunpack.c.h.b16 %v562
        %v3096 = vunpack.c.l.b16 %v563
        %v3097 = vunpack.c.h.b16 %v563
        %v3098 = vunpack.c.l.b16 %v564
        %v3099 = vunpack.c.h.b16 %v564
        %v3100 = vunpack.c.l.b16 %v565
        %v3101 = vunpack.c.h.b16 %v565
        %v3102 = vunpack.c.l.b16 %v566
        %v3103 = vunpack.c.h.b16 %v566
        %v3104 = vunpack.c.l.b16 %v567
        %v3105 = vunpack.c.h.b16 %v567
        %v3106 = vunpack.c.l.b16 %v568
        %v3107 = vunpack.c.h.b16 %v568
        %v3108 = vunpack.c.l.b16 %v569
        %v3109 = vunpack.c.h.b16 %v569
        %v3110 = vunpack.c.l.b16 %v570
        %v3111 = vunpack.c.h.b16 %v570
        %v3112 = vunpack.c.l.b16 %v571
        %v3113 = vunpack.c.h.b16 %v571
        %v3114 = vunpack.c.l.b16 %v572
        %v3115 = vunpack.c.h.b16 %v572
        %v3116 = vunpack.c.l.b16 %v573
        %v3117 = vunpack.c.h.b16 %v573
        %v3118 = vunpack.c.l.b16 %v574
        %v3119 = vunpack.c.h.b16 %v574
        %v3120 = vunpack.c.l.b16 %v575
        %v3121 = vunpack.c.h.b16 %v575
        %v3122 = vunpack.c.l.b16 %v576
        %v3123 = vunpack.c.h.b16 %v576
        %v3124 = vunpack.c.l.b16 %v577
        %v3125 = vunpack.c.h.b16 %v577
        %v3126 = vunpack.c.l.b16 %v578
        %v3127 = vunpack.c.h.b16 %v578
        %v3128 = vunpack.c.l.b16 %v579
        %v3129 = vunpack.c.h.b16 %v579
        %v3130 = vunpack.c.l.b16 %v580
        %v3131 = vunpack.c.h.b16 %v580
        %v3132 = vunpack.c.l.b16 %v581
        %v3133 = vunpack.c.h.b16 %v581
        %v3134 = vunpack.c.l.b16 %v582
        %v3135 = vunpack.c.h.b16 %v582
        %v3136 = vunpack.c.l.b16 %v583
        %v3137 = vunpack.c.h.b16 %v583
        %v3138 = vunpack.c.l.b16 %v584
        %v3139 = vunpack.c.h.b16 %v584
        %v3140 = vunpack.c.l.b16 %v585
        %v3141 = vunpack.c.h.b16 %v585
        %v3142 = vunpack.c.l.b16 %v586
        %v3143 = vunpack.c.h.b16 %v586
        %v3144 = vunpack.c.l.b16 %v587
        %v3145 = vunpack.c.h.b16 %v587
        %v3146 = vunpack.c.l.b16 %v588
        %v3147 = vunpack.c.h.b16 %v588
        %v3148 = vunpack.c.l.b16 %v589
        %v3149 = vunpack.c.h.b16 %v589
        %v3150 = vunpack.c.l.b16 %v590
        %v3151 = vunpack.c.h.b16 %v590
        %v3152 = vunpack.c.l.b16 %v591
        %v3153 = vunpack.c.h.b16 %v591
        %v3154 = vunpack.c.l.b16 %v592
        %v3155 = vunpack.c.h.b16 %v592
        %v3156 = vunpack.c.l.b16 %v593
        %v3157 = vunpack.c.h.b16 %v593
        %v3158 = vunpack.c.l.b16 %v594
        %v3159 = vunpack.c.h.b16 %v594
        %v3160 = vunpack.c.l.b16 %v595
        %v3161 = vunpack.c.h.b16 %v595
        %v3162 = vunpack.c.l.b16 %v596
        %v3163 = vunpack.c.h.b16 %v596
        %v3164 = vunpack.c.l.b16 %v597
        %v3165 = vunpack.c.h.b16 %v597
        %v3166 = vunpack.c.l.b16 %v598
        %v3167 = vunpack.c.h.b16 %v598
        %v3168 = vunpack.c.l.b16 %v599
        %v3169 = vunpack.c.h.b16 %v599
        %v3170 = vunpack.c.l.b16 %v600
        %v3171 = vunpack.c.h.b16 %v600
        %v3172 = vunpack.c.l.b16 %v601
        %v3173 = vunpack.c.h.b16 %v601
        %v3174 = vunpack.c.l.b16 %v602
        %v3175 = vunpack.c.h.b16 %v602
        %v3176 = vunpack.c.l.b16 %v603
        %v3177 = vunpack.c.h.b16 %v603
        %v3178 = vunpack.c.l.b16 %v604
        %v3179 = vunpack.c.h.b16 %v604
        %v3180 = vunpack.c.l.b16 %v605
        %v3181 = vunpack.c.h.b16 %v605
        %v3182 = vunpack.c.l.b16 %v606
        %v3183 = vunpack.c.h.b16 %v606
        %v3184 = vunpack.c.l.b16 %v607
        %v3185 = vunpack.c.h.b16 %v607
        %v3186 = vunpack.c.l.b16 %v608
        %v3187 = vunpack.c.h.b16 %v608
        %v3188 = vunpack.c.l.b16 %v609
        %v3189 = vunpack.c.h.b16 %v609
        %v3190 = vunpack.c.l.b16 %v610
        %v3191 = vunpack.c.h.b16 %v610
        %v3192 = vunpack.c.l.b16 %v611
        %v3193 = vunpack.c.h.b16 %v611
        %v3194 = vunpack.c.l.b16 %v612
        %v3195 = vunpack.c.h.b16 %v612
        %v3196 = vunpack.c.l.b16 %v613
        %v3197 = vunpack.c.h.b16 %v613
        %v3198 = vunpack.c.l.b16 %v614
        %v3199 = vunpack.c.h.b16 %v614
        %v3200 = vunpack.c.l.b16 %v615
        %v3201 = vunpack.c.h.b16 %v615
        %v3202 = vunpack.c.l.b16 %v616
        %v3203 = vunpack.c.h.b16 %v616
        %v3204 = vunpack.c.l.b16 %v617
        %v3205 = vunpack.c.h.b16 %v617
        %v3206 = vunpack.c.l.b16 %v618
        %v3207 = vunpack.c.h.b16 %v618
        %v3208 = vunpack.c.l.b16 %v619
        %v3209 = vunpack.c.h.b16 %v619
        %v3210 = vunpack.c.l.b16 %v620
        %v3211 = vunpack.c.h.b16 %v620
        %v3212 = vunpack.c.l.b16 %v621
        %v3213 = vunpack.c.h.b16 %v621
        %v3214 = vunpack.c.l.b16 %v622
        %v3215 = vunpack.c.h.b16 %v622
        %v3216 = vunpack.c.l.b16 %v623
        %v3217 = vunpack.c.h.b16 %v623
        %v3218 = vunpack.c.l.b16 %v624
        %v3219 = vunpack.c.h.b16 %v624
        %v3220 = vunpack.c.l.b16 %v625
        %v3221 = vunpack.c.h.b16 %v625
        %v3222 = vunpack.c.l.b16 %v626
        %v3223 = vunpack.c.h.b16 %v626
        %v3224 = vunpack.c.l.b16 %v627
        %v3225 = vunpack.c.h.b16 %v627
        %v3226 = vunpack.c.l.b16 %v628
        %v3227 = vunpack.c.h.b16 %v628
        %v3228 = vunpack.c.l.b16 %v629
        %v3229 = vunpack.c.h.b16 %v629
        %v3230 = vunpack.c.l.b16 %v630
        %v3231 = vunpack.c.h.b16 %v630
        %v3232 = vunpack.c.l.b16 %v631
        %v3233 = vunpack.c.h.b16 %v631
        %v3234 = vunpack.c.l.b16 %v632
        %v3235 = vunpack.c.h.b16 %v632
        %v3236 = vunpack.c.l.b16 %v633
        %v3237 = vunpack.c.h.b16 %v633
        %v3238 = vunpack.c.l.b16 %v634
        %v3239 = vunpack.c.h.b16 %v634
        %v3240 = vunpack.c.l.b16 %v635
        %v3241 = vunpack.c.h.b16 %v635
        %v3242 = vunpack.c.l.b16 %v636
        %v3243 = vunpack.c.h.b16 %v636
        %v3244 = vunpack.c.l.b16 %v637
        %v3245 = vunpack.c.h.b16 %v637
        %v3246 = vunpack.c.l.b16 %v638
        %v3247 = vunpack.c.h.b16 %v638
        %v3248 = vunpack.c.l.b16 %v639
        %v3249 = vunpack.c.h.b16 %v639
        %v3250 = vunpack.c.l.b16 %v640
        %v3251 = vunpack.c.h.b16 %v640
        %v3252 = vunpack.c.l.b16 %v641
        %v3253 = vunpack.c.h.b16 %v641
        %v3254 = vunpack.c.l.b16 %v642
        %v3255 = vunpack.c.h.b16 %v642
        %v3256 = vunpack.c.l.b16 %v643
        %v3257 = vunpack.c.h.b16 %v643
        %v3258 = vunpack.c.l.b16 %v644
        %v3259 = vunpack.c.h.b16 %v644
        %v3260 = vunpack.c.l.b16 %v645
        %v3261 = vunpack.c.h.b16 %v645
        %v3262 = vunpack.c.l.b16 %v646
        %v3263 = vunpack.c.h.b16 %v646
        %v3264 = vunpack.c.l.b16 %v647
        %v3265 = vunpack.c.h.b16 %v647
        %v3266 = vunpack.c.l.b16 %v648
        %v3267 = vunpack.c.h.b16 %v648
        %v3268 = vunpack.c.l.b16 %v649
        %v3269 = vunpack.c.h.b16 %v649
        %v3270 = vunpack.c.l.b16 %v650
        %v3271 = vunpack.c.h.b16 %v650
        %v3272 = vunpack.c.l.b16 %v651
        %v3273 = vunpack.c.h.b16 %v651
        %v3274 = vunpack.c.l.b16 %v652
        %v3275 = vunpack.c.h.b16 %v652
        %v3276 = vunpack.c.l.b16 %v653
        %v3277 = vunpack.c.h.b16 %v653
        %v3278 = vunpack.c.l.b16 %v654
        %v3279 = vunpack.c.h.b16 %v654
        %v3280 = vunpack.c.l.b16 %v655
        %v3281 = vunpack.c.h.b16 %v655
        %v3282 = vunpack.c.l.b16 %v656
        %v3283 = vunpack.c.h.b16 %v656
        %v3284 = vunpack.c.l.b16 %v657
        %v3285 = vunpack.c.h.b16 %v657
        %v3286 = vunpack.c.l.b16 %v658
        %v3287 = vunpack.c.h.b16 %v658
        %v3288 = vunpack.c.l.b16 %v659
        %v3289 = vunpack.c.h.b16 %v659
        %v3290 = vunpack.c.l.b16 %v660
        %v3291 = vunpack.c.h.b16 %v660
        %v3292 = vunpack.c.l.b16 %v661
        %v3293 = vunpack.c.h.b16 %v661
        %v3294 = vunpack.c.l.b16 %v662
        %v3295 = vunpack.c.h.b16 %v662
        %v3296 = vunpack.c.l.b16 %v663
        %v3297 = vunpack.c.h.b16 %v663
        %v3298 = vunpack.c.l.b16 %v664
        %v3299 = vunpack.c.h.b16 %v664
        %v3300 = vunpack.c.l.b16 %v665
        %v3301 = vunpack.c.h.b16 %v665
        %v3302 = vunpack.c.l.b16 %v666
        %v3303 = vunpack.c.h.b16 %v666
        %v3304 = vunpack.c.l.b16 %v667
        %v3305 = vunpack.c.h.b16 %v667
        %v3306 = vunpack.c.l.b16 %v668
        %v3307 = vunpack.c.h.b16 %v668
        %v3308 = vunpack.c.l.b16 %v669
        %v3309 = vunpack.c.h.b16 %v669
        %v3310 = vunpack.c.l.b16 %v670
        %v3311 = vunpack.c.h.b16 %v670
        %v3312 = vunpack.c.l.b16 %v671
        %v3313 = vunpack.c.h.b16 %v671
        %v3314 = vunpack.c.l.b16 %v672
        %v3315 = vunpack.c.h.b16 %v672
        %v3316 = vunpack.c.l.b16 %v673
        %v3317 = vunpack.c.h.b16 %v673
        %v3318 = vunpack.c.l.b16 %v674
        %v3319 = vunpack.c.h.b16 %v674
        %v3320 = vunpack.c.l.b16 %v675
        %v3321 = vunpack.c.h.b16 %v675
        %v3322 = vunpack.c.l.b16 %v676
        %v3323 = vunpack.c.h.b16 %v676
        %v3324 = vunpack.c.l.b16 %v677
        %v3325 = vunpack.c.h.b16 %v677
        %v3326 = vunpack.c.l.b16 %v678
        %v3327 = vunpack.c.h.b16 %v678
        %v3328 = vunpack.c.l.b16 %v679
        %v3329 = vunpack.c.h.b16 %v679
        %v3330 = vunpack.c.l.b16 %v680
        %v3331 = vunpack.c.h.b16 %v680
        %v3332 = vunpack.c.l.b16 %v681
        %v3333 = vunpack.c.h.b16 %v681
        %v3334 = vunpack.c.l.b16 %v682
        %v3335 = vunpack.c.h.b16 %v682
        %v3336 = vunpack.c.l.b16 %v683
        %v3337 = vunpack.c.h.b16 %v683
        %v3338 = vunpack.c.l.b16 %v684
        %v3339 = vunpack.c.h.b16 %v684
        %v3340 = vunpack.c.l.b16 %v685
        %v3341 = vunpack.c.h.b16 %v685
        %v3342 = vunpack.c.l.b16 %v686
        %v3343 = vunpack.c.h.b16 %v686
        %v3344 = vunpack.c.l.b16 %v687
        %v3345 = vunpack.c.h.b16 %v687
        %v3346 = vunpack.c.l.b16 %v688
        %v3347 = vunpack.c.h.b16 %v688
        %v3348 = vunpack.c.l.b16 %v689
        %v3349 = vunpack.c.h.b16 %v689
        %v3350 = vunpack.c.l.b16 %v690
        %v3351 = vunpack.c.h.b16 %v690
        %v3352 = vunpack.c.l.b16 %v691
        %v3353 = vunpack.c.h.b16 %v691
        %v3354 = vunpack.c.l.b16 %v692
        %v3355 = vunpack.c.h.b16 %v692
        %v3356 = vunpack.c.l.b16 %v693
        %v3357 = vunpack.c.h.b16 %v693
        %v3358 = vunpack.c.l.b16 %v694
        %v3359 = vunpack.c.h.b16 %v694
        %v3360 = vunpack.c.l.b16 %v695
        %v3361 = vunpack.c.h.b16 %v695
        %v3362 = vunpack.c.l.b16 %v696
        %v3363 = vunpack.c.h.b16 %v696
        %v3364 = vunpack.c.l.b16 %v697
        %v3365 = vunpack.c.h.b16 %v697
        %v3366 = vunpack.c.l.b16 %v698
        %v3367 = vunpack.c.h.b16 %v698
        %v3368 = vunpack.c.l.b16 %v699
        %v3369 = vunpack.c.h.b16 %v699
        %v3370 = vunpack.c.l.b16 %v700
        %v3371 = vunpack.c.h.b16 %v700
        %v3372 = vunpack.c.l.b16 %v701
        %v3373 = vunpack.c.h.b16 %v701
        %v3374 = vunpack.c.l.b16 %v702
        %v3375 = vunpack.c.h.b16 %v702
        %v3376 = vunpack.c.l.b16 %v703
        %v3377 = vunpack.c.h.b16 %v703
        %v3378 = vunpack.c.l.b16 %v704
        %v3379 = vunpack.c.h.b16 %v704
        %v3380 = vunpack.c.l.b16 %v705
        %v3381 = vunpack.c.h.b16 %v705
        %v3382 = vunpack.c.l.b16 %v706
        %v3383 = vunpack.c.h.b16 %v706
        %v3384 = vunpack.c.l.b16 %v707
        %v3385 = vunpack.c.h.b16 %v707
        %v3386 = vunpack.c.l.b16 %v708
        %v3387 = vunpack.c.h.b16 %v708
        %v3388 = vunpack.c.l.b16 %v709
        %v3389 = vunpack.c.h.b16 %v709
        %v3390 = vunpack.c.l.b16 %v710
        %v3391 = vunpack.c.h.b16 %v710
        %v3392 = vunpack.c.l.b16 %v711
        %v3393 = vunpack.c.h.b16 %v711
        %v3394 = vunpack.c.l.b16 %v712
        %v3395 = vunpack.c.h.b16 %v712
        %v3396 = vunpack.c.l.b16 %v713
        %v3397 = vunpack.c.h.b16 %v713
        %v3398 = vunpack.c.l.b16 %v714
        %v3399 = vunpack.c.h.b16 %v714
        %v3400 = vunpack.c.l.b16 %v715
        %v3401 = vunpack.c.h.b16 %v715
        %v3402 = vunpack.c.l.b16 %v716
        %v3403 = vunpack.c.h.b16 %v716
        %v3404 = vunpack.c.l.b16 %v717
        %v3405 = vunpack.c.h.b16 %v717
        %v3406 = vunpack.c.l.b16 %v718
        %v3407 = vunpack.c.h.b16 %v718
        %v3408 = vunpack.c.l.b16 %v719
        %v3409 = vunpack.c.h.b16 %v719
        %v3410 = vunpack.c.l.b16 %v720
        %v3411 = vunpack.c.h.b16 %v720
        %v3412 = vunpack.c.l.b16 %v721
        %v3413 = vunpack.c.h.b16 %v721
        %v3414 = vunpack.c.l.b16 %v722
        %v3415 = vunpack.c.h.b16 %v722
        %v3416 = vunpack.c.l.b16 %v723
        %v3417 = vunpack.c.h.b16 %v723
        %v3418 = vunpack.c.l.b16 %v724
        %v3419 = vunpack.c.h.b16 %v724
        %v3420 = vunpack.c.l.b16 %v725
        %v3421 = vunpack.c.h.b16 %v725
        %v3422 = vunpack.c.l.b16 %v726
        %v3423 = vunpack.c.h.b16 %v726
        %v3424 = vunpack.c.l.b16 %v727
        %v3425 = vunpack.c.h.b16 %v727
        %v3426 = vunpack.c.l.b16 %v728
        %v3427 = vunpack.c.h.b16 %v728
        %v3428 = vunpack.c.l.b16 %v729
        %v3429 = vunpack.c.h.b16 %v729
        %v3430 = vunpack.c.l.b16 %v730
        %v3431 = vunpack.c.h.b16 %v730
        %v3432 = vunpack.c.l.b16 %v731
        %v3433 = vunpack.c.h.b16 %v731
        %v3434 = vunpack.c.l.b16 %v732
        %v3435 = vunpack.c.h.b16 %v732
        %v3436 = vunpack.c.l.b16 %v733
        %v3437 = vunpack.c.h.b16 %v733
        %v3438 = vunpack.c.l.b16 %v734
        %v3439 = vunpack.c.h.b16 %v734
        %v3440 = vunpack.c.l.b16 %v735
        %v3441 = vunpack.c.h.b16 %v735
        %v3442 = vunpack.c.l.b16 %v736
        %v3443 = vunpack.c.h.b16 %v736
        %v3444 = vunpack.c.l.b16 %v737
        %v3445 = vunpack.c.h.b16 %v737
        %v3446 = vunpack.c.l.b16 %v738
        %v3447 = vunpack.c.h.b16 %v738
        %v3448 = vunpack.c.l.b16 %v739
        %v3449 = vunpack.c.h.b16 %v739
        %v3450 = vunpack.c.l.b16 %v740
        %v3451 = vunpack.c.h.b16 %v740
        %v3452 = vunpack.c.l.b16 %v741
        %v3453 = vunpack.c.h.b16 %v741
        %v3454 = vunpack.c.l.b16 %v742
        %v3455 = vunpack.c.h.b16 %v742
        %v3456 = vunpack.c.l.b16 %v743
        %v3457 = vunpack.c.h.b16 %v743
        %v3458 = vunpack.c.l.b16 %v744
        %v3459 = vunpack.c.h.b16 %v744
        %v3460 = vunpack.c.l.b16 %v745
        %v3461 = vunpack.c.h.b16 %v745
        %v3462 = vunpack.c.l.b16 %v746
        %v3463 = vunpack.c.h.b16 %v746
        %v3464 = vunpack.c.l.b16 %v747
        %v3465 = vunpack.c.h.b16 %v747
        %v3466 = vunpack.c.l.b16 %v748
        %v3467 = vunpack.c.h.b16 %v748
        %v3468 = vunpack.c.l.b16 %v749
        %v3469 = vunpack.c.h.b16 %v749
        %v3470 = vunpack.c.l.b16 %v750
        %v3471 = vunpack.c.h.b16 %v750
        %v3472 = vunpack.c.l.b16 %v751
        %v3473 = vunpack.c.h.b16 %v751
        %v3474 = vunpack.c.l.b16 %v752
        %v3475 = vunpack.c.h.b16 %v752
        %v3476 = vunpack.c.l.b16 %v753
        %v3477 = vunpack.c.h.b16 %v753
        %v3478 = vunpack.c.l.b16 %v754
        %v3479 = vunpack.c.h.b16 %v754
        %v3480 = vunpack.c.l.b16 %v755
        %v3481 = vunpack.c.h.b16 %v755
        %v3482 = vunpack.c.l.b16 %v756
        %v3483 = vunpack.c.h.b16 %v756
        %v3484 = vunpack.c.l.b16 %v757
        %v3485 = vunpack.c.h.b16 %v757
        %v3486 = vunpack.c.l.b16 %v758
        %v3487 = vunpack.c.h.b16 %v758
        %v3488 = vunpack.c.l.b16 %v759
        %v3489 = vunpack.c.h.b16 %v759
        %v3490 = vunpack.c.l.b16 %v760
        %v3491 = vunpack.c.h.b16 %v760
        %v3492 = vunpack.c.l.b16 %v761
        %v3493 = vunpack.c.h.b16 %v761
        %v3494 = vunpack.c.l.b16 %v762
        %v3495 = vunpack.c.h.b16 %v762
        %v3496 = vunpack.c.l.b16 %v763
        %v3497 = vunpack.c.h.b16 %v763
        %v3498 = vunpack.c.l.b16 %v764
        %v3499 = vunpack.c.h.b16 %v764
        %v3500 = vunpack.c.l.b16 %v765
        %v3501 = vunpack.c.h.b16 %v765
        %v3502 = vunpack.c.l.b16 %v766
        %v3503 = vunpack.c.h.b16 %v766
        %v3504 = vunpack.c.l.b16 %v767
        %v3505 = vunpack.c.h.b16 %v767
        %v3506 = vunpack.c.l.b16 %v768
        %v3507 = vunpack.c.h.b16 %v768
        %v3508 = vunpack.c.l.b16 %v769
        %v3509 = vunpack.c.h.b16 %v769
        %v3510 = vunpack.c.l.b16 %v770
        %v3511 = vunpack.c.h.b16 %v770
        %v3512 = vunpack.c.l.b16 %v771
        %v3513 = vunpack.c.h.b16 %v771
        %v3514 = vunpack.c.l.b16 %v772
        %v3515 = vunpack.c.h.b16 %v772
        %v3516 = vunpack.c.l.b16 %v773
        %v3517 = vunpack.c.h.b16 %v773
        %v3518 = vunpack.c.l.b16 %v774
        %v3519 = vunpack.c.h.b16 %v774
        %v3520 = vunpack.c.l.b16 %v775
        %v3521 = vunpack.c.h.b16 %v775
        %v3522 = vunpack.c.l.b16 %v776
        %v3523 = vunpack.c.h.b16 %v776
        %v3524 = vunpack.c.l.b16 %v777
        %v3525 = vunpack.c.h.b16 %v777
        %v3526 = vunpack.c.l.b16 %v778
        %v3527 = vunpack.c.h.b16 %v778
        %v3528 = vunpack.c.l.b16 %v779
        %v3529 = vunpack.c.h.b16 %v779
        %v3530 = vunpack.c.l.b16 %v780
        %v3531 = vunpack.c.h.b16 %v780
        %v3532 = vunpack.c.l.b16 %v781
        %v3533 = vunpack.c.h.b16 %v781
        %v3534 = vunpack.c.l.b16 %v782
        %v3535 = vunpack.c.h.b16 %v782
        %v3536 = vunpack.c.l.b16 %v783
        %v3537 = vunpack.c.h.b16 %v783
        %v3538 = vunpack.c.l.b16 %v784
        %v3539 = vunpack.c.h.b16 %v784
        %v3540 = vunpack.c.l.b16 %v785
        %v3541 = vunpack.c.h.b16 %v785
        %v3542 = vunpack.c.l.b16 %v786
        %v3543 = vunpack.c.h.b16 %v786
        %v3544 = vunpack.c.l.b16 %v787
        %v3545 = vunpack.c.h.b16 %v787
        %v3546 = vunpack.c.l.b16 %v788
        %v3547 = vunpack.c.h.b16 %v788
        %v3548 = vunpack.c.l.b16 %v789
        %v3549 = vunpack.c.h.b16 %v789
        %v3550 = vunpack.c.l.b16 %v790
        %v3551 = vunpack.c.h.b16 %v790
        %v3552 = vunpack.c.l.b16 %v791
        %v3553 = vunpack.c.h.b16 %v791
        %v3554 = vunpack.c.l.b16 %v792
        %v3555 = vunpack.c.h.b16 %v792
        %v3556 = vunpack.c.l.b16 %v793
        %v3557 = vunpack.c.h.b16 %v793
        %v3558 = vunpack.c.l.b16 %v794
        %v3559 = vunpack.c.h.b16 %v794
        %v3560 = vunpack.c.l.b16 %v795
        %v3561 = vunpack.c.h.b16 %v795
        %v3562 = vunpack.c.l.b16 %v796
        %v3563 = vunpack.c.h.b16 %v796
        %v3564 = vunpack.c.l.b16 %v797
        %v3565 = vunpack.c.h.b16 %v797
        %v3566 = vunpack.c.l.b16 %v798
        %v3567 = vunpack.c.h.b16 %v798
        %v3568 = vunpack.c.l.b16 %v799
        %v3569 = vunpack.c.h.b16 %v799
        %v3570 = vunpack.c.l.b16 %v800
        %v3571 = vunpack.c.h.b16 %v800
        %v3572 = vunpack.c.l.b16 %v801
        %v3573 = vunpack.c.h.b16 %v801
        %v3574 = vunpack.c.l.b16 %v802
        %v3575 = vunpack.c.h.b16 %v802
        %v3576 = vunpack.c.l.b16 %v803
        %v3577 = vunpack.c.h.b16 %v803
        %v3578 = vunpack.c.l.b16 %v804
        %v3579 = vunpack.c.h.b16 %v804
        %v3580 = vunpack.c.l.b16 %v805
        %v3581 = vunpack.c.h.b16 %v805
        %v3582 = vunpack.c.l.b16 %v806
        %v3583 = vunpack.c.h.b16 %v806
        %v3584 = vunpack.c.l.b16 %v807
        %v3585 = vunpack.c.h.b16 %v807
        %v3586 = vunpack.c.l.b16 %v808
        %v3587 = vunpack.c.h.b16 %v808
        %v3588 = vunpack.c.l.b16 %v809
        %v3589 = vunpack.c.h.b16 %v809
        %v3590 = vunpack.c.l.b16 %v810
        %v3591 = vunpack.c.h.b16 %v810
        %v3592 = vunpack.c.l.b16 %v811
        %v3593 = vunpack.c.h.b16 %v811
        %v3594 = vunpack.c.l.b16 %v812
        %v3595 = vunpack.c.h.b16 %v812
        %v3596 = vunpack.c.l.b16 %v813
        %v3597 = vunpack.c.h.b16 %v813
        %v3598 = vunpack.c.l.b16 %v814
        %v3599 = vunpack.c.h.b16 %v814
        %v3600 = vunpack.c.l.b16 %v815
        %v3601 = vunpack.c.h.b16 %v815
        %v3602 = vunpack.c.l.b16 %v816
        %v3603 = vunpack.c.h.b16 %v816
        %v3604 = vunpack.c.l.b16 %v817
        %v3605 = vunpack.c.h.b16 %v817
        %v3606 = vunpack.c.l.b16 %v818
        %v3607 = vunpack.c.h.b16 %v818
        %v3608 = vunpack.c.l.b16 %v819
        %v3609 = vunpack.c.h.b16 %v819
        %v3610 = vunpack.c.l.b16 %v820
        %v3611 = vunpack.c.h.b16 %v820
        %v3612 = vunpack.c.l.b16 %v821
        %v3613 = vunpack.c.h.b16 %v821
        %v3614 = vunpack.c.l.b16 %v822
        %v3615 = vunpack.c.h.b16 %v822
        %v3616 = vunpack.c.l.b16 %v823
        %v3617 = vunpack.c.h.b16 %v823
        %v3618 = vunpack.c.l.b16 %v824
        %v3619 = vunpack.c.h.b16 %v824
        %v3620 = vunpack.c.l.b16 %v825
        %v3621 = vunpack.c.h.b16 %v825
        %v3622 = vunpack.c.l.b16 %v826
        %v3623 = vunpack.c.h.b16 %v826
        %v3624 = vunpack.c.l.b16 %v827
        %v3625 = vunpack.c.h.b16 %v827
        %v3626 = vunpack.c.l.b16 %v828
        %v3627 = vunpack.c.h.b16 %v828
        %v3628 = vunpack.c.l.b16 %v829
        %v3629 = vunpack.c.h.b16 %v829
        %v3630 = vunpack.c.l.b16 %v830
        %v3631 = vunpack.c.h.b16 %v830
        %v3632 = vunpack.c.l.b16 %v831
        %v3633 = vunpack.c.h.b16 %v831
        %v3634 = vunpack.c.l.b16 %v832
        %v3635 = vunpack.c.h.b16 %v832
        %v3636 = vunpack.c.l.b16 %v833
        %v3637 = vunpack.c.h.b16 %v833
        %v3638 = vunpack.c.l.b16 %v834
        %v3639 = vunpack.c.h.b16 %v834
        %v3640 = vunpack.c.l.b16 %v835
        %v3641 = vunpack.c.h.b16 %v835
        %v3642 = vunpack.c.l.b16 %v836
        %v3643 = vunpack.c.h.b16 %v836
        %v3644 = vunpack.c.l.b16 %v837
        %v3645 = vunpack.c.h.b16 %v837
        %v3646 = vunpack.c.l.b16 %v838
        %v3647 = vunpack.c.h.b16 %v838
        %v3648 = vunpack.c.l.b16 %v839
        %v3649 = vunpack.c.h.b16 %v839
        %v3650 = vunpack.c.l.b16 %v840
        %v3651 = vunpack.c.h.b16 %v840
        %v3652 = vunpack.c.l.b16 %v841
        %v3653 = vunpack.c.h.b16 %v841
        %v3654 = vunpack.c.l.b16 %v842
        %v3655 = vunpack.c.h.b16 %v842
        %v3656 = vunpack.c.l.b16 %v843
        %v3657 = vunpack.c.h.b16 %v843
        %v3658 = vunpack.c.l.b16 %v844
        %v3659 = vunpack.c.h.b16 %v844
        %v3660 = vunpack.c.l.b16 %v845
        %v3661 = vunpack.c.h.b16 %v845
        %v3662 = vunpack.c.l.b16 %v846
        %v3663 = vunpack.c.h.b16 %v846
        %v3664 = vunpack.c.l.b16 %v847
        %v3665 = vunpack.c.h.b16 %v847
        %v3666 = vunpack.c.l.b16 %v848
        %v3667 = vunpack.c.h.b16 %v848
        %v3668 = vunpack.c.l.b16 %v849
        %v3669 = vunpack.c.h.b16 %v849
        %v3670 = vunpack.c.l.b16 %v850
        %v3671 = vunpack.c.h.b16 %v850
        %v3672 = vunpack.c.l.b16 %v851
        %v3673 = vunpack.c.h.b16 %v851
        %v3674 = vunpack.c.l.b16 %v852
        %v3675 = vunpack.c.h.b16 %v852
        %v3676 = vunpack.c.l.b16 %v853
        %v3677 = vunpack.c.h.b16 %v853
        %v3678 = vunpack.c.l.b16 %v854
        %v3679 = vunpack.c.h.b16 %v854
        %v3680 = vunpack.c.l.b16 %v855
        %v3681 = vunpack.c.h.b16 %v855
        %v3682 = vunpack.c.l.b16 %v856
        %v3683 = vunpack.c.h.b16 %v856
        %v3684 = vunpack.c.l.b16 %v857
        %v3685 = vunpack.c.h.b16 %v857
        %v3686 = vunpack.c.l.b16 %v858
        %v3687 = vunpack.c.h.b16 %v858
        %v3688 = vunpack.c.l.b16 %v859
        %v3689 = vunpack.c.h.b16 %v859
        %v3690 = vunpack.c.l.b16 %v860
        %v3691 = vunpack.c.h.b16 %v860
        %v3692 = vunpack.c.l.b16 %v861
        %v3693 = vunpack.c.h.b16 %v861
        %v3694 = vunpack.c.l.b16 %v862
        %v3695 = vunpack.c.h.b16 %v862
        %v3696 = vunpack.c.l.b16 %v863
        %v3697 = vunpack.c.h.b16 %v863
        %v3698 = vunpack.c.l.b16 %v864
        %v3699 = vunpack.c.h.b16 %v864
        %v3700 = vunpack.c.l.b16 %v865
        %v3701 = vunpack.c.h.b16 %v865
        %v3702 = vunpack.c.l.b16 %v866
        %v3703 = vunpack.c.h.b16 %v866
        %v3704 = vunpack.c.l.b16 %v867
        %v3705 = vunpack.c.h.b16 %v867
        %v3706 = vunpack.c.l.b16 %v868
        %v3707 = vunpack.c.h.b16 %v868
        %v3708 = vunpack.c.l.b16 %v869
        %v3709 = vunpack.c.h.b16 %v869
        %v3710 = vunpack.c.l.b16 %v870
        %v3711 = vunpack.c.h.b16 %v870
        %v3712 = vunpack.c.l.b16 %v871
        %v3713 = vunpack.c.h.b16 %v871
        %v3714 = vunpack.c.l.b16 %v872
        %v3715 = vunpack.c.h.b16 %v872
        %v3716 = vunpack.c.l.b16 %v873
        %v3717 = vunpack.c.h.b16 %v873
        %v3718 = vunpack.c.l.b16 %v874
        %v3719 = vunpack.c.h.b16 %v874
        %v3720 = vunpack.c.l.b16 %v875
        %v3721 = vunpack.c.h.b16 %v875
        %v3722 = vunpack.c.l.b16 %v876
        %v3723 = vunpack.c.h.b16 %v876
        %v3724 = vunpack.c.l.b16 %v877
        %v3725 = vunpack.c.h.b16 %v877
        %v3726 = vunpack.c.l.b16 %v878
        %v3727 = vunpack.c.h.b16 %v878
        %v3728 = vunpack.c.l.b16 %v879
        %v3729 = vunpack.c.h.b16 %v879
        %v3730 = vunpack.c.l.b16 %v880
        %v3731 = vunpack.c.h.b16 %v880
        %v3732 = vunpack.c.l.b16 %v881
        %v3733 = vunpack.c.h.b16 %v881
        %v3734 = vunpack.c.l.b16 %v882
        %v3735 = vunpack.c.h.b16 %v882
        %v3736 = vunpack.c.l.b16 %v883
        %v3737 = vunpack.c.h.b16 %v883
        %v3738 = vunpack.c.l.b16 %v884
        %v3739 = vunpack.c.h.b16 %v884
        %v3740 = vunpack.c.l.b16 %v885
        %v3741 = vunpack.c.h.b16 %v885
        %v3742 = vunpack.c.l.b16 %v886
        %v3743 = vunpack.c.h.b16 %v886
        %v3744 = vunpack.c.l.b16 %v887
        %v3745 = vunpack.c.h.b16 %v887
        %v3746 = vunpack.c.l.b16 %v888
        %v3747 = vunpack.c.h.b16 %v888
        %v3748 = vunpack.c.l.b16 %v889
        %v3749 = vunpack.c.h.b16 %v889
        %v3750 = vunpack.c.l.b16 %v890
        %v3751 = vunpack.c.h.b16 %v890
        %v3752 = vunpack.c.l.b16 %v891
        %v3753 = vunpack.c.h.b16 %v891
        %v3754 = vunpack.c.l.b16 %v892
        %v3755 = vunpack.c.h.b16 %v892
        %v3756 = vunpack.c.l.b16 %v893
        %v3757 = vunpack.c.h.b16 %v893
        %v3758 = vunpack.c.l.b16 %v894
        %v3759 = vunpack.c.h.b16 %v894
        %v3760 = vunpack.c.l.b16 %v895
        %v3761 = vunpack.c.h.b16 %v895
        %v3762 = vunpack.c.l.b16 %v896
        %v3763 = vunpack.c.h.b16 %v896
        %v3764 = vunpack.c.l.b16 %v897
        %v3765 = vunpack.c.h.b16 %v897
        %v3766 = vunpack.c.l.b16 %v898
        %v3767 = vunpack.c.h.b16 %v898
        %v3768 = vunpack.c.l.b16 %v899
        %v3769 = vunpack.c.h.b16 %v899
        %v3770 = vunpack.c.l.b16 %v900
        %v3771 = vunpack.c.h.b16 %v900
        %v3772 = vunpack.c.l.b16 %v901
        %v3773 = vunpack.c.h.b16 %v901
        %v3774 = vunpack.c.l.b16 %v902
        %v3775 = vunpack.c.h.b16 %v902
        %v3776 = vunpack.c.l.b16 %v903
        %v3777 = vunpack.c.h.b16 %v903
        %v3778 = vunpack.c.l.b16 %v904
        %v3779 = vunpack.c.h.b16 %v904
        %v3780 = vunpack.c.l.b16 %v905
        %v3781 = vunpack.c.h.b16 %v905
        %v3782 = vunpack.c.l.b16 %v906
        %v3783 = vunpack.c.h.b16 %v906
        %v3784 = vunpack.c.l.b16 %v907
        %v3785 = vunpack.c.h.b16 %v907
        %v3786 = vunpack.c.l.b16 %v908
        %v3787 = vunpack.c.h.b16 %v908
        %v3788 = vunpack.c.l.b16 %v909
        %v3789 = vunpack.c.h.b16 %v909
        %v3790 = vunpack.c.l.b16 %v910
        %v3791 = vunpack.c.h.b16 %v910
        %v3792 = vunpack.c.l.b16 %v911
        %v3793 = vunpack.c.h.b16 %v911
        %v3794 = vunpack.c.l.b16 %v912
        %v3795 = vunpack.c.h.b16 %v912
        %v3796 = vunpack.c.l.b16 %v913
        %v3797 = vunpack.c.h.b16 %v913
        %v3798 = vunpack.c.l.b16 %v914
        %v3799 = vunpack.c.h.b16 %v914
        %v3800 = vunpack.c.l.b16 %v915
        %v3801 = vunpack.c.h.b16 %v915
        %v3802 = vunpack.c.l.b16 %v916
        %v3803 = vunpack.c.h.b16 %v916
        %v3804 = vunpack.c.l.b16 %v917
        %v3805 = vunpack.c.h.b16 %v917
        %v3806 = vunpack.c.l.b16 %v918
        %v3807 = vunpack.c.h.b16 %v918
        %v3808 = vunpack.c.l.b16 %v919
        %v3809 = vunpack.c.h.b16 %v919
        %v3810 = vunpack.c.l.b16 %v920
        %v3811 = vunpack.c.h.b16 %v920
        %v3812 = vunpack.c.l.b16 %v921
        %v3813 = vunpack.c.h.b16 %v921
        %v3814 = vunpack.c.l.b16 %v922
        %v3815 = vunpack.c.h.b16 %v922
        %v3816 = vunpack.c.l.b16 %v923
        %v3817 = vunpack.c.h.b16 %v923
        %v3818 = vunpack.c.l.b16 %v924
        %v3819 = vunpack.c.h.b16 %v924
        %v3820 = vunpack.c.l.b16 %v925
        %v3821 = vunpack.c.h.b16 %v925
        %v3822 = vunpack.c.l.b16 %v926
        %v3823 = vunpack.c.h.b16 %v926
        %v3824 = vunpack.c.l.b16 %v927
        %v3825 = vunpack.c.h.b16 %v927
        %v3826 = vunpack.c.l.b16 %v928
        %v3827 = vunpack.c.h.b16 %v928
        %v3828 = vunpack.c.l.b16 %v929
        %v3829 = vunpack.c.h.b16 %v929
        %v3830 = vunpack.c.l.b16 %v930
        %v3831 = vunpack.c.h.b16 %v930
        %v3832 = vunpack.c.l.b16 %v931
        %v3833 = vunpack.c.h.b16 %v931
        %v3834 = vunpack.c.l.b16 %v932
        %v3835 = vunpack.c.h.b16 %v932
        %v3836 = vunpack.c.l.b16 %v933
        %v3837 = vunpack.c.h.b16 %v933
        %v3838 = vunpack.c.l.b16 %v934
        %v3839 = vunpack.c.h.b16 %v934
        %v3840 = vunpack.c.l.b16 %v935
        %v3841 = vunpack.c.h.b16 %v935
        %v3842 = vunpack.c.l.b16 %v936
        %v3843 = vunpack.c.h.b16 %v936
        %v3844 = vunpack.c.l.b16 %v937
        %v3845 = vunpack.c.h.b16 %v937
        %v3846 = vunpack.c.l.b16 %v938
        %v3847 = vunpack.c.h.b16 %v938
        %v3848 = vunpack.c.l.b16 %v939
        %v3849 = vunpack.c.h.b16 %v939
        %v3850 = vunpack.c.l.b16 %v940
        %v3851 = vunpack.c.h.b16 %v940
        %v3852 = vunpack.c.l.b16 %v941
        %v3853 = vunpack.c.h.b16 %v941
        %v3854 = vunpack.c.l.b16 %v942
        %v3855 = vunpack.c.h.b16 %v942
        %v3856 = vunpack.c.l.b16 %v943
        %v3857 = vunpack.c.h.b16 %v943
        %v3858 = vunpack.c.l.b16 %v944
        %v3859 = vunpack.c.h.b16 %v944
        %v3860 = vunpack.c.l.b16 %v945
        %v3861 = vunpack.c.h.b16 %v945
        %v3862 = vunpack.c.l.b16 %v946
        %v3863 = vunpack.c.h.b16 %v946
        %v3864 = vunpack.c.l.b16 %v947
        %v3865 = vunpack.c.h.b16 %v947
        %v3866 = vunpack.c.l.b16 %v948
        %v3867 = vunpack.c.h.b16 %v948
        %v3868 = vunpack.c.l.b16 %v949
        %v3869 = vunpack.c.h.b16 %v949
        %v3870 = vunpack.c.l.b16 %v950
        %v3871 = vunpack.c.h.b16 %v950
        %v3872 = vunpack.c.l.b16 %v951
        %v3873 = vunpack.c.h.b16 %v951
        %v3874 = vunpack.c.l.b16 %v952
        %v3875 = vunpack.c.h.b16 %v952
        %v3876 = vunpack.c.l.b16 %v953
        %v3877 = vunpack.c.h.b16 %v953
        %v3878 = vunpack.c.l.b16 %v954
        %v3879 = vunpack.c.h.b16 %v954
        %v3880 = vunpack.c.l.b16 %v955
        %v3881 = vunpack.c.h.b16 %v955
        %v3882 = vunpack.c.l.b16 %v956
        %v3883 = vunpack.c.h.b16 %v956
        %v3884 = vunpack.c.l.b16 %v957
        %v3885 = vunpack.c.h.b16 %v957
        %v3886 = vunpack.c.l.b16 %v958
        %v3887 = vunpack.c.h.b16 %v958
        %v3888 = vunpack.c.l.b16 %v959
        %v3889 = vunpack.c.h.b16 %v959
        %v3890 = vunpack.c.l.b16 %v960
        %v3891 = vunpack.c.h.b16 %v960
        %v3892 = vunpack.c.l.b16 %v961
        %v3893 = vunpack.c.h.b16 %v961
        %v3894 = vunpack.c.l.b16 %v962
        %v3895 = vunpack.c.h.b16 %v962
        %v3896 = vunpack.c.l.b16 %v963
        %v3897 = vunpack.c.h.b16 %v963
        %v3898 = vunpack.c.l.b16 %v964
        %v3899 = vunpack.c.h.b16 %v964
        %v3900 = vunpack.c.l.b16 %v965
        %v3901 = vunpack.c.h.b16 %v965
        %v3902 = vunpack.c.l.b16 %v966
        %v3903 = vunpack.c.h.b16 %v966
        %v3904 = vunpack.c.l.b16 %v967
        %v3905 = vunpack.c.h.b16 %v967
        %v3906 = vunpack.c.l.b16 %v968
        %v3907 = vunpack.c.h.b16 %v968
        %v3908 = vunpack.c.l.b16 %v969
        %v3909 = vunpack.c.h.b16 %v969
        %v3910 = vunpack.c.l.b16 %v970
        %v3911 = vunpack.c.h.b16 %v970
        %v3912 = vunpack.c.l.b16 %v971
        %v3913 = vunpack.c.h.b16 %v971
        %v3914 = vunpack.c.l.b16 %v972
        %v3915 = vunpack.c.h.b16 %v972
        %v3916 = vunpack.c.l.b16 %v973
        %v3917 = vunpack.c.h.b16 %v973
        %v3918 = vunpack.c.l.b16 %v974
        %v3919 = vunpack.c.h.b16 %v974
        %v3920 = vunpack.c.l.b16 %v975
        %v3921 = vunpack.c.h.b16 %v975
        %v3922 = vunpack.c.l.b16 %v976
        %v3923 = vunpack.c.h.b16 %v976
        %v3924 = vunpack.c.l.b16 %v977
        %v3925 = vunpack.c.h.b16 %v977
        %v3926 = vunpack.c.l.b16 %v978
        %v3927 = vunpack.c.h.b16 %v978
        %v3928 = vunpack.c.l.b16 %v979
        %v3929 = vunpack.c.h.b16 %v979
        %v3930 = vunpack.c.l.b16 %v980
        %v3931 = vunpack.c.h.b16 %v980
        %v3932 = vunpack.c.l.b16 %v981
        %v3933 = vunpack.c.h.b16 %v981
        %v3934 = vunpack.c.l.b16 %v982
        %v3935 = vunpack.c.h.b16 %v982
        %v3936 = vunpack.c.l.b16 %v983
        %v3937 = vunpack.c.h.b16 %v983
        %v3938 = vunpack.c.l.b16 %v984
        %v3939 = vunpack.c.h.b16 %v984
        %v3940 = vunpack.c.l.b16 %v985
        %v3941 = vunpack.c.h.b16 %v985
        %v3942 = vunpack.c.l.b16 %v986
        %v3943 = vunpack.c.h.b16 %v986
        %v3944 = vunpack.c.l.b16 %v987
        %v3945 = vunpack.c.h.b16 %v987
        %v3946 = vunpack.c.l.b16 %v988
        %v3947 = vunpack.c.h.b16 %v988
        %v3948 = vunpack.c.l.b16 %v989
        %v3949 = vunpack.c.h.b16 %v989
        %v3950 = vunpack.c.l.b16 %v990
        %v3951 = vunpack.c.h.b16 %v990
        %v3952 = vunpack.c.l.b16 %v991
        %v3953 = vunpack.c.h.b16 %v991
        %v3954 = vunpack.c.l.b16 %v992
        %v3955 = vunpack.c.h.b16 %v992
        %v3956 = vunpack.c.l.b16 %v993
        %v3957 = vunpack.c.h.b16 %v993
        %v3958 = vunpack.c.l.b16 %v994
        %v3959 = vunpack.c.h.b16 %v994
        %v3960 = vunpack.c.l.b16 %v995
        %v3961 = vunpack.c.h.b16 %v995
        %v3962 = vunpack.c.l.b16 %v996
        %v3963 = vunpack.c.h.b16 %v996
        %v3964 = vunpack.c.l.b16 %v997
        %v3965 = vunpack.c.h.b16 %v997
        %v3966 = vunpack.c.l.b16 %v998
        %v3967 = vunpack.c.h.b16 %v998
        %v3968 = vunpack.c.l.b16 %v999
        %v3969 = vunpack.c.h.b16 %v999
        %v3970 = vunpack.c.l.b16 %v1000
        %v3971 = vunpack.c.h.b16 %v1000
        %v3972 = vunpack.c.l.b16 %v1001
        %v3973 = vunpack.c.h.b16 %v1001
        %v3974 = vunpack.c.l.b16 %v1002
        %v3975 = vunpack.c.h.b16 %v1002
        %v3976 = vunpack.c.l.b16 %v1003
        %v3977 = vunpack.c.h.b16 %v1003
        %v3978 = vunpack.c.l.b16 %v1004
        %v3979 = vunpack.c.h.b16 %v1004
        %v3980 = vunpack.c.l.b16 %v1005
        %v3981 = vunpack.c.h.b16 %v1005
        %v3982 = vunpack.c.l.b16 %v1006
        %v3983 = vunpack.c.h.b16 %v1006
        %v3984 = vunpack.c.l.b16 %v1007
        %v3985 = vunpack.c.h.b16 %v1007
        %v3986 = vunpack.c.l.b16 %v1008
        %v3987 = vunpack.c.h.b16 %v1008
        %v3988 = vunpack.c.l.b16 %v1009
        %v3989 = vunpack.c.h.b16 %v1009
        %v3990 = vunpack.c.l.b16 %v1010
        %v3991 = vunpack.c.h.b16 %v1010
        %v3992 = vunpack.c.l.b16 %v1011
        %v3993 = vunpack.c.h.b16 %v1011
        %v3994 = vunpack.c.l.b16 %v1012
        %v3995 = vunpack.c.h.b16 %v1012
        %v3996 = vunpack.c.l.b16 %v1013
        %v3997 = vunpack.c.h.b16 %v1013
        %v3998 = vunpack.c.l.b16 %v1014
        %v3999 = vunpack.c.h.b16 %v1014
        %v4000 = vunpack.c.l.b16 %v1015
        %v4001 = vunpack.c.h.b16 %v1015
        %v4002 = vunpack.c.l.b16 %v1016
        %v4003 = vunpack.c.h.b16 %v1016
        %v4004 = vunpack.c.l.b16 %v1017
        %v4005 = vunpack.c.h.b16 %v1017
        %v4006 = vunpack.c.l.b16 %v1018
        %v4007 = vunpack.c.h.b16 %v1018
        %v4008 = vunpack.c.l.b16 %v1019
        %v4009 = vunpack.c.h.b16 %v1019
        %v4010 = vunpack.c.l.b16 %v1020
        %v4011 = vunpack.c.h.b16 %v1020
        %v4012 = vunpack.c.l.b16 %v1021
        %v4013 = vunpack.c.h.b16 %v1021
        %v4014 = vunpack.c.l.b16 %v1022
        %v4015 = vunpack.c.h.b16 %v1022
        %v4016 = vunpack.c.l.b16 %v1023
        %v4017 = vunpack.c.h.b16 %v1023
        %v4018 = vunpack.c.l.b16 %v1024
        %v4019 = vunpack.c.h.b16 %v1024
        %v4020 = vunpack.c.l.b16 %v1025
        %v4021 = vunpack.c.h.b16 %v1025
        %v4022 = vunpack.c.l.b16 %v1026
        %v4023 = vunpack.c.h.b16 %v1026
        %v4024 = vunpack.c.l.b16 %v1027
        %v4025 = vunpack.c.h.b16 %v1027
        %v4026 = vunpack.c.l.b16 %v1028
        %v4027 = vunpack.c.h.b16 %v1028
        %v4028 = vunpack.c.l.b16 %v1029
        %v4029 = vunpack.c.h.b16 %v1029
        %v4030 = vunpack.c.l.b16 %v1030
        %v4031 = vunpack.c.h.b16 %v1030
        %v4032 = vunpack.c.l.b16 %v1031
        %v4033 = vunpack.c.h.b16 %v1031
        %v4034 = vunpack.c.l.b16 %v1032
        %v4035 = vunpack.c.h.b16 %v1032
        %v4036 = vunpack.c.l.b16 %v1033
        %v4037 = vunpack.c.h.b16 %v1033
        %v4038 = vunpack.c.l.b16 %v1034
        %v4039 = vunpack.c.h.b16 %v1034
        %v4040 = vunpack.c.l.b16 %v1035
        %v4041 = vunpack.c.h.b16 %v1035
        %v4042 = vunpack.c.l.b16 %v1036
        %v4043 = vunpack.c.h.b16 %v1036
        %v4044 = vunpack.c.l.b16 %v1037
        %v4045 = vunpack.c.h.b16 %v1037
        %v4046 = vunpack.c.l.b16 %v1038
        %v4047 = vunpack.c.h.b16 %v1038
        %v4048 = vunpack.c.l.b16 %v1039
        %v4049 = vunpack.c.h.b16 %v1039
        %v4050 = vunpack.c.l.b16 %v1040
        %v4051 = vunpack.c.h.b16 %v1040
        %v4052 = vunpack.c.l.b16 %v1041
        %v4053 = vunpack.c.h.b16 %v1041
        %v4054 = vunpack.c.l.b16 %v1042
        %v4055 = vunpack.c.h.b16 %v1042
        %v4056 = vunpack.c.l.b16 %v1043
        %v4057 = vunpack.c.h.b16 %v1043
        %v4058 = vunpack.c.l.b16 %v1044
        %v4059 = vunpack.c.h.b16 %v1044
        %v4060 = vunpack.c.l.b16 %v1045
        %v4061 = vunpack.c.h.b16 %v1045
        %v4062 = vunpack.c.l.b16 %v1046
        %v4063 = vunpack.c.h.b16 %v1046
        %v4064 = vunpack.c.l.b16 %v1047
        %v4065 = vunpack.c.h.b16 %v1047
        %v4066 = vunpack.c.l.b16 %v1048
        %v4067 = vunpack.c.h.b16 %v1048
        %v4068 = vunpack.c.l.b16 %v1049
        %v4069 = vunpack.c.h.b16 %v1049
        %v4070 = vunpack.c.l.b16 %v1050
        %v4071 = vunpack.c.h.b16 %v1050
        %v4072 = vunpack.c.l.b16 %v1051
        %v4073 = vunpack.c.h.b16 %v1051
        %v4074 = vunpack.c.l.b16 %v1052
        %v4075 = vunpack.c.h.b16 %v1052
        %v4076 = vunpack.c.l.b16 %v1053
        %v4077 = vunpack.c.h.b16 %v1053
        %v4078 = vunpack.c.l.b16 %v1054
        %v4079 = vunpack.c.h.b16 %v1054
        %v4080 = vunpack.c.l.b16 %v1055
        %v4081 = vunpack.c.h.b16 %v1055
        %v4082 = vunpack.c.l.b16 %v1056
        %v4083 = vunpack.c.h.b16 %v1056
        %v4084 = vunpack.c.l.b16 %v1057
        %v4085 = vunpack.c.h.b16 %v1057
        %v4086 = vunpack.c.l.b16 %v1058
        %v4087 = vunpack.c.h.b16 %v1058
        %v4088 = vunpack.c.l.b16 %v1059
        %v4089 = vunpack.c.h.b16 %v1059
        %v4090 = vunpack.c.l.b16 %v1060
        %v4091 = vunpack.c.h.b16 %v1060
        %v4092 = vunpack.c.l.b16 %v1061
        %v4093 = vunpack.c.h.b16 %v1061
        %v4094 = vunpack.c.l.b16 %v1062
        %v4095 = vunpack.c.h.b16 %v1062
        %v4096 = vunpack.c.l.b16 %v1063
        %v4097 = vunpack.c.h.b16 %v1063
        %v4098 = vunpack.c.l.b16 %v1064
        %v4099 = vunpack.c.h.b16 %v1064
        %v4100 = vunpack.c.l.b16 %v1065
        %v4101 = vunpack.c.h.b16 %v1065
        %v4102 = vunpack.c.l.b16 %v1066
        %v4103 = vunpack.c.h.b16 %v1066
        %v4104 = vunpack.c.l.b16 %v1067
        %v4105 = vunpack.c.h.b16 %v1067
        %v4106 = vunpack.c.l.b16 %v1068
        %v4107 = vunpack.c.h.b16 %v1068
        %v4108 = vunpack.c.l.b16 %v1069
        %v4109 = vunpack.c.h.b16 %v1069
        %v4110 = vunpack.c.l.b16 %v1070
        %v4111 = vunpack.c.h.b16 %v1070
        %v4112 = vunpack.c.l.b16 %v1071
        %v4113 = vunpack.c.h.b16 %v1071
        %v4114 = vunpack.c.l.b16 %v1072
        %v4115 = vunpack.c.h.b16 %v1072
        %v4116 = vunpack.c.l.b16 %v1073
        %v4117 = vunpack.c.h.b16 %v1073
        %v4118 = vunpack.c.l.b16 %v1074
        %v4119 = vunpack.c.h.b16 %v1074
        %v4120 = vunpack.c.l.b16 %v1075
        %v4121 = vunpack.c.h.b16 %v1075
        %v4122 = vunpack.c.l.b16 %v1076
        %v4123 = vunpack.c.h.b16 %v1076
        %v4124 = vunpack.c.l.b16 %v1077
        %v4125 = vunpack.c.h.b16 %v1077
        %v4126 = vunpack.c.l.b16 %v1078
        %v4127 = vunpack.c.h.b16 %v1078
        %v4128 = vunpack.c.l.b16 %v1079
        %v4129 = vunpack.c.h.b16 %v1079
        %v4130 = vunpack.c.l.b16 %v1080
        %v4131 = vunpack.c.h.b16 %v1080
        %v4132 = vunpack.c.l.b16 %v1081
        %v4133 = vunpack.c.h.b16 %v1081
        %v4134 = vunpack.c.l.b16 %v1082
        %v4135 = vunpack.c.h.b16 %v1082
        %v4136 = vunpack.c.l.b16 %v1083
        %v4137 = vunpack.c.h.b16 %v1083
        %v4138 = vunpack.c.l.b16 %v1084
        %v4139 = vunpack.c.h.b16 %v1084
        %v4140 = vunpack.c.l.b16 %v1085
        %v4141 = vunpack.c.h.b16 %v1085
        %v4142 = vunpack.c.l.b16 %v1086
        %v4143 = vunpack.c.h.b16 %v1086
        %v4144 = vunpack.c.l.b16 %v1087
        %v4145 = vunpack.c.h.b16 %v1087
        %v4146 = vunpack.c.l.b16 %v1088
        %v4147 = vunpack.c.h.b16 %v1088
        %v4148 = vunpack.c.l.b16 %v1089
        %v4149 = vunpack.c.h.b16 %v1089
        %v4150 = vunpack.c.l.b16 %v1090
        %v4151 = vunpack.c.h.b16 %v1090
        %v4152 = vunpack.c.l.b16 %v1091
        %v4153 = vunpack.c.h.b16 %v1091
        %v4154 = vunpack.c.l.b16 %v1092
        %v4155 = vunpack.c.h.b16 %v1092
        %v4156 = vunpack.c.l.b16 %v1093
        %v4157 = vunpack.c.h.b16 %v1093
        %v4158 = vunpack.c.l.b16 %v1094
        %v4159 = vunpack.c.h.b16 %v1094
        %v4160 = vunpack.c.l.b16 %v1095
        %v4161 = vunpack.c.h.b16 %v1095
        %v4162 = vunpack.c.l.b16 %v1096
        %v4163 = vunpack.c.h.b16 %v1096
        %v4164 = vunpack.c.l.b16 %v1097
        %v4165 = vunpack.c.h.b16 %v1097
        %v4166 = vunpack.c.l.b16 %v1098
        %v4167 = vunpack.c.h.b16 %v1098
        %v4168 = vunpack.c.l.b16 %v1099
        %v4169 = vunpack.c.h.b16 %v1099
        %v4170 = vunpack.c.l.b16 %v1100
        %v4171 = vunpack.c.h.b16 %v1100
        %v4172 = vunpack.c.l.b16 %v1101
        %v4173 = vunpack.c.h.b16 %v1101
        %v4174 = vunpack.c.l.b16 %v1102
        %v4175 = vunpack.c.h.b16 %v1102
        %v4176 = vunpack.c.l.b16 %v1103
        %v4177 = vunpack.c.h.b16 %v1103
        %v4178 = vunpack.c.l.b16 %v1104
        %v4179 = vunpack.c.h.b16 %v1104
        %v4180 = vunpack.c.l.b16 %v1105
        %v4181 = vunpack.c.h.b16 %v1105
        %v4182 = vunpack.c.l.b16 %v1106
        %v4183 = vunpack.c.h.b16 %v1106
        %v4184 = vunpack.c.l.b16 %v1107
        %v4185 = vunpack.c.h.b16 %v1107
        %v4186 = vunpack.c.l.b16 %v1108
        %v4187 = vunpack.c.h.b16 %v1108
        %v4188 = vunpack.c.l.b16 %v1109
        %v4189 = vunpack.c.h.b16 %v1109
        %v4190 = vunpack.c.l.b16 %v1110
        %v4191 = vunpack.c.h.b16 %v1110
        %v4192 = vunpack.c.l.b16 %v1111
        %v4193 = vunpack.c.h.b16 %v1111
        %v4194 = vunpack.c.l.b16 %v1112
        %v4195 = vunpack.c.h.b16 %v1112
        %v4196 = vunpack.c.l.b16 %v1113
        %v4197 = vunpack.c.h.b16 %v1113
        %v4198 = vunpack.c.l.b16 %v1114
        %v4199 = vunpack.c.h.b16 %v1114
        %v4200 = vunpack.c.l.b16 %v1115
        %v4201 = vunpack.c.h.b16 %v1115
        %v4202 = vunpack.c.l.b16 %v1116
        %v4203 = vunpack.c.h.b16 %v1116
        %v4204 = vunpack.c.l.b16 %v1117
        %v4205 = vunpack.c.h.b16 %v1117
        %v4206 = vunpack.c.l.b16 %v1118
        %v4207 = vunpack.c.h.b16 %v1118
        %v4208 = vunpack.c.l.b16 %v1119
        %v4209 = vunpack.c.h.b16 %v1119
        %v4210 = vunpack.c.l.b16 %v1120
        %v4211 = vunpack.c.h.b16 %v1120
        %v4212 = vunpack.c.l.b16 %v1121
        %v4213 = vunpack.c.h.b16 %v1121
        %v4214 = vunpack.c.l.b16 %v1122
        %v4215 = vunpack.c.h.b16 %v1122
        %v4216 = vunpack.c.l.b16 %v1123
        %v4217 = vunpack.c.h.b16 %v1123
        %v4218 = vunpack.c.l.b16 %v1124
        %v4219 = vunpack.c.h.b16 %v1124
        %v4220 = vunpack.c.l.b16 %v1125
        %v4221 = vunpack.c.h.b16 %v1125
        %v4222 = vunpack.c.l.b16 %v1126
        %v4223 = vunpack.c.h.b16 %v1126
        %v4224 = vunpack.c.l.b16 %v1127
        %v4225 = vunpack.c.h.b16 %v1127
        %v4226 = vunpack.c.l.b16 %v1128
        %v4227 = vunpack.c.h.b16 %v1128
        %v4228 = vunpack.c.l.b16 %v1129
        %v4229 = vunpack.c.h.b16 %v1129
        %v4230 = vunpack.c.l.b16 %v1130
        %v4231 = vunpack.c.h.b16 %v1130
        %v4232 = vunpack.c.l.b16 %v1131
        %v4233 = vunpack.c.h.b16 %v1131
        %v4234 = vunpack.c.l.b16 %v1132
        %v4235 = vunpack.c.h.b16 %v1132
        %v4236 = vunpack.c.l.b16 %v1133
        %v4237 = vunpack.c.h.b16 %v1133
        %v4238 = vunpack.c.l.b16 %v1134
        %v4239 = vunpack.c.h.b16 %v1134
        %v4240 = vunpack.c.l.b16 %v1135
        %v4241 = vunpack.c.h.b16 %v1135
        %v4242 = vunpack.c.l.b16 %v1136
        %v4243 = vunpack.c.h.b16 %v1136
        %v4244 = vunpack.c.l.b16 %v1137
        %v4245 = vunpack.c.h.b16 %v1137
        %v4246 = vunpack.c.l.b16 %v1138
        %v4247 = vunpack.c.h.b16 %v1138
        %v4248 = vunpack.c.l.b16 %v1139
        %v4249 = vunpack.c.h.b16 %v1139
        %v4250 = vunpack.c.l.b16 %v1140
        %v4251 = vunpack.c.h.b16 %v1140
        %v4252 = vunpack.c.l.b16 %v1141
        %v4253 = vunpack.c.h.b16 %v1141
        %v4254 = vunpack.c.l.b16 %v1142
        %v4255 = vunpack.c.h.b16 %v1142
        %v4256 = vunpack.c.l.b16 %v1143
        %v4257 = vunpack.c.h.b16 %v1143
        %v4258 = vunpack.c.l.b16 %v1144
        %v4259 = vunpack.c.h.b16 %v1144
        %v4260 = vunpack.c.l.b16 %v1145
        %v4261 = vunpack.c.h.b16 %v1145
        %v4262 = vunpack.c.l.b16 %v1146
        %v4263 = vunpack.c.h.b16 %v1146
        %v4264 = vunpack.c.l.b16 %v1147
        %v4265 = vunpack.c.h.b16 %v1147
        %v4266 = vunpack.c.l.b16 %v1148
        %v4267 = vunpack.c.h.b16 %v1148
        %v4268 = vunpack.c.l.b16 %v1149
        %v4269 = vunpack.c.h.b16 %v1149
        %v4270 = vunpack.c.l.b16 %v1150
        %v4271 = vunpack.c.h.b16 %v1150
        %v4272 = vunpack.c.l.b16 %v1151
        %v4273 = vunpack.c.h.b16 %v1151
        %v4274 = vunpack.c.l.b16 %v1152
        %v4275 = vunpack.c.h.b16 %v1152
        %v4276 = vunpack.c.l.b16 %v1153
        %v4277 = vunpack.c.h.b16 %v1153
        %v4278 = vunpack.c.l.b16 %v1154
        %v4279 = vunpack.c.h.b16 %v1154
        %v4280 = vunpack.c.l.b16 %v1155
        %v4281 = vunpack.c.h.b16 %v1155
        %v4282 = vunpack.c.l.b16 %v1156
        %v4283 = vunpack.c.h.b16 %v1156
        %v4284 = vunpack.c.l.b16 %v1157
        %v4285 = vunpack.c.h.b16 %v1157
        %v4286 = vunpack.c.l.b16 %v1158
        %v4287 = vunpack.c.h.b16 %v1158
        %v4288 = vunpack.c.l.b16 %v1159
        %v4289 = vunpack.c.h.b16 %v1159
        %v4290 = vunpack.c.l.b16 %v1160
        %v4291 = vunpack.c.h.b16 %v1160
        %v4292 = vunpack.c.l.b16 %v1161
        %v4293 = vunpack.c.h.b16 %v1161
        %v4294 = vunpack.c.l.b16 %v1162
        %v4295 = vunpack.c.h.b16 %v1162
        %v4296 = vunpack.c.l.b16 %v1163
        %v4297 = vunpack.c.h.b16 %v1163
        %v4298 = vunpack.c.l.b16 %v1164
        %v4299 = vunpack.c.h.b16 %v1164
        %v4300 = vunpack.c.l.b16 %v1165
        %v4301 = vunpack.c.h.b16 %v1165
        %v4302 = vunpack.c.l.b16 %v1166
        %v4303 = vunpack.c.h.b16 %v1166
        %v4304 = vunpack.c.l.b16 %v1167
        %v4305 = vunpack.c.h.b16 %v1167
        %v4306 = vunpack.c.l.b16 %v1168
        %v4307 = vunpack.c.h.b16 %v1168
        %v4308 = vunpack.c.l.b16 %v1169
        %v4309 = vunpack.c.h.b16 %v1169
        %v4310 = vunpack.c.l.b16 %v1170
        %v4311 = vunpack.c.h.b16 %v1170
        %v4312 = vunpack.c.l.b16 %v1171
        %v4313 = vunpack.c.h.b16 %v1171
        %v4314 = vunpack.c.l.b16 %v1172
        %v4315 = vunpack.c.h.b16 %v1172
        %v4316 = vunpack.c.l.b16 %v1173
        %v4317 = vunpack.c.h.b16 %v1173
        %v4318 = vunpack.c.l.b16 %v1174
        %v4319 = vunpack.c.h.b16 %v1174
        %v4320 = vunpack.c.l.b16 %v1175
        %v4321 = vunpack.c.h.b16 %v1175
        %v4322 = vunpack.c.l.b16 %v1176
        %v4323 = vunpack.c.h.b16 %v1176
        %v4324 = vunpack.c.l.b16 %v1177
        %v4325 = vunpack.c.h.b16 %v1177
        %v4326 = vunpack.c.l.b16 %v1178
        %v4327 = vunpack.c.h.b16 %v1178
        %v4328 = vunpack.c.l.b16 %v1179
        %v4329 = vunpack.c.h.b16 %v1179
        %v4330 = vunpack.c.l.b16 %v1180
        %v4331 = vunpack.c.h.b16 %v1180
        %v4332 = vunpack.c.l.b16 %v1181
        %v4333 = vunpack.c.h.b16 %v1181
        %v4334 = vunpack.c.l.b16 %v1182
        %v4335 = vunpack.c.h.b16 %v1182
        %v4336 = vunpack.c.l.b16 %v1183
        %v4337 = vunpack.c.h.b16 %v1183
        %v4338 = vunpack.c.l.b16 %v1184
        %v4339 = vunpack.c.h.b16 %v1184
        %v4340 = vunpack.c.l.b16 %v1185
        %v4341 = vunpack.c.h.b16 %v1185
        %v4342 = vunpack.c.l.b16 %v1186
        %v4343 = vunpack.c.h.b16 %v1186
        %v4344 = vunpack.c.l.b16 %v1187
        %v4345 = vunpack.c.h.b16 %v1187
        %v4346 = vunpack.c.l.b16 %v1188
        %v4347 = vunpack.c.h.b16 %v1188
        %v4348 = vunpack.c.l.b16 %v1189
        %v4349 = vunpack.c.h.b16 %v1189
        %v4350 = vunpack.c.l.b16 %v1190
        %v4351 = vunpack.c.h.b16 %v1190
        %v4352 = vunpack.c.l.b16 %v1191
        %v4353 = vunpack.c.h.b16 %v1191
        %v4354 = vunpack.c.l.b16 %v1192
        %v4355 = vunpack.c.h.b16 %v1192
        %v4356 = vunpack.c.l.b16 %v1193
        %v4357 = vunpack.c.h.b16 %v1193
        %v4358 = vunpack.c.l.b16 %v1194
        %v4359 = vunpack.c.h.b16 %v1194
        %v4360 = vunpack.c.l.b16 %v1195
        %v4361 = vunpack.c.h.b16 %v1195
        %v4362 = vunpack.c.l.b16 %v1196
        %v4363 = vunpack.c.h.b16 %v1196
        %v4364 = vunpack.c.l.b16 %v1197
        %v4365 = vunpack.c.h.b16 %v1197
        %v4366 = vunpack.c.l.b16 %v1198
        %v4367 = vunpack.c.h.b16 %v1198
        %v4368 = vunpack.c.l.b16 %v1199
        %v4369 = vunpack.c.h.b16 %v1199
        %v4370 = vunpack.c.l.b16 %v1200
        %v4371 = vunpack.c.h.b16 %v1200
        %v4372 = vunpack.c.l.b16 %v1201
        %v4373 = vunpack.c.h.b16 %v1201
        %v4374 = vunpack.c.l.b16 %v1202
        %v4375 = vunpack.c.h.b16 %v1202
        %v4376 = vunpack.c.l.b16 %v1203
        %v4377 = vunpack.c.h.b16 %v1203
        %v4378 = vunpack.c.l.b16 %v1204
        %v4379 = vunpack.c.h.b16 %v1204
        %v4380 = vunpack.c.l.b16 %v1205
        %v4381 = vunpack.c.h.b16 %v1205
        %v4382 = vunpack.c.l.b16 %v1206
        %v4383 = vunpack.c.h.b16 %v1206
        %v4384 = vunpack.c.l.b16 %v1207
        %v4385 = vunpack.c.h.b16 %v1207
        %v4386 = vunpack.c.l.b16 %v1208
        %v4387 = vunpack.c.h.b16 %v1208
        %v4388 = vunpack.c.l.b16 %v1209
        %v4389 = vunpack.c.h.b16 %v1209
        %v4390 = vunpack.c.l.b16 %v1210
        %v4391 = vunpack.c.h.b16 %v1210
        %v4392 = vunpack.c.l.b16 %v1211
        %v4393 = vunpack.c.h.b16 %v1211
        %v4394 = vunpack.c.l.b16 %v1212
        %v4395 = vunpack.c.h.b16 %v1212
        %v4396 = vunpack.c.l.b16 %v1213
        %v4397 = vunpack.c.h.b16 %v1213
        %v4398 = vunpack.c.l.b16 %v1214
        %v4399 = vunpack.c.h.b16 %v1214
        %v4400 = vunpack.c.l.b16 %v1215
        %v4401 = vunpack.c.h.b16 %v1215
        %v4402 = vunpack.c.l.b16 %v1216
        %v4403 = vunpack.c.h.b16 %v1216
        %v4404 = vunpack.c.l.b16 %v1217
        %v4405 = vunpack.c.h.b16 %v1217
        %v4406 = vunpack.c.l.b16 %v1218
        %v4407 = vunpack.c.h.b16 %v1218
        %v4408 = vunpack.c.l.b16 %v1219
        %v4409 = vunpack.c.h.b16 %v1219
        %v4410 = vunpack.c.l.b16 %v1220
        %v4411 = vunpack.c.h.b16 %v1220
        %v4412 = vunpack.c.l.b16 %v1221
        %v4413 = vunpack.c.h.b16 %v1221
        %v4414 = vunpack.c.l.b16 %v1222
        %v4415 = vunpack.c.h.b16 %v1222
        %v4416 = vunpack.c.l.b16 %v1223
        %v4417 = vunpack.c.h.b16 %v1223
        %v4418 = vunpack.c.l.b16 %v1224
        %v4419 = vunpack.c.h.b16 %v1224
        %v4420 = vunpack.c.l.b16 %v1225
        %v4421 = vunpack.c.h.b16 %v1225
        %v4422 = vunpack.c.l.b16 %v1226
        %v4423 = vunpack.c.h.b16 %v1226
        %v4424 = vunpack.c.l.b16 %v1227
        %v4425 = vunpack.c.h.b16 %v1227
        %v4426 = vunpack.c.l.b16 %v1228
        %v4427 = vunpack.c.h.b16 %v1228
        %v4428 = vunpack.c.l.b16 %v1229
        %v4429 = vunpack.c.h.b16 %v1229
        %v4430 = vunpack.c.l.b16 %v1230
        %v4431 = vunpack.c.h.b16 %v1230
        %v4432 = vunpack.c.l.b16 %v1231
        %v4433 = vunpack.c.h.b16 %v1231
        %v4434 = vunpack.c.l.b16 %v1232
        %v4435 = vunpack.c.h.b16 %v1232
        %v4436 = vunpack.c.l.b16 %v1233
        %v4437 = vunpack.c.h.b16 %v1233
        %v4438 = vunpack.c.l.b16 %v1234
        %v4439 = vunpack.c.h.b16 %v1234
        %v4440 = vunpack.c.l.b16 %v1235
        %v4441 = vunpack.c.h.b16 %v1235
        %v4442 = vunpack.c.l.b16 %v1236
        %v4443 = vunpack.c.h.b16 %v1236
        %v4444 = vunpack.c.l.b16 %v1237
        %v4445 = vunpack.c.h.b16 %v1237
        %v4446 = vunpack.c.l.b16 %v1238
        %v4447 = vunpack.c.h.b16 %v1238
        %v4448 = vunpack.c.l.b16 %v1239
        %v4449 = vunpack.c.h.b16 %v1239
        %v4450 = vunpack.c.l.b16 %v1240
        %v4451 = vunpack.c.h.b16 %v1240
        %v4452 = vunpack.c.l.b16 %v1241
        %v4453 = vunpack.c.h.b16 %v1241
        %v4454 = vunpack.c.l.b16 %v1242
        %v4455 = vunpack.c.h.b16 %v1242
        %v4456 = vunpack.c.l.b16 %v1243
        %v4457 = vunpack.c.h.b16 %v1243
        %v4458 = vunpack.c.l.b16 %v1244
        %v4459 = vunpack.c.h.b16 %v1244
        %v4460 = vunpack.c.l.b16 %v1245
        %v4461 = vunpack.c.h.b16 %v1245
        %v4462 = vunpack.c.l.b16 %v1246
        %v4463 = vunpack.c.h.b16 %v1246
        %v4464 = vunpack.c.l.b16 %v1247
        %v4465 = vunpack.c.h.b16 %v1247
        %v4466 = vunpack.c.l.b16 %v1248
        %v4467 = vunpack.c.h.b16 %v1248
        %v4468 = vunpack.c.l.b16 %v1249
        %v4469 = vunpack.c.h.b16 %v1249
        %v4470 = vunpack.c.l.b16 %v1250
        %v4471 = vunpack.c.h.b16 %v1250
        %v4472 = vunpack.c.l.b16 %v1251
        %v4473 = vunpack.c.h.b16 %v1251
        %v4474 = vunpack.c.l.b16 %v1252
        %v4475 = vunpack.c.h.b16 %v1252
        %v4476 = vunpack.c.l.b16 %v1253
        %v4477 = vunpack.c.h.b16 %v1253
        %v4478 = vunpack.c.l.b16 %v1254
        %v4479 = vunpack.c.h.b16 %v1254
        %v4480 = vunpack.c.l.b16 %v1255
        %v4481 = vunpack.c.h.b16 %v1255
        %v4482 = vunpack.c.l.b16 %v1256
        %v4483 = vunpack.c.h.b16 %v1256
        %v4484 = vunpack.c.l.b16 %v1257
        %v4485 = vunpack.c.h.b16 %v1257
        %v4486 = vunpack.c.l.b16 %v1258
        %v4487 = vunpack.c.h.b16 %v1258
        %v4488 = vunpack.c.l.b16 %v1259
        %v4489 = vunpack.c.h.b16 %v1259
        %v4490 = vunpack.c.l.b16 %v1260
        %v4491 = vunpack.c.h.b16 %v1260
        %v4492 = vunpack.c.l.b16 %v1261
        %v4493 = vunpack.c.h.b16 %v1261
        %v4494 = vunpack.c.l.b16 %v1262
        %v4495 = vunpack.c.h.b16 %v1262
        %v4496 = vunpack.c.l.b16 %v1263
        %v4497 = vunpack.c.h.b16 %v1263
        %v4498 = vunpack.c.l.b16 %v1264
        %v4499 = vunpack.c.h.b16 %v1264
        %v4500 = vunpack.c.l.b16 %v1265
        %v4501 = vunpack.c.h.b16 %v1265
        %v4502 = vunpack.c.l.b16 %v1266
        %v4503 = vunpack.c.h.b16 %v1266
        %v4504 = vunpack.c.l.b16 %v1267
        %v4505 = vunpack.c.h.b16 %v1267
        %v4506 = vunpack.c.l.b16 %v1268
        %v4507 = vunpack.c.h.b16 %v1268
        %v4508 = vunpack.c.l.b16 %v1269
        %v4509 = vunpack.c.h.b16 %v1269
        %v4510 = vunpack.c.l.b16 %v1270
        %v4511 = vunpack.c.h.b16 %v1270
        %v4512 = vunpack.c.l.b16 %v1271
        %v4513 = vunpack.c.h.b16 %v1271
        %v4514 = vunpack.c.l.b16 %v1272
        %v4515 = vunpack.c.h.b16 %v1272
        %v4516 = vunpack.c.l.b16 %v1273
        %v4517 = vunpack.c.h.b16 %v1273
        %v4518 = vunpack.c.l.b16 %v1274
        %v4519 = vunpack.c.h.b16 %v1274
        %v4520 = vunpack.c.l.b16 %v1275
        %v4521 = vunpack.c.h.b16 %v1275
        %v4522 = vunpack.c.l.b16 %v1276
        %v4523 = vunpack.c.h.b16 %v1276
        %v4524 = vunpack.c.l.b16 %v1277
        %v4525 = vunpack.c.h.b16 %v1277
        %v4526 = vunpack.c.l.b16 %v1278
        %v4527 = vunpack.c.h.b16 %v1278
        %v4528 = vunpack.c.l.b16 %v1279
        %v4529 = vunpack.c.h.b16 %v1279
        %v4530 = vunpack.c.l.b16 %v1280
        %v4531 = vunpack.c.h.b16 %v1280
        %v4532 = vunpack.c.l.b16 %v1281
        %v4533 = vunpack.c.h.b16 %v1281
        %v4534 = vunpack.c.l.b16 %v1282
        %v4535 = vunpack.c.h.b16 %v1282
        %v4536 = vunpack.c.l.b16 %v1283
        %v4537 = vunpack.c.h.b16 %v1283
        %v4538 = vunpack.c.l.b16 %v1284
        %v4539 = vunpack.c.h.b16 %v1284
        %v4540 = vunpack.c.l.b16 %v1285
        %v4541 = vunpack.c.h.b16 %v1285
        %v4542 = vunpack.c.l.b16 %v1286
        %v4543 = vunpack.c.h.b16 %v1286
        %v4544 = vunpack.c.l.b16 %v1287
        %v4545 = vunpack.c.h.b16 %v1287
        %v4546 = vunpack.c.l.b16 %v1288
        %v4547 = vunpack.c.h.b16 %v1288
        %v4548 = vunpack.c.l.b16 %v1289
        %v4549 = vunpack.c.h.b16 %v1289
        %v4550 = vunpack.c.l.b16 %v1290
        %v4551 = vunpack.c.h.b16 %v1290
        %v4552 = vunpack.c.l.b16 %v1291
        %v4553 = vunpack.c.h.b16 %v1291
        %v4554 = vunpack.c.l.b16 %v1292
        %v4555 = vunpack.c.h.b16 %v1292
        %v4556 = vunpack.c.l.b16 %v1293
        %v4557 = vunpack.c.h.b16 %v1293
        %v4558 = vunpack.c.l.b16 %v1294
        %v4559 = vunpack.c.h.b16 %v1294
        %v4560 = vunpack.c.l.b16 %v1295
        %v4561 = vunpack.c.h.b16 %v1295
        %v4562 = vunpack.c.l.b16 %v1296
        %v4563 = vunpack.c.h.b16 %v1296
        %v4564 = vunpack.c.l.b16 %v1297
        %v4565 = vunpack.c.h.b16 %v1297
        %v4566 = vunpack.c.l.b16 %v1298
        %v4567 = vunpack.c.h.b16 %v1298
        %v4568 = vunpack.c.l.b16 %v1299
        %v4569 = vunpack.c.h.b16 %v1299
        %v4570 = vunpack.c.l.b16 %v1300
        %v4571 = vunpack.c.h.b16 %v1300
        %v4572 = vunpack.c.l.b16 %v1301
        %v4573 = vunpack.c.h.b16 %v1301
        %v4574 = vunpack.c.l.b16 %v1302
        %v4575 = vunpack.c.h.b16 %v1302
        %v4576 = vunpack.c.l.b16 %v1303
        %v4577 = vunpack.c.h.b16 %v1303
        %v4578 = vunpack.c.l.b16 %v1304
        %v4579 = vunpack.c.h.b16 %v1304
        %v4580 = vunpack.c.l.b16 %v1305
        %v4581 = vunpack.c.h.b16 %v1305
        %v4582 = vunpack.c.l.b16 %v1306
        %v4583 = vunpack.c.h.b16 %v1306
        %v4584 = vunpack.c.l.b16 %v1307
        %v4585 = vunpack.c.h.b16 %v1307
        %v4586 = vunpack.c.l.b16 %v1308
        %v4587 = vunpack.c.h.b16 %v1308
        %v4588 = vunpack.c.l.b16 %v1309
        %v4589 = vunpack.c.h.b16 %v1309
        %v4590 = vunpack.c.l.b16 %v1310
        %v4591 = vunpack.c.h.b16 %v1310
        %v4592 = vunpack.c.l.b16 %v1311
        %v4593 = vunpack.c.h.b16 %v1311
        %v4594 = vunpack.c.l.b16 %v1312
        %v4595 = vunpack.c.h.b16 %v1312
        %v4596 = vunpack.c.l.b16 %v1313
        %v4597 = vunpack.c.h.b16 %v1313
        %v4598 = vunpack.c.l.b16 %v1314
        %v4599 = vunpack.c.h.b16 %v1314
        %v4600 = vunpack.c.l.b16 %v1315
        %v4601 = vunpack.c.h.b16 %v1315
        %v4602 = vunpack.c.l.b16 %v1316
        %v4603 = vunpack.c.h.b16 %v1316
        %v4604 = vunpack.c.l.b16 %v1317
        %v4605 = vunpack.c.h.b16 %v1317
        %v4606 = vunpack.c.l.b16 %v1318
        %v4607 = vunpack.c.h.b16 %v1318
        %v4608 = vunpack.c.l.b16 %v1319
        %v4609 = vunpack.c.h.b16 %v1319
        %v4610 = vunpack.c.l.b16 %v1320
        %v4611 = vunpack.c.h.b16 %v1320
        %v4612 = vunpack.c.l.b16 %v1321
        %v4613 = vunpack.c.h.b16 %v1321
        %v4614 = vunpack.c.l.b16 %v1322
        %v4615 = vunpack.c.h.b16 %v1322
        %v4616 = vunpack.c.l.b16 %v1323
        %v4617 = vunpack.c.h.b16 %v1323
        %v4618 = vunpack.c.l.b16 %v1324
        %v4619 = vunpack.c.h.b16 %v1324
        %v4620 = vunpack.c.l.b16 %v1325
        %v4621 = vunpack.c.h.b16 %v1325
        %v4622 = vunpack.c.l.b16 %v1326
        %v4623 = vunpack.c.h.b16 %v1326
        %v4624 = vunpack.c.l.b16 %v1327
        %v4625 = vunpack.c.h.b16 %v1327
        %v4626 = vunpack.c.l.b16 %v1328
        %v4627 = vunpack.c.h.b16 %v1328
        %v4628 = vunpack.c.l.b16 %v1329
        %v4629 = vunpack.c.h.b16 %v1329
        %v4630 = vunpack.c.l.b16 %v1330
        %v4631 = vunpack.c.h.b16 %v1330
        %v4632 = vunpack.c.l.b16 %v1331
        %v4633 = vunpack.c.h.b16 %v1331
        %v4634 = vunpack.c.l.b16 %v1332
        %v4635 = vunpack.c.h.b16 %v1332
        %v4636 = vunpack.c.l.b16 %v1333
        %v4637 = vunpack.c.h.b16 %v1333
        %v4638 = vpack.c.b16 %v2594, %v2590
        %v4639 = vpack.c.b16 %v2595, %v2591
        %v4640 = vpack.c.b16 %v2596, %v2592
        %v4641 = vpack.c.b16 %v2597, %v2593
        %v4642 = vpack.c.b16 %v2602, %v2598
        %v4643 = vpack.c.b16 %v2603, %v2599
        %v4644 = vpack.c.b16 %v2604, %v2600
        %v4645 = vpack.c.b16 %v2605, %v2601
        %v4646 = vpack.c.b16 %v2610, %v2606
        %v4647 = vpack.c.b16 %v2611, %v2607
        %v4648 = vpack.c.b16 %v2612, %v2608
        %v4649 = vpack.c.b16 %v2613, %v2609
        %v4650 = vpack.c.b16 %v2618, %v2614
        %v4651 = vpack.c.b16 %v2619, %v2615
        %v4652 = vpack.c.b16 %v2620, %v2616
        %v4653 = vpack.c.b16 %v2621, %v2617
        %v4654 = vpack.c.b16 %v2626, %v2622
        %v4655 = vpack.c.b16 %v2627, %v2623
        %v4656 = vpack.c.b16 %v2628, %v2624
        %v4657 = vpack.c.b16 %v2629, %v2625
        %v4658 = vpack.c.b16 %v2634, %v2630
        %v4659 = vpack.c.b16 %v2635, %v2631
        %v4660 = vpack.c.b16 %v2636, %v2632
        %v4661 = vpack.c.b16 %v2637, %v2633
        %v4662 = vpack.c.b16 %v2642, %v2638
        %v4663 = vpack.c.b16 %v2643, %v2639
        %v4664 = vpack.c.b16 %v2644, %v2640
        %v4665 = vpack.c.b16 %v2645, %v2641
        %v4666 = vpack.c.b16 %v2650, %v2646
        %v4667 = vpack.c.b16 %v2651, %v2647
        %v4668 = vpack.c.b16 %v2652, %v2648
        %v4669 = vpack.c.b16 %v2653, %v2649
        %v4670 = vpack.c.b16 %v2658, %v2654
        %v4671 = vpack.c.b16 %v2659, %v2655
        %v4672 = vpack.c.b16 %v2660, %v2656
        %v4673 = vpack.c.b16 %v2661, %v2657
        %v4674 = vpack.c.b16 %v2666, %v2662
        %v4675 = vpack.c.b16 %v2667, %v2663
        %v4676 = vpack.c.b16 %v2668, %v2664
        %v4677 = vpack.c.b16 %v2669, %v2665
        %v4678 = vpack.c.b16 %v2674, %v2670
        %v4679 = vpack.c.b16 %v2675, %v2671
        %v4680 = vpack.c.b16 %v2676, %v2672
        %v4681 = vpack.c.b16 %v2677, %v2673
        %v4682 = vpack.c.b16 %v2682, %v2678
        %v4683 = vpack.c.b16 %v2683, %v2679
        %v4684 = vpack.c.b16 %v2684, %v2680
        %v4685 = vpack.c.b16 %v2685, %v2681
        %v4686 = vpack.c.b16 %v2690, %v2686
        %v4687 = vpack.c.b16 %v2691, %v2687
        %v4688 = vpack.c.b16 %v2692, %v2688
        %v4689 = vpack.c.b16 %v2693, %v2689
        %v4690 = vpack.c.b16 %v2698, %v2694
        %v4691 = vpack.c.b16 %v2699, %v2695
        %v4692 = vpack.c.b16 %v2700, %v2696
        %v4693 = vpack.c.b16 %v2701, %v2697
        %v4694 = vpack.c.b16 %v2706, %v2702
        %v4695 = vpack.c.b16 %v2707, %v2703
        %v4696 = vpack.c.b16 %v2708, %v2704
        %v4697 = vpack.c.b16 %v2709, %v2705
        %v4698 = vpack.c.b16 %v2714, %v2710
        %v4699 = vpack.c.b16 %v2715, %v2711
        %v4700 = vpack.c.b16 %v2716, %v2712
        %v4701 = vpack.c.b16 %v2717, %v2713
        %v4702 = vpack.c.b16 %v2722, %v2718
        %v4703 = vpack.c.b16 %v2723, %v2719
        %v4704 = vpack.c.b16 %v2724, %v2720
        %v4705 = vpack.c.b16 %v2725, %v2721
        %v4706 = vpack.c.b16 %v2730, %v2726
        %v4707 = vpack.c.b16 %v2731, %v2727
        %v4708 = vpack.c.b16 %v2732, %v2728
        %v4709 = vpack.c.b16 %v2733, %v2729
        %v4710 = vpack.c.b16 %v2738, %v2734
        %v4711 = vpack.c.b16 %v2739, %v2735
        %v4712 = vpack.c.b16 %v2740, %v2736
        %v4713 = vpack.c.b16 %v2741, %v2737
        %v4714 = vpack.c.b16 %v2746, %v2742
        %v4715 = vpack.c.b16 %v2747, %v2743
        %v4716 = vpack.c.b16 %v2748, %v2744
        %v4717 = vpack.c.b16 %v2749, %v2745
        %v4718 = vpack.c.b16 %v2754, %v2750
        %v4719 = vpack.c.b16 %v2755, %v2751
        %v4720 = vpack.c.b16 %v2756, %v2752
        %v4721 = vpack.c.b16 %v2757, %v2753
        %v4722 = vpack.c.b16 %v2762, %v2758
        %v4723 = vpack.c.b16 %v2763, %v2759
        %v4724 = vpack.c.b16 %v2764, %v2760
        %v4725 = vpack.c.b16 %v2765, %v2761
        %v4726 = vpack.c.b16 %v2770, %v2766
        %v4727 = vpack.c.b16 %v2771, %v2767
        %v4728 = vpack.c.b16 %v2772, %v2768
        %v4729 = vpack.c.b16 %v2773, %v2769
        %v4730 = vpack.c.b16 %v2778, %v2774
        %v4731 = vpack.c.b16 %v2779, %v2775
        %v4732 = vpack.c.b16 %v2780, %v2776
        %v4733 = vpack.c.b16 %v2781, %v2777
        %v4734 = vpack.c.b16 %v2786, %v2782
        %v4735 = vpack.c.b16 %v2787, %v2783
        %v4736 = vpack.c.b16 %v2788, %v2784
        %v4737 = vpack.c.b16 %v2789, %v2785
        %v4738 = vpack.c.b16 %v2794, %v2790
        %v4739 = vpack.c.b16 %v2795, %v2791
        %v4740 = vpack.c.b16 %v2796, %v2792
        %v4741 = vpack.c.b16 %v2797, %v2793
        %v4742 = vpack.c.b16 %v2802, %v2798
        %v4743 = vpack.c.b16 %v2803, %v2799
        %v4744 = vpack.c.b16 %v2804, %v2800
        %v4745 = vpack.c.b16 %v2805, %v2801
        %v4746 = vpack.c.b16 %v2810, %v2806
        %v4747 = vpack.c.b16 %v2811, %v2807
        %v4748 = vpack.c.b16 %v2812, %v2808
        %v4749 = vpack.c.b16 %v2813, %v2809
        %v4750 = vpack.c.b16 %v2818, %v2814
        %v4751 = vpack.c.b16 %v2819, %v2815
        %v4752 = vpack.c.b16 %v2820, %v2816
        %v4753 = vpack.c.b16 %v2821, %v2817
        %v4754 = vpack.c.b16 %v2826, %v2822
        %v4755 = vpack.c.b16 %v2827, %v2823
        %v4756 = vpack.c.b16 %v2828, %v2824
        %v4757 = vpack.c.b16 %v2829, %v2825
        %v4758 = vpack.c.b16 %v2834, %v2830
        %v4759 = vpack.c.b16 %v2835, %v2831
        %v4760 = vpack.c.b16 %v2836, %v2832
        %v4761 = vpack.c.b16 %v2837, %v2833
        %v4762 = vpack.c.b16 %v2842, %v2838
        %v4763 = vpack.c.b16 %v2843, %v2839
        %v4764 = vpack.c.b16 %v2844, %v2840
        %v4765 = vpack.c.b16 %v2845, %v2841
        %v4766 = vpack.c.b16 %v2850, %v2846
        %v4767 = vpack.c.b16 %v2851, %v2847
        %v4768 = vpack.c.b16 %v2852, %v2848
        %v4769 = vpack.c.b16 %v2853, %v2849
        %v4770 = vpack.c.b16 %v2858, %v2854
        %v4771 = vpack.c.b16 %v2859, %v2855
        %v4772 = vpack.c.b16 %v2860, %v2856
        %v4773 = vpack.c.b16 %v2861, %v2857
        %v4774 = vpack.c.b16 %v2866, %v2862
        %v4775 = vpack.c.b16 %v2867, %v2863
        %v4776 = vpack.c.b16 %v2868, %v2864
        %v4777 = vpack.c.b16 %v2869, %v2865
        %v4778 = vpack.c.b16 %v2874, %v2870
        %v4779 = vpack.c.b16 %v2875, %v2871
        %v4780 = vpack.c.b16 %v2876, %v2872
        %v4781 = vpack.c.b16 %v2877, %v2873
        %v4782 = vpack.c.b16 %v2882, %v2878
        %v4783 = vpack.c.b16 %v2883, %v2879
        %v4784 = vpack.c.b16 %v2884, %v2880
        %v4785 = vpack.c.b16 %v2885, %v2881
        %v4786 = vpack.c.b16 %v2890, %v2886
        %v4787 = vpack.c.b16 %v2891, %v2887
        %v4788 = vpack.c.b16 %v2892, %v2888
        %v4789 = vpack.c.b16 %v2893, %v2889
        %v4790 = vpack.c.b16 %v2898, %v2894
        %v4791 = vpack.c.b16 %v2899, %v2895
        %v4792 = vpack.c.b16 %v2900, %v2896
        %v4793 = vpack.c.b16 %v2901, %v2897
        %v4794 = vpack.c.b16 %v2906, %v2902
        %v4795 = vpack.c.b16 %v2907, %v2903
        %v4796 = vpack.c.b16 %v2908, %v2904
        %v4797 = vpack.c.b16 %v2909, %v2905
        %v4798 = vpack.c.b16 %v2914, %v2910
        %v4799 = vpack.c.b16 %v2915, %v2911
        %v4800 = vpack.c.b16 %v2916, %v2912
        %v4801 = vpack.c.b16 %v2917, %v2913
        %v4802 = vpack.c.b16 %v2922, %v2918
        %v4803 = vpack.c.b16 %v2923, %v2919
        %v4804 = vpack.c.b16 %v2924, %v2920
        %v4805 = vpack.c.b16 %v2925, %v2921
        %v4806 = vpack.c.b16 %v2930, %v2926
        %v4807 = vpack.c.b16 %v2931, %v2927
        %v4808 = vpack.c.b16 %v2932, %v2928
        %v4809 = vpack.c.b16 %v2933, %v2929
        %v4810 = vpack.c.b16 %v2938, %v2934
        %v4811 = vpack.c.b16 %v2939, %v2935
        %v4812 = vpack.c.b16 %v2940, %v2936
        %v4813 = vpack.c.b16 %v2941, %v2937
        %v4814 = vpack.c.b16 %v2946, %v2942
        %v4815 = vpack.c.b16 %v2947, %v2943
        %v4816 = vpack.c.b16 %v2948, %v2944
        %v4817 = vpack.c.b16 %v2949, %v2945
        %v4818 = vpack.c.b16 %v2954, %v2950
        %v4819 = vpack.c.b16 %v2955, %v2951
        %v4820 = vpack.c.b16 %v2956, %v2952
        %v4821 = vpack.c.b16 %v2957, %v2953
        %v4822 = vpack.c.b16 %v2962, %v2958
        %v4823 = vpack.c.b16 %v2963, %v2959
        %v4824 = vpack.c.b16 %v2964, %v2960
        %v4825 = vpack.c.b16 %v2965, %v2961
        %v4826 = vpack.c.b16 %v2970, %v2966
        %v4827 = vpack.c.b16 %v2971, %v2967
        %v4828 = vpack.c.b16 %v2972, %v2968
        %v4829 = vpack.c.b16 %v2973, %v2969
        %v4830 = vpack.c.b16 %v2978, %v2974
        %v4831 = vpack.c.b16 %v2979, %v2975
        %v4832 = vpack.c.b16 %v2980, %v2976
        %v4833 = vpack.c.b16 %v2981, %v2977
        %v4834 = vpack.c.b16 %v2986, %v2982
        %v4835 = vpack.c.b16 %v2987, %v2983
        %v4836 = vpack.c.b16 %v2988, %v2984
        %v4837 = vpack.c.b16 %v2989, %v2985
        %v4838 = vpack.c.b16 %v2994, %v2990
        %v4839 = vpack.c.b16 %v2995, %v2991
        %v4840 = vpack.c.b16 %v2996, %v2992
        %v4841 = vpack.c.b16 %v2997, %v2993
        %v4842 = vpack.c.b16 %v3002, %v2998
        %v4843 = vpack.c.b16 %v3003, %v2999
        %v4844 = vpack.c.b16 %v3004, %v3000
        %v4845 = vpack.c.b16 %v3005, %v3001
        %v4846 = vpack.c.b16 %v3010, %v3006
        %v4847 = vpack.c.b16 %v3011, %v3007
        %v4848 = vpack.c.b16 %v3012, %v3008
        %v4849 = vpack.c.b16 %v3013, %v3009
        %v4850 = vpack.c.b16 %v3018, %v3014
        %v4851 = vpack.c.b16 %v3019, %v3015
        %v4852 = vpack.c.b16 %v3020, %v3016
        %v4853 = vpack.c.b16 %v3021, %v3017
        %v4854 = vpack.c.b16 %v3026, %v3022
        %v4855 = vpack.c.b16 %v3027, %v3023
        %v4856 = vpack.c.b16 %v3028, %v3024
        %v4857 = vpack.c.b16 %v3029, %v3025
        %v4858 = vpack.c.b16 %v3034, %v3030
        %v4859 = vpack.c.b16 %v3035, %v3031
        %v4860 = vpack.c.b16 %v3036, %v3032
        %v4861 = vpack.c.b16 %v3037, %v3033
        %v4862 = vpack.c.b16 %v3042, %v3038
        %v4863 = vpack.c.b16 %v3043, %v3039
        %v4864 = vpack.c.b16 %v3044, %v3040
        %v4865 = vpack.c.b16 %v3045, %v3041
        %v4866 = vpack.c.b16 %v3050, %v3046
        %v4867 = vpack.c.b16 %v3051, %v3047
        %v4868 = vpack.c.b16 %v3052, %v3048
        %v4869 = vpack.c.b16 %v3053, %v3049
        %v4870 = vpack.c.b16 %v3058, %v3054
        %v4871 = vpack.c.b16 %v3059, %v3055
        %v4872 = vpack.c.b16 %v3060, %v3056
        %v4873 = vpack.c.b16 %v3061, %v3057
        %v4874 = vpack.c.b16 %v3066, %v3062
        %v4875 = vpack.c.b16 %v3067, %v3063
        %v4876 = vpack.c.b16 %v3068, %v3064
        %v4877 = vpack.c.b16 %v3069, %v3065
        %v4878 = vpack.c.b16 %v3074, %v3070
        %v4879 = vpack.c.b16 %v3075, %v3071
        %v4880 = vpack.c.b16 %v3076, %v3072
        %v4881 = vpack.c.b16 %v3077, %v3073
        %v4882 = vpack.c.b16 %v3082, %v3078
        %v4883 = vpack.c.b16 %v3083, %v3079
        %v4884 = vpack.c.b16 %v3084, %v3080
        %v4885 = vpack.c.b16 %v3085, %v3081
        %v4886 = vpack.c.b16 %v3090, %v3086
        %v4887 = vpack.c.b16 %v3091, %v3087
        %v4888 = vpack.c.b16 %v3092, %v3088
        %v4889 = vpack.c.b16 %v3093, %v3089
        %v4890 = vpack.c.b16 %v3098, %v3094
        %v4891 = vpack.c.b16 %v3099, %v3095
        %v4892 = vpack.c.b16 %v3100, %v3096
        %v4893 = vpack.c.b16 %v3101, %v3097
        %v4894 = vpack.c.b16 %v3106, %v3102
        %v4895 = vpack.c.b16 %v3107, %v3103
        %v4896 = vpack.c.b16 %v3108, %v3104
        %v4897 = vpack.c.b16 %v3109, %v3105
        %v4898 = vpack.c.b16 %v3114, %v3110
        %v4899 = vpack.c.b16 %v3115, %v3111
        %v4900 = vpack.c.b16 %v3116, %v3112
        %v4901 = vpack.c.b16 %v3117, %v3113
        %v4902 = vpack.c.b16 %v3122, %v3118
        %v4903 = vpack.c.b16 %v3123, %v3119
        %v4904 = vpack.c.b16 %v3124, %v3120
        %v4905 = vpack.c.b16 %v3125, %v3121
        %v4906 = vpack.c.b16 %v3130, %v3126
        %v4907 = vpack.c.b16 %v3131, %v3127
        %v4908 = vpack.c.b16 %v3132, %v3128
        %v4909 = vpack.c.b16 %v3133, %v3129
        %v4910 = vpack.c.b16 %v3138, %v3134
        %v4911 = vpack.c.b16 %v3139, %v3135
        %v4912 = vpack.c.b16 %v3140, %v3136
        %v4913 = vpack.c.b16 %v3141, %v3137
        %v4914 = vpack.c.b16 %v3146, %v3142
        %v4915 = vpack.c.b16 %v3147, %v3143
        %v4916 = vpack.c.b16 %v3148, %v3144
        %v4917 = vpack.c.b16 %v3149, %v3145
        %v4918 = vpack.c.b16 %v3154, %v3150
        %v4919 = vpack.c.b16 %v3155, %v3151
        %v4920 = vpack.c.b16 %v3156, %v3152
        %v4921 = vpack.c.b16 %v3157, %v3153
        %v4922 = vpack.c.b16 %v3162, %v3158
        %v4923 = vpack.c.b16 %v3163, %v3159
        %v4924 = vpack.c.b16 %v3164, %v3160
        %v4925 = vpack.c.b16 %v3165, %v3161
        %v4926 = vpack.c.b16 %v3170, %v3166
        %v4927 = vpack.c.b16 %v3171, %v3167
        %v4928 = vpack.c.b16 %v3172, %v3168
        %v4929 = vpack.c.b16 %v3173, %v3169
        %v4930 = vpack.c.b16 %v3178, %v3174
        %v4931 = vpack.c.b16 %v3179, %v3175
        %v4932 = vpack.c.b16 %v3180, %v3176
        %v4933 = vpack.c.b16 %v3181, %v3177
        %v4934 = vpack.c.b16 %v3186, %v3182
        %v4935 = vpack.c.b16 %v3187, %v3183
        %v4936 = vpack.c.b16 %v3188, %v3184
        %v4937 = vpack.c.b16 %v3189, %v3185
        %v4938 = vpack.c.b16 %v3194, %v3190
        %v4939 = vpack.c.b16 %v3195, %v3191
        %v4940 = vpack.c.b16 %v3196, %v3192
        %v4941 = vpack.c.b16 %v3197, %v3193
        %v4942 = vpack.c.b16 %v3202, %v3198
        %v4943 = vpack.c.b16 %v3203, %v3199
        %v4944 = vpack.c.b16 %v3204, %v3200
        %v4945 = vpack.c.b16 %v3205, %v3201
        %v4946 = vpack.c.b16 %v3210, %v3206
        %v4947 = vpack.c.b16 %v3211, %v3207
        %v4948 = vpack.c.b16 %v3212, %v3208
        %v4949 = vpack.c.b16 %v3213, %v3209
        %v4950 = vpack.c.b16 %v3218, %v3214
        %v4951 = vpack.c.b16 %v3219, %v3215
        %v4952 = vpack.c.b16 %v3220, %v3216
        %v4953 = vpack.c.b16 %v3221, %v3217
        %v4954 = vpack.c.b16 %v3226, %v3222
        %v4955 = vpack.c.b16 %v3227, %v3223
        %v4956 = vpack.c.b16 %v3228, %v3224
        %v4957 = vpack.c.b16 %v3229, %v3225
        %v4958 = vpack.c.b16 %v3234, %v3230
        %v4959 = vpack.c.b16 %v3235, %v3231
        %v4960 = vpack.c.b16 %v3236, %v3232
        %v4961 = vpack.c.b16 %v3237, %v3233
        %v4962 = vpack.c.b16 %v3242, %v3238
        %v4963 = vpack.c.b16 %v3243, %v3239
        %v4964 = vpack.c.b16 %v3244, %v3240
        %v4965 = vpack.c.b16 %v3245, %v3241
        %v4966 = vpack.c.b16 %v3250, %v3246
        %v4967 = vpack.c.b16 %v3251, %v3247
        %v4968 = vpack.c.b16 %v3252, %v3248
        %v4969 = vpack.c.b16 %v3253, %v3249
        %v4970 = vpack.c.b16 %v3258, %v3254
        %v4971 = vpack.c.b16 %v3259, %v3255
        %v4972 = vpack.c.b16 %v3260, %v3256
        %v4973 = vpack.c.b16 %v3261, %v3257
        %v4974 = vpack.c.b16 %v3266, %v3262
        %v4975 = vpack.c.b16 %v3267, %v3263
        %v4976 = vpack.c.b16 %v3268, %v3264
        %v4977 = vpack.c.b16 %v3269, %v3265
        %v4978 = vpack.c.b16 %v3274, %v3270
        %v4979 = vpack.c.b16 %v3275, %v3271
        %v4980 = vpack.c.b16 %v3276, %v3272
        %v4981 = vpack.c.b16 %v3277, %v3273
        %v4982 = vpack.c.b16 %v3282, %v3278
        %v4983 = vpack.c.b16 %v3283, %v3279
        %v4984 = vpack.c.b16 %v3284, %v3280
        %v4985 = vpack.c.b16 %v3285, %v3281
        %v4986 = vpack.c.b16 %v3290, %v3286
        %v4987 = vpack.c.b16 %v3291, %v3287
        %v4988 = vpack.c.b16 %v3292, %v3288
        %v4989 = vpack.c.b16 %v3293, %v3289
        %v4990 = vpack.c.b16 %v3298, %v3294
        %v4991 = vpack.c.b16 %v3299, %v3295
        %v4992 = vpack.c.b16 %v3300, %v3296
        %v4993 = vpack.c.b16 %v3301, %v3297
        %v4994 = vpack.c.b16 %v3306, %v3302
        %v4995 = vpack.c.b16 %v3307, %v3303
        %v4996 = vpack.c.b16 %v3308, %v3304
        %v4997 = vpack.c.b16 %v3309, %v3305
        %v4998 = vpack.c.b16 %v3314, %v3310
        %v4999 = vpack.c.b16 %v3315, %v3311
        %v5000 = vpack.c.b16 %v3316, %v3312
        %v5001 = vpack.c.b16 %v3317, %v3313
        %v5002 = vpack.c.b16 %v3322, %v3318
        %v5003 = vpack.c.b16 %v3323, %v3319
        %v5004 = vpack.c.b16 %v3324, %v3320
        %v5005 = vpack.c.b16 %v3325, %v3321
        %v5006 = vpack.c.b16 %v3330, %v3326
        %v5007 = vpack.c.b16 %v3331, %v3327
        %v5008 = vpack.c.b16 %v3332, %v3328
        %v5009 = vpack.c.b16 %v3333, %v3329
        %v5010 = vpack.c.b16 %v3338, %v3334
        %v5011 = vpack.c.b16 %v3339, %v3335
        %v5012 = vpack.c.b16 %v3340, %v3336
        %v5013 = vpack.c.b16 %v3341, %v3337
        %v5014 = vpack.c.b16 %v3346, %v3342
        %v5015 = vpack.c.b16 %v3347, %v3343
        %v5016 = vpack.c.b16 %v3348, %v3344
        %v5017 = vpack.c.b16 %v3349, %v3345
        %v5018 = vpack.c.b16 %v3354, %v3350
        %v5019 = vpack.c.b16 %v3355, %v3351
        %v5020 = vpack.c.b16 %v3356, %v3352
        %v5021 = vpack.c.b16 %v3357, %v3353
        %v5022 = vpack.c.b16 %v3362, %v3358
        %v5023 = vpack.c.b16 %v3363, %v3359
        %v5024 = vpack.c.b16 %v3364, %v3360
        %v5025 = vpack.c.b16 %v3365, %v3361
        %v5026 = vpack.c.b16 %v3370, %v3366
        %v5027 = vpack.c.b16 %v3371, %v3367
        %v5028 = vpack.c.b16 %v3372, %v3368
        %v5029 = vpack.c.b16 %v3373, %v3369
        %v5030 = vpack.c.b16 %v3378, %v3374
        %v5031 = vpack.c.b16 %v3379, %v3375
        %v5032 = vpack.c.b16 %v3380, %v3376
        %v5033 = vpack.c.b16 %v3381, %v3377
        %v5034 = vpack.c.b16 %v3386, %v3382
        %v5035 = vpack.c.b16 %v3387, %v3383
        %v5036 = vpack.c.b16 %v3388, %v3384
        %v5037 = vpack.c.b16 %v3389, %v3385
        %v5038 = vpack.c.b16 %v3394, %v3390
        %v5039 = vpack.c.b16 %v3395, %v3391
        %v5040 = vpack.c.b16 %v3396, %v3392
        %v5041 = vpack.c.b16 %v3397, %v3393
        %v5042 = vpack.c.b16 %v3402, %v3398
        %v5043 = vpack.c.b16 %v3403, %v3399
        %v5044 = vpack.c.b16 %v3404, %v3400
        %v5045 = vpack.c.b16 %v3405, %v3401
        %v5046 = vpack.c.b16 %v3410, %v3406
        %v5047 = vpack.c.b16 %v3411, %v3407
        %v5048 = vpack.c.b16 %v3412, %v3408
        %v5049 = vpack.c.b16 %v3413, %v3409
        %v5050 = vpack.c.b16 %v3418, %v3414
        %v5051 = vpack.c.b16 %v3419, %v3415
        %v5052 = vpack.c.b16 %v3420, %v3416
        %v5053 = vpack.c.b16 %v3421, %v3417
        %v5054 = vpack.c.b16 %v3426, %v3422
        %v5055 = vpack.c.b16 %v3427, %v3423
        %v5056 = vpack.c.b16 %v3428, %v3424
        %v5057 = vpack.c.b16 %v3429, %v3425
        %v5058 = vpack.c.b16 %v3434, %v3430
        %v5059 = vpack.c.b16 %v3435, %v3431
        %v5060 = vpack.c.b16 %v3436, %v3432
        %v5061 = vpack.c.b16 %v3437, %v3433
        %v5062 = vpack.c.b16 %v3442, %v3438
        %v5063 = vpack.c.b16 %v3443, %v3439
        %v5064 = vpack.c.b16 %v3444, %v3440
        %v5065 = vpack.c.b16 %v3445, %v3441
        %v5066 = vpack.c.b16 %v3450, %v3446
        %v5067 = vpack.c.b16 %v3451, %v3447
        %v5068 = vpack.c.b16 %v3452, %v3448
        %v5069 = vpack.c.b16 %v3453, %v3449
        %v5070 = vpack.c.b16 %v3458, %v3454
        %v5071 = vpack.c.b16 %v3459, %v3455
        %v5072 = vpack.c.b16 %v3460, %v3456
        %v5073 = vpack.c.b16 %v3461, %v3457
        %v5074 = vpack.c.b16 %v3466, %v3462
        %v5075 = vpack.c.b16 %v3467, %v3463
        %v5076 = vpack.c.b16 %v3468, %v3464
        %v5077 = vpack.c.b16 %v3469, %v3465
        %v5078 = vpack.c.b16 %v3474, %v3470
        %v5079 = vpack.c.b16 %v3475, %v3471
        %v5080 = vpack.c.b16 %v3476, %v3472
        %v5081 = vpack.c.b16 %v3477, %v3473
        %v5082 = vpack.c.b16 %v3482, %v3478
        %v5083 = vpack.c.b16 %v3483, %v3479
        %v5084 = vpack.c.b16 %v3484, %v3480
        %v5085 = vpack.c.b16 %v3485, %v3481
        %v5086 = vpack.c.b16 %v3490, %v3486
        %v5087 = vpack.c.b16 %v3491, %v3487
        %v5088 = vpack.c.b16 %v3492, %v3488
        %v5089 = vpack.c.b16 %v3493, %v3489
        %v5090 = vpack.c.b16 %v3498, %v3494
        %v5091 = vpack.c.b16 %v3499, %v3495
        %v5092 = vpack.c.b16 %v3500, %v3496
        %v5093 = vpack.c.b16 %v3501, %v3497
        %v5094 = vpack.c.b16 %v3506, %v3502
        %v5095 = vpack.c.b16 %v3507, %v3503
        %v5096 = vpack.c.b16 %v3508, %v3504
        %v5097 = vpack.c.b16 %v3509, %v3505
        %v5098 = vpack.c.b16 %v3514, %v3510
        %v5099 = vpack.c.b16 %v3515, %v3511
        %v5100 = vpack.c.b16 %v3516, %v3512
        %v5101 = vpack.c.b16 %v3517, %v3513
        %v5102 = vpack.c.b16 %v3522, %v3518
        %v5103 = vpack.c.b16 %v3523, %v3519
        %v5104 = vpack.c.b16 %v3524, %v3520
        %v5105 = vpack.c.b16 %v3525, %v3521
        %v5106 = vpack.c.b16 %v3530, %v3526
        %v5107 = vpack.c.b16 %v3531, %v3527
        %v5108 = vpack.c.b16 %v3532, %v3528
        %v5109 = vpack.c.b16 %v3533, %v3529
        %v5110 = vpack.c.b16 %v3538, %v3534
        %v5111 = vpack.c.b16 %v3539, %v3535
        %v5112 = vpack.c.b16 %v3540, %v3536
        %v5113 = vpack.c.b16 %v3541, %v3537
        %v5114 = vpack.c.b16 %v3546, %v3542
        %v5115 = vpack.c.b16 %v3547, %v3543
        %v5116 = vpack.c.b16 %v3548, %v3544
        %v5117 = vpack.c.b16 %v3549, %v3545
        %v5118 = vpack.c.b16 %v3554, %v3550
        %v5119 = vpack.c.b16 %v3555, %v3551
        %v5120 = vpack.c.b16 %v3556, %v3552
        %v5121 = vpack.c.b16 %v3557, %v3553
        %v5122 = vpack.c.b16 %v3562, %v3558
        %v5123 = vpack.c.b16 %v3563, %v3559
        %v5124 = vpack.c.b16 %v3564, %v3560
        %v5125 = vpack.c.b16 %v3565, %v3561
        %v5126 = vpack.c.b16 %v3570, %v3566
        %v5127 = vpack.c.b16 %v3571, %v3567
        %v5128 = vpack.c.b16 %v3572, %v3568
        %v5129 = vpack.c.b16 %v3573, %v3569
        %v5130 = vpack.c.b16 %v3578, %v3574
        %v5131 = vpack.c.b16 %v3579, %v3575
        %v5132 = vpack.c.b16 %v3580, %v3576
        %v5133 = vpack.c.b16 %v3581, %v3577
        %v5134 = vpack.c.b16 %v3586, %v3582
        %v5135 = vpack.c.b16 %v3587, %v3583
        %v5136 = vpack.c.b16 %v3588, %v3584
        %v5137 = vpack.c.b16 %v3589, %v3585
        %v5138 = vpack.c.b16 %v3594, %v3590
        %v5139 = vpack.c.b16 %v3595, %v3591
        %v5140 = vpack.c.b16 %v3596, %v3592
        %v5141 = vpack.c.b16 %v3597, %v3593
        %v5142 = vpack.c.b16 %v3602, %v3598
        %v5143 = vpack.c.b16 %v3603, %v3599
        %v5144 = vpack.c.b16 %v3604, %v3600
        %v5145 = vpack.c.b16 %v3605, %v3601
        %v5146 = vpack.c.b16 %v3610, %v3606
        %v5147 = vpack.c.b16 %v3611, %v3607
        %v5148 = vpack.c.b16 %v3612, %v3608
        %v5149 = vpack.c.b16 %v3613, %v3609
        %v5150 = vpack.c.b16 %v3618, %v3614
        %v5151 = vpack.c.b16 %v3619, %v3615
        %v5152 = vpack.c.b16 %v3620, %v3616
        %v5153 = vpack.c.b16 %v3621, %v3617
        %v5154 = vpack.c.b16 %v3626, %v3622
        %v5155 = vpack.c.b16 %v3627, %v3623
        %v5156 = vpack.c.b16 %v3628, %v3624
        %v5157 = vpack.c.b16 %v3629, %v3625
        %v5158 = vpack.c.b16 %v3634, %v3630
        %v5159 = vpack.c.b16 %v3635, %v3631
        %v5160 = vpack.c.b16 %v3636, %v3632
        %v5161 = vpack.c.b16 %v3637, %v3633
        %v5162 = vpack.c.b16 %v3642, %v3638
        %v5163 = vpack.c.b16 %v3643, %v3639
        %v5164 = vpack.c.b16 %v3644, %v3640
        %v5165 = vpack.c.b16 %v3645, %v3641
        %v5166 = vpack.c.b16 %v3650, %v3646
        %v5167 = vpack.c.b16 %v3651, %v3647
        %v5168 = vpack.c.b16 %v3652, %v3648
        %v5169 = vpack.c.b16 %v3653, %v3649
        %v5170 = vpack.c.b16 %v3658, %v3654
        %v5171 = vpack.c.b16 %v3659, %v3655
        %v5172 = vpack.c.b16 %v3660, %v3656
        %v5173 = vpack.c.b16 %v3661, %v3657
        %v5174 = vpack.c.b16 %v3666, %v3662
        %v5175 = vpack.c.b16 %v3667, %v3663
        %v5176 = vpack.c.b16 %v3668, %v3664
        %v5177 = vpack.c.b16 %v3669, %v3665
        %v5178 = vpack.c.b16 %v3674, %v3670
        %v5179 = vpack.c.b16 %v3675, %v3671
        %v5180 = vpack.c.b16 %v3676, %v3672
        %v5181 = vpack.c.b16 %v3677, %v3673
        %v5182 = vpack.c.b16 %v3682, %v3678
        %v5183 = vpack.c.b16 %v3683, %v3679
        %v5184 = vpack.c.b16 %v3684, %v3680
        %v5185 = vpack.c.b16 %v3685, %v3681
        %v5186 = vpack.c.b16 %v3690, %v3686
        %v5187 = vpack.c.b16 %v3691, %v3687
        %v5188 = vpack.c.b16 %v3692, %v3688
        %v5189 = vpack.c.b16 %v3693, %v3689
        %v5190 = vpack.c.b16 %v3698, %v3694
        %v5191 = vpack.c.b16 %v3699, %v3695
        %v5192 = vpack.c.b16 %v3700, %v3696
        %v5193 = vpack.c.b16 %v3701, %v3697
        %v5194 = vpack.c.b16 %v3706, %v3702
        %v5195 = vpack.c.b16 %v3707, %v3703
        %v5196 = vpack.c.b16 %v3708, %v3704
        %v5197 = vpack.c.b16 %v3709, %v3705
        %v5198 = vpack.c.b16 %v3714, %v3710
        %v5199 = vpack.c.b16 %v3715, %v3711
        %v5200 = vpack.c.b16 %v3716, %v3712
        %v5201 = vpack.c.b16 %v3717, %v3713
        %v5202 = vpack.c.b16 %v3722, %v3718
        %v5203 = vpack.c.b16 %v3723, %v3719
        %v5204 = vpack.c.b16 %v3724, %v3720
        %v5205 = vpack.c.b16 %v3725, %v3721
        %v5206 = vpack.c.b16 %v3730, %v3726
        %v5207 = vpack.c.b16 %v3731, %v3727
        %v5208 = vpack.c.b16 %v3732, %v3728
        %v5209 = vpack.c.b16 %v3733, %v3729
        %v5210 = vpack.c.b16 %v3738, %v3734
        %v5211 = vpack.c.b16 %v3739, %v3735
        %v5212 = vpack.c.b16 %v3740, %v3736
        %v5213 = vpack.c.b16 %v3741, %v3737
        %v5214 = vpack.c.b16 %v3746, %v3742
        %v5215 = vpack.c.b16 %v3747, %v3743
        %v5216 = vpack.c.b16 %v3748, %v3744
        %v5217 = vpack.c.b16 %v3749, %v3745
        %v5218 = vpack.c.b16 %v3754, %v3750
        %v5219 = vpack.c.b16 %v3755, %v3751
        %v5220 = vpack.c.b16 %v3756, %v3752
        %v5221 = vpack.c.b16 %v3757, %v3753
        %v5222 = vpack.c.b16 %v3762, %v3758
        %v5223 = vpack.c.b16 %v3763, %v3759
        %v5224 = vpack.c.b16 %v3764, %v3760
        %v5225 = vpack.c.b16 %v3765, %v3761
        %v5226 = vpack.c.b16 %v3770, %v3766
        %v5227 = vpack.c.b16 %v3771, %v3767
        %v5228 = vpack.c.b16 %v3772, %v3768
        %v5229 = vpack.c.b16 %v3773, %v3769
        %v5230 = vpack.c.b16 %v3778, %v3774
        %v5231 = vpack.c.b16 %v3779, %v3775
        %v5232 = vpack.c.b16 %v3780, %v3776
        %v5233 = vpack.c.b16 %v3781, %v3777
        %v5234 = vpack.c.b16 %v3786, %v3782
        %v5235 = vpack.c.b16 %v3787, %v3783
        %v5236 = vpack.c.b16 %v3788, %v3784
        %v5237 = vpack.c.b16 %v3789, %v3785
        %v5238 = vpack.c.b16 %v3794, %v3790
        %v5239 = vpack.c.b16 %v3795, %v3791
        %v5240 = vpack.c.b16 %v3796, %v3792
        %v5241 = vpack.c.b16 %v3797, %v3793
        %v5242 = vpack.c.b16 %v3802, %v3798
        %v5243 = vpack.c.b16 %v3803, %v3799
        %v5244 = vpack.c.b16 %v3804, %v3800
        %v5245 = vpack.c.b16 %v3805, %v3801
        %v5246 = vpack.c.b16 %v3810, %v3806
        %v5247 = vpack.c.b16 %v3811, %v3807
        %v5248 = vpack.c.b16 %v3812, %v3808
        %v5249 = vpack.c.b16 %v3813, %v3809
        %v5250 = vpack.c.b16 %v3818, %v3814
        %v5251 = vpack.c.b16 %v3819, %v3815
        %v5252 = vpack.c.b16 %v3820, %v3816
        %v5253 = vpack.c.b16 %v3821, %v3817
        %v5254 = vpack.c.b16 %v3826, %v3822
        %v5255 = vpack.c.b16 %v3827, %v3823
        %v5256 = vpack.c.b16 %v3828, %v3824
        %v5257 = vpack.c.b16 %v3829, %v3825
        %v5258 = vpack.c.b16 %v3834, %v3830
        %v5259 = vpack.c.b16 %v3835, %v3831
        %v5260 = vpack.c.b16 %v3836, %v3832
        %v5261 = vpack.c.b16 %v3837, %v3833
        %v5262 = vpack.c.b16 %v3842, %v3838
        %v5263 = vpack.c.b16 %v3843, %v3839
        %v5264 = vpack.c.b16 %v3844, %v3840
        %v5265 = vpack.c.b16 %v3845, %v3841
        %v5266 = vpack.c.b16 %v3850, %v3846
        %v5267 = vpack.c.b16 %v3851, %v3847
        %v5268 = vpack.c.b16 %v3852, %v3848
        %v5269 = vpack.c.b16 %v3853, %v3849
        %v5270 = vpack.c.b16 %v3858, %v3854
        %v5271 = vpack.c.b16 %v3859, %v3855
        %v5272 = vpack.c.b16 %v3860, %v3856
        %v5273 = vpack.c.b16 %v3861, %v3857
        %v5274 = vpack.c.b16 %v3866, %v3862
        %v5275 = vpack.c.b16 %v3867, %v3863
        %v5276 = vpack.c.b16 %v3868, %v3864
        %v5277 = vpack.c.b16 %v3869, %v3865
        %v5278 = vpack.c.b16 %v3874, %v3870
        %v5279 = vpack.c.b16 %v3875, %v3871
        %v5280 = vpack.c.b16 %v3876, %v3872
        %v5281 = vpack.c.b16 %v3877, %v3873
        %v5282 = vpack.c.b16 %v3882, %v3878
        %v5283 = vpack.c.b16 %v3883, %v3879
        %v5284 = vpack.c.b16 %v3884, %v3880
        %v5285 = vpack.c.b16 %v3885, %v3881
        %v5286 = vpack.c.b16 %v3890, %v3886
        %v5287 = vpack.c.b16 %v3891, %v3887
        %v5288 = vpack.c.b16 %v3892, %v3888
        %v5289 = vpack.c.b16 %v3893, %v3889
        %v5290 = vpack.c.b16 %v3898, %v3894
        %v5291 = vpack.c.b16 %v3899, %v3895
        %v5292 = vpack.c.b16 %v3900, %v3896
        %v5293 = vpack.c.b16 %v3901, %v3897
        %v5294 = vpack.c.b16 %v3906, %v3902
        %v5295 = vpack.c.b16 %v3907, %v3903
        %v5296 = vpack.c.b16 %v3908, %v3904
        %v5297 = vpack.c.b16 %v3909, %v3905
        %v5298 = vpack.c.b16 %v3914, %v3910
        %v5299 = vpack.c.b16 %v3915, %v3911
        %v5300 = vpack.c.b16 %v3916, %v3912
        %v5301 = vpack.c.b16 %v3917, %v3913
        %v5302 = vpack.c.b16 %v3922, %v3918
        %v5303 = vpack.c.b16 %v3923, %v3919
        %v5304 = vpack.c.b16 %v3924, %v3920
        %v5305 = vpack.c.b16 %v3925, %v3921
        %v5306 = vpack.c.b16 %v3930, %v3926
        %v5307 = vpack.c.b16 %v3931, %v3927
        %v5308 = vpack.c.b16 %v3932, %v3928
        %v5309 = vpack.c.b16 %v3933, %v3929
        %v5310 = vpack.c.b16 %v3938, %v3934
        %v5311 = vpack.c.b16 %v3939, %v3935
        %v5312 = vpack.c.b16 %v3940, %v3936
        %v5313 = vpack.c.b16 %v3941, %v3937
        %v5314 = vpack.c.b16 %v3946, %v3942
        %v5315 = vpack.c.b16 %v3947, %v3943
        %v5316 = vpack.c.b16 %v3948, %v3944
        %v5317 = vpack.c.b16 %v3949, %v3945
        %v5318 = vpack.c.b16 %v3954, %v3950
        %v5319 = vpack.c.b16 %v3955, %v3951
        %v5320 = vpack.c.b16 %v3956, %v3952
        %v5321 = vpack.c.b16 %v3957, %v3953
        %v5322 = vpack.c.b16 %v3962, %v3958
        %v5323 = vpack.c.b16 %v3963, %v3959
        %v5324 = vpack.c.b16 %v3964, %v3960
        %v5325 = vpack.c.b16 %v3965, %v3961
        %v5326 = vpack.c.b16 %v3970, %v3966
        %v5327 = vpack.c.b16 %v3971, %v3967
        %v5328 = vpack.c.b16 %v3972, %v3968
        %v5329 = vpack.c.b16 %v3973, %v3969
        %v5330 = vpack.c.b16 %v3978, %v3974
        %v5331 = vpack.c.b16 %v3979, %v3975
        %v5332 = vpack.c.b16 %v3980, %v3976
        %v5333 = vpack.c.b16 %v3981, %v3977
        %v5334 = vpack.c.b16 %v3986, %v3982
        %v5335 = vpack.c.b16 %v3987, %v3983
        %v5336 = vpack.c.b16 %v3988, %v3984
        %v5337 = vpack.c.b16 %v3989, %v3985
        %v5338 = vpack.c.b16 %v3994, %v3990
        %v5339 = vpack.c.b16 %v3995, %v3991
        %v5340 = vpack.c.b16 %v3996, %v3992
        %v5341 = vpack.c.b16 %v3997, %v3993
        %v5342 = vpack.c.b16 %v4002, %v3998
        %v5343 = vpack.c.b16 %v4003, %v3999
        %v5344 = vpack.c.b16 %v4004, %v4000
        %v5345 = vpack.c.b16 %v4005, %v4001
        %v5346 = vpack.c.b16 %v4010, %v4006
        %v5347 = vpack.c.b16 %v4011, %v4007
        %v5348 = vpack.c.b16 %v4012, %v4008
        %v5349 = vpack.c.b16 %v4013, %v4009
        %v5350 = vpack.c.b16 %v4018, %v4014
        %v5351 = vpack.c.b16 %v4019, %v4015
        %v5352 = vpack.c.b16 %v4020, %v4016
        %v5353 = vpack.c.b16 %v4021, %v4017
        %v5354 = vpack.c.b16 %v4026, %v4022
        %v5355 = vpack.c.b16 %v4027, %v4023
        %v5356 = vpack.c.b16 %v4028, %v4024
        %v5357 = vpack.c.b16 %v4029, %v4025
        %v5358 = vpack.c.b16 %v4034, %v4030
        %v5359 = vpack.c.b16 %v4035, %v4031
        %v5360 = vpack.c.b16 %v4036, %v4032
        %v5361 = vpack.c.b16 %v4037, %v4033
        %v5362 = vpack.c.b16 %v4042, %v4038
        %v5363 = vpack.c.b16 %v4043, %v4039
        %v5364 = vpack.c.b16 %v4044, %v4040
        %v5365 = vpack.c.b16 %v4045, %v4041
        %v5366 = vpack.c.b16 %v4050, %v4046
        %v5367 = vpack.c.b16 %v4051, %v4047
        %v5368 = vpack.c.b16 %v4052, %v4048
        %v5369 = vpack.c.b16 %v4053, %v4049
        %v5370 = vpack.c.b16 %v4058, %v4054
        %v5371 = vpack.c.b16 %v4059, %v4055
        %v5372 = vpack.c.b16 %v4060, %v4056
        %v5373 = vpack.c.b16 %v4061, %v4057
        %v5374 = vpack.c.b16 %v4066, %v4062
        %v5375 = vpack.c.b16 %v4067, %v4063
        %v5376 = vpack.c.b16 %v4068, %v4064
        %v5377 = vpack.c.b16 %v4069, %v4065
        %v5378 = vpack.c.b16 %v4074, %v4070
        %v5379 = vpack.c.b16 %v4075, %v4071
        %v5380 = vpack.c.b16 %v4076, %v4072
        %v5381 = vpack.c.b16 %v4077, %v4073
        %v5382 = vpack.c.b16 %v4082, %v4078
        %v5383 = vpack.c.b16 %v4083, %v4079
        %v5384 = vpack.c.b16 %v4084, %v4080
        %v5385 = vpack.c.b16 %v4085, %v4081
        %v5386 = vpack.c.b16 %v4090, %v4086
        %v5387 = vpack.c.b16 %v4091, %v4087
        %v5388 = vpack.c.b16 %v4092, %v4088
        %v5389 = vpack.c.b16 %v4093, %v4089
        %v5390 = vpack.c.b16 %v4098, %v4094
        %v5391 = vpack.c.b16 %v4099, %v4095
        %v5392 = vpack.c.b16 %v4100, %v4096
        %v5393 = vpack.c.b16 %v4101, %v4097
        %v5394 = vpack.c.b16 %v4106, %v4102
        %v5395 = vpack.c.b16 %v4107, %v4103
        %v5396 = vpack.c.b16 %v4108, %v4104
        %v5397 = vpack.c.b16 %v4109, %v4105
        %v5398 = vpack.c.b16 %v4114, %v4110
        %v5399 = vpack.c.b16 %v4115, %v4111
        %v5400 = vpack.c.b16 %v4116, %v4112
        %v5401 = vpack.c.b16 %v4117, %v4113
        %v5402 = vpack.c.b16 %v4122, %v4118
        %v5403 = vpack.c.b16 %v4123, %v4119
        %v5404 = vpack.c.b16 %v4124, %v4120
        %v5405 = vpack.c.b16 %v4125, %v4121
        %v5406 = vpack.c.b16 %v4130, %v4126
        %v5407 = vpack.c.b16 %v4131, %v4127
        %v5408 = vpack.c.b16 %v4132, %v4128
        %v5409 = vpack.c.b16 %v4133, %v4129
        %v5410 = vpack.c.b16 %v4138, %v4134
        %v5411 = vpack.c.b16 %v4139, %v4135
        %v5412 = vpack.c.b16 %v4140, %v4136
        %v5413 = vpack.c.b16 %v4141, %v4137
        %v5414 = vpack.c.b16 %v4146, %v4142
        %v5415 = vpack.c.b16 %v4147, %v4143
        %v5416 = vpack.c.b16 %v4148, %v4144
        %v5417 = vpack.c.b16 %v4149, %v4145
        %v5418 = vpack.c.b16 %v4154, %v4150
        %v5419 = vpack.c.b16 %v4155, %v4151
        %v5420 = vpack.c.b16 %v4156, %v4152
        %v5421 = vpack.c.b16 %v4157, %v4153
        %v5422 = vpack.c.b16 %v4162, %v4158
        %v5423 = vpack.c.b16 %v4163, %v4159
        %v5424 = vpack.c.b16 %v4164, %v4160
        %v5425 = vpack.c.b16 %v4165, %v4161
        %v5426 = vpack.c.b16 %v4170, %v4166
        %v5427 = vpack.c.b16 %v4171, %v4167
        %v5428 = vpack.c.b16 %v4172, %v4168
        %v5429 = vpack.c.b16 %v4173, %v4169
        %v5430 = vpack.c.b16 %v4178, %v4174
        %v5431 = vpack.c.b16 %v4179, %v4175
        %v5432 = vpack.c.b16 %v4180, %v4176
        %v5433 = vpack.c.b16 %v4181, %v4177
        %v5434 = vpack.c.b16 %v4186, %v4182
        %v5435 = vpack.c.b16 %v4187, %v4183
        %v5436 = vpack.c.b16 %v4188, %v4184
        %v5437 = vpack.c.b16 %v4189, %v4185
        %v5438 = vpack.c.b16 %v4194, %v4190
        %v5439 = vpack.c.b16 %v4195, %v4191
        %v5440 = vpack.c.b16 %v4196, %v4192
        %v5441 = vpack.c.b16 %v4197, %v4193
        %v5442 = vpack.c.b16 %v4202, %v4198
        %v5443 = vpack.c.b16 %v4203, %v4199
        %v5444 = vpack.c.b16 %v4204, %v4200
        %v5445 = vpack.c.b16 %v4205, %v4201
        %v5446 = vpack.c.b16 %v4210, %v4206
        %v5447 = vpack.c.b16 %v4211, %v4207
        %v5448 = vpack.c.b16 %v4212, %v4208
        %v5449 = vpack.c.b16 %v4213, %v4209
        %v5450 = vpack.c.b16 %v4218, %v4214
        %v5451 = vpack.c.b16 %v4219, %v4215
        %v5452 = vpack.c.b16 %v4220, %v4216
        %v5453 = vpack.c.b16 %v4221, %v4217
        %v5454 = vpack.c.b16 %v4226, %v4222
        %v5455 = vpack.c.b16 %v4227, %v4223
        %v5456 = vpack.c.b16 %v4228, %v4224
        %v5457 = vpack.c.b16 %v4229, %v4225
        %v5458 = vpack.c.b16 %v4234, %v4230
        %v5459 = vpack.c.b16 %v4235, %v4231
        %v5460 = vpack.c.b16 %v4236, %v4232
        %v5461 = vpack.c.b16 %v4237, %v4233
        %v5462 = vpack.c.b16 %v4242, %v4238
        %v5463 = vpack.c.b16 %v4243, %v4239
        %v5464 = vpack.c.b16 %v4244, %v4240
        %v5465 = vpack.c.b16 %v4245, %v4241
        %v5466 = vpack.c.b16 %v4250, %v4246
        %v5467 = vpack.c.b16 %v4251, %v4247
        %v5468 = vpack.c.b16 %v4252, %v4248
        %v5469 = vpack.c.b16 %v4253, %v4249
        %v5470 = vpack.c.b16 %v4258, %v4254
        %v5471 = vpack.c.b16 %v4259, %v4255
        %v5472 = vpack.c.b16 %v4260, %v4256
        %v5473 = vpack.c.b16 %v4261, %v4257
        %v5474 = vpack.c.b16 %v4266, %v4262
        %v5475 = vpack.c.b16 %v4267, %v4263
        %v5476 = vpack.c.b16 %v4268, %v4264
        %v5477 = vpack.c.b16 %v4269, %v4265
        %v5478 = vpack.c.b16 %v4274, %v4270
        %v5479 = vpack.c.b16 %v4275, %v4271
        %v5480 = vpack.c.b16 %v4276, %v4272
        %v5481 = vpack.c.b16 %v4277, %v4273
        %v5482 = vpack.c.b16 %v4282, %v4278
        %v5483 = vpack.c.b16 %v4283, %v4279
        %v5484 = vpack.c.b16 %v4284, %v4280
        %v5485 = vpack.c.b16 %v4285, %v4281
        %v5486 = vpack.c.b16 %v4290, %v4286
        %v5487 = vpack.c.b16 %v4291, %v4287
        %v5488 = vpack.c.b16 %v4292, %v4288
        %v5489 = vpack.c.b16 %v4293, %v4289
        %v5490 = vpack.c.b16 %v4298, %v4294
        %v5491 = vpack.c.b16 %v4299, %v4295
        %v5492 = vpack.c.b16 %v4300, %v4296
        %v5493 = vpack.c.b16 %v4301, %v4297
        %v5494 = vpack.c.b16 %v4306, %v4302
        %v5495 = vpack.c.b16 %v4307, %v4303
        %v5496 = vpack.c.b16 %v4308, %v4304
        %v5497 = vpack.c.b16 %v4309, %v4305
        %v5498 = vpack.c.b16 %v4314, %v4310
        %v5499 = vpack.c.b16 %v4315, %v4311
        %v5500 = vpack.c.b16 %v4316, %v4312
        %v5501 = vpack.c.b16 %v4317, %v4313
        %v5502 = vpack.c.b16 %v4322, %v4318
        %v5503 = vpack.c.b16 %v4323, %v4319
        %v5504 = vpack.c.b16 %v4324, %v4320
        %v5505 = vpack.c.b16 %v4325, %v4321
        %v5506 = vpack.c.b16 %v4330, %v4326
        %v5507 = vpack.c.b16 %v4331, %v4327
        %v5508 = vpack.c.b16 %v4332, %v4328
        %v5509 = vpack.c.b16 %v4333, %v4329
        %v5510 = vpack.c.b16 %v4338, %v4334
        %v5511 = vpack.c.b16 %v4339, %v4335
        %v5512 = vpack.c.b16 %v4340, %v4336
        %v5513 = vpack.c.b16 %v4341, %v4337
        %v5514 = vpack.c.b16 %v4346, %v4342
        %v5515 = vpack.c.b16 %v4347, %v4343
        %v5516 = vpack.c.b16 %v4348, %v4344
        %v5517 = vpack.c.b16 %v4349, %v4345
        %v5518 = vpack.c.b16 %v4354, %v4350
        %v5519 = vpack.c.b16 %v4355, %v4351
        %v5520 = vpack.c.b16 %v4356, %v4352
        %v5521 = vpack.c.b16 %v4357, %v4353
        %v5522 = vpack.c.b16 %v4362, %v4358
        %v5523 = vpack.c.b16 %v4363, %v4359
        %v5524 = vpack.c.b16 %v4364, %v4360
        %v5525 = vpack.c.b16 %v4365, %v4361
        %v5526 = vpack.c.b16 %v4370, %v4366
        %v5527 = vpack.c.b16 %v4371, %v4367
        %v5528 = vpack.c.b16 %v4372, %v4368
        %v5529 = vpack.c.b16 %v4373, %v4369
        %v5530 = vpack.c.b16 %v4378, %v4374
        %v5531 = vpack.c.b16 %v4379, %v4375
        %v5532 = vpack.c.b16 %v4380, %v4376
        %v5533 = vpack.c.b16 %v4381, %v4377
        %v5534 = vpack.c.b16 %v4386, %v4382
        %v5535 = vpack.c.b16 %v4387, %v4383
        %v5536 = vpack.c.b16 %v4388, %v4384
        %v5537 = vpack.c.b16 %v4389, %v4385
        %v5538 = vpack.c.b16 %v4394, %v4390
        %v5539 = vpack.c.b16 %v4395, %v4391
        %v5540 = vpack.c.b16 %v4396, %v4392
        %v5541 = vpack.c.b16 %v4397, %v4393
        %v5542 = vpack.c.b16 %v4402, %v4398
        %v5543 = vpack.c.b16 %v4403, %v4399
        %v5544 = vpack.c.b16 %v4404, %v4400
        %v5545 = vpack.c.b16 %v4405, %v4401
        %v5546 = vpack.c.b16 %v4410, %v4406
        %v5547 = vpack.c.b16 %v4411, %v4407
        %v5548 = vpack.c.b16 %v4412, %v4408
        %v5549 = vpack.c.b16 %v4413, %v4409
        %v5550 = vpack.c.b16 %v4418, %v4414
        %v5551 = vpack.c.b16 %v4419, %v4415
        %v5552 = vpack.c.b16 %v4420, %v4416
        %v5553 = vpack.c.b16 %v4421, %v4417
        %v5554 = vpack.c.b16 %v4426, %v4422
        %v5555 = vpack.c.b16 %v4427, %v4423
        %v5556 = vpack.c.b16 %v4428, %v4424
        %v5557 = vpack.c.b16 %v4429, %v4425
        %v5558 = vpack.c.b16 %v4434, %v4430
        %v5559 = vpack.c.b16 %v4435, %v4431
        %v5560 = vpack.c.b16 %v4436, %v4432
        %v5561 = vpack.c.b16 %v4437, %v4433
        %v5562 = vpack.c.b16 %v4442, %v4438
        %v5563 = vpack.c.b16 %v4443, %v4439
        %v5564 = vpack.c.b16 %v4444, %v4440
        %v5565 = vpack.c.b16 %v4445, %v4441
        %v5566 = vpack.c.b16 %v4450, %v4446
        %v5567 = vpack.c.b16 %v4451, %v4447
        %v5568 = vpack.c.b16 %v4452, %v4448
        %v5569 = vpack.c.b16 %v4453, %v4449
        %v5570 = vpack.c.b16 %v4458, %v4454
        %v5571 = vpack.c.b16 %v4459, %v4455
        %v5572 = vpack.c.b16 %v4460, %v4456
        %v5573 = vpack.c.b16 %v4461, %v4457
        %v5574 = vpack.c.b16 %v4466, %v4462
        %v5575 = vpack.c.b16 %v4467, %v4463
        %v5576 = vpack.c.b16 %v4468, %v4464
        %v5577 = vpack.c.b16 %v4469, %v4465
        %v5578 = vpack.c.b16 %v4474, %v4470
        %v5579 = vpack.c.b16 %v4475, %v4471
        %v5580 = vpack.c.b16 %v4476, %v4472
        %v5581 = vpack.c.b16 %v4477, %v4473
        %v5582 = vpack.c.b16 %v4482, %v4478
        %v5583 = vpack.c.b16 %v4483, %v4479
        %v5584 = vpack.c.b16 %v4484, %v4480
        %v5585 = vpack.c.b16 %v4485, %v4481
        %v5586 = vpack.c.b16 %v4490, %v4486
        %v5587 = vpack.c.b16 %v4491, %v4487
        %v5588 = vpack.c.b16 %v4492, %v4488
        %v5589 = vpack.c.b16 %v4493, %v4489
        %v5590 = vpack.c.b16 %v4498, %v4494
        %v5591 = vpack.c.b16 %v4499, %v4495
        %v5592 = vpack.c.b16 %v4500, %v4496
        %v5593 = vpack.c.b16 %v4501, %v4497
        %v5594 = vpack.c.b16 %v4506, %v4502
        %v5595 = vpack.c.b16 %v4507, %v4503
        %v5596 = vpack.c.b16 %v4508, %v4504
        %v5597 = vpack.c.b16 %v4509, %v4505
        %v5598 = vpack.c.b16 %v4514, %v4510
        %v5599 = vpack.c.b16 %v4515, %v4511
        %v5600 = vpack.c.b16 %v4516, %v4512
        %v5601 = vpack.c.b16 %v4517, %v4513
        %v5602 = vpack.c.b16 %v4522, %v4518
        %v5603 = vpack.c.b16 %v4523, %v4519
        %v5604 = vpack.c.b16 %v4524, %v4520
        %v5605 = vpack.c.b16 %v4525, %v4521
        %v5606 = vpack.c.b16 %v4530, %v4526
        %v5607 = vpack.c.b16 %v4531, %v4527
        %v5608 = vpack.c.b16 %v4532, %v4528
        %v5609 = vpack.c.b16 %v4533, %v4529
        %v5610 = vpack.c.b16 %v4538, %v4534
        %v5611 = vpack.c.b16 %v4539, %v4535
        %v5612 = vpack.c.b16 %v4540, %v4536
        %v5613 = vpack.c.b16 %v4541, %v4537
        %v5614 = vpack.c.b16 %v4546, %v4542
        %v5615 = vpack.c.b16 %v4547, %v4543
        %v5616 = vpack.c.b16 %v4548, %v4544
        %v5617 = vpack.c.b16 %v4549, %v4545
        %v5618 = vpack.c.b16 %v4554, %v4550
        %v5619 = vpack.c.b16 %v4555, %v4551
        %v5620 = vpack.c.b16 %v4556, %v4552
        %v5621 = vpack.c.b16 %v4557, %v4553
        %v5622 = vpack.c.b16 %v4562, %v4558
        %v5623 = vpack.c.b16 %v4563, %v4559
        %v5624 = vpack.c.b16 %v4564, %v4560
        %v5625 = vpack.c.b16 %v4565, %v4561
        %v5626 = vpack.c.b16 %v4570, %v4566
        %v5627 = vpack.c.b16 %v4571, %v4567
        %v5628 = vpack.c.b16 %v4572, %v4568
        %v5629 = vpack.c.b16 %v4573, %v4569
        %v5630 = vpack.c.b16 %v4578, %v4574
        %v5631 = vpack.c.b16 %v4579, %v4575
        %v5632 = vpack.c.b16 %v4580, %v4576
        %v5633 = vpack.c.b16 %v4581, %v4577
        %v5634 = vpack.c.b16 %v4586, %v4582
        %v5635 = vpack.c.b16 %v4587, %v4583
        %v5636 = vpack.c.b16 %v4588, %v4584
        %v5637 = vpack.c.b16 %v4589, %v4585
        %v5638 = vpack.c.b16 %v4594, %v4590
        %v5639 = vpack.c.b16 %v4595, %v4591
        %v5640 = vpack.c.b16 %v4596, %v4592
        %v5641 = vpack.c.b16 %v4597, %v4593
        %v5642 = vpack.c.b16 %v4602, %v4598
        %v5643 = vpack.c.b16 %v4603, %v4599
        %v5644 = vpack.c.b16 %v4604, %v4600
        %v5645 = vpack.c.b16 %v4605, %v4601
        %v5646 = vpack.c.b16 %v4610, %v4606
        %v5647 = vpack.c.b16 %v4611, %v4607
        %v5648 = vpack.c.b16 %v4612, %v4608
        %v5649 = vpack.c.b16 %v4613, %v4609
        %v5650 = vpack.c.b16 %v4618, %v4614
        %v5651 = vpack.c.b16 %v4619, %v4615
        %v5652 = vpack.c.b16 %v4620, %v4616
        %v5653 = vpack.c.b16 %v4621, %v4617
        %v5654 = vpack.c.b16 %v4626, %v4622
        %v5655 = vpack.c.b16 %v4627, %v4623
        %v5656 = vpack.c.b16 %v4628, %v4624
        %v5657 = vpack.c.b16 %v4629, %v4625
        %v5658 = vpack.c.b16 %v4634, %v4630
        %v5659 = vpack.c.b16 %v4635, %v4631
        %v5660 = vpack.c.b16 %v4636, %v4632
        %v5661 = vpack.c.b16 %v4637, %v4633
        %6686 = vmatprep.subr.bf16.mxu0 %v4639
        %6687 = vmatpush1.bf16.msra.mxu0 %v4638
        %6688 = vmatprep.subr.bf16.mxu0 %v4643
        %6689 = vmatpush1.bf16.msra.mxu0 %v4642
        %6690 = vmatprep.subr.bf16.mxu0 %v4647
        %6691 = vmatpush1.bf16.msra.mxu0 %v4646
        %6692 = vmatprep.subr.bf16.mxu0 %v4651
        %6693 = vmatpush1.bf16.msra.mxu0 %v4650
        %6694 = vmatprep.subr.bf16.mxu0 %v4655
        %6695 = vmatpush1.bf16.msra.mxu0 %v4654
        %6696 = vmatprep.subr.bf16.mxu0 %v4659
        %6697 = vmatpush1.bf16.msra.mxu0 %v4658
        %6698 = vmatprep.subr.bf16.mxu0 %v4663
        %6699 = vmatpush1.bf16.msra.mxu0 %v4662
        %6700 = vmatprep.subr.bf16.mxu0 %v4667
        %6701 = vmatpush1.bf16.msra.mxu0 %v4666
        %6702 = vmatprep.subr.bf16.mxu0 %v4671
        %6703 = vmatpush1.bf16.msra.mxu0 %v4670
        %6704 = vmatprep.subr.bf16.mxu0 %v4675
        %6705 = vmatpush1.bf16.msra.mxu0 %v4674
        %6706 = vmatprep.subr.bf16.mxu0 %v4679
        %6707 = vmatpush1.bf16.msra.mxu0 %v4678
        %6708 = vmatprep.subr.bf16.mxu0 %v4683
        %6709 = vmatpush1.bf16.msra.mxu0 %v4682
        %6710 = vmatprep.subr.bf16.mxu0 %v4687
        %6711 = vmatpush1.bf16.msra.mxu0 %v4686
        %6712 = vmatprep.subr.bf16.mxu0 %v4691
        %6713 = vmatpush1.bf16.msra.mxu0 %v4690
        %6714 = vmatprep.subr.bf16.mxu0 %v4695
        %6715 = vmatpush1.bf16.msra.mxu0 %v4694
        %6716 = vmatprep.subr.bf16.mxu0 %v4699
        %6717 = vmatpush1.bf16.msra.mxu0 %v4698
        %6718 = vmatprep.mubr.bf16.mxu0 %v1375
        %6719 = vmatmul.mubr.bf16.gmra.mrb[0].mxu0 %v1361
        %v6720 = vpop.f32.mrb[0].mxu0
        %v6721 = vadd.f32 0.0, %v6720
        %v6722 = vpop.f32.mrb[0].mxu0
        %v6723 = vadd.f32 0.0, %v6722
        %v6724 = vpop.f32.mrb[0].mxu0
        %v6725 = vpop.f32.mrb[0].mxu0
        %6726 = vdwg.mxu0
        %6727 = vmatprep.subr.bf16.mxu0 %v4703
        %6728 = vmatpush1.bf16.msra.mxu0 %v4702
        %6729 = vmatprep.subr.bf16.mxu0 %v4707
        %6730 = vmatpush1.bf16.msra.mxu0 %v4706
        %6731 = vmatprep.subr.bf16.mxu0 %v4711
        %6732 = vmatpush1.bf16.msra.mxu0 %v4710
        %6733 = vmatprep.subr.bf16.mxu0 %v4715
        %6734 = vmatpush1.bf16.msra.mxu0 %v4714
        %6735 = vmatprep.subr.bf16.mxu0 %v4719
        %6736 = vmatpush1.bf16.msra.mxu0 %v4718
        %6737 = vmatprep.subr.bf16.mxu0 %v4723
        %6738 = vmatpush1.bf16.msra.mxu0 %v4722
        %6739 = vmatprep.subr.bf16.mxu0 %v4727
        %6740 = vmatpush1.bf16.msra.mxu0 %v4726
        %6741 = vmatprep.subr.bf16.mxu0 %v4731
        %6742 = vmatpush1.bf16.msra.mxu0 %v4730
        %6743 = vmatprep.subr.bf16.mxu0 %v4735
        %6744 = vmatpush1.bf16.msra.mxu0 %v4734
        %6745 = vmatprep.subr.bf16.mxu0 %v4739
        %6746 = vmatpush1.bf16.msra.mxu0 %v4738
        %6747 = vmatprep.subr.bf16.mxu0 %v4743
        %6748 = vmatpush1.bf16.msra.mxu0 %v4742
        %6749 = vmatprep.subr.bf16.mxu0 %v4747
        %6750 = vmatpush1.bf16.msra.mxu0 %v4746
        %6751 = vmatprep.subr.bf16.mxu0 %v4751
        %6752 = vmatpush1.bf16.msra.mxu0 %v4750
        %6753 = vmatprep.subr.bf16.mxu0 %v4755
        %6754 = vmatpush1.bf16.msra.mxu0 %v4754
        %6755 = vmatprep.subr.bf16.mxu0 %v4759
        %6756 = vmatpush1.bf16.msra.mxu0 %v4758
        %6757 = vmatprep.subr.bf16.mxu0 %v4763
        %6758 = vmatpush1.bf16.msra.mxu0 %v4762
        %6759 = vmatprep.mubr.bf16.mxu0 %v1385
        %6760 = vmatmul.mubr.bf16.gmra.mrb[0].mxu0 %v1383
        %v6761 = vpop.f32.mrb[0].mxu0
        %v6762 = vadd.f32 %v6721, %v6761
        %v6763 = vpop.f32.mrb[0].mxu0
        %v6764 = vadd.f32 %v6723, %v6763
        %v6765 = vpop.f32.mrb[0].mxu0
        %v6766 = vpop.f32.mrb[0].mxu0
        %6767 = vdwg.mxu0
        %6768 = vmatprep.subr.bf16.mxu0 %v4767
        %6769 = vmatpush1.bf16.msra.mxu0 %v4766
        %6770 = vmatprep.subr.bf16.mxu0 %v4771
        %6771 = vmatpush1.bf16.msra.mxu0 %v4770
        %6772 = vmatprep.subr.bf16.mxu0 %v4775
        %6773 = vmatpush1.bf16.msra.mxu0 %v4774
        %6774 = vmatprep.subr.bf16.mxu0 %v4779
        %6775 = vmatpush1.bf16.msra.mxu0 %v4778
        %6776 = vmatprep.subr.bf16.mxu0 %v4783
        %6777 = vmatpush1.bf16.msra.mxu0 %v4782
        %6778 = vmatprep.subr.bf16.mxu0 %v4787
        %6779 = vmatpush1.bf16.msra.mxu0 %v4786
        %6780 = vmatprep.subr.bf16.mxu0 %v4791
        %6781 = vmatpush1.bf16.msra.mxu0 %v4790
        %6782 = vmatprep.subr.bf16.mxu0 %v4795
        %6783 = vmatpush1.bf16.msra.mxu0 %v4794
        %6784 = vmatprep.subr.bf16.mxu0 %v4799
        %6785 = vmatpush1.bf16.msra.mxu0 %v4798
        %6786 = vmatprep.subr.bf16.mxu0 %v4803
        %6787 = vmatpush1.bf16.msra.mxu0 %v4802
        %6788 = vmatprep.subr.bf16.mxu0 %v4807
        %6789 = vmatpush1.bf16.msra.mxu0 %v4806
        %6790 = vmatprep.subr.bf16.mxu0 %v4811
        %6791 = vmatpush1.bf16.msra.mxu0 %v4810
        %6792 = vmatprep.subr.bf16.mxu0 %v4815
        %6793 = vmatpush1.bf16.msra.mxu0 %v4814
        %6794 = vmatprep.subr.bf16.mxu0 %v4819
        %6795 = vmatpush1.bf16.msra.mxu0 %v4818
        %6796 = vmatprep.subr.bf16.mxu0 %v4823
        %6797 = vmatpush1.bf16.msra.mxu0 %v4822
        %6798 = vmatprep.subr.bf16.mxu0 %v4827
        %6799 = vmatpush1.bf16.msra.mxu0 %v4826
        %6800 = vmatprep.mubr.bf16.mxu0 %v1382
        %6801 = vmatmul.mubr.bf16.gmra.mrb[0].mxu0 %v1368
        %v6802 = vpop.f32.mrb[0].mxu0
        %v6803 = vadd.f32 %v6762, %v6802
        %v6804 = vpop.f32.mrb[0].mxu0
        %v6805 = vadd.f32 %v6764, %v6804
        %v6806 = vpop.f32.mrb[0].mxu0
        %v6807 = vpop.f32.mrb[0].mxu0
        %6808 = vdwg.mxu0
        %6809 = vmatprep.subr.bf16.mxu0 %v4831
        %6810 = vmatpush1.bf16.msra.mxu0 %v4830
        %6811 = vmatprep.subr.bf16.mxu0 %v4835
        %6812 = vmatpush1.bf16.msra.mxu0 %v4834
        %6813 = vmatprep.subr.bf16.mxu0 %v4839
        %6814 = vmatpush1.bf16.msra.mxu0 %v4838
        %6815 = vmatprep.subr.bf16.mxu0 %v4843
        %6816 = vmatpush1.bf16.msra.mxu0 %v4842
        %6817 = vmatprep.subr.bf16.mxu0 %v4847
        %6818 = vmatpush1.bf16.msra.mxu0 %v4846
        %6819 = vmatprep.subr.bf16.mxu0 %v4851
        %6820 = vmatpush1.bf16.msra.mxu0 %v4850
        %6821 = vmatprep.subr.bf16.mxu0 %v4855
        %6822 = vmatpush1.bf16.msra.mxu0 %v4854
        %6823 = vmatprep.subr.bf16.mxu0 %v4859
        %6824 = vmatpush1.bf16.msra.mxu0 %v4858
        %6825 = vmatprep.subr.bf16.mxu0 %v4863
        %6826 = vmatpush1.bf16.msra.mxu0 %v4862
        %6827 = vmatprep.subr.bf16.mxu0 %v4867
        %6828 = vmatpush1.bf16.msra.mxu0 %v4866
        %6829 = vmatprep.subr.bf16.mxu0 %v4871
        %6830 = vmatpush1.bf16.msra.mxu0 %v4870
        %6831 = vmatprep.subr.bf16.mxu0 %v4875
        %6832 = vmatpush1.bf16.msra.mxu0 %v4874
        %6833 = vmatprep.subr.bf16.mxu0 %v4879
        %6834 = vmatpush1.bf16.msra.mxu0 %v4878
        %6835 = vmatprep.subr.bf16.mxu0 %v4883
        %6836 = vmatpush1.bf16.msra.mxu0 %v4882
        %6837 = vmatprep.subr.bf16.mxu0 %v4887
        %6838 = vmatpush1.bf16.msra.mxu0 %v4886
        %6839 = vmatprep.subr.bf16.mxu0 %v4891
        %6840 = vmatpush1.bf16.msra.mxu0 %v4890
        %6841 = vmatprep.mubr.bf16.mxu0 %v1386
        %6842 = vmatmul.mubr.bf16.gmra.mrb[0].mxu0 %v1384
        %v6843 = vpop.f32.mrb[0].mxu0
        %v6844 = vadd.f32 %v6803, %v6843
        %v6845 = vpop.f32.mrb[0].mxu0
        %v6846 = vadd.f32 %v6805, %v6845
        %v6847 = vpop.f32.mrb[0].mxu0
        %v6848 = vpop.f32.mrb[0].mxu0
        %6849 = vdwg.mxu0
        %6850 = vmatprep.subr.bf16.mxu0 %v4895
        %6851 = vmatpush1.bf16.msra.mxu0 %v4894
        %6852 = vmatprep.subr.bf16.mxu0 %v4899
        %6853 = vmatpush1.bf16.msra.mxu0 %v4898
        %6854 = vmatprep.subr.bf16.mxu0 %v4903
        %6855 = vmatpush1.bf16.msra.mxu0 %v4902
        %6856 = vmatprep.subr.bf16.mxu0 %v4907
        %6857 = vmatpush1.bf16.msra.mxu0 %v4906
        %6858 = vmatprep.subr.bf16.mxu0 %v4911
        %6859 = vmatpush1.bf16.msra.mxu0 %v4910
        %6860 = vmatprep.subr.bf16.mxu0 %v4915
        %6861 = vmatpush1.bf16.msra.mxu0 %v4914
        %6862 = vmatprep.subr.bf16.mxu0 %v4919
        %6863 = vmatpush1.bf16.msra.mxu0 %v4918
        %6864 = vmatprep.subr.bf16.mxu0 %v4923
        %6865 = vmatpush1.bf16.msra.mxu0 %v4922
        %6866 = vmatprep.subr.bf16.mxu0 %v4927
        %6867 = vmatpush1.bf16.msra.mxu0 %v4926
        %6868 = vmatprep.subr.bf16.mxu0 %v4931
        %6869 = vmatpush1.bf16.msra.mxu0 %v4930
        %6870 = vmatprep.subr.bf16.mxu0 %v4935
        %6871 = vmatpush1.bf16.msra.mxu0 %v4934
        %6872 = vmatprep.subr.bf16.mxu0 %v4939
        %6873 = vmatpush1.bf16.msra.mxu0 %v4938
        %6874 = vmatprep.subr.bf16.mxu0 %v4943
        %6875 = vmatpush1.bf16.msra.mxu0 %v4942
        %6876 = vmatprep.subr.bf16.mxu0 %v4947
        %6877 = vmatpush1.bf16.msra.mxu0 %v4946
        %6878 = vmatprep.subr.bf16.mxu0 %v4951
        %6879 = vmatpush1.bf16.msra.mxu0 %v4950
        %6880 = vmatprep.subr.bf16.mxu0 %v4955
        %6881 = vmatpush1.bf16.msra.mxu0 %v4954
        %6882 = vmatprep.mubr.bf16.mxu0 %v1424
        %6883 = vmatmul.mubr.bf16.gmra.mrb[0].mxu0 %v1410
        %v6884 = vpop.f32.mrb[0].mxu0
        %v6885 = vadd.f32 %v6844, %v6884
        %v6886 = vpop.f32.mrb[0].mxu0
        %v6887 = vadd.f32 %v6846, %v6886
        %v6888 = vpop.f32.mrb[0].mxu0
        %v6889 = vpop.f32.mrb[0].mxu0
        %6890 = vdwg.mxu0
        %6891 = vmatprep.subr.bf16.mxu0 %v4959
        %6892 = vmatpush1.bf16.msra.mxu0 %v4958
        %6893 = vmatprep.subr.bf16.mxu0 %v4963
        %6894 = vmatpush1.bf16.msra.mxu0 %v4962
        %6895 = vmatprep.subr.bf16.mxu0 %v4967
        %6896 = vmatpush1.bf16.msra.mxu0 %v4966
        %6897 = vmatprep.subr.bf16.mxu0 %v4971
        %6898 = vmatpush1.bf16.msra.mxu0 %v4970
        %6899 = vmatprep.subr.bf16.mxu0 %v4975
        %6900 = vmatpush1.bf16.msra.mxu0 %v4974
        %6901 = vmatprep.subr.bf16.mxu0 %v4979
        %6902 = vmatpush1.bf16.msra.mxu0 %v4978
        %6903 = vmatprep.subr.bf16.mxu0 %v4983
        %6904 = vmatpush1.bf16.msra.mxu0 %v4982
        %6905 = vmatprep.subr.bf16.mxu0 %v4987
        %6906 = vmatpush1.bf16.msra.mxu0 %v4986
        %6907 = vmatprep.subr.bf16.mxu0 %v4991
        %6908 = vmatpush1.bf16.msra.mxu0 %v4990
        %6909 = vmatprep.subr.bf16.mxu0 %v4995
        %6910 = vmatpush1.bf16.msra.mxu0 %v4994
        %6911 = vmatprep.subr.bf16.mxu0 %v4999
        %6912 = vmatpush1.bf16.msra.mxu0 %v4998
        %6913 = vmatprep.subr.bf16.mxu0 %v5003
        %6914 = vmatpush1.bf16.msra.mxu0 %v5002
        %6915 = vmatprep.subr.bf16.mxu0 %v5007
        %6916 = vmatpush1.bf16.msra.mxu0 %v5006
        %6917 = vmatprep.subr.bf16.mxu0 %v5011
        %6918 = vmatpush1.bf16.msra.mxu0 %v5010
        %6919 = vmatprep.subr.bf16.mxu0 %v5015
        %6920 = vmatpush1.bf16.msra.mxu0 %v5014
        %6921 = vmatprep.subr.bf16.mxu0 %v5019
        %6922 = vmatpush1.bf16.msra.mxu0 %v5018
        %6923 = vmatprep.mubr.bf16.mxu0 %v1434
        %6924 = vmatmul.mubr.bf16.gmra.mrb[0].mxu0 %v1432
        %v6925 = vpop.f32.mrb[0].mxu0
        %v6926 = vadd.f32 %v6885, %v6925
        %v6927 = vpop.f32.mrb[0].mxu0
        %v6928 = vadd.f32 %v6887, %v6927
        %v6929 = vpop.f32.mrb[0].mxu0
        %v6930 = vpop.f32.mrb[0].mxu0
        %6931 = vdwg.mxu0
        %6932 = vmatprep.subr.bf16.mxu0 %v5023
        %6933 = vmatpush1.bf16.msra.mxu0 %v5022
        %6934 = vmatprep.subr.bf16.mxu0 %v5027
        %6935 = vmatpush1.bf16.msra.mxu0 %v5026
        %6936 = vmatprep.subr.bf16.mxu0 %v5031
        %6937 = vmatpush1.bf16.msra.mxu0 %v5030
        %6938 = vmatprep.subr.bf16.mxu0 %v5035
        %6939 = vmatpush1.bf16.msra.mxu0 %v5034
        %6940 = vmatprep.subr.bf16.mxu0 %v5039
        %6941 = vmatpush1.bf16.msra.mxu0 %v5038
        %6942 = vmatprep.subr.bf16.mxu0 %v5043
        %6943 = vmatpush1.bf16.msra.mxu0 %v5042
        %6944 = vmatprep.subr.bf16.mxu0 %v5047
        %6945 = vmatpush1.bf16.msra.mxu0 %v5046
        %6946 = vmatprep.subr.bf16.mxu0 %v5051
        %6947 = vmatpush1.bf16.msra.mxu0 %v5050
        %6948 = vmatprep.subr.bf16.mxu0 %v5055
        %6949 = vmatpush1.bf16.msra.mxu0 %v5054
        %6950 = vmatprep.subr.bf16.mxu0 %v5059
        %6951 = vmatpush1.bf16.msra.mxu0 %v5058
        %6952 = vmatprep.subr.bf16.mxu0 %v5063
        %6953 = vmatpush1.bf16.msra.mxu0 %v5062
        %6954 = vmatprep.subr.bf16.mxu0 %v5067
        %6955 = vmatpush1.bf16.msra.mxu0 %v5066
        %6956 = vmatprep.subr.bf16.mxu0 %v5071
        %6957 = vmatpush1.bf16.msra.mxu0 %v5070
        %6958 = vmatprep.subr.bf16.mxu0 %v5075
        %6959 = vmatpush1.bf16.msra.mxu0 %v5074
        %6960 = vmatprep.subr.bf16.mxu0 %v5079
        %6961 = vmatpush1.bf16.msra.mxu0 %v5078
        %6962 = vmatprep.subr.bf16.mxu0 %v5083
        %6963 = vmatpush1.bf16.msra.mxu0 %v5082
        %6964 = vmatprep.mubr.bf16.mxu0 %v1431
        %6965 = vmatmul.mubr.bf16.gmra.mrb[0].mxu0 %v1417
        %v6966 = vpop.f32.mrb[0].mxu0
        %v6967 = vadd.f32 %v6926, %v6966
        %v6968 = vpop.f32.mrb[0].mxu0
        %v6969 = vadd.f32 %v6928, %v6968
        %v6970 = vpop.f32.mrb[0].mxu0
        %v6971 = vpop.f32.mrb[0].mxu0
        %6972 = vdwg.mxu0
        %6973 = vmatprep.subr.bf16.mxu0 %v5087
        %6974 = vmatpush1.bf16.msra.mxu0 %v5086
        %6975 = vmatprep.subr.bf16.mxu0 %v5091
        %6976 = vmatpush1.bf16.msra.mxu0 %v5090
        %6977 = vmatprep.subr.bf16.mxu0 %v5095
        %6978 = vmatpush1.bf16.msra.mxu0 %v5094
        %6979 = vmatprep.subr.bf16.mxu0 %v5099
        %6980 = vmatpush1.bf16.msra.mxu0 %v5098
        %6981 = vmatprep.subr.bf16.mxu0 %v5103
        %6982 = vmatpush1.bf16.msra.mxu0 %v5102
        %6983 = vmatprep.subr.bf16.mxu0 %v5107
        %6984 = vmatpush1.bf16.msra.mxu0 %v5106
        %6985 = vmatprep.subr.bf16.mxu0 %v5111
        %6986 = vmatpush1.bf16.msra.mxu0 %v5110
        %6987 = vmatprep.subr.bf16.mxu0 %v5115
        %6988 = vmatpush1.bf16.msra.mxu0 %v5114
        %6989 = vmatprep.subr.bf16.mxu0 %v5119
        %6990 = vmatpush1.bf16.msra.mxu0 %v5118
        %6991 = vmatprep.subr.bf16.mxu0 %v5123
        %6992 = vmatpush1.bf16.msra.mxu0 %v5122
        %6993 = vmatprep.subr.bf16.mxu0 %v5127
        %6994 = vmatpush1.bf16.msra.mxu0 %v5126
        %6995 = vmatprep.subr.bf16.mxu0 %v5131
        %6996 = vmatpush1.bf16.msra.mxu0 %v5130
        %6997 = vmatprep.subr.bf16.mxu0 %v5135
        %6998 = vmatpush1.bf16.msra.mxu0 %v5134
        %6999 = vmatprep.subr.bf16.mxu0 %v5139
        %7000 = vmatpush1.bf16.msra.mxu0 %v5138
        %7001 = vmatprep.subr.bf16.mxu0 %v5143
        %7002 = vmatpush1.bf16.msra.mxu0 %v5142
        %7003 = vmatprep.subr.bf16.mxu0 %v5147
        %7004 = vmatpush1.bf16.msra.mxu0 %v5146
        %7005 = vmatprep.mubr.bf16.mxu0 %v1435
        %7006 = vmatmul.mubr.bf16.gmra.mrb[0].mxu0 %v1433
        %v7007 = vpop.f32.mrb[0].mxu0
        %v7008 = vadd.f32 %v6967, %v7007
        %v7009 = vpop.f32.mrb[0].mxu0
        %v7010 = vadd.f32 %v6969, %v7009
        %v7011 = vpop.f32.mrb[0].mxu0
        %v7012 = vpop.f32.mrb[0].mxu0
        %7013 = vdwg.mxu0
        %7014 = vmatprep.subr.bf16.mxu0 %v5151
        %7015 = vmatpush1.bf16.msra.mxu0 %v5150
        %7016 = vmatprep.subr.bf16.mxu0 %v5155
        %7017 = vmatpush1.bf16.msra.mxu0 %v5154
        %7018 = vmatprep.subr.bf16.mxu0 %v5159
        %7019 = vmatpush1.bf16.msra.mxu0 %v5158
        %7020 = vmatprep.subr.bf16.mxu0 %v5163
        %7021 = vmatpush1.bf16.msra.mxu0 %v5162
        %7022 = vmatprep.subr.bf16.mxu0 %v5167
        %7023 = vmatpush1.bf16.msra.mxu0 %v5166
        %7024 = vmatprep.subr.bf16.mxu0 %v5171
        %7025 = vmatpush1.bf16.msra.mxu0 %v5170
        %7026 = vmatprep.subr.bf16.mxu0 %v5175
        %7027 = vmatpush1.bf16.msra.mxu0 %v5174
        %7028 = vmatprep.subr.bf16.mxu0 %v5179
        %7029 = vmatpush1.bf16.msra.mxu0 %v5178
        %7030 = vmatprep.subr.bf16.mxu0 %v5183
        %7031 = vmatpush1.bf16.msra.mxu0 %v5182
        %7032 = vmatprep.subr.bf16.mxu0 %v5187
        %7033 = vmatpush1.bf16.msra.mxu0 %v5186
        %7034 = vmatprep.subr.bf16.mxu0 %v5191
        %7035 = vmatpush1.bf16.msra.mxu0 %v5190
        %7036 = vmatprep.subr.bf16.mxu0 %v5195
        %7037 = vmatpush1.bf16.msra.mxu0 %v5194
        %7038 = vmatprep.subr.bf16.mxu0 %v5199
        %7039 = vmatpush1.bf16.msra.mxu0 %v5198
        %7040 = vmatprep.subr.bf16.mxu0 %v5203
        %7041 = vmatpush1.bf16.msra.mxu0 %v5202
        %7042 = vmatprep.subr.bf16.mxu0 %v5207
        %7043 = vmatpush1.bf16.msra.mxu0 %v5206
        %7044 = vmatprep.subr.bf16.mxu0 %v5211
        %7045 = vmatpush1.bf16.msra.mxu0 %v5210
        %7046 = vmatprep.mubr.bf16.mxu0 %v1473
        %7047 = vmatmul.mubr.bf16.gmra.mrb[0].mxu0 %v1459
        %v7048 = vpop.f32.mrb[0].mxu0
        %v7049 = vadd.f32 %v7008, %v7048
        %v7050 = vpop.f32.mrb[0].mxu0
        %v7051 = vadd.f32 %v7010, %v7050
        %v7052 = vpop.f32.mrb[0].mxu0
        %v7053 = vpop.f32.mrb[0].mxu0
        %7054 = vdwg.mxu0
        %7055 = vmatprep.subr.bf16.mxu0 %v5215
        %7056 = vmatpush1.bf16.msra.mxu0 %v5214
        %7057 = vmatprep.subr.bf16.mxu0 %v5219
        %7058 = vmatpush1.bf16.msra.mxu0 %v5218
        %7059 = vmatprep.subr.bf16.mxu0 %v5223
        %7060 = vmatpush1.bf16.msra.mxu0 %v5222
        %7061 = vmatprep.subr.bf16.mxu0 %v5227
        %7062 = vmatpush1.bf16.msra.mxu0 %v5226
        %7063 = vmatprep.subr.bf16.mxu0 %v5231
        %7064 = vmatpush1.bf16.msra.mxu0 %v5230
        %7065 = vmatprep.subr.bf16.mxu0 %v5235
        %7066 = vmatpush1.bf16.msra.mxu0 %v5234
        %7067 = vmatprep.subr.bf16.mxu0 %v5239
        %7068 = vmatpush1.bf16.msra.mxu0 %v5238
        %7069 = vmatprep.subr.bf16.mxu0 %v5243
        %7070 = vmatpush1.bf16.msra.mxu0 %v5242
        %7071 = vmatprep.subr.bf16.mxu0 %v5247
        %7072 = vmatpush1.bf16.msra.mxu0 %v5246
        %7073 = vmatprep.subr.bf16.mxu0 %v5251
        %7074 = vmatpush1.bf16.msra.mxu0 %v5250
        %7075 = vmatprep.subr.bf16.mxu0 %v5255
        %7076 = vmatpush1.bf16.msra.mxu0 %v5254
        %7077 = vmatprep.subr.bf16.mxu0 %v5259
        %7078 = vmatpush1.bf16.msra.mxu0 %v5258
        %7079 = vmatprep.subr.bf16.mxu0 %v5263
        %7080 = vmatpush1.bf16.msra.mxu0 %v5262
        %7081 = vmatprep.subr.bf16.mxu0 %v5267
        %7082 = vmatpush1.bf16.msra.mxu0 %v5266
        %7083 = vmatprep.subr.bf16.mxu0 %v5271
        %7084 = vmatpush1.bf16.msra.mxu0 %v5270
        %7085 = vmatprep.subr.bf16.mxu0 %v5275
        %7086 = vmatpush1.bf16.msra.mxu0 %v5274
        %7087 = vmatprep.mubr.bf16.mxu0 %v1483
        %7088 = vmatmul.mubr.bf16.gmra.mrb[0].mxu0 %v1481
        %v7089 = vpop.f32.mrb[0].mxu0
        %v7090 = vadd.f32 %v7049, %v7089
        %v7091 = vpop.f32.mrb[0].mxu0
        %v7092 = vadd.f32 %v7051, %v7091
        %v7093 = vpop.f32.mrb[0].mxu0
        %v7094 = vpop.f32.mrb[0].mxu0
        %7095 = vdwg.mxu0
        %7096 = vmatprep.subr.bf16.mxu0 %v5279
        %7097 = vmatpush1.bf16.msra.mxu0 %v5278
        %7098 = vmatprep.subr.bf16.mxu0 %v5283
        %7099 = vmatpush1.bf16.msra.mxu0 %v5282
        %7100 = vmatprep.subr.bf16.mxu0 %v5287
        %7101 = vmatpush1.bf16.msra.mxu0 %v5286
        %7102 = vmatprep.subr.bf16.mxu0 %v5291
        %7103 = vmatpush1.bf16.msra.mxu0 %v5290
        %7104 = vmatprep.subr.bf16.mxu0 %v5295
        %7105 = vmatpush1.bf16.msra.mxu0 %v5294
        %7106 = vmatprep.subr.bf16.mxu0 %v5299
        %7107 = vmatpush1.bf16.msra.mxu0 %v5298
        %7108 = vmatprep.subr.bf16.mxu0 %v5303
        %7109 = vmatpush1.bf16.msra.mxu0 %v5302
        %7110 = vmatprep.subr.bf16.mxu0 %v5307
        %7111 = vmatpush1.bf16.msra.mxu0 %v5306
        %7112 = vmatprep.subr.bf16.mxu0 %v5311
        %7113 = vmatpush1.bf16.msra.mxu0 %v5310
        %7114 = vmatprep.subr.bf16.mxu0 %v5315
        %7115 = vmatpush1.bf16.msra.mxu0 %v5314
        %7116 = vmatprep.subr.bf16.mxu0 %v5319
        %7117 = vmatpush1.bf16.msra.mxu0 %v5318
        %7118 = vmatprep.subr.bf16.mxu0 %v5323
        %7119 = vmatpush1.bf16.msra.mxu0 %v5322
        %7120 = vmatprep.subr.bf16.mxu0 %v5327
        %7121 = vmatpush1.bf16.msra.mxu0 %v5326
        %7122 = vmatprep.subr.bf16.mxu0 %v5331
        %7123 = vmatpush1.bf16.msra.mxu0 %v5330
        %7124 = vmatprep.subr.bf16.mxu0 %v5335
        %7125 = vmatpush1.bf16.msra.mxu0 %v5334
        %7126 = vmatprep.subr.bf16.mxu0 %v5339
        %7127 = vmatpush1.bf16.msra.mxu0 %v5338
        %7128 = vmatprep.mubr.bf16.mxu0 %v1480
        %7129 = vmatmul.mubr.bf16.gmra.mrb[0].mxu0 %v1466
        %v7130 = vpop.f32.mrb[0].mxu0
        %v7131 = vadd.f32 %v7090, %v7130
        %v7132 = vpop.f32.mrb[0].mxu0
        %v7133 = vadd.f32 %v7092, %v7132
        %v7134 = vpop.f32.mrb[0].mxu0
        %v7135 = vpop.f32.mrb[0].mxu0
        %7136 = vdwg.mxu0
        %7137 = vmatprep.subr.bf16.mxu0 %v5343
        %7138 = vmatpush1.bf16.msra.mxu0 %v5342
        %7139 = vmatprep.subr.bf16.mxu0 %v5347
        %7140 = vmatpush1.bf16.msra.mxu0 %v5346
        %7141 = vmatprep.subr.bf16.mxu0 %v5351
        %7142 = vmatpush1.bf16.msra.mxu0 %v5350
        %7143 = vmatprep.subr.bf16.mxu0 %v5355
        %7144 = vmatpush1.bf16.msra.mxu0 %v5354
        %7145 = vmatprep.subr.bf16.mxu0 %v5359
        %7146 = vmatpush1.bf16.msra.mxu0 %v5358
        %7147 = vmatprep.subr.bf16.mxu0 %v5363
        %7148 = vmatpush1.bf16.msra.mxu0 %v5362
        %7149 = vmatprep.subr.bf16.mxu0 %v5367
        %7150 = vmatpush1.bf16.msra.mxu0 %v5366
        %7151 = vmatprep.subr.bf16.mxu0 %v5371
        %7152 = vmatpush1.bf16.msra.mxu0 %v5370
        %7153 = vmatprep.subr.bf16.mxu0 %v5375
        %7154 = vmatpush1.bf16.msra.mxu0 %v5374
        %7155 = vmatprep.subr.bf16.mxu0 %v5379
        %7156 = vmatpush1.bf16.msra.mxu0 %v5378
        %7157 = vmatprep.subr.bf16.mxu0 %v5383
        %7158 = vmatpush1.bf16.msra.mxu0 %v5382
        %7159 = vmatprep.subr.bf16.mxu0 %v5387
        %7160 = vmatpush1.bf16.msra.mxu0 %v5386
        %7161 = vmatprep.subr.bf16.mxu0 %v5391
        %7162 = vmatpush1.bf16.msra.mxu0 %v5390
        %7163 = vmatprep.subr.bf16.mxu0 %v5395
        %7164 = vmatpush1.bf16.msra.mxu0 %v5394
        %7165 = vmatprep.subr.bf16.mxu0 %v5399
        %7166 = vmatpush1.bf16.msra.mxu0 %v5398
        %7167 = vmatprep.subr.bf16.mxu0 %v5403
        %7168 = vmatpush1.bf16.msra.mxu0 %v5402
        %7169 = vmatprep.mubr.bf16.mxu0 %v1484
        %7170 = vmatmul.mubr.bf16.gmra.mrb[0].mxu0 %v1482
        %v7171 = vpop.f32.mrb[0].mxu0
        %v7172 = vadd.f32 %v7131, %v7171
        %v7173 = vpop.f32.mrb[0].mxu0
        %v7174 = vadd.f32 %v7133, %v7173
        %v7175 = vpop.f32.mrb[0].mxu0
        %v7176 = vpop.f32.mrb[0].mxu0
        %7177 = vdwg.mxu0
        %7178 = vmatprep.subr.bf16.mxu0 %v5407
        %7179 = vmatpush1.bf16.msra.mxu0 %v5406
        %7180 = vmatprep.subr.bf16.mxu0 %v5411
        %7181 = vmatpush1.bf16.msra.mxu0 %v5410
        %7182 = vmatprep.subr.bf16.mxu0 %v5415
        %7183 = vmatpush1.bf16.msra.mxu0 %v5414
        %7184 = vmatprep.subr.bf16.mxu0 %v5419
        %7185 = vmatpush1.bf16.msra.mxu0 %v5418
        %7186 = vmatprep.subr.bf16.mxu0 %v5423
        %7187 = vmatpush1.bf16.msra.mxu0 %v5422
        %7188 = vmatprep.subr.bf16.mxu0 %v5427
        %7189 = vmatpush1.bf16.msra.mxu0 %v5426
        %7190 = vmatprep.subr.bf16.mxu0 %v5431
        %7191 = vmatpush1.bf16.msra.mxu0 %v5430
        %7192 = vmatprep.subr.bf16.mxu0 %v5435
        %7193 = vmatpush1.bf16.msra.mxu0 %v5434
        %7194 = vmatprep.subr.bf16.mxu0 %v5439
        %7195 = vmatpush1.bf16.msra.mxu0 %v5438
        %7196 = vmatprep.subr.bf16.mxu0 %v5443
        %7197 = vmatpush1.bf16.msra.mxu0 %v5442
        %7198 = vmatprep.subr.bf16.mxu0 %v5447
        %7199 = vmatpush1.bf16.msra.mxu0 %v5446
        %7200 = vmatprep.subr.bf16.mxu0 %v5451
        %7201 = vmatpush1.bf16.msra.mxu0 %v5450
        %7202 = vmatprep.subr.bf16.mxu0 %v5455
        %7203 = vmatpush1.bf16.msra.mxu0 %v5454
        %7204 = vmatprep.subr.bf16.mxu0 %v5459
        %7205 = vmatpush1.bf16.msra.mxu0 %v5458
        %7206 = vmatprep.subr.bf16.mxu0 %v5463
        %7207 = vmatpush1.bf16.msra.mxu0 %v5462
        %7208 = vmatprep.subr.bf16.mxu0 %v5467
        %7209 = vmatpush1.bf16.msra.mxu0 %v5466
        %7210 = vmatprep.mubr.bf16.mxu0 %v1522
        %7211 = vmatmul.mubr.bf16.gmra.mrb[0].mxu0 %v1508
        %v7212 = vpop.f32.mrb[0].mxu0
        %v7213 = vadd.f32 %v7172, %v7212
        %v7214 = vpop.f32.mrb[0].mxu0
        %v7215 = vadd.f32 %v7174, %v7214
        %v7216 = vpop.f32.mrb[0].mxu0
        %v7217 = vpop.f32.mrb[0].mxu0
        %7218 = vdwg.mxu0
        %7219 = vmatprep.subr.bf16.mxu0 %v5471
        %7220 = vmatpush1.bf16.msra.mxu0 %v5470
        %7221 = vmatprep.subr.bf16.mxu0 %v5475
        %7222 = vmatpush1.bf16.msra.mxu0 %v5474
        %7223 = vmatprep.subr.bf16.mxu0 %v5479
        %7224 = vmatpush1.bf16.msra.mxu0 %v5478
        %7225 = vmatprep.subr.bf16.mxu0 %v5483
        %7226 = vmatpush1.bf16.msra.mxu0 %v5482
        %7227 = vmatprep.subr.bf16.mxu0 %v5487
        %7228 = vmatpush1.bf16.msra.mxu0 %v5486
        %7229 = vmatprep.subr.bf16.mxu0 %v5491
        %7230 = vmatpush1.bf16.msra.mxu0 %v5490
        %7231 = vmatprep.subr.bf16.mxu0 %v5495
        %7232 = vmatpush1.bf16.msra.mxu0 %v5494
        %7233 = vmatprep.subr.bf16.mxu0 %v5499
        %7234 = vmatpush1.bf16.msra.mxu0 %v5498
        %7235 = vmatprep.subr.bf16.mxu0 %v5503
        %7236 = vmatpush1.bf16.msra.mxu0 %v5502
        %7237 = vmatprep.subr.bf16.mxu0 %v5507
        %7238 = vmatpush1.bf16.msra.mxu0 %v5506
        %7239 = vmatprep.subr.bf16.mxu0 %v5511
        %7240 = vmatpush1.bf16.msra.mxu0 %v5510
        %7241 = vmatprep.subr.bf16.mxu0 %v5515
        %7242 = vmatpush1.bf16.msra.mxu0 %v5514
        %7243 = vmatprep.subr.bf16.mxu0 %v5519
        %7244 = vmatpush1.bf16.msra.mxu0 %v5518
        %7245 = vmatprep.subr.bf16.mxu0 %v5523
        %7246 = vmatpush1.bf16.msra.mxu0 %v5522
        %7247 = vmatprep.subr.bf16.mxu0 %v5527
        %7248 = vmatpush1.bf16.msra.mxu0 %v5526
        %7249 = vmatprep.subr.bf16.mxu0 %v5531
        %7250 = vmatpush1.bf16.msra.mxu0 %v5530
        %7251 = vmatprep.mubr.bf16.mxu0 %v1532
        %7252 = vmatmul.mubr.bf16.gmra.mrb[0].mxu0 %v1530
        %v7253 = vpop.f32.mrb[0].mxu0
        %v7254 = vadd.f32 %v7213, %v7253
        %v7255 = vpop.f32.mrb[0].mxu0
        %v7256 = vadd.f32 %v7215, %v7255
        %v7257 = vpop.f32.mrb[0].mxu0
        %v7258 = vpop.f32.mrb[0].mxu0
        %7259 = vdwg.mxu0
        %7260 = vmatprep.subr.bf16.mxu0 %v5535
        %7261 = vmatpush1.bf16.msra.mxu0 %v5534
        %7262 = vmatprep.subr.bf16.mxu0 %v5539
        %7263 = vmatpush1.bf16.msra.mxu0 %v5538
        %7264 = vmatprep.subr.bf16.mxu0 %v5543
        %7265 = vmatpush1.bf16.msra.mxu0 %v5542
        %7266 = vmatprep.subr.bf16.mxu0 %v5547
        %7267 = vmatpush1.bf16.msra.mxu0 %v5546
        %7268 = vmatprep.subr.bf16.mxu0 %v5551
        %7269 = vmatpush1.bf16.msra.mxu0 %v5550
        %7270 = vmatprep.subr.bf16.mxu0 %v5555
        %7271 = vmatpush1.bf16.msra.mxu0 %v5554
        %7272 = vmatprep.subr.bf16.mxu0 %v5559
        %7273 = vmatpush1.bf16.msra.mxu0 %v5558
        %7274 = vmatprep.subr.bf16.mxu0 %v5563
        %7275 = vmatpush1.bf16.msra.mxu0 %v5562
        %7276 = vmatprep.subr.bf16.mxu0 %v5567
        %7277 = vmatpush1.bf16.msra.mxu0 %v5566
        %7278 = vmatprep.subr.bf16.mxu0 %v5571
        %7279 = vmatpush1.bf16.msra.mxu0 %v5570
        %7280 = vmatprep.subr.bf16.mxu0 %v5575
        %7281 = vmatpush1.bf16.msra.mxu0 %v5574
        %7282 = vmatprep.subr.bf16.mxu0 %v5579
        %7283 = vmatpush1.bf16.msra.mxu0 %v5578
        %7284 = vmatprep.subr.bf16.mxu0 %v5583
        %7285 = vmatpush1.bf16.msra.mxu0 %v5582
        %7286 = vmatprep.subr.bf16.mxu0 %v5587
        %7287 = vmatpush1.bf16.msra.mxu0 %v5586
        %7288 = vmatprep.subr.bf16.mxu0 %v5591
        %7289 = vmatpush1.bf16.msra.mxu0 %v5590
        %7290 = vmatprep.subr.bf16.mxu0 %v5595
        %7291 = vmatpush1.bf16.msra.mxu0 %v5594
        %7292 = vmatprep.mubr.bf16.mxu0 %v1529
        %7293 = vmatmul.mubr.bf16.gmra.mrb[0].mxu0 %v1515
        %v7294 = vpop.f32.mrb[0].mxu0
        %v7295 = vadd.f32 %v7254, %v7294
        %v7296 = vpop.f32.mrb[0].mxu0
        %v7297 = vadd.f32 %v7256, %v7296
        %v7298 = vpop.f32.mrb[0].mxu0
        %v7299 = vpop.f32.mrb[0].mxu0
        %7300 = vdwg.mxu0
        %7301 = vmatprep.subr.bf16.mxu0 %v5599
        %7302 = vmatpush1.bf16.msra.mxu0 %v5598
        %7303 = vmatprep.subr.bf16.mxu0 %v5603
        %7304 = vmatpush1.bf16.msra.mxu0 %v5602
        %7305 = vmatprep.subr.bf16.mxu0 %v5607
        %7306 = vmatpush1.bf16.msra.mxu0 %v5606
        %7307 = vmatprep.subr.bf16.mxu0 %v5611
        %7308 = vmatpush1.bf16.msra.mxu0 %v5610
        %7309 = vmatprep.subr.bf16.mxu0 %v5615
        %7310 = vmatpush1.bf16.msra.mxu0 %v5614
        %7311 = vmatprep.subr.bf16.mxu0 %v5619
        %7312 = vmatpush1.bf16.msra.mxu0 %v5618
        %7313 = vmatprep.subr.bf16.mxu0 %v5623
        %7314 = vmatpush1.bf16.msra.mxu0 %v5622
        %7315 = vmatprep.subr.bf16.mxu0 %v5627
        %7316 = vmatpush1.bf16.msra.mxu0 %v5626
        %7317 = vmatprep.subr.bf16.mxu0 %v5631
        %7318 = vmatpush1.bf16.msra.mxu0 %v5630
        %7319 = vmatprep.subr.bf16.mxu0 %v5635
        %7320 = vmatpush1.bf16.msra.mxu0 %v5634
        %7321 = vmatprep.subr.bf16.mxu0 %v5639
        %7322 = vmatpush1.bf16.msra.mxu0 %v5638
        %7323 = vmatprep.subr.bf16.mxu0 %v5643
        %7324 = vmatpush1.bf16.msra.mxu0 %v5642
        %7325 = vmatprep.subr.bf16.mxu0 %v5647
        %7326 = vmatpush1.bf16.msra.mxu0 %v5646
        %7327 = vmatprep.subr.bf16.mxu0 %v5651
        %7328 = vmatpush1.bf16.msra.mxu0 %v5650
        %7329 = vmatprep.subr.bf16.mxu0 %v5655
        %7330 = vmatpush1.bf16.msra.mxu0 %v5654
        %7331 = vmatprep.subr.bf16.mxu0 %v5659
        %7332 = vmatpush1.bf16.msra.mxu0 %v5658
        %7333 = vmatprep.mubr.bf16.mxu0 %v1533
        %7334 = vmatmul.mubr.bf16.gmra.mrb[0].mxu0 %v1531
        %v7335 = vpop.f32.mrb[0].mxu0
        %v7336 = vadd.f32 %v7295, %v7335
        %v7337 = vpop.f32.mrb[0].mxu0
        %v7338 = vadd.f32 %v7297, %v7337
        %v7339 = vpop.f32.mrb[0].mxu0
        %v7340 = vpop.f32.mrb[0].mxu0
        %7341 = vdwg.mxu0
        %7342 = vmatprep.subr.bf16.mxu0 %v4641
        %7343 = vmatpush1.bf16.msra.mxu0 %v4640
        %7344 = vmatprep.subr.bf16.mxu0 %v4645
        %7345 = vmatpush1.bf16.msra.mxu0 %v4644
        %7346 = vmatprep.subr.bf16.mxu0 %v4649
        %7347 = vmatpush1.bf16.msra.mxu0 %v4648
        %7348 = vmatprep.subr.bf16.mxu0 %v4653
        %7349 = vmatpush1.bf16.msra.mxu0 %v4652
        %7350 = vmatprep.subr.bf16.mxu0 %v4657
        %7351 = vmatpush1.bf16.msra.mxu0 %v4656
        %7352 = vmatprep.subr.bf16.mxu0 %v4661
        %7353 = vmatpush1.bf16.msra.mxu0 %v4660
        %7354 = vmatprep.subr.bf16.mxu0 %v4665
        %7355 = vmatpush1.bf16.msra.mxu0 %v4664
        %7356 = vmatprep.subr.bf16.mxu0 %v4669
        %7357 = vmatpush1.bf16.msra.mxu0 %v4668
        %7358 = vmatprep.subr.bf16.mxu0 %v4673
        %7359 = vmatpush1.bf16.msra.mxu0 %v4672
        %7360 = vmatprep.subr.bf16.mxu0 %v4677
        %7361 = vmatpush1.bf16.msra.mxu0 %v4676
        %7362 = vmatprep.subr.bf16.mxu0 %v4681
        %7363 = vmatpush1.bf16.msra.mxu0 %v4680
        %7364 = vmatprep.subr.bf16.mxu0 %v4685
        %7365 = vmatpush1.bf16.msra.mxu0 %v4684
        %7366 = vmatprep.subr.bf16.mxu0 %v4689
        %7367 = vmatpush1.bf16.msra.mxu0 %v4688
        %7368 = vmatprep.subr.bf16.mxu0 %v4693
        %7369 = vmatpush1.bf16.msra.mxu0 %v4692
        %7370 = vmatprep.subr.bf16.mxu0 %v4697
        %7371 = vmatpush1.bf16.msra.mxu0 %v4696
        %7372 = vmatprep.subr.bf16.mxu0 %v4701
        %7373 = vmatpush1.bf16.msra.mxu0 %v4700
        %7374 = vmatprep.mubr.bf16.mxu0 %v1375
        %7375 = vmatmul.mubr.bf16.gmra.mrb[0].mxu0 %v1361
        %v7376 = vpop.f32.mrb[0].mxu0
        %v7377 = vadd.f32 0.0, %v7376
        %v7378 = vpop.f32.mrb[0].mxu0
        %v7379 = vadd.f32 0.0, %v7378
        %v7380 = vpop.f32.mrb[0].mxu0
        %v7381 = vpop.f32.mrb[0].mxu0
        %7382 = vdwg.mxu0
        %7383 = vmatprep.subr.bf16.mxu0 %v4705
        %7384 = vmatpush1.bf16.msra.mxu0 %v4704
        %7385 = vmatprep.subr.bf16.mxu0 %v4709
        %7386 = vmatpush1.bf16.msra.mxu0 %v4708
        %7387 = vmatprep.subr.bf16.mxu0 %v4713
        %7388 = vmatpush1.bf16.msra.mxu0 %v4712
        %7389 = vmatprep.subr.bf16.mxu0 %v4717
        %7390 = vmatpush1.bf16.msra.mxu0 %v4716
        %7391 = vmatprep.subr.bf16.mxu0 %v4721
        %7392 = vmatpush1.bf16.msra.mxu0 %v4720
        %7393 = vmatprep.subr.bf16.mxu0 %v4725
        %7394 = vmatpush1.bf16.msra.mxu0 %v4724
        %7395 = vmatprep.subr.bf16.mxu0 %v4729
        %7396 = vmatpush1.bf16.msra.mxu0 %v4728
        %7397 = vmatprep.subr.bf16.mxu0 %v4733
        %7398 = vmatpush1.bf16.msra.mxu0 %v4732
        %7399 = vmatprep.subr.bf16.mxu0 %v4737
        %7400 = vmatpush1.bf16.msra.mxu0 %v4736
        %7401 = vmatprep.subr.bf16.mxu0 %v4741
        %7402 = vmatpush1.bf16.msra.mxu0 %v4740
        %7403 = vmatprep.subr.bf16.mxu0 %v4745
        %7404 = vmatpush1.bf16.msra.mxu0 %v4744
        %7405 = vmatprep.subr.bf16.mxu0 %v4749
        %7406 = vmatpush1.bf16.msra.mxu0 %v4748
        %7407 = vmatprep.subr.bf16.mxu0 %v4753
        %7408 = vmatpush1.bf16.msra.mxu0 %v4752
        %7409 = vmatprep.subr.bf16.mxu0 %v4757
        %7410 = vmatpush1.bf16.msra.mxu0 %v4756
        %7411 = vmatprep.subr.bf16.mxu0 %v4761
        %7412 = vmatpush1.bf16.msra.mxu0 %v4760
        %7413 = vmatprep.subr.bf16.mxu0 %v4765
        %7414 = vmatpush1.bf16.msra.mxu0 %v4764
        %7415 = vmatprep.mubr.bf16.mxu0 %v1385
        %7416 = vmatmul.mubr.bf16.gmra.mrb[0].mxu0 %v1383
        %v7417 = vpop.f32.mrb[0].mxu0
        %v7418 = vadd.f32 %v7377, %v7417
        %v7419 = vpop.f32.mrb[0].mxu0
        %v7420 = vadd.f32 %v7379, %v7419
        %v7421 = vpop.f32.mrb[0].mxu0
        %v7422 = vpop.f32.mrb[0].mxu0
        %7423 = vdwg.mxu0
        %7424 = vmatprep.subr.bf16.mxu0 %v4769
        %7425 = vmatpush1.bf16.msra.mxu0 %v4768
        %7426 = vmatprep.subr.bf16.mxu0 %v4773
        %7427 = vmatpush1.bf16.msra.mxu0 %v4772
        %7428 = vmatprep.subr.bf16.mxu0 %v4777
        %7429 = vmatpush1.bf16.msra.mxu0 %v4776
        %7430 = vmatprep.subr.bf16.mxu0 %v4781
        %7431 = vmatpush1.bf16.msra.mxu0 %v4780
        %7432 = vmatprep.subr.bf16.mxu0 %v4785
        %7433 = vmatpush1.bf16.msra.mxu0 %v4784
        %7434 = vmatprep.subr.bf16.mxu0 %v4789
        %7435 = vmatpush1.bf16.msra.mxu0 %v4788
        %7436 = vmatprep.subr.bf16.mxu0 %v4793
        %7437 = vmatpush1.bf16.msra.mxu0 %v4792
        %7438 = vmatprep.subr.bf16.mxu0 %v4797
        %7439 = vmatpush1.bf16.msra.mxu0 %v4796
        %7440 = vmatprep.subr.bf16.mxu0 %v4801
        %7441 = vmatpush1.bf16.msra.mxu0 %v4800
        %7442 = vmatprep.subr.bf16.mxu0 %v4805
        %7443 = vmatpush1.bf16.msra.mxu0 %v4804
        %7444 = vmatprep.subr.bf16.mxu0 %v4809
        %7445 = vmatpush1.bf16.msra.mxu0 %v4808
        %7446 = vmatprep.subr.bf16.mxu0 %v4813
        %7447 = vmatpush1.bf16.msra.mxu0 %v4812
        %7448 = vmatprep.subr.bf16.mxu0 %v4817
        %7449 = vmatpush1.bf16.msra.mxu0 %v4816
        %7450 = vmatprep.subr.bf16.mxu0 %v4821
        %7451 = vmatpush1.bf16.msra.mxu0 %v4820
        %7452 = vmatprep.subr.bf16.mxu0 %v4825
        %7453 = vmatpush1.bf16.msra.mxu0 %v4824
        %7454 = vmatprep.subr.bf16.mxu0 %v4829
        %7455 = vmatpush1.bf16.msra.mxu0 %v4828
        %7456 = vmatprep.mubr.bf16.mxu0 %v1382
        %7457 = vmatmul.mubr.bf16.gmra.mrb[0].mxu0 %v1368
        %v7458 = vpop.f32.mrb[0].mxu0
        %v7459 = vadd.f32 %v7418, %v7458
        %v7460 = vpop.f32.mrb[0].mxu0
        %v7461 = vadd.f32 %v7420, %v7460
        %v7462 = vpop.f32.mrb[0].mxu0
        %v7463 = vpop.f32.mrb[0].mxu0
        %7464 = vdwg.mxu0
        %7465 = vmatprep.subr.bf16.mxu0 %v4833
        %7466 = vmatpush1.bf16.msra.mxu0 %v4832
        %7467 = vmatprep.subr.bf16.mxu0 %v4837
        %7468 = vmatpush1.bf16.msra.mxu0 %v4836
        %7469 = vmatprep.subr.bf16.mxu0 %v4841
        %7470 = vmatpush1.bf16.msra.mxu0 %v4840
        %7471 = vmatprep.subr.bf16.mxu0 %v4845
        %7472 = vmatpush1.bf16.msra.mxu0 %v4844
        %7473 = vmatprep.subr.bf16.mxu0 %v4849
        %7474 = vmatpush1.bf16.msra.mxu0 %v4848
        %7475 = vmatprep.subr.bf16.mxu0 %v4853
        %7476 = vmatpush1.bf16.msra.mxu0 %v4852
        %7477 = vmatprep.subr.bf16.mxu0 %v4857
        %7478 = vmatpush1.bf16.msra.mxu0 %v4856
        %7479 = vmatprep.subr.bf16.mxu0 %v4861
        %7480 = vmatpush1.bf16.msra.mxu0 %v4860
        %7481 = vmatprep.subr.bf16.mxu0 %v4865
        %7482 = vmatpush1.bf16.msra.mxu0 %v4864
        %7483 = vmatprep.subr.bf16.mxu0 %v4869
        %7484 = vmatpush1.bf16.msra.mxu0 %v4868
        %7485 = vmatprep.subr.bf16.mxu0 %v4873
        %7486 = vmatpush1.bf16.msra.mxu0 %v4872
        %7487 = vmatprep.subr.bf16.mxu0 %v4877
        %7488 = vmatpush1.bf16.msra.mxu0 %v4876
        %7489 = vmatprep.subr.bf16.mxu0 %v4881
        %7490 = vmatpush1.bf16.msra.mxu0 %v4880
        %7491 = vmatprep.subr.bf16.mxu0 %v4885
        %7492 = vmatpush1.bf16.msra.mxu0 %v4884
        %7493 = vmatprep.subr.bf16.mxu0 %v4889
        %7494 = vmatpush1.bf16.msra.mxu0 %v4888
        %7495 = vmatprep.subr.bf16.mxu0 %v4893
        %7496 = vmatpush1.bf16.msra.mxu0 %v4892
        %7497 = vmatprep.mubr.bf16.mxu0 %v1386
        %7498 = vmatmul.mubr.bf16.gmra.mrb[0].mxu0 %v1384
        %v7499 = vpop.f32.mrb[0].mxu0
        %v7500 = vadd.f32 %v7459, %v7499
        %v7501 = vpop.f32.mrb[0].mxu0
        %v7502 = vadd.f32 %v7461, %v7501
        %v7503 = vpop.f32.mrb[0].mxu0
        %v7504 = vpop.f32.mrb[0].mxu0
        %7505 = vdwg.mxu0
        %7506 = vmatprep.subr.bf16.mxu0 %v4897
        %7507 = vmatpush1.bf16.msra.mxu0 %v4896
        %7508 = vmatprep.subr.bf16.mxu0 %v4901
        %7509 = vmatpush1.bf16.msra.mxu0 %v4900
        %7510 = vmatprep.subr.bf16.mxu0 %v4905
        %7511 = vmatpush1.bf16.msra.mxu0 %v4904
        %7512 = vmatprep.subr.bf16.mxu0 %v4909
        %7513 = vmatpush1.bf16.msra.mxu0 %v4908
        %7514 = vmatprep.subr.bf16.mxu0 %v4913
        %7515 = vmatpush1.bf16.msra.mxu0 %v4912
        %7516 = vmatprep.subr.bf16.mxu0 %v4917
        %7517 = vmatpush1.bf16.msra.mxu0 %v4916
        %7518 = vmatprep.subr.bf16.mxu0 %v4921
        %7519 = vmatpush1.bf16.msra.mxu0 %v4920
        %7520 = vmatprep.subr.bf16.mxu0 %v4925
        %7521 = vmatpush1.bf16.msra.mxu0 %v4924
        %7522 = vmatprep.subr.bf16.mxu0 %v4929
        %7523 = vmatpush1.bf16.msra.mxu0 %v4928
        %7524 = vmatprep.subr.bf16.mxu0 %v4933
        %7525 = vmatpush1.bf16.msra.mxu0 %v4932
        %7526 = vmatprep.subr.bf16.mxu0 %v4937
        %7527 = vmatpush1.bf16.msra.mxu0 %v4936
        %7528 = vmatprep.subr.bf16.mxu0 %v4941
        %7529 = vmatpush1.bf16.msra.mxu0 %v4940
        %7530 = vmatprep.subr.bf16.mxu0 %v4945
        %7531 = vmatpush1.bf16.msra.mxu0 %v4944
        %7532 = vmatprep.subr.bf16.mxu0 %v4949
        %7533 = vmatpush1.bf16.msra.mxu0 %v4948
        %7534 = vmatprep.subr.bf16.mxu0 %v4953
        %7535 = vmatpush1.bf16.msra.mxu0 %v4952
        %7536 = vmatprep.subr.bf16.mxu0 %v4957
        %7537 = vmatpush1.bf16.msra.mxu0 %v4956
        %7538 = vmatprep.mubr.bf16.mxu0 %v1424
        %7539 = vmatmul.mubr.bf16.gmra.mrb[0].mxu0 %v1410
        %v7540 = vpop.f32.mrb[0].mxu0
        %v7541 = vadd.f32 %v7500, %v7540
        %v7542 = vpop.f32.mrb[0].mxu0
        %v7543 = vadd.f32 %v7502, %v7542
        %v7544 = vpop.f32.mrb[0].mxu0
        %v7545 = vpop.f32.mrb[0].mxu0
        %7546 = vdwg.mxu0
        %7547 = vmatprep.subr.bf16.mxu0 %v4961
        %7548 = vmatpush1.bf16.msra.mxu0 %v4960
        %7549 = vmatprep.subr.bf16.mxu0 %v4965
        %7550 = vmatpush1.bf16.msra.mxu0 %v4964
        %7551 = vmatprep.subr.bf16.mxu0 %v4969
        %7552 = vmatpush1.bf16.msra.mxu0 %v4968
        %7553 = vmatprep.subr.bf16.mxu0 %v4973
        %7554 = vmatpush1.bf16.msra.mxu0 %v4972
        %7555 = vmatprep.subr.bf16.mxu0 %v4977
        %7556 = vmatpush1.bf16.msra.mxu0 %v4976
        %7557 = vmatprep.subr.bf16.mxu0 %v4981
        %7558 = vmatpush1.bf16.msra.mxu0 %v4980
        %7559 = vmatprep.subr.bf16.mxu0 %v4985
        %7560 = vmatpush1.bf16.msra.mxu0 %v4984
        %7561 = vmatprep.subr.bf16.mxu0 %v4989
        %7562 = vmatpush1.bf16.msra.mxu0 %v4988
        %7563 = vmatprep.subr.bf16.mxu0 %v4993
        %7564 = vmatpush1.bf16.msra.mxu0 %v4992
        %7565 = vmatprep.subr.bf16.mxu0 %v4997
        %7566 = vmatpush1.bf16.msra.mxu0 %v4996
        %7567 = vmatprep.subr.bf16.mxu0 %v5001
        %7568 = vmatpush1.bf16.msra.mxu0 %v5000
        %7569 = vmatprep.subr.bf16.mxu0 %v5005
        %7570 = vmatpush1.bf16.msra.mxu0 %v5004
        %7571 = vmatprep.subr.bf16.mxu0 %v5009
        %7572 = vmatpush1.bf16.msra.mxu0 %v5008
        %7573 = vmatprep.subr.bf16.mxu0 %v5013
        %7574 = vmatpush1.bf16.msra.mxu0 %v5012
        %7575 = vmatprep.subr.bf16.mxu0 %v5017
        %7576 = vmatpush1.bf16.msra.mxu0 %v5016
        %7577 = vmatprep.subr.bf16.mxu0 %v5021
        %7578 = vmatpush1.bf16.msra.mxu0 %v5020
        %7579 = vmatprep.mubr.bf16.mxu0 %v1434
        %7580 = vmatmul.mubr.bf16.gmra.mrb[0].mxu0 %v1432
        %v7581 = vpop.f32.mrb[0].mxu0
        %v7582 = vadd.f32 %v7541, %v7581
        %v7583 = vpop.f32.mrb[0].mxu0
        %v7584 = vadd.f32 %v7543, %v7583
        %v7585 = vpop.f32.mrb[0].mxu0
        %v7586 = vpop.f32.mrb[0].mxu0
        %7587 = vdwg.mxu0
        %7588 = vmatprep.subr.bf16.mxu0 %v5025
        %7589 = vmatpush1.bf16.msra.mxu0 %v5024
        %7590 = vmatprep.subr.bf16.mxu0 %v5029
        %7591 = vmatpush1.bf16.msra.mxu0 %v5028
        %7592 = vmatprep.subr.bf16.mxu0 %v5033
        %7593 = vmatpush1.bf16.msra.mxu0 %v5032
        %7594 = vmatprep.subr.bf16.mxu0 %v5037
        %7595 = vmatpush1.bf16.msra.mxu0 %v5036
        %7596 = vmatprep.subr.bf16.mxu0 %v5041
        %7597 = vmatpush1.bf16.msra.mxu0 %v5040
        %7598 = vmatprep.subr.bf16.mxu0 %v5045
        %7599 = vmatpush1.bf16.msra.mxu0 %v5044
        %7600 = vmatprep.subr.bf16.mxu0 %v5049
        %7601 = vmatpush1.bf16.msra.mxu0 %v5048
        %7602 = vmatprep.subr.bf16.mxu0 %v5053
        %7603 = vmatpush1.bf16.msra.mxu0 %v5052
        %7604 = vmatprep.subr.bf16.mxu0 %v5057
        %7605 = vmatpush1.bf16.msra.mxu0 %v5056
        %7606 = vmatprep.subr.bf16.mxu0 %v5061
        %7607 = vmatpush1.bf16.msra.mxu0 %v5060
        %7608 = vmatprep.subr.bf16.mxu0 %v5065
        %7609 = vmatpush1.bf16.msra.mxu0 %v5064
        %7610 = vmatprep.subr.bf16.mxu0 %v5069
        %7611 = vmatpush1.bf16.msra.mxu0 %v5068
        %7612 = vmatprep.subr.bf16.mxu0 %v5073
        %7613 = vmatpush1.bf16.msra.mxu0 %v5072
        %7614 = vmatprep.subr.bf16.mxu0 %v5077
        %7615 = vmatpush1.bf16.msra.mxu0 %v5076
        %7616 = vmatprep.subr.bf16.mxu0 %v5081
        %7617 = vmatpush1.bf16.msra.mxu0 %v5080
        %7618 = vmatprep.subr.bf16.mxu0 %v5085
        %7619 = vmatpush1.bf16.msra.mxu0 %v5084
        %7620 = vmatprep.mubr.bf16.mxu0 %v1431
        %7621 = vmatmul.mubr.bf16.gmra.mrb[0].mxu0 %v1417
        %v7622 = vpop.f32.mrb[0].mxu0
        %v7623 = vadd.f32 %v7582, %v7622
        %v7624 = vpop.f32.mrb[0].mxu0
        %v7625 = vadd.f32 %v7584, %v7624
        %v7626 = vpop.f32.mrb[0].mxu0
        %v7627 = vpop.f32.mrb[0].mxu0
        %7628 = vdwg.mxu0
        %7629 = vmatprep.subr.bf16.mxu0 %v5089
        %7630 = vmatpush1.bf16.msra.mxu0 %v5088
        %7631 = vmatprep.subr.bf16.mxu0 %v5093
        %7632 = vmatpush1.bf16.msra.mxu0 %v5092
        %7633 = vmatprep.subr.bf16.mxu0 %v5097
        %7634 = vmatpush1.bf16.msra.mxu0 %v5096
        %7635 = vmatprep.subr.bf16.mxu0 %v5101
        %7636 = vmatpush1.bf16.msra.mxu0 %v5100
        %7637 = vmatprep.subr.bf16.mxu0 %v5105
        %7638 = vmatpush1.bf16.msra.mxu0 %v5104
        %7639 = vmatprep.subr.bf16.mxu0 %v5109
        %7640 = vmatpush1.bf16.msra.mxu0 %v5108
        %7641 = vmatprep.subr.bf16.mxu0 %v5113
        %7642 = vmatpush1.bf16.msra.mxu0 %v5112
        %7643 = vmatprep.subr.bf16.mxu0 %v5117
        %7644 = vmatpush1.bf16.msra.mxu0 %v5116
        %7645 = vmatprep.subr.bf16.mxu0 %v5121
        %7646 = vmatpush1.bf16.msra.mxu0 %v5120
        %7647 = vmatprep.subr.bf16.mxu0 %v5125
        %7648 = vmatpush1.bf16.msra.mxu0 %v5124
        %7649 = vmatprep.subr.bf16.mxu0 %v5129
        %7650 = vmatpush1.bf16.msra.mxu0 %v5128
        %7651 = vmatprep.subr.bf16.mxu0 %v5133
        %7652 = vmatpush1.bf16.msra.mxu0 %v5132
        %7653 = vmatprep.subr.bf16.mxu0 %v5137
        %7654 = vmatpush1.bf16.msra.mxu0 %v5136
        %7655 = vmatprep.subr.bf16.mxu0 %v5141
        %7656 = vmatpush1.bf16.msra.mxu0 %v5140
        %7657 = vmatprep.subr.bf16.mxu0 %v5145
        %7658 = vmatpush1.bf16.msra.mxu0 %v5144
        %7659 = vmatprep.subr.bf16.mxu0 %v5149
        %7660 = vmatpush1.bf16.msra.mxu0 %v5148
        %7661 = vmatprep.mubr.bf16.mxu0 %v1435
        %7662 = vmatmul.mubr.bf16.gmra.mrb[0].mxu0 %v1433
        %v7663 = vpop.f32.mrb[0].mxu0
        %v7664 = vadd.f32 %v7623, %v7663
        %v7665 = vpop.f32.mrb[0].mxu0
        %v7666 = vadd.f32 %v7625, %v7665
        %v7667 = vpop.f32.mrb[0].mxu0
        %v7668 = vpop.f32.mrb[0].mxu0
        %7669 = vdwg.mxu0
        %7670 = vmatprep.subr.bf16.mxu0 %v5153
        %7671 = vmatpush1.bf16.msra.mxu0 %v5152
        %7672 = vmatprep.subr.bf16.mxu0 %v5157
        %7673 = vmatpush1.bf16.msra.mxu0 %v5156
        %7674 = vmatprep.subr.bf16.mxu0 %v5161
        %7675 = vmatpush1.bf16.msra.mxu0 %v5160
        %7676 = vmatprep.subr.bf16.mxu0 %v5165
        %7677 = vmatpush1.bf16.msra.mxu0 %v5164
        %7678 = vmatprep.subr.bf16.mxu0 %v5169
        %7679 = vmatpush1.bf16.msra.mxu0 %v5168
        %7680 = vmatprep.subr.bf16.mxu0 %v5173
        %7681 = vmatpush1.bf16.msra.mxu0 %v5172
        %7682 = vmatprep.subr.bf16.mxu0 %v5177
        %7683 = vmatpush1.bf16.msra.mxu0 %v5176
        %7684 = vmatprep.subr.bf16.mxu0 %v5181
        %7685 = vmatpush1.bf16.msra.mxu0 %v5180
        %7686 = vmatprep.subr.bf16.mxu0 %v5185
        %7687 = vmatpush1.bf16.msra.mxu0 %v5184
        %7688 = vmatprep.subr.bf16.mxu0 %v5189
        %7689 = vmatpush1.bf16.msra.mxu0 %v5188
        %7690 = vmatprep.subr.bf16.mxu0 %v5193
        %7691 = vmatpush1.bf16.msra.mxu0 %v5192
        %7692 = vmatprep.subr.bf16.mxu0 %v5197
        %7693 = vmatpush1.bf16.msra.mxu0 %v5196
        %7694 = vmatprep.subr.bf16.mxu0 %v5201
        %7695 = vmatpush1.bf16.msra.mxu0 %v5200
        %7696 = vmatprep.subr.bf16.mxu0 %v5205
        %7697 = vmatpush1.bf16.msra.mxu0 %v5204
        %7698 = vmatprep.subr.bf16.mxu0 %v5209
        %7699 = vmatpush1.bf16.msra.mxu0 %v5208
        %7700 = vmatprep.subr.bf16.mxu0 %v5213
        %7701 = vmatpush1.bf16.msra.mxu0 %v5212
        %7702 = vmatprep.mubr.bf16.mxu0 %v1473
        %7703 = vmatmul.mubr.bf16.gmra.mrb[0].mxu0 %v1459
        %v7704 = vpop.f32.mrb[0].mxu0
        %v7705 = vadd.f32 %v7664, %v7704
        %v7706 = vpop.f32.mrb[0].mxu0
        %v7707 = vadd.f32 %v7666, %v7706
        %v7708 = vpop.f32.mrb[0].mxu0
        %v7709 = vpop.f32.mrb[0].mxu0
        %7710 = vdwg.mxu0
        %7711 = vmatprep.subr.bf16.mxu0 %v5217
        %7712 = vmatpush1.bf16.msra.mxu0 %v5216
        %7713 = vmatprep.subr.bf16.mxu0 %v5221
        %7714 = vmatpush1.bf16.msra.mxu0 %v5220
        %7715 = vmatprep.subr.bf16.mxu0 %v5225
        %7716 = vmatpush1.bf16.msra.mxu0 %v5224
        %7717 = vmatprep.subr.bf16.mxu0 %v5229
        %7718 = vmatpush1.bf16.msra.mxu0 %v5228
        %7719 = vmatprep.subr.bf16.mxu0 %v5233
        %7720 = vmatpush1.bf16.msra.mxu0 %v5232
        %7721 = vmatprep.subr.bf16.mxu0 %v5237
        %7722 = vmatpush1.bf16.msra.mxu0 %v5236
        %7723 = vmatprep.subr.bf16.mxu0 %v5241
        %7724 = vmatpush1.bf16.msra.mxu0 %v5240
        %7725 = vmatprep.subr.bf16.mxu0 %v5245
        %7726 = vmatpush1.bf16.msra.mxu0 %v5244
        %7727 = vmatprep.subr.bf16.mxu0 %v5249
        %7728 = vmatpush1.bf16.msra.mxu0 %v5248
        %7729 = vmatprep.subr.bf16.mxu0 %v5253
        %7730 = vmatpush1.bf16.msra.mxu0 %v5252
        %7731 = vmatprep.subr.bf16.mxu0 %v5257
        %7732 = vmatpush1.bf16.msra.mxu0 %v5256
        %7733 = vmatprep.subr.bf16.mxu0 %v5261
        %7734 = vmatpush1.bf16.msra.mxu0 %v5260
        %7735 = vmatprep.subr.bf16.mxu0 %v5265
        %7736 = vmatpush1.bf16.msra.mxu0 %v5264
        %7737 = vmatprep.subr.bf16.mxu0 %v5269
        %7738 = vmatpush1.bf16.msra.mxu0 %v5268
        %7739 = vmatprep.subr.bf16.mxu0 %v5273
        %7740 = vmatpush1.bf16.msra.mxu0 %v5272
        %7741 = vmatprep.subr.bf16.mxu0 %v5277
        %7742 = vmatpush1.bf16.msra.mxu0 %v5276
        %7743 = vmatprep.mubr.bf16.mxu0 %v1483
        %7744 = vmatmul.mubr.bf16.gmra.mrb[0].mxu0 %v1481
        %v7745 = vpop.f32.mrb[0].mxu0
        %v7746 = vadd.f32 %v7705, %v7745
        %v7747 = vpop.f32.mrb[0].mxu0
        %v7748 = vadd.f32 %v7707, %v7747
        %v7749 = vpop.f32.mrb[0].mxu0
        %v7750 = vpop.f32.mrb[0].mxu0
        %7751 = vdwg.mxu0
        %7752 = vmatprep.subr.bf16.mxu0 %v5281
        %7753 = vmatpush1.bf16.msra.mxu0 %v5280
        %7754 = vmatprep.subr.bf16.mxu0 %v5285
        %7755 = vmatpush1.bf16.msra.mxu0 %v5284
        %7756 = vmatprep.subr.bf16.mxu0 %v5289
        %7757 = vmatpush1.bf16.msra.mxu0 %v5288
        %7758 = vmatprep.subr.bf16.mxu0 %v5293
        %7759 = vmatpush1.bf16.msra.mxu0 %v5292
        %7760 = vmatprep.subr.bf16.mxu0 %v5297
        %7761 = vmatpush1.bf16.msra.mxu0 %v5296
        %7762 = vmatprep.subr.bf16.mxu0 %v5301
        %7763 = vmatpush1.bf16.msra.mxu0 %v5300
        %7764 = vmatprep.subr.bf16.mxu0 %v5305
        %7765 = vmatpush1.bf16.msra.mxu0 %v5304
        %7766 = vmatprep.subr.bf16.mxu0 %v5309
        %7767 = vmatpush1.bf16.msra.mxu0 %v5308
        %7768 = vmatprep.subr.bf16.mxu0 %v5313
        %7769 = vmatpush1.bf16.msra.mxu0 %v5312
        %7770 = vmatprep.subr.bf16.mxu0 %v5317
        %7771 = vmatpush1.bf16.msra.mxu0 %v5316
        %7772 = vmatprep.subr.bf16.mxu0 %v5321
        %7773 = vmatpush1.bf16.msra.mxu0 %v5320
        %7774 = vmatprep.subr.bf16.mxu0 %v5325
        %7775 = vmatpush1.bf16.msra.mxu0 %v5324
        %7776 = vmatprep.subr.bf16.mxu0 %v5329
        %7777 = vmatpush1.bf16.msra.mxu0 %v5328
        %7778 = vmatprep.subr.bf16.mxu0 %v5333
        %7779 = vmatpush1.bf16.msra.mxu0 %v5332
        %7780 = vmatprep.subr.bf16.mxu0 %v5337
        %7781 = vmatpush1.bf16.msra.mxu0 %v5336
        %7782 = vmatprep.subr.bf16.mxu0 %v5341
        %7783 = vmatpush1.bf16.msra.mxu0 %v5340
        %7784 = vmatprep.mubr.bf16.mxu0 %v1480
        %7785 = vmatmul.mubr.bf16.gmra.mrb[0].mxu0 %v1466
        %v7786 = vpop.f32.mrb[0].mxu0
        %v7787 = vadd.f32 %v7746, %v7786
        %v7788 = vpop.f32.mrb[0].mxu0
        %v7789 = vadd.f32 %v7748, %v7788
        %v7790 = vpop.f32.mrb[0].mxu0
        %v7791 = vpop.f32.mrb[0].mxu0
        %7792 = vdwg.mxu0
        %7793 = vmatprep.subr.bf16.mxu0 %v5345
        %7794 = vmatpush1.bf16.msra.mxu0 %v5344
        %7795 = vmatprep.subr.bf16.mxu0 %v5349
        %7796 = vmatpush1.bf16.msra.mxu0 %v5348
        %7797 = vmatprep.subr.bf16.mxu0 %v5353
        %7798 = vmatpush1.bf16.msra.mxu0 %v5352
        %7799 = vmatprep.subr.bf16.mxu0 %v5357
        %7800 = vmatpush1.bf16.msra.mxu0 %v5356
        %7801 = vmatprep.subr.bf16.mxu0 %v5361
        %7802 = vmatpush1.bf16.msra.mxu0 %v5360
        %7803 = vmatprep.subr.bf16.mxu0 %v5365
        %7804 = vmatpush1.bf16.msra.mxu0 %v5364
        %7805 = vmatprep.subr.bf16.mxu0 %v5369
        %7806 = vmatpush1.bf16.msra.mxu0 %v5368
        %7807 = vmatprep.subr.bf16.mxu0 %v5373
        %7808 = vmatpush1.bf16.msra.mxu0 %v5372
        %7809 = vmatprep.subr.bf16.mxu0 %v5377
        %7810 = vmatpush1.bf16.msra.mxu0 %v5376
        %7811 = vmatprep.subr.bf16.mxu0 %v5381
        %7812 = vmatpush1.bf16.msra.mxu0 %v5380
        %7813 = vmatprep.subr.bf16.mxu0 %v5385
        %7814 = vmatpush1.bf16.msra.mxu0 %v5384
        %7815 = vmatprep.subr.bf16.mxu0 %v5389
        %7816 = vmatpush1.bf16.msra.mxu0 %v5388
        %7817 = vmatprep.subr.bf16.mxu0 %v5393
        %7818 = vmatpush1.bf16.msra.mxu0 %v5392
        %7819 = vmatprep.subr.bf16.mxu0 %v5397
        %7820 = vmatpush1.bf16.msra.mxu0 %v5396
        %7821 = vmatprep.subr.bf16.mxu0 %v5401
        %7822 = vmatpush1.bf16.msra.mxu0 %v5400
        %7823 = vmatprep.subr.bf16.mxu0 %v5405
        %7824 = vmatpush1.bf16.msra.mxu0 %v5404
        %7825 = vmatprep.mubr.bf16.mxu0 %v1484
        %7826 = vmatmul.mubr.bf16.gmra.mrb[0].mxu0 %v1482
        %v7827 = vpop.f32.mrb[0].mxu0
        %v7828 = vadd.f32 %v7787, %v7827
        %v7829 = vpop.f32.mrb[0].mxu0
        %v7830 = vadd.f32 %v7789, %v7829
        %v7831 = vpop.f32.mrb[0].mxu0
        %v7832 = vpop.f32.mrb[0].mxu0
        %7833 = vdwg.mxu0
        %7834 = vmatprep.subr.bf16.mxu0 %v5409
        %7835 = vmatpush1.bf16.msra.mxu0 %v5408
        %7836 = vmatprep.subr.bf16.mxu0 %v5413
        %7837 = vmatpush1.bf16.msra.mxu0 %v5412
        %7838 = vmatprep.subr.bf16.mxu0 %v5417
        %7839 = vmatpush1.bf16.msra.mxu0 %v5416
        %7840 = vmatprep.subr.bf16.mxu0 %v5421
        %7841 = vmatpush1.bf16.msra.mxu0 %v5420
        %7842 = vmatprep.subr.bf16.mxu0 %v5425
        %7843 = vmatpush1.bf16.msra.mxu0 %v5424
        %7844 = vmatprep.subr.bf16.mxu0 %v5429
        %7845 = vmatpush1.bf16.msra.mxu0 %v5428
        %7846 = vmatprep.subr.bf16.mxu0 %v5433
        %7847 = vmatpush1.bf16.msra.mxu0 %v5432
        %7848 = vmatprep.subr.bf16.mxu0 %v5437
        %7849 = vmatpush1.bf16.msra.mxu0 %v5436
        %7850 = vmatprep.subr.bf16.mxu0 %v5441
        %7851 = vmatpush1.bf16.msra.mxu0 %v5440
        %7852 = vmatprep.subr.bf16.mxu0 %v5445
        %7853 = vmatpush1.bf16.msra.mxu0 %v5444
        %7854 = vmatprep.subr.bf16.mxu0 %v5449
        %7855 = vmatpush1.bf16.msra.mxu0 %v5448
        %7856 = vmatprep.subr.bf16.mxu0 %v5453
        %7857 = vmatpush1.bf16.msra.mxu0 %v5452
        %7858 = vmatprep.subr.bf16.mxu0 %v5457
        %7859 = vmatpush1.bf16.msra.mxu0 %v5456
        %7860 = vmatprep.subr.bf16.mxu0 %v5461
        %7861 = vmatpush1.bf16.msra.mxu0 %v5460
        %7862 = vmatprep.subr.bf16.mxu0 %v5465
        %7863 = vmatpush1.bf16.msra.mxu0 %v5464
        %7864 = vmatprep.subr.bf16.mxu0 %v5469
        %7865 = vmatpush1.bf16.msra.mxu0 %v5468
        %7866 = vmatprep.mubr.bf16.mxu0 %v1522
        %7867 = vmatmul.mubr.bf16.gmra.mrb[0].mxu0 %v1508
        %v7868 = vpop.f32.mrb[0].mxu0
        %v7869 = vadd.f32 %v7828, %v7868
        %v7870 = vpop.f32.mrb[0].mxu0
        %v7871 = vadd.f32 %v7830, %v7870
        %v7872 = vpop.f32.mrb[0].mxu0
        %v7873 = vpop.f32.mrb[0].mxu0
        %7874 = vdwg.mxu0
        %7875 = vmatprep.subr.bf16.mxu0 %v5473
        %7876 = vmatpush1.bf16.msra.mxu0 %v5472
        %7877 = vmatprep.subr.bf16.mxu0 %v5477
        %7878 = vmatpush1.bf16.msra.mxu0 %v5476
        %7879 = vmatprep.subr.bf16.mxu0 %v5481
        %7880 = vmatpush1.bf16.msra.mxu0 %v5480
        %7881 = vmatprep.subr.bf16.mxu0 %v5485
        %7882 = vmatpush1.bf16.msra.mxu0 %v5484
        %7883 = vmatprep.subr.bf16.mxu0 %v5489
        %7884 = vmatpush1.bf16.msra.mxu0 %v5488
        %7885 = vmatprep.subr.bf16.mxu0 %v5493
        %7886 = vmatpush1.bf16.msra.mxu0 %v5492
        %7887 = vmatprep.subr.bf16.mxu0 %v5497
        %7888 = vmatpush1.bf16.msra.mxu0 %v5496
        %7889 = vmatprep.subr.bf16.mxu0 %v5501
        %7890 = vmatpush1.bf16.msra.mxu0 %v5500
        %7891 = vmatprep.subr.bf16.mxu0 %v5505
        %7892 = vmatpush1.bf16.msra.mxu0 %v5504
        %7893 = vmatprep.subr.bf16.mxu0 %v5509
        %7894 = vmatpush1.bf16.msra.mxu0 %v5508
        %7895 = vmatprep.subr.bf16.mxu0 %v5513
        %7896 = vmatpush1.bf16.msra.mxu0 %v5512
        %7897 = vmatprep.subr.bf16.mxu0 %v5517
        %7898 = vmatpush1.bf16.msra.mxu0 %v5516
        %7899 = vmatprep.subr.bf16.mxu0 %v5521
        %7900 = vmatpush1.bf16.msra.mxu0 %v5520
        %7901 = vmatprep.subr.bf16.mxu0 %v5525
        %7902 = vmatpush1.bf16.msra.mxu0 %v5524
        %7903 = vmatprep.subr.bf16.mxu0 %v5529
        %7904 = vmatpush1.bf16.msra.mxu0 %v5528
        %7905 = vmatprep.subr.bf16.mxu0 %v5533
        %7906 = vmatpush1.bf16.msra.mxu0 %v5532
        %7907 = vmatprep.mubr.bf16.mxu0 %v1532
        %7908 = vmatmul.mubr.bf16.gmra.mrb[0].mxu0 %v1530
        %v7909 = vpop.f32.mrb[0].mxu0
        %v7910 = vadd.f32 %v7869, %v7909
        %v7911 = vpop.f32.mrb[0].mxu0
        %v7912 = vadd.f32 %v7871, %v7911
        %v7913 = vpop.f32.mrb[0].mxu0
        %v7914 = vpop.f32.mrb[0].mxu0
        %7915 = vdwg.mxu0
        %7916 = vmatprep.subr.bf16.mxu0 %v5537
        %7917 = vmatpush1.bf16.msra.mxu0 %v5536
        %7918 = vmatprep.subr.bf16.mxu0 %v5541
        %7919 = vmatpush1.bf16.msra.mxu0 %v5540
        %7920 = vmatprep.subr.bf16.mxu0 %v5545
        %7921 = vmatpush1.bf16.msra.mxu0 %v5544
        %7922 = vmatprep.subr.bf16.mxu0 %v5549
        %7923 = vmatpush1.bf16.msra.mxu0 %v5548
        %7924 = vmatprep.subr.bf16.mxu0 %v5553
        %7925 = vmatpush1.bf16.msra.mxu0 %v5552
        %7926 = vmatprep.subr.bf16.mxu0 %v5557
        %7927 = vmatpush1.bf16.msra.mxu0 %v5556
        %7928 = vmatprep.subr.bf16.mxu0 %v5561
        %7929 = vmatpush1.bf16.msra.mxu0 %v5560
        %7930 = vmatprep.subr.bf16.mxu0 %v5565
        %7931 = vmatpush1.bf16.msra.mxu0 %v5564
        %7932 = vmatprep.subr.bf16.mxu0 %v5569
        %7933 = vmatpush1.bf16.msra.mxu0 %v5568
        %7934 = vmatprep.subr.bf16.mxu0 %v5573
        %7935 = vmatpush1.bf16.msra.mxu0 %v5572
        %7936 = vmatprep.subr.bf16.mxu0 %v5577
        %7937 = vmatpush1.bf16.msra.mxu0 %v5576
        %7938 = vmatprep.subr.bf16.mxu0 %v5581
        %7939 = vmatpush1.bf16.msra.mxu0 %v5580
        %7940 = vmatprep.subr.bf16.mxu0 %v5585
        %7941 = vmatpush1.bf16.msra.mxu0 %v5584
        %7942 = vmatprep.subr.bf16.mxu0 %v5589
        %7943 = vmatpush1.bf16.msra.mxu0 %v5588
        %7944 = vmatprep.subr.bf16.mxu0 %v5593
        %7945 = vmatpush1.bf16.msra.mxu0 %v5592
        %7946 = vmatprep.subr.bf16.mxu0 %v5597
        %7947 = vmatpush1.bf16.msra.mxu0 %v5596
        %7948 = vmatprep.mubr.bf16.mxu0 %v1529
        %7949 = vmatmul.mubr.bf16.gmra.mrb[0].mxu0 %v1515
        %v7950 = vpop.f32.mrb[0].mxu0
        %v7951 = vadd.f32 %v7910, %v7950
        %v7952 = vpop.f32.mrb[0].mxu0
        %v7953 = vadd.f32 %v7912, %v7952
        %v7954 = vpop.f32.mrb[0].mxu0
        %v7955 = vpop.f32.mrb[0].mxu0
        %7956 = vdwg.mxu0
        %7957 = vmatprep.subr.bf16.mxu0 %v5601
        %7958 = vmatpush1.bf16.msra.mxu0 %v5600
        %7959 = vmatprep.subr.bf16.mxu0 %v5605
        %7960 = vmatpush1.bf16.msra.mxu0 %v5604
        %7961 = vmatprep.subr.bf16.mxu0 %v5609
        %7962 = vmatpush1.bf16.msra.mxu0 %v5608
        %7963 = vmatprep.subr.bf16.mxu0 %v5613
        %7964 = vmatpush1.bf16.msra.mxu0 %v5612
        %7965 = vmatprep.subr.bf16.mxu0 %v5617
        %7966 = vmatpush1.bf16.msra.mxu0 %v5616
        %7967 = vmatprep.subr.bf16.mxu0 %v5621
        %7968 = vmatpush1.bf16.msra.mxu0 %v5620
        %7969 = vmatprep.subr.bf16.mxu0 %v5625
        %7970 = vmatpush1.bf16.msra.mxu0 %v5624
        %7971 = vmatprep.subr.bf16.mxu0 %v5629
        %7972 = vmatpush1.bf16.msra.mxu0 %v5628
        %7973 = vmatprep.subr.bf16.mxu0 %v5633
        %7974 = vmatpush1.bf16.msra.mxu0 %v5632
        %7975 = vmatprep.subr.bf16.mxu0 %v5637
        %7976 = vmatpush1.bf16.msra.mxu0 %v5636
        %7977 = vmatprep.subr.bf16.mxu0 %v5641
        %7978 = vmatpush1.bf16.msra.mxu0 %v5640
        %7979 = vmatprep.subr.bf16.mxu0 %v5645
        %7980 = vmatpush1.bf16.msra.mxu0 %v5644
        %7981 = vmatprep.subr.bf16.mxu0 %v5649
        %7982 = vmatpush1.bf16.msra.mxu0 %v5648
        %7983 = vmatprep.subr.bf16.mxu0 %v5653
        %7984 = vmatpush1.bf16.msra.mxu0 %v5652
        %7985 = vmatprep.subr.bf16.mxu0 %v5657
        %7986 = vmatpush1.bf16.msra.mxu0 %v5656
        %7987 = vmatprep.subr.bf16.mxu0 %v5661
        %7988 = vmatpush1.bf16.msra.mxu0 %v5660
        %7989 = vmatprep.mubr.bf16.mxu0 %v1533
        %7990 = vmatmul.mubr.bf16.gmra.mrb[0].mxu0 %v1531
        %v7991 = vpop.f32.mrb[0].mxu0
        %v7992 = vadd.f32 %v7951, %v7991
        %v7993 = vpop.f32.mrb[0].mxu0
        %v7994 = vadd.f32 %v7953, %v7993
        %v7995 = vpop.f32.mrb[0].mxu0
        %v7996 = vpop.f32.mrb[0].mxu0
        %7997 = vdwg.mxu0
        %v8002 = vcombine.low %v7336, %v7338
        %v8003 = vcombine.low %v7992, %v7994
        %v8005 = vunpack.c.l.s4 1983009808
        %v8006 = vunpack.c.0.s8 %v8005
        %v8007 = vlaneseq
        %v8008 = vshrl.u32 %v8007, 7
        %v8009 = vsub.s32 %v8006, %v8008
        %v8010 = vrot.slane %v8002, %v8009
        %v8012 = vunpack.c.l.s4 1983009808
        %v8013 = vunpack.c.0.s8 %v8012
        %v8014 = vlaneseq
        %v8015 = vshrl.u32 %v8014, 7
        %v8016 = vsub.s32 %v8013, %v8015
        %v8017 = vrot.slane %v8003, %v8016
        %v8018 = vcombine.low %v8010, %v8017
        %v8020 = vadd.f32 %v303, %v8018
        %8021 = vst [vmem:[%s248] sm:$0xff] %v8020
        %p8022 = scmp.eq.s32.totalorder %s25, 2
        // Predicated region
        $region45: #{dnn_forward.2} parent=31 // pred_check
          %p8023 = pneg %p8022
        $region46: #{dnn_forward.2} parent=31 // pred_check_branch
          %8025 = sbr.rel (%p8023) target = $region48
        $region47: #{dnn_forward.2} parent=31 // pred_region
          %v8026 = vld [vmem:[%s248] sm:$0xff]
          %v8027 = vmax.f32 %v8026, 0.0
          %8028 = vst [vmem:[%s248] sm:$0xff] %v8027
        $region48: #{dnn_forward.2} parent=31 // pred_fallthru
          _
        %s8029 = smul.u32 4, %s24
        %p8030 = scmp.lt.s32.totalorder %s8029, 7
        %s8031 = scalar_select %p8030, %s8029, 7
        %s8032 = smul.addr %s8031, 2
        %s8033 = scalar_lea.vmem %s3, %s8032
        // Predicated region
        $region49: #{dnn_forward.2} parent=31 // pred_check
          %p8034 = pneg %p125
        $region50: #{dnn_forward.2} parent=31 // pred_check_branch
          %8036 = sbr.rel (%p8034) target = $region52
        $region51: #{dnn_forward.2} parent=31 // pred_region
          %s8037 = smul.u32 4, %s24
        $region52: #{dnn_forward.2} parent=31 // pred_fallthru
          _
      $region32: #{dnn_forward.2} parent=5 // pred_fallthru
        _
      %p8038 = scmp.le.s32.totalorder 2, %s15
      // Predicated region
      $region53: #{dnn_forward.2} parent=5 // pred_check
        %p8039 = pneg %p8038
      $region54: #{dnn_forward.2} parent=5 // pred_check_branch
        %8041 = sbr.rel (%p8039) target = $region56
      $region55: #{dnn_forward.2} parent=5 // pred_region
        %s8042 = ssub.s32 %s15, 2
        // Predicated region
        $region57: #{dnn_forward.2} parent=55 // pred_check
          %p8043 = pneg %p131
        $region58: #{dnn_forward.2} parent=55 // pred_check_branch
          %8045 = sbr.rel (%p8043) target = $region60
        $region59: #{dnn_forward.2} parent=55 // pred_region
          %s8046 = smul.u32 4, %s26
          %p8047 = scmp.lt.s32.totalorder %s8046, 7
          %s8048 = scalar_select %p8047, %s8046, 7
          %s8049 = smul.addr %s8048, 2
          %s8050 = scalar_lea.vmem %s3, %s8049
        $region60: #{dnn_forward.2} parent=55 // pred_fallthru
          _
      $region56: #{dnn_forward.2} parent=5 // pred_fallthru
        _
    $region6: #{dnn_forward.2} parent=1 // loop_footer
      %s19 = sadd.s32 1, %s15
    $region7: #{dnn_forward.2} parent=1 // loop_footer_branch
      %14 = sbr.rel target = $region3
    $region8: #{dnn_forward.2} parent=1 // loop_exit
      _
    %8051 = vsyncpa [#allocation3], 1
    %s8052 = scalar_lea.sflag [#allocation3], 1
    %8053 = vsyncpa %s8052, 1
    %8054 = vsyncpa [#allocation5], 1
    %s8055 = scalar_lea.sflag [#allocation5], 1
    %8056 = vsyncpa %s8055, 1

</llo_original>
